<compile_context>
chip_gen: v7x
topology: tpu7x:2x2x1
jax: 0.10.0
libtpu: 0.0.40
codegen_flags: <defaults>
</compile_context>

<pallas_src>
import functools

import jax
import jax.numpy as jnp
from jax import lax
from jax.experimental import pallas as pl
from jax.experimental.pallas import tpu as pltpu


_HALO = 4                             # recompute halo rows (>=3 needed for 3 stacked 3x3 convs)
_TILE_VMEM_BUDGET = 24 * 1024 * 1024  # per-tile working-set budget used to pick the row tile
_VMEM_LIMIT_BYTES = 48 * 1024 * 1024  # scoped VMEM limit (<= 64 MiB physical on v7x)
_BN_EPS = 1e-5


# ------------------------------ Pallas kernel ------------------------------ #

def _ssh_kernel(xt_ref, xm_ref, xb_ref,
                wA_ref, bA_ref, wB_ref, bB_ref, wC_ref, bC_ref,
                o_ref, xs_ref, t5_ref, t7_ref,
                *, W, TH, Cin, C2, C4, slope):
    """Fused SSH forward for one (batch, row-tile) grid step.

    xt/xm/xb : (1, HALO*W|TH*W|HALO*W, Cin)  input rows above / tile / below
    w*_ref   : (3, 3*Cin_s, Cout_s) bf16     BN-scale-folded weights, per-ky rows
                                             ordered [kx=0 | kx=1 | kx=2] x Cin_s
    b*_ref   : (1, Cout_s) f32               folded BN bias
    o_ref    : (1, TH*W, C2+2*C4)            relu(cat(out3, out5, out7)) for the tile
    xs/t5/t7 : VMEM scratch for the halo'd bf16 slab and the two intermediates
    """
    bf16 = jnp.bfloat16
    f32 = jnp.float32
    HB = _HALO * W                    # halo rows, flattened
    MO = TH * W                       # output rows, flattened
    M = MO + 2 * HB                   # slab rows, flattened

    t = pl.program_id(1)
    t_last = pl.num_programs(1) - 1

    # ---- assemble the halo'd bf16 input slab in VMEM (x is cast exactly once) ----
    xs_ref[pl.ds(0, HB), :] = xt_ref[0].astype(bf16)
    xs_ref[pl.ds(HB, MO), :] = xm_ref[0].astype(bf16)
    xs_ref[pl.ds(HB + MO, HB), :] = xb_ref[0].astype(bf16)

    def zero_edge_halos(ref, c):
        # At the true image top/bottom the halo must behave like the conv's zero
        # padding: two tiny conditional stores replace full-array row-mask
        # multiplies, and also make the +-W roll wrap-around harmless.
        @pl.when(t == 0)
        def _():
            ref[pl.ds(0, HB), :] = jnp.zeros((HB, c), bf16)

        @pl.when(t == t_last)
        def _():
            ref[pl.ds(HB + MO, HB), :] = jnp.zeros((HB, c), bf16)

    zero_edge_halos(xs_ref, Cin)

    # Left/right image-border masks, built in-kernel from an iota (no mask input).
    col = lax.broadcasted_iota(jnp.int32, (M, 1), 0) % W
    not_first_col = (col != 0).astype(bf16)
    not_last_col = (col != W - 1).astype(bf16)

    def conv3x3_bn(x_bf16, w_ref, b_ref):
        """3x3 SAME conv + folded BN over the flat (M, Cin_s) halo'd slab."""
        # kx taps folded into the contraction dim; masks are {0,1} so bf16 is exact.
        x_r = jnp.roll(x_bf16, 1, axis=0) * not_first_col    # source column x-1
        x_l = jnp.roll(x_bf16, -1, axis=0) * not_last_col    # source column x+1
        xcat = jnp.concatenate([x_r, x_bf16, x_l], axis=1)   # (M, 3*Cin_s) bf16

        # One MXU matmul per ky row of the stencil, f32 accumulation.
        p0 = jnp.dot(xcat, w_ref[0], preferred_element_type=f32)   # ky=0 (src row y-1)
        p1 = jnp.dot(xcat, w_ref[1], preferred_element_type=f32)   # ky=1
        p2 = jnp.dot(xcat, w_ref[2], preferred_element_type=f32)   # ky=2 (src row y+1)

        # ky taps realized by rotating the products by +-W rows on the XLU.
        # Wrap-around garbage only lands in (discarded) halo rows; the zeroed
        # edge halos reproduce SAME zero padding exactly -> no row masks needed.
        acc = p1 + pltpu.roll(p0, W, axis=0) + pltpu.roll(p2, M - W, axis=0)
        return acc + b_ref[...]       # BN scale is folded into w; add bias.

    def leaky(y):
        return jnp.where(y >= 0, y, slope * y)

    def crop(v):                      # drop the halo rows
        return v[HB:HB + MO, :]

    # Stage A: conv3x3 and conv5x5_1 share input x -> one fused matmul group.
    yA = conv3x3_bn(xs_ref[...], wA_ref, bA_ref)        # (M, C2 + C4) f32
    out3 = yA[:, :C2]
    t5_ref[...] = leaky(yA[:, C2:]).astype(bf16)        # conv5x5_1 + LeakyReLU
    zero_edge_halos(t5_ref, C4)

    # Stage B: conv5x5_2 and conv7x7_2 share input t5 -> one fused matmul group.
    yB = conv3x3_bn(t5_ref[...], wB_ref, bB_ref)        # (M, 2*C4)
    out5 = yB[:, :C4]
    t7_ref[...] = leaky(yB[:, C4:]).astype(bf16)
    zero_edge_halos(t7_ref, C4)

    # Stage C: conv7x7_3.
    out7 = conv3x3_bn(t7_ref[...], wC_ref, bC_ref)      # (M, C4)

    # torch.cat(dim=channels) + F.relu fused in VMEM; only the TH tile rows are
    # written back (halo is recompute-only).
    out = jnp.maximum(
        jnp.concatenate([crop(out3), crop(out5), crop(out7)], axis=1), 0.0)
    o_ref[0] = out.astype(o_ref.dtype)


# --------------------------- Parameter creation ----------------------------- #

def _make_conv_bn(key, cin, cout):
    kw, kg, kb, km, kv = jax.random.split(key, 5)
    w = jax.random.normal(kw, (3, 3, cin, cout), jnp.float32) * 0.1   # HWIO
    gamma = jax.random.uniform(kg, (cout,), jnp.float32, 0.5, 1.5)
    beta = jax.random.normal(kb, (cout,), jnp.float32) * 0.1
    mean = jax.random.normal(km, (cout,), jnp.float32) * 0.1
    var = jax.random.uniform(kv, (cout,), jnp.float32, 0.5, 1.5)
    scale = gamma / jnp.sqrt(var + _BN_EPS)     # inference-folded BatchNorm
    bias = beta - mean * scale
    return {"w": w, "scale": scale, "bias": bias}


def make_ssh_params(key, in_channel):
    assert in_channel % 4 == 0
    ks = jax.random.split(key, 5)
    c2, c4 = in_channel // 2, in_channel // 4
    return {
        "conv3x3":   _make_conv_bn(ks[0], in_channel, c2),
        "conv5x5_1": _make_conv_bn(ks[1], in_channel, c4),
        "conv5x5_2": _make_conv_bn(ks[2], c4, c4),
        "conv7x7_2": _make_conv_bn(ks[3], c4, c4),
        "conv7x7_3": _make_conv_bn(ks[4], c4, c4),
    }


def _fold_and_pack(*convs):
    """Fold BN scale into conv weights, concat Cout of convs sharing an input,
    pack as (3, 3*Cin, Cout_total) bf16 plus (1, Cout_total) f32 bias."""
    w = jnp.concatenate([c["w"] * c["scale"] for c in convs], axis=-1)
    kh, kw, cin, cout = w.shape
    w = w.reshape(kh, kw * cin, cout).astype(jnp.bfloat16)
    b = jnp.concatenate([c["bias"] for c in convs]).reshape(1, cout)
    return w, b.astype(jnp.float32)


# --------------------------- Row-tile selection ------------------------------ #

def _row_tile_vmem_bytes(th, W, Cin, C2, C4, out_bytes):
    """Rough per-tile working-set estimate (inputs/outputs double-buffered)."""
    S = th + 2 * _HALO
    M, MO = S * W, th * W
    C = C2 + 2 * C4
    b = 2 * M * Cin * 4                  # double-buffered input slab (f32 from HBM)
    b += 2 * MO * C * out_bytes          # double-buffered output tile
    b += M * Cin * 2 + 2 * M * C4 * 2    # bf16 scratch: slab, t5, t7
    b += M * 3 * Cin * 2                 # xcat for stage A (largest stage)
    b += 4 * M * (C2 + C4) * 4           # f32 products + accumulator, stage A
    return b


def _pick_row_tile(H, W, Cin, C2, C4, out_bytes):
    """Largest row tile (multiple of _HALO, divides H) whose working set fits."""
    cands = [th for th in range(_HALO, H + 1, _HALO) if H % th == 0]
    best = cands[0]
    for th in cands:
        if _row_tile_vmem_bytes(th, W, Cin, C2, C4, out_bytes) <= _TILE_VMEM_BUDGET:
            best = th
    return best


# ------------------------------ SSH forward --------------------------------- #

def ssh_forward(x_nhwc, params, *, slope=0.1, out_dtype=jnp.bfloat16,
                row_tile=None):
    """x: (N, H, W, C) NHWC (f32 or bf16). Returns (N, H, W, C) in `out_dtype`."""
    N, H, W, Cin = x_nhwc.shape
    assert Cin % 4 == 0
    assert H % _HALO == 0, "H must be a multiple of the 4-row halo block"
    assert W % 8 == 0, "W must be a multiple of 8 (sublane alignment)"
    C2, C4 = Cin // 2, Cin // 4
    C = C2 + 2 * C4
    HW = H * W

    out_bytes = jnp.dtype(out_dtype).itemsize
    if row_tile is None:
        row_tile = _pick_row_tile(H, W, Cin, C2, C4, out_bytes)
    TH = row_tile
    assert TH % _HALO == 0 and H % TH == 0, (TH, H)
    T = H // TH                       # number of row tiles
    R = TH // _HALO                   # tile size in halo-block units
    B4 = H // _HALO                   # halo blocks along H
    S = TH + 2 * _HALO                # slab rows per tile

    # NOTE: no wrapper-side dtype cast of x (that would be an extra, un-hidden
    # HBM round trip); the kernel casts each tile to bf16 in VMEM. Feed bf16
    # directly if the producer can.
    x_flat = x_nhwc.reshape(N, HW, Cin)

    wA, bA = _fold_and_pack(params["conv3x3"], params["conv5x5_1"])    # Cin -> C2+C4
    wB, bB = _fold_and_pack(params["conv5x5_2"], params["conv7x7_2"])  # C4  -> 2*C4
    wC, bC = _fold_and_pack(params["conv7x7_3"])                       # C4  -> C4

    kernel = functools.partial(_ssh_kernel, W=W, TH=TH, Cin=Cin, C2=C2, C4=C4,
                               slope=slope)

    out_flat = pl.pallas_call(
        kernel,
        out_shape=jax.ShapeDtypeStruct((N, HW, C), out_dtype),
        grid=(N, T),
        in_specs=[
            # Halo'd input slab: clamped rows above / the tile itself / rows below.
            pl.BlockSpec((1, _HALO * W, Cin),
                         lambda n, t: (n, jnp.maximum(t * R - 1, 0), 0)),
            pl.BlockSpec((1, TH * W, Cin), lambda n, t: (n, t, 0)),
            pl.BlockSpec((1, _HALO * W, Cin),
                         lambda n, t: (n, jnp.minimum((t + 1) * R, B4 - 1), 0)),
            # Weights/biases: constant block index -> stay resident in VMEM.
            pl.BlockSpec(wA.shape, lambda n, t: (0, 0, 0)),
            pl.BlockSpec(bA.shape, lambda n, t: (0, 0)),
            pl.BlockSpec(wB.shape, lambda n, t: (0, 0, 0)),
            pl.BlockSpec(bB.shape, lambda n, t: (0, 0)),
            pl.BlockSpec(wC.shape, lambda n, t: (0, 0, 0)),
            pl.BlockSpec(bC.shape, lambda n, t: (0, 0)),
        ],
        out_specs=pl.BlockSpec((1, TH * W, C), lambda n, t: (n, t, 0)),
        scratch_shapes=[
            pltpu.VMEM((S * W, Cin), jnp.bfloat16),   # halo'd input slab
            pltpu.VMEM((S * W, C4), jnp.bfloat16),    # t5 (conv5x5_1 output)
            pltpu.VMEM((S * W, C4), jnp.bfloat16),    # t7 (conv7x7_2 output)
        ],
        compiler_params=pltpu.CompilerParams(
            dimension_semantics=("parallel", "parallel"),
            vmem_limit_bytes=_VMEM_LIMIT_BYTES),
    )(x_flat, x_flat, x_flat, wA, bA, wB, bB, wC, bC)

    return out_flat.reshape(N, H, W, C)


# ------------------------- Pure-JAX reference check ------------------------- #

def _ref_conv_bn(x, p):
    y = lax.conv_general_dilated(
        x, p["w"], window_strides=(1, 1), padding="SAME",
        dimension_numbers=("NHWC", "HWIO", "NHWC"))
    return y * p["scale"] + p["bias"]


def ssh_reference(x, params, slope=0.1):
    def leaky(y):
        return jnp.where(y >= 0, y, slope * y)
    o3 = _ref_conv_bn(x, params["conv3x3"])
    t5 = leaky(_ref_conv_bn(x, params["conv5x5_1"]))
    o5 = _ref_conv_bn(t5, params["conv5x5_2"])
    t7 = leaky(_ref_conv_bn(t5, params["conv7x7_2"]))
    o7 = _ref_conv_bn(t7, params["conv7x7_3"])
    return jnp.maximum(jnp.concatenate([o3, o5, o7], axis=-1), 0.0)


# ---------------------------------- Main ------------------------------------ #

if __name__ == "__main__":
    key = jax.random.PRNGKey(0)
    k_x, k_p = jax.random.split(key)

    N, C, H, W = 2, 16, 16, 16                 # in_channel=16 (divisible by 4)
    # PyTorch forward takes NCHW; build NCHW then move to the kernel's NHWC layout.
    x_nchw = jax.random.normal(k_x, (N, C, H, W), jnp.float32)
    x_nhwc = jnp.transpose(x_nchw, (0, 2, 3, 1))

    params = make_ssh_params(k_p, C)
    ref = jax.block_until_ready(ssh_reference(x_nhwc, params))

    # Run twice: auto row tile (single tile at this size) and a forced 4-row
    # tiling that exercises the halo / edge-zero-padding logic.
    for row_tile in (None, 4):
        out = jax.block_until_ready(ssh_forward(x_nhwc, params, row_tile=row_tile))
        assert out.shape == (N, H, W, C), out.shape
        out_f32 = out.astype(jnp.float32)
        err = float(jnp.max(jnp.abs(out_f32 - ref)))
        # bf16 MXU inputs, bf16 intermediates (t5/t7) and bf16 output -> looser
        # tolerance than a pure f32 pipeline.
        assert jnp.allclose(out_f32, ref, atol=1e-1, rtol=1e-1), (
            f"mismatch (row_tile={row_tile}), max err {err}")

    print("KERNEL_OK")
</pallas_src>

<mosaic_0001>
module attributes {stable_mosaic.version = 11 : i64} {
  func.func @_ssh_kernel(%arg0: i32, %arg1: i32, %arg2: memref<1x64x16xf32, #tpu.memory_space<vmem>>, %arg3: memref<1x256x16xf32, #tpu.memory_space<vmem>>, %arg4: memref<1x64x16xf32, #tpu.memory_space<vmem>>, %arg5: memref<3x48x12xbf16, #tpu.memory_space<vmem>>, %arg6: memref<1x12xf32, #tpu.memory_space<vmem>>, %arg7: memref<3x12x8xbf16, #tpu.memory_space<vmem>>, %arg8: memref<1x8xf32, #tpu.memory_space<vmem>>, %arg9: memref<3x12x4xbf16, #tpu.memory_space<vmem>>, %arg10: memref<1x4xf32, #tpu.memory_space<vmem>>, %arg11: memref<1x256x16xbf16, #tpu.memory_space<vmem>>, %arg12: memref<384x16xbf16, #tpu.memory_space<vmem>>, %arg13: memref<384x4xbf16, #tpu.memory_space<vmem>>, %arg14: memref<384x4xbf16, #tpu.memory_space<vmem>>) attributes {dimension_semantics = [#tpu.dimension_semantics<parallel>, #tpu.dimension_semantics<parallel>], iteration_bounds = array<i64: 2, 1>, scalar_prefetch = 0 : i64, scratch_operands = 3 : i64, tpu.core_type = #tpu.core_type<tc>, window_params = [{transform_indices = @transform_0, window_bounds = array<i64: 1, 64, 16>}, {transform_indices = @transform_1, window_bounds = array<i64: 1, 256, 16>}, {transform_indices = @transform_2, window_bounds = array<i64: 1, 64, 16>}, {pipeline_mode = #tpu.pipeline_mode<synchronous>, transform_indices = @transform_3, window_bounds = array<i64: 3, 48, 12>}, {pipeline_mode = #tpu.pipeline_mode<synchronous>, transform_indices = @transform_4, window_bounds = array<i64: 1, 12>}, {pipeline_mode = #tpu.pipeline_mode<synchronous>, transform_indices = @transform_5, window_bounds = array<i64: 3, 12, 8>}, {pipeline_mode = #tpu.pipeline_mode<synchronous>, transform_indices = @transform_6, window_bounds = array<i64: 1, 8>}, {pipeline_mode = #tpu.pipeline_mode<synchronous>, transform_indices = @transform_7, window_bounds = array<i64: 3, 12, 4>}, {pipeline_mode = #tpu.pipeline_mode<synchronous>, transform_indices = @transform_8, window_bounds = array<i64: 1, 4>}, {transform_indices = @transform_9, window_bounds = array<i64: 1, 256, 16>}]} {
    %c0 = arith.constant 0 : index
    %c0_0 = arith.constant 0 : index
    %c0_1 = arith.constant 0 : index
    %0 = vector.load %arg2[%c0, %c0_0, %c0_1] : memref<1x64x16xf32, #tpu.memory_space<vmem>>, vector<1x64x16xf32>
    %1 = vector.shape_cast %0 : vector<1x64x16xf32> to vector<64x16xf32>
    %2 = arith.truncf %1 : vector<64x16xf32> to vector<64x16xbf16>
    %c0_2 = arith.constant 0 : index
    %c0_3 = arith.constant 0 : index
    %3 = vector.load %arg12[%c0_2, %c0_3] : memref<384x16xbf16, #tpu.memory_space<vmem>>, vector<64x16xbf16>
    tpu.vector_store %arg12[%c0_2, %c0_3], %2 {strides = array<i32>} : memref<384x16xbf16, #tpu.memory_space<vmem>>, vector<64x16xbf16>,
    %c0_4 = arith.constant 0 : index
    %c0_5 = arith.constant 0 : index
    %c0_6 = arith.constant 0 : index
    %4 = vector.load %arg3[%c0_4, %c0_5, %c0_6] : memref<1x256x16xf32, #tpu.memory_space<vmem>>, vector<1x256x16xf32>
    %5 = vector.shape_cast %4 : vector<1x256x16xf32> to vector<256x16xf32>
    %6 = arith.truncf %5 : vector<256x16xf32> to vector<256x16xbf16>
    %c64 = arith.constant 64 : index
    %c0_7 = arith.constant 0 : index
    %7 = vector.load %arg12[%c64, %c0_7] : memref<384x16xbf16, #tpu.memory_space<vmem>>, vector<256x16xbf16>
    tpu.vector_store %arg12[%c64, %c0_7], %6 {strides = array<i32>} : memref<384x16xbf16, #tpu.memory_space<vmem>>, vector<256x16xbf16>,
    %c0_8 = arith.constant 0 : index
    %c0_9 = arith.constant 0 : index
    %c0_10 = arith.constant 0 : index
    %8 = vector.load %arg4[%c0_8, %c0_9, %c0_10] : memref<1x64x16xf32, #tpu.memory_space<vmem>>, vector<1x64x16xf32>
    %9 = vector.shape_cast %8 : vector<1x64x16xf32> to vector<64x16xf32>
    %10 = arith.truncf %9 : vector<64x16xf32> to vector<64x16xbf16>
    %c320 = arith.constant 320 : index
    %c0_11 = arith.constant 0 : index
    %11 = vector.load %arg12[%c320, %c0_11] : memref<384x16xbf16, #tpu.memory_space<vmem>>, vector<64x16xbf16>
    tpu.vector_store %arg12[%c320, %c0_11], %10 {strides = array<i32>} : memref<384x16xbf16, #tpu.memory_space<vmem>>, vector<64x16xbf16>,
    %c0_i32 = arith.constant 0 : i32
    %12 = arith.cmpi eq, %arg1, %c0_i32 : i32
    %13 = arith.extui %12 : i1 to i32
    %c0_i32_12 = arith.constant 0 : i32
    %14 = arith.cmpi ne, %13, %c0_i32_12 : i32
    scf.if %14 {
      %cst_90 = arith.constant 0.000000e+00 : bf16
      %169 = vector.broadcast %cst_90 : bf16 to vector<64x16xbf16>
      %c0_91 = arith.constant 0 : index
      %c0_92 = arith.constant 0 : index
      %170 = vector.load %arg12[%c0_91, %c0_92] : memref<384x16xbf16, #tpu.memory_space<vmem>>, vector<64x16xbf16>
      tpu.vector_store %arg12[%c0_91, %c0_92], %169 {strides = array<i32>} : memref<384x16xbf16, #tpu.memory_space<vmem>>, vector<64x16xbf16>,
    } else {
    }
    %c0_i32_13 = arith.constant 0 : i32
    %15 = arith.cmpi eq, %arg1, %c0_i32_13 : i32
    %16 = arith.extui %15 : i1 to i32
    %c0_i32_14 = arith.constant 0 : i32
    %17 = arith.cmpi ne, %16, %c0_i32_14 : i32
    scf.if %17 {
      %cst_90 = arith.constant 0.000000e+00 : bf16
      %169 = vector.broadcast %cst_90 : bf16 to vector<64x16xbf16>
      %c320_91 = arith.constant 320 : index
      %c0_92 = arith.constant 0 : index
      %170 = vector.load %arg12[%c320_91, %c0_92] : memref<384x16xbf16, #tpu.memory_space<vmem>>, vector<64x16xbf16>
      tpu.vector_store %arg12[%c320_91, %c0_92], %169 {strides = array<i32>} : memref<384x16xbf16, #tpu.memory_space<vmem>>, vector<64x16xbf16>,
    } else {
    }
    %18 = tpu.iota {dimensions = array<i32: 0>} : vector<384x1xi32>
    %c16_i32 = arith.constant 16 : i32
    %c0_i32_15 = arith.constant 0 : i32
    %19 = arith.cmpi eq, %c16_i32, %c0_i32_15 : i32
    %c1_i32 = arith.constant 1 : i32
    %20 = arith.select %19, %c1_i32, %c16_i32 : i32
    %21 = vector.broadcast %20 : i32 to vector<384x1xi32>
    %22 = arith.remsi %18, %21 : vector<384x1xi32>
    %c0_i32_16 = arith.constant 0 : i32
    %23 = vector.broadcast %c0_i32_16 : i32 to vector<384x1xi32>
    %24 = arith.cmpi ne, %22, %23 : vector<384x1xi32>
    %c0_i32_17 = arith.constant 0 : i32
    %25 = vector.broadcast %c0_i32_17 : i32 to vector<384x1xi32>
    %26 = arith.cmpi slt, %22, %25 : vector<384x1xi32>
    %c0_i32_18 = arith.constant 0 : i32
    %27 = arith.cmpi slt, %20, %c0_i32_18 : i32
    %28 = vector.broadcast %27 : i1 to vector<384x1xi1>
    %29 = vector.broadcast %28 : vector<384x1xi1> to vector<384x1xi1>
    %30 = arith.xori %26, %29 : vector<384x1xi1>
    %31 = arith.andi %30, %24 : vector<384x1xi1>
    %32 = vector.broadcast %20 : i32 to vector<384x1xi32>
    %33 = arith.addi %22, %32 : vector<384x1xi32>
    %34 = arith.select %31, %33, %22 : vector<384x1xi1>, vector<384x1xi32>
    %c0_i32_19 = arith.constant 0 : i32
    %35 = vector.broadcast %c0_i32_19 : i32 to vector<384x1xi32>
    %36 = arith.cmpi ne, %34, %35 : vector<384x1xi32>
    %37 = arith.extui %36 : vector<384x1xi1> to vector<384x1xi32>
    %38 = arith.sitofp %37 : vector<384x1xi32> to vector<384x1xf32>
    %39 = arith.truncf %38 : vector<384x1xf32> to vector<384x1xbf16>
    %c15_i32 = arith.constant 15 : i32
    %40 = vector.broadcast %c15_i32 : i32 to vector<384x1xi32>
    %41 = arith.cmpi ne, %34, %40 : vector<384x1xi32>
    %42 = arith.extui %41 : vector<384x1xi1> to vector<384x1xi32>
    %43 = arith.sitofp %42 : vector<384x1xi32> to vector<384x1xf32>
    %44 = arith.truncf %43 : vector<384x1xf32> to vector<384x1xbf16>
    %c0_20 = arith.constant 0 : index
    %c0_21 = arith.constant 0 : index
    %45 = vector.load %arg12[%c0_20, %c0_21] : memref<384x16xbf16, #tpu.memory_space<vmem>>, vector<384x16xbf16>
    %46 = vector.extract_strided_slice %45 {offsets = [383, 0], sizes = [1, 16], strides = [1, 1]} : vector<384x16xbf16> to vector<1x16xbf16>
    %47 = vector.extract_strided_slice %45 {offsets = [0, 0], sizes = [383, 16], strides = [1, 1]} : vector<384x16xbf16> to vector<383x16xbf16>
    %48 = tpu.concatenate %46, %47 in 0 : vector<1x16xbf16>, vector<383x16xbf16> -> vector<384x16xbf16>
    %49 = vector.broadcast %39 : vector<384x1xbf16> to vector<384x16xbf16>
    %50 = arith.mulf %48, %49 : vector<384x16xbf16>
    %51 = vector.extract_strided_slice %45 {offsets = [1, 0], sizes = [383, 16], strides = [1, 1]} : vector<384x16xbf16> to vector<383x16xbf16>
    %52 = vector.extract_strided_slice %45 {offsets = [0, 0], sizes = [1, 16], strides = [1, 1]} : vector<384x16xbf16> to vector<1x16xbf16>
    %53 = tpu.concatenate %51, %52 in 0 : vector<383x16xbf16>, vector<1x16xbf16> -> vector<384x16xbf16>
    %54 = vector.broadcast %44 : vector<384x1xbf16> to vector<384x16xbf16>
    %55 = arith.mulf %53, %54 : vector<384x16xbf16>
    %56 = tpu.concatenate %50, %45, %55 in 1 : vector<384x16xbf16>, vector<384x16xbf16>, vector<384x16xbf16> -> vector<384x48xbf16>
    %c0_22 = arith.constant 0 : index
    %c0_23 = arith.constant 0 : index
    %c0_24 = arith.constant 0 : index
    %57 = vector.load %arg5[%c0_22, %c0_23, %c0_24] : memref<3x48x12xbf16, #tpu.memory_space<vmem>>, vector<1x48x12xbf16>
    %58 = vector.shape_cast %57 : vector<1x48x12xbf16> to vector<48x12xbf16>
    %cst = arith.constant dense<0.000000e+00> : vector<384x12xf32>
    %59 = tpu.matmul %56, %58, %cst {dimension_numbers = #tpu.dot_dimension_numbers<[1], [0], [0], [1], [0, 0, 1, 1], [], []>} : vector<384x48xbf16>, vector<48x12xbf16>, vector<384x12xf32> -> vector<384x12xf32>
    %c1 = arith.constant 1 : index
    %c0_25 = arith.constant 0 : index
    %c0_26 = arith.constant 0 : index
    %60 = vector.load %arg5[%c1, %c0_25, %c0_26] : memref<3x48x12xbf16, #tpu.memory_space<vmem>>, vector<1x48x12xbf16>
    %61 = vector.shape_cast %60 : vector<1x48x12xbf16> to vector<48x12xbf16>
    %cst_27 = arith.constant dense<0.000000e+00> : vector<384x12xf32>
    %62 = tpu.matmul %56, %61, %cst_27 {dimension_numbers = #tpu.dot_dimension_numbers<[1], [0], [0], [1], [0, 0, 1, 1], [], []>} : vector<384x48xbf16>, vector<48x12xbf16>, vector<384x12xf32> -> vector<384x12xf32>
    %c2 = arith.constant 2 : index
    %c0_28 = arith.constant 0 : index
    %c0_29 = arith.constant 0 : index
    %63 = vector.load %arg5[%c2, %c0_28, %c0_29] : memref<3x48x12xbf16, #tpu.memory_space<vmem>>, vector<1x48x12xbf16>
    %64 = vector.shape_cast %63 : vector<1x48x12xbf16> to vector<48x12xbf16>
    %cst_30 = arith.constant dense<0.000000e+00> : vector<384x12xf32>
    %65 = tpu.matmul %56, %64, %cst_30 {dimension_numbers = #tpu.dot_dimension_numbers<[1], [0], [0], [1], [0, 0, 1, 1], [], []>} : vector<384x48xbf16>, vector<48x12xbf16>, vector<384x12xf32> -> vector<384x12xf32>
    %c16_i32_31 = arith.constant 16 : i32
    %66 = tpu.dynamic_rotate %59 by %c16_i32_31 dim 0 : vector<384x12xf32>, i32 -> vector<384x12xf32>
    %67 = arith.addf %62, %66 : vector<384x12xf32>
    %c368_i32 = arith.constant 368 : i32
    %68 = tpu.dynamic_rotate %65 by %c368_i32 dim 0 : vector<384x12xf32>, i32 -> vector<384x12xf32>
    %69 = arith.addf %67, %68 : vector<384x12xf32>
    %c0_32 = arith.constant 0 : index
    %c0_33 = arith.constant 0 : index
    %70 = vector.load %arg6[%c0_32, %c0_33] : memref<1x12xf32, #tpu.memory_space<vmem>>, vector<1x12xf32>
    %71 = vector.broadcast %70 : vector<1x12xf32> to vector<384x12xf32>
    %72 = arith.addf %69, %71 : vector<384x12xf32>
    %73 = vector.extract_strided_slice %72 {offsets = [0, 0], sizes = [384, 8], strides = [1, 1]} : vector<384x12xf32> to vector<384x8xf32>
    %74 = vector.extract_strided_slice %72 {offsets = [0, 8], sizes = [384, 4], strides = [1, 1]} : vector<384x12xf32> to vector<384x4xf32>
    %cst_34 = arith.constant 0.000000e+00 : f32
    %75 = vector.broadcast %cst_34 : f32 to vector<384x4xf32>
    %76 = arith.cmpf oge, %74, %75 : vector<384x4xf32>
    %cst_35 = arith.constant 1.000000e-01 : f32
    %77 = vector.broadcast %cst_35 : f32 to vector<384x4xf32>
    %78 = arith.mulf %77, %74 : vector<384x4xf32>
    %79 = arith.select %76, %74, %78 : vector<384x4xi1>, vector<384x4xf32>
    %80 = arith.truncf %79 : vector<384x4xf32> to vector<384x4xbf16>
    %c0_36 = arith.constant 0 : index
    %c0_37 = arith.constant 0 : index
    %81 = vector.load %arg13[%c0_36, %c0_37] : memref<384x4xbf16, #tpu.memory_space<vmem>>, vector<384x4xbf16>
    tpu.vector_store %arg13[%c0_36, %c0_37], %80 {strides = array<i32>} : memref<384x4xbf16, #tpu.memory_space<vmem>>, vector<384x4xbf16>,
    %c0_i32_38 = arith.constant 0 : i32
    %82 = arith.cmpi eq, %arg1, %c0_i32_38 : i32
    %83 = arith.extui %82 : i1 to i32
    %c0_i32_39 = arith.constant 0 : i32
    %84 = arith.cmpi ne, %83, %c0_i32_39 : i32
    scf.if %84 {
      %cst_90 = arith.constant 0.000000e+00 : bf16
      %169 = vector.broadcast %cst_90 : bf16 to vector<64x4xbf16>
      %c0_91 = arith.constant 0 : index
      %c0_92 = arith.constant 0 : index
      %170 = vector.load %arg13[%c0_91, %c0_92] : memref<384x4xbf16, #tpu.memory_space<vmem>>, vector<64x4xbf16>
      tpu.vector_store %arg13[%c0_91, %c0_92], %169 {strides = array<i32>} : memref<384x4xbf16, #tpu.memory_space<vmem>>, vector<64x4xbf16>,
    } else {
    }
    %c0_i32_40 = arith.constant 0 : i32
    %85 = arith.cmpi eq, %arg1, %c0_i32_40 : i32
    %86 = arith.extui %85 : i1 to i32
    %c0_i32_41 = arith.constant 0 : i32
    %87 = arith.cmpi ne, %86, %c0_i32_41 : i32
    scf.if %87 {
      %cst_90 = arith.constant 0.000000e+00 : bf16
      %169 = vector.broadcast %cst_90 : bf16 to vector<64x4xbf16>
      %c320_91 = arith.constant 320 : index
      %c0_92 = arith.constant 0 : index
      %170 = vector.load %arg13[%c320_91, %c0_92] : memref<384x4xbf16, #tpu.memory_space<vmem>>, vector<64x4xbf16>
      tpu.vector_store %arg13[%c320_91, %c0_92], %169 {strides = array<i32>} : memref<384x4xbf16, #tpu.memory_space<vmem>>, vector<64x4xbf16>,
    } else {
    }
    %c0_42 = arith.constant 0 : index
    %c0_43 = arith.constant 0 : index
    %88 = vector.load %arg13[%c0_42, %c0_43] : memref<384x4xbf16, #tpu.memory_space<vmem>>, vector<384x4xbf16>
    %89 = vector.extract_strided_slice %88 {offsets = [383, 0], sizes = [1, 4], strides = [1, 1]} : vector<384x4xbf16> to vector<1x4xbf16>
    %90 = vector.extract_strided_slice %88 {offsets = [0, 0], sizes = [383, 4], strides = [1, 1]} : vector<384x4xbf16> to vector<383x4xbf16>
    %91 = tpu.concatenate %89, %90 in 0 : vector<1x4xbf16>, vector<383x4xbf16> -> vector<384x4xbf16>
    %92 = vector.broadcast %39 : vector<384x1xbf16> to vector<384x4xbf16>
    %93 = arith.mulf %91, %92 : vector<384x4xbf16>
    %94 = vector.extract_strided_slice %88 {offsets = [1, 0], sizes = [383, 4], strides = [1, 1]} : vector<384x4xbf16> to vector<383x4xbf16>
    %95 = vector.extract_strided_slice %88 {offsets = [0, 0], sizes = [1, 4], strides = [1, 1]} : vector<384x4xbf16> to vector<1x4xbf16>
    %96 = tpu.concatenate %94, %95 in 0 : vector<383x4xbf16>, vector<1x4xbf16> -> vector<384x4xbf16>
    %97 = vector.broadcast %44 : vector<384x1xbf16> to vector<384x4xbf16>
    %98 = arith.mulf %96, %97 : vector<384x4xbf16>
    %99 = tpu.concatenate %93, %88, %98 in 1 : vector<384x4xbf16>, vector<384x4xbf16>, vector<384x4xbf16> -> vector<384x12xbf16>
    %c0_44 = arith.constant 0 : index
    %c0_45 = arith.constant 0 : index
    %c0_46 = arith.constant 0 : index
    %100 = vector.load %arg7[%c0_44, %c0_45, %c0_46] : memref<3x12x8xbf16, #tpu.memory_space<vmem>>, vector<1x12x8xbf16>
    %101 = vector.shape_cast %100 : vector<1x12x8xbf16> to vector<12x8xbf16>
    %cst_47 = arith.constant dense<0.000000e+00> : vector<384x8xf32>
    %102 = tpu.matmul %99, %101, %cst_47 {dimension_numbers = #tpu.dot_dimension_numbers<[1], [0], [0], [1], [0, 0, 1, 1], [], []>} : vector<384x12xbf16>, vector<12x8xbf16>, vector<384x8xf32> -> vector<384x8xf32>
    %c1_48 = arith.constant 1 : index
    %c0_49 = arith.constant 0 : index
    %c0_50 = arith.constant 0 : index
    %103 = vector.load %arg7[%c1_48, %c0_49, %c0_50] : memref<3x12x8xbf16, #tpu.memory_space<vmem>>, vector<1x12x8xbf16>
    %104 = vector.shape_cast %103 : vector<1x12x8xbf16> to vector<12x8xbf16>
    %cst_51 = arith.constant dense<0.000000e+00> : vector<384x8xf32>
    %105 = tpu.matmul %99, %104, %cst_51 {dimension_numbers = #tpu.dot_dimension_numbers<[1], [0], [0], [1], [0, 0, 1, 1], [], []>} : vector<384x12xbf16>, vector<12x8xbf16>, vector<384x8xf32> -> vector<384x8xf32>
    %c2_52 = arith.constant 2 : index
    %c0_53 = arith.constant 0 : index
    %c0_54 = arith.constant 0 : index
    %106 = vector.load %arg7[%c2_52, %c0_53, %c0_54] : memref<3x12x8xbf16, #tpu.memory_space<vmem>>, vector<1x12x8xbf16>
    %107 = vector.shape_cast %106 : vector<1x12x8xbf16> to vector<12x8xbf16>
    %cst_55 = arith.constant dense<0.000000e+00> : vector<384x8xf32>
    %108 = tpu.matmul %99, %107, %cst_55 {dimension_numbers = #tpu.dot_dimension_numbers<[1], [0], [0], [1], [0, 0, 1, 1], [], []>} : vector<384x12xbf16>, vector<12x8xbf16>, vector<384x8xf32> -> vector<384x8xf32>
    %c16_i32_56 = arith.constant 16 : i32
    %109 = tpu.dynamic_rotate %102 by %c16_i32_56 dim 0 : vector<384x8xf32>, i32 -> vector<384x8xf32>
    %110 = arith.addf %105, %109 : vector<384x8xf32>
    %c368_i32_57 = arith.constant 368 : i32
    %111 = tpu.dynamic_rotate %108 by %c368_i32_57 dim 0 : vector<384x8xf32>, i32 -> vector<384x8xf32>
    %112 = arith.addf %110, %111 : vector<384x8xf32>
    %c0_58 = arith.constant 0 : index
    %c0_59 = arith.constant 0 : index
    %113 = vector.load %arg8[%c0_58, %c0_59] : memref<1x8xf32, #tpu.memory_space<vmem>>, vector<1x8xf32>
    %114 = vector.broadcast %113 : vector<1x8xf32> to vector<384x8xf32>
    %115 = arith.addf %112, %114 : vector<384x8xf32>
    %116 = vector.extract_strided_slice %115 {offsets = [0, 0], sizes = [384, 4], strides = [1, 1]} : vector<384x8xf32> to vector<384x4xf32>
    %117 = vector.extract_strided_slice %115 {offsets = [0, 4], sizes = [384, 4], strides = [1, 1]} : vector<384x8xf32> to vector<384x4xf32>
    %cst_60 = arith.constant 0.000000e+00 : f32
    %118 = vector.broadcast %cst_60 : f32 to vector<384x4xf32>
    %119 = arith.cmpf oge, %117, %118 : vector<384x4xf32>
    %cst_61 = arith.constant 1.000000e-01 : f32
    %120 = vector.broadcast %cst_61 : f32 to vector<384x4xf32>
    %121 = arith.mulf %120, %117 : vector<384x4xf32>
    %122 = arith.select %119, %117, %121 : vector<384x4xi1>, vector<384x4xf32>
    %123 = arith.truncf %122 : vector<384x4xf32> to vector<384x4xbf16>
    %c0_62 = arith.constant 0 : index
    %c0_63 = arith.constant 0 : index
    %124 = vector.load %arg14[%c0_62, %c0_63] : memref<384x4xbf16, #tpu.memory_space<vmem>>, vector<384x4xbf16>
    tpu.vector_store %arg14[%c0_62, %c0_63], %123 {strides = array<i32>} : memref<384x4xbf16, #tpu.memory_space<vmem>>, vector<384x4xbf16>,
    %c0_i32_64 = arith.constant 0 : i32
    %125 = arith.cmpi eq, %arg1, %c0_i32_64 : i32
    %126 = arith.extui %125 : i1 to i32
    %c0_i32_65 = arith.constant 0 : i32
    %127 = arith.cmpi ne, %126, %c0_i32_65 : i32
    scf.if %127 {
      %cst_90 = arith.constant 0.000000e+00 : bf16
      %169 = vector.broadcast %cst_90 : bf16 to vector<64x4xbf16>
      %c0_91 = arith.constant 0 : index
      %c0_92 = arith.constant 0 : index
      %170 = vector.load %arg14[%c0_91, %c0_92] : memref<384x4xbf16, #tpu.memory_space<vmem>>, vector<64x4xbf16>
      tpu.vector_store %arg14[%c0_91, %c0_92], %169 {strides = array<i32>} : memref<384x4xbf16, #tpu.memory_space<vmem>>, vector<64x4xbf16>,
    } else {
    }
    %c0_i32_66 = arith.constant 0 : i32
    %128 = arith.cmpi eq, %arg1, %c0_i32_66 : i32
    %129 = arith.extui %128 : i1 to i32
    %c0_i32_67 = arith.constant 0 : i32
    %130 = arith.cmpi ne, %129, %c0_i32_67 : i32
    scf.if %130 {
      %cst_90 = arith.constant 0.000000e+00 : bf16
      %169 = vector.broadcast %cst_90 : bf16 to vector<64x4xbf16>
      %c320_91 = arith.constant 320 : index
      %c0_92 = arith.constant 0 : index
      %170 = vector.load %arg14[%c320_91, %c0_92] : memref<384x4xbf16, #tpu.memory_space<vmem>>, vector<64x4xbf16>
      tpu.vector_store %arg14[%c320_91, %c0_92], %169 {strides = array<i32>} : memref<384x4xbf16, #tpu.memory_space<vmem>>, vector<64x4xbf16>,
    } else {
    }
    %c0_68 = arith.constant 0 : index
    %c0_69 = arith.constant 0 : index
    %131 = vector.load %arg14[%c0_68, %c0_69] : memref<384x4xbf16, #tpu.memory_space<vmem>>, vector<384x4xbf16>
    %132 = vector.extract_strided_slice %131 {offsets = [383, 0], sizes = [1, 4], strides = [1, 1]} : vector<384x4xbf16> to vector<1x4xbf16>
    %133 = vector.extract_strided_slice %131 {offsets = [0, 0], sizes = [383, 4], strides = [1, 1]} : vector<384x4xbf16> to vector<383x4xbf16>
    %134 = tpu.concatenate %132, %133 in 0 : vector<1x4xbf16>, vector<383x4xbf16> -> vector<384x4xbf16>
    %135 = vector.broadcast %39 : vector<384x1xbf16> to vector<384x4xbf16>
    %136 = arith.mulf %134, %135 : vector<384x4xbf16>
    %137 = vector.extract_strided_slice %131 {offsets = [1, 0], sizes = [383, 4], strides = [1, 1]} : vector<384x4xbf16> to vector<383x4xbf16>
    %138 = vector.extract_strided_slice %131 {offsets = [0, 0], sizes = [1, 4], strides = [1, 1]} : vector<384x4xbf16> to vector<1x4xbf16>
    %139 = tpu.concatenate %137, %138 in 0 : vector<383x4xbf16>, vector<1x4xbf16> -> vector<384x4xbf16>
    %140 = vector.broadcast %44 : vector<384x1xbf16> to vector<384x4xbf16>
    %141 = arith.mulf %139, %140 : vector<384x4xbf16>
    %142 = tpu.concatenate %136, %131, %141 in 1 : vector<384x4xbf16>, vector<384x4xbf16>, vector<384x4xbf16> -> vector<384x12xbf16>
    %c0_70 = arith.constant 0 : index
    %c0_71 = arith.constant 0 : index
    %c0_72 = arith.constant 0 : index
    %143 = vector.load %arg9[%c0_70, %c0_71, %c0_72] : memref<3x12x4xbf16, #tpu.memory_space<vmem>>, vector<1x12x4xbf16>
    %144 = vector.shape_cast %143 : vector<1x12x4xbf16> to vector<12x4xbf16>
    %cst_73 = arith.constant dense<0.000000e+00> : vector<384x4xf32>
    %145 = tpu.matmul %142, %144, %cst_73 {dimension_numbers = #tpu.dot_dimension_numbers<[1], [0], [0], [1], [0, 0, 1, 1], [], []>} : vector<384x12xbf16>, vector<12x4xbf16>, vector<384x4xf32> -> vector<384x4xf32>
    %c1_74 = arith.constant 1 : index
    %c0_75 = arith.constant 0 : index
    %c0_76 = arith.constant 0 : index
    %146 = vector.load %arg9[%c1_74, %c0_75, %c0_76] : memref<3x12x4xbf16, #tpu.memory_space<vmem>>, vector<1x12x4xbf16>
    %147 = vector.shape_cast %146 : vector<1x12x4xbf16> to vector<12x4xbf16>
    %cst_77 = arith.constant dense<0.000000e+00> : vector<384x4xf32>
    %148 = tpu.matmul %142, %147, %cst_77 {dimension_numbers = #tpu.dot_dimension_numbers<[1], [0], [0], [1], [0, 0, 1, 1], [], []>} : vector<384x12xbf16>, vector<12x4xbf16>, vector<384x4xf32> -> vector<384x4xf32>
    %c2_78 = arith.constant 2 : index
    %c0_79 = arith.constant 0 : index
    %c0_80 = arith.constant 0 : index
    %149 = vector.load %arg9[%c2_78, %c0_79, %c0_80] : memref<3x12x4xbf16, #tpu.memory_space<vmem>>, vector<1x12x4xbf16>
    %150 = vector.shape_cast %149 : vector<1x12x4xbf16> to vector<12x4xbf16>
    %cst_81 = arith.constant dense<0.000000e+00> : vector<384x4xf32>
    %151 = tpu.matmul %142, %150, %cst_81 {dimension_numbers = #tpu.dot_dimension_numbers<[1], [0], [0], [1], [0, 0, 1, 1], [], []>} : vector<384x12xbf16>, vector<12x4xbf16>, vector<384x4xf32> -> vector<384x4xf32>
    %c16_i32_82 = arith.constant 16 : i32
    %152 = tpu.dynamic_rotate %145 by %c16_i32_82 dim 0 : vector<384x4xf32>, i32 -> vector<384x4xf32>
    %153 = arith.addf %148, %152 : vector<384x4xf32>
    %c368_i32_83 = arith.constant 368 : i32
    %154 = tpu.dynamic_rotate %151 by %c368_i32_83 dim 0 : vector<384x4xf32>, i32 -> vector<384x4xf32>
    %155 = arith.addf %153, %154 : vector<384x4xf32>
    %c0_84 = arith.constant 0 : index
    %c0_85 = arith.constant 0 : index
    %156 = vector.load %arg10[%c0_84, %c0_85] : memref<1x4xf32, #tpu.memory_space<vmem>>, vector<1x4xf32>
    %157 = vector.broadcast %156 : vector<1x4xf32> to vector<384x4xf32>
    %158 = arith.addf %155, %157 : vector<384x4xf32>
    %159 = vector.extract_strided_slice %73 {offsets = [64, 0], sizes = [256, 8], strides = [1, 1]} : vector<384x8xf32> to vector<256x8xf32>
    %160 = vector.extract_strided_slice %116 {offsets = [64, 0], sizes = [256, 4], strides = [1, 1]} : vector<384x4xf32> to vector<256x4xf32>
    %161 = vector.extract_strided_slice %158 {offsets = [64, 0], sizes = [256, 4], strides = [1, 1]} : vector<384x4xf32> to vector<256x4xf32>
    %162 = tpu.concatenate %159, %160, %161 in 1 : vector<256x8xf32>, vector<256x4xf32>, vector<256x4xf32> -> vector<256x16xf32>
    %cst_86 = arith.constant 0.000000e+00 : f32
    %163 = vector.broadcast %cst_86 : f32 to vector<256x16xf32>
    %164 = arith.maximumf %162, %163 : vector<256x16xf32>
    %165 = arith.truncf %164 : vector<256x16xf32> to vector<256x16xbf16>
    %c0_87 = arith.constant 0 : index
    %c0_88 = arith.constant 0 : index
    %c0_89 = arith.constant 0 : index
    %166 = vector.load %arg11[%c0_87, %c0_88, %c0_89] : memref<1x256x16xbf16, #tpu.memory_space<vmem>>, vector<1x256x16xbf16>
    %167 = vector.shape_cast %166 : vector<1x256x16xbf16> to vector<256x16xbf16>
    %168 = vector.shape_cast %165 : vector<256x16xbf16> to vector<1x256x16xbf16>
    tpu.vector_store %arg11[%c0_87, %c0_88, %c0_89], %168 {strides = array<i32>} : memref<1x256x16xbf16, #tpu.memory_space<vmem>>, vector<1x256x16xbf16>,
    return
  }
  func.func @transform_0(%arg0: i32, %arg1: i32) -> (i32, i32, i32) {
    %c4_i32 = arith.constant 4 : i32
    %0 = arith.muli %arg1, %c4_i32 : i32
    %c1_i32 = arith.constant 1 : i32
    %1 = arith.subi %0, %c1_i32 : i32
    %c0_i32 = arith.constant 0 : i32
    %2 = arith.maxsi %1, %c0_i32 : i32
    %c0_i32_0 = arith.constant 0 : i32
    %c0_i32_1 = arith.constant 0 : i32
    return %arg0, %2, %c0_i32_0 : i32, i32, i32
  }
  func.func @transform_1(%arg0: i32, %arg1: i32) -> (i32, i32, i32) {
    %c0_i32 = arith.constant 0 : i32
    %c0_i32_0 = arith.constant 0 : i32
    return %arg0, %arg1, %c0_i32 : i32, i32, i32
  }
  func.func @transform_2(%arg0: i32, %arg1: i32) -> (i32, i32, i32) {
    %c1_i32 = arith.constant 1 : i32
    %0 = arith.addi %arg1, %c1_i32 : i32
    %c4_i32 = arith.constant 4 : i32
    %1 = arith.muli %0, %c4_i32 : i32
    %c3_i32 = arith.constant 3 : i32
    %2 = arith.minsi %1, %c3_i32 : i32
    %c0_i32 = arith.constant 0 : i32
    %c0_i32_0 = arith.constant 0 : i32
    return %arg0, %2, %c0_i32 : i32, i32, i32
  }
  func.func @transform_3(%arg0: i32, %arg1: i32) -> (i32, i32, i32) {
    %c0_i32 = arith.constant 0 : i32
    %c0_i32_0 = arith.constant 0 : i32
    %c0_i32_1 = arith.constant 0 : i32
    %c0_i32_2 = arith.constant 0 : i32
    return %c0_i32, %c0_i32_0, %c0_i32_1 : i32, i32, i32
  }
  func.func @transform_4(%arg0: i32, %arg1: i32) -> (i32, i32) {
    %c0_i32 = arith.constant 0 : i32
    %c0_i32_0 = arith.constant 0 : i32
    %c0_i32_1 = arith.constant 0 : i32
    return %c0_i32, %c0_i32_0 : i32, i32
  }
  func.func @transform_5(%arg0: i32, %arg1: i32) -> (i32, i32, i32) {
    %c0_i32 = arith.constant 0 : i32
    %c0_i32_0 = arith.constant 0 : i32
    %c0_i32_1 = arith.constant 0 : i32
    %c0_i32_2 = arith.constant 0 : i32
    return %c0_i32, %c0_i32_0, %c0_i32_1 : i32, i32, i32
  }
  func.func @transform_6(%arg0: i32, %arg1: i32) -> (i32, i32) {
    %c0_i32 = arith.constant 0 : i32
    %c0_i32_0 = arith.constant 0 : i32
    %c0_i32_1 = arith.constant 0 : i32
    return %c0_i32, %c0_i32_0 : i32, i32
  }
  func.func @transform_7(%arg0: i32, %arg1: i32) -> (i32, i32, i32) {
    %c0_i32 = arith.constant 0 : i32
    %c0_i32_0 = arith.constant 0 : i32
    %c0_i32_1 = arith.constant 0 : i32
    %c0_i32_2 = arith.constant 0 : i32
    return %c0_i32, %c0_i32_0, %c0_i32_1 : i32, i32, i32
  }
  func.func @transform_8(%arg0: i32, %arg1: i32) -> (i32, i32) {
    %c0_i32 = arith.constant 0 : i32
    %c0_i32_0 = arith.constant 0 : i32
    %c0_i32_1 = arith.constant 0 : i32
    return %c0_i32, %c0_i32_0 : i32, i32
  }
  func.func @transform_9(%arg0: i32, %arg1: i32) -> (i32, i32, i32) {
    %c0_i32 = arith.constant 0 : i32
    %c0_i32_0 = arith.constant 0 : i32
    return %arg0, %arg1, %c0_i32 : i32, i32, i32
  }
}

</mosaic_0001>

<llo_original>
// kernel: tpu_custom_call.1
$region0: #{tpu_custom_call.1}
  #allocation0 [shape = 'u32[]', space=smem, size = 0x4, offset = 0x4, fixed_abs, tag = 'smem constant byte address 0x4 - core index']
  #allocation1 [shape = 'u32[144,128]{1,0:T(1,128)}', space=vmem, size = 0x12000, scoped, tag = 'internal scratch']
  #allocation2 [shape = 'bf16[384,16]{1,0:T(16,128)(2,1)}', space=vmem, size = 0x18000, scoped, tag = 'scratch operand']
  #allocation3 [shape = 'bf16[384,4]{1,0:T(16,128)(2,1)}', space=vmem, size = 0x18000, scoped, tag = 'scratch operand']
  #allocation4 [shape = 'bf16[384,4]{1,0:T(16,128)(2,1)}', space=vmem, size = 0x18000, scoped, tag = 'scratch operand']
  %s0 = inlined_call_operand.vmem [shape: f32[2,256,16], index: 0, kind: input, shape index: {}]
  %s1 = inlined_call_operand.vmem [shape: f32[2,256,16], index: 1, kind: input, shape index: {}]
  %s2 = inlined_call_operand.vmem [shape: f32[2,256,16], index: 2, kind: input, shape index: {}]
  %s3 = inlined_call_operand.vmem [shape: bf16[3,48,12], index: 3, kind: input, shape index: {}]
  %s4 = inlined_call_operand.vmem [shape: f32[1,12], index: 4, kind: input, shape index: {}]
  %s5 = inlined_call_operand.vmem [shape: bf16[3,12,8], index: 5, kind: input, shape index: {}]
  %s6 = inlined_call_operand.vmem [shape: f32[1,8], index: 6, kind: input, shape index: {}]
  %s7 = inlined_call_operand.vmem [shape: bf16[3,12,4], index: 7, kind: input, shape index: {}]
  %s8 = inlined_call_operand.vmem [shape: f32[1,4], index: 8, kind: input, shape index: {}]
  %s9 = inlined_call_operand.vmem [shape: bf16[2,256,16], index: 9, kind: output, shape index: {}]
  %s10 = sld [smem:[#allocation0]]
  $region81: #{tpu_custom_call.1} parent=0
    _
  %s12 = ssub.s32 1, %s10
  %s13 = scalar_select 0, %s12, %s10
  loop: start=0, step=1, limit=4
  $region2: #{tpu_custom_call.1} parent=0 // loop_pre_header
    _
  $region3: #{tpu_custom_call.1} parent=0 // loop_header
    %s15 = sphi 0, %s19
    %p16 = scmp.ge.s32.totalorder %s15, 4
    %s22 = sphi 0, %s34
    %s23 = sphi 0, %s30
    %s24 = sphi 0, %s22
    %s25 = sphi 0, %s23
    %s26 = sphi 0, %s24
    %s27 = sphi 0, %s25
    %s47 = sphi 0, %s49
    %s50 = sphi 0, %s47
    %s51 = sphi 0, %s50
    %s67 = sphi 0, %s51
    %s75 = sphi 0, %s77
    %s78 = sphi 0, %s75
    %s79 = sphi 0, %s78
    %s95 = sphi 0, %s79
    %s111 = sphi 0, %s113
    %s114 = sphi 0, %s111
    %s115 = sphi 0, %s114
    %s131 = sphi 0, %s115
    %s135 = sphi 0, %s135
    %s137 = sphi 0, %s135
    %s138 = sphi 0, %s137
    %s152 = sphi 0, %s138
    %s156 = sphi 0, %s156
    %s158 = sphi 0, %s156
    %s159 = sphi 0, %s158
    %s173 = sphi 0, %s159
    %s177 = sphi 0, %s177
    %s179 = sphi 0, %s177
    %s180 = sphi 0, %s179
    %s194 = sphi 0, %s180
    %s198 = sphi 0, %s198
    %s200 = sphi 0, %s198
    %s201 = sphi 0, %s200
    %s215 = sphi 0, %s201
    %s219 = sphi 0, %s219
    %s221 = sphi 0, %s219
    %s222 = sphi 0, %s221
    %s236 = sphi 0, %s222
    %s240 = sphi 0, %s240
    %s242 = sphi 0, %s240
    %s243 = sphi 0, %s242
    %s257 = sphi 0, %s243
    %s265 = sphi 0, %s267
    %s268 = sphi 0, %s265
    %s269 = sphi 0, %s268
    %s285 = sphi 0, %s269
  $region4: #{tpu_custom_call.1} parent=0 // loop_header_branch
    %18 = sbr.rel (%p16) target = $region8
  $region5: #{tpu_custom_call.1} parent=0 // loop_body
    %s20 = ssub.s32 %s15, 1
    %s21 = ssub.s32 %s15, 2
    %s28 = sadd.s32 1, %s23
    %p29 = scmp.ge.s32.totalorder %s28, 1
    %s30 = scalar_select %p29, 0, %s28
    %s31 = sadd.s32 1, %s22
    %s32 = scalar_select %p29, %s31, %s22
    %p33 = scmp.ge.s32.totalorder %s32, 2
    %s34 = scalar_select %p33, 0, %s32
    %s35 = smul.u32 %s23, 4
    %s36 = ssub.s32 %s35, 1
    %p37 = scmp.gt.s32.totalorder %s36, 0
    %s38 = scalar_select %p37, %s36, 0
    %s39 = smul.u32 %s30, 4
    %s40 = ssub.s32 %s39, 1
    %p41 = scmp.gt.s32.totalorder %s40, 0
    %s42 = scalar_select %p41, %s40, 0
    %s43 = ssub.s32 %s22, %s34
    %s44 = ssub.s32 %s38, %s42
    %s45 = sor.u32 %s43, %s44
    %p46 = scmp.eq.s32.totalorder %s45, 0
    %s48 = sadd.s32 %s47, 1
    %s49 = scalar_select %p46, %s47, %s48
    %p52 = pneg %p46
    %p53 = scmp.eq.s32.totalorder %s15, 1
    %p54 = por %p52, %p53
    %p55 = scmp.ne.s32.totalorder %s47, %s50
    %p56 = scmp.eq.s32.totalorder %s15, 0
    %p57 = por %p55, %p56
    %p58 = scmp.ne.s32.totalorder %s47, %s50
    %p59 = scmp.eq.s32.totalorder %s20, 1
    %p60 = por %p58, %p59
    %p61 = scmp.ne.s32.totalorder %s50, %s51
    %p62 = scmp.eq.s32.totalorder %s20, 0
    %p63 = por %p61, %p62
    %p64 = scmp.ne.s32.totalorder %s50, %s51
    %p65 = scmp.eq.s32.totalorder %s21, 1
    %p66 = por %p64, %p65
    %p68 = scmp.ne.s32.totalorder %s51, %s67
    %p69 = scmp.eq.s32.totalorder %s21, 0
    %p70 = por %p68, %p69
    %s71 = ssub.s32 %s22, %s34
    %s72 = ssub.s32 %s23, %s30
    %s73 = sor.u32 %s71, %s72
    %p74 = scmp.eq.s32.totalorder %s73, 0
    %s76 = sadd.s32 %s75, 1
    %s77 = scalar_select %p74, %s75, %s76
    %p80 = pneg %p74
    %p81 = scmp.eq.s32.totalorder %s15, 1
    %p82 = por %p80, %p81
    %p83 = scmp.ne.s32.totalorder %s75, %s78
    %p84 = scmp.eq.s32.totalorder %s15, 0
    %p85 = por %p83, %p84
    %p86 = scmp.ne.s32.totalorder %s75, %s78
    %p87 = scmp.eq.s32.totalorder %s20, 1
    %p88 = por %p86, %p87
    %p89 = scmp.ne.s32.totalorder %s78, %s79
    %p90 = scmp.eq.s32.totalorder %s20, 0
    %p91 = por %p89, %p90
    %p92 = scmp.ne.s32.totalorder %s78, %s79
    %p93 = scmp.eq.s32.totalorder %s21, 1
    %p94 = por %p92, %p93
    %p96 = scmp.ne.s32.totalorder %s79, %s95
    %p97 = scmp.eq.s32.totalorder %s21, 0
    %p98 = por %p96, %p97
    %s99 = sadd.s32 %s23, 1
    %s100 = smul.u32 %s99, 4
    %p101 = scmp.lt.s32.totalorder %s100, 3
    %s102 = scalar_select %p101, %s100, 3
    %s103 = sadd.s32 %s30, 1
    %s104 = smul.u32 %s103, 4
    %p105 = scmp.lt.s32.totalorder %s104, 3
    %s106 = scalar_select %p105, %s104, 3
    %s107 = ssub.s32 %s22, %s34
    %s108 = ssub.s32 %s102, %s106
    %s109 = sor.u32 %s107, %s108
    %p110 = scmp.eq.s32.totalorder %s109, 0
    %s112 = sadd.s32 %s111, 1
    %s113 = scalar_select %p110, %s111, %s112
    %p116 = pneg %p110
    %p117 = scmp.eq.s32.totalorder %s15, 1
    %p118 = por %p116, %p117
    %p119 = scmp.ne.s32.totalorder %s111, %s114
    %p120 = scmp.eq.s32.totalorder %s15, 0
    %p121 = por %p119, %p120
    %p122 = scmp.ne.s32.totalorder %s111, %s114
    %p123 = scmp.eq.s32.totalorder %s20, 1
    %p124 = por %p122, %p123
    %p125 = scmp.ne.s32.totalorder %s114, %s115
    %p126 = scmp.eq.s32.totalorder %s20, 0
    %p127 = por %p125, %p126
    %p128 = scmp.ne.s32.totalorder %s114, %s115
    %p129 = scmp.eq.s32.totalorder %s21, 1
    %p130 = por %p128, %p129
    %p132 = scmp.ne.s32.totalorder %s115, %s131
    %p133 = scmp.eq.s32.totalorder %s21, 0
    %p134 = por %p132, %p133
    %s136 = sadd.s32 %s135, 1
    %p139 = scmp.eq.s32.totalorder %s15, 1
    %p140 = scmp.ne.s32.totalorder %s135, %s137
    %p141 = scmp.eq.s32.totalorder %s15, 0
    %p142 = por %p140, %p141
    %p143 = scmp.ne.s32.totalorder %s135, %s137
    %p144 = scmp.eq.s32.totalorder %s20, 1
    %p145 = por %p143, %p144
    %p146 = scmp.ne.s32.totalorder %s137, %s138
    %p147 = scmp.eq.s32.totalorder %s20, 0
    %p148 = por %p146, %p147
    %p149 = scmp.ne.s32.totalorder %s137, %s138
    %p150 = scmp.eq.s32.totalorder %s21, 1
    %p151 = por %p149, %p150
    %p153 = scmp.ne.s32.totalorder %s138, %s152
    %p154 = scmp.eq.s32.totalorder %s21, 0
    %p155 = por %p153, %p154
    %s157 = sadd.s32 %s156, 1
    %p160 = scmp.eq.s32.totalorder %s15, 1
    %p161 = scmp.ne.s32.totalorder %s156, %s158
    %p162 = scmp.eq.s32.totalorder %s15, 0
    %p163 = por %p161, %p162
    %p164 = scmp.ne.s32.totalorder %s156, %s158
    %p165 = scmp.eq.s32.totalorder %s20, 1
    %p166 = por %p164, %p165
    %p167 = scmp.ne.s32.totalorder %s158, %s159
    %p168 = scmp.eq.s32.totalorder %s20, 0
    %p169 = por %p167, %p168
    %p170 = scmp.ne.s32.totalorder %s158, %s159
    %p171 = scmp.eq.s32.totalorder %s21, 1
    %p172 = por %p170, %p171
    %p174 = scmp.ne.s32.totalorder %s159, %s173
    %p175 = scmp.eq.s32.totalorder %s21, 0
    %p176 = por %p174, %p175
    %s178 = sadd.s32 %s177, 1
    %p181 = scmp.eq.s32.totalorder %s15, 1
    %p182 = scmp.ne.s32.totalorder %s177, %s179
    %p183 = scmp.eq.s32.totalorder %s15, 0
    %p184 = por %p182, %p183
    %p185 = scmp.ne.s32.totalorder %s177, %s179
    %p186 = scmp.eq.s32.totalorder %s20, 1
    %p187 = por %p185, %p186
    %p188 = scmp.ne.s32.totalorder %s179, %s180
    %p189 = scmp.eq.s32.totalorder %s20, 0
    %p190 = por %p188, %p189
    %p191 = scmp.ne.s32.totalorder %s179, %s180
    %p192 = scmp.eq.s32.totalorder %s21, 1
    %p193 = por %p191, %p192
    %p195 = scmp.ne.s32.totalorder %s180, %s194
    %p196 = scmp.eq.s32.totalorder %s21, 0
    %p197 = por %p195, %p196
    %s199 = sadd.s32 %s198, 1
    %p202 = scmp.eq.s32.totalorder %s15, 1
    %p203 = scmp.ne.s32.totalorder %s198, %s200
    %p204 = scmp.eq.s32.totalorder %s15, 0
    %p205 = por %p203, %p204
    %p206 = scmp.ne.s32.totalorder %s198, %s200
    %p207 = scmp.eq.s32.totalorder %s20, 1
    %p208 = por %p206, %p207
    %p209 = scmp.ne.s32.totalorder %s200, %s201
    %p210 = scmp.eq.s32.totalorder %s20, 0
    %p211 = por %p209, %p210
    %p212 = scmp.ne.s32.totalorder %s200, %s201
    %p213 = scmp.eq.s32.totalorder %s21, 1
    %p214 = por %p212, %p213
    %p216 = scmp.ne.s32.totalorder %s201, %s215
    %p217 = scmp.eq.s32.totalorder %s21, 0
    %p218 = por %p216, %p217
    %s220 = sadd.s32 %s219, 1
    %p223 = scmp.eq.s32.totalorder %s15, 1
    %p224 = scmp.ne.s32.totalorder %s219, %s221
    %p225 = scmp.eq.s32.totalorder %s15, 0
    %p226 = por %p224, %p225
    %p227 = scmp.ne.s32.totalorder %s219, %s221
    %p228 = scmp.eq.s32.totalorder %s20, 1
    %p229 = por %p227, %p228
    %p230 = scmp.ne.s32.totalorder %s221, %s222
    %p231 = scmp.eq.s32.totalorder %s20, 0
    %p232 = por %p230, %p231
    %p233 = scmp.ne.s32.totalorder %s221, %s222
    %p234 = scmp.eq.s32.totalorder %s21, 1
    %p235 = por %p233, %p234
    %p237 = scmp.ne.s32.totalorder %s222, %s236
    %p238 = scmp.eq.s32.totalorder %s21, 0
    %p239 = por %p237, %p238
    %s241 = sadd.s32 %s240, 1
    %p244 = scmp.eq.s32.totalorder %s15, 1
    %p245 = scmp.ne.s32.totalorder %s240, %s242
    %p246 = scmp.eq.s32.totalorder %s15, 0
    %p247 = por %p245, %p246
    %p248 = scmp.ne.s32.totalorder %s240, %s242
    %p249 = scmp.eq.s32.totalorder %s20, 1
    %p250 = por %p248, %p249
    %p251 = scmp.ne.s32.totalorder %s242, %s243
    %p252 = scmp.eq.s32.totalorder %s20, 0
    %p253 = por %p251, %p252
    %p254 = scmp.ne.s32.totalorder %s242, %s243
    %p255 = scmp.eq.s32.totalorder %s21, 1
    %p256 = por %p254, %p255
    %p258 = scmp.ne.s32.totalorder %s243, %s257
    %p259 = scmp.eq.s32.totalorder %s21, 0
    %p260 = por %p258, %p259
    %s261 = ssub.s32 %s22, %s34
    %s262 = ssub.s32 %s23, %s30
    %s263 = sor.u32 %s261, %s262
    %p264 = scmp.eq.s32.totalorder %s263, 0
    %s266 = sadd.s32 %s265, 1
    %s267 = scalar_select %p264, %s265, %s266
    %p270 = pneg %p264
    %p271 = scmp.eq.s32.totalorder %s15, 1
    %p272 = por %p270, %p271
    %p273 = scmp.ne.s32.totalorder %s265, %s268
    %p274 = scmp.eq.s32.totalorder %s15, 0
    %p275 = por %p273, %p274
    %p276 = scmp.ne.s32.totalorder %s265, %s268
    %p277 = scmp.eq.s32.totalorder %s20, 1
    %p278 = por %p276, %p277
    %p279 = scmp.ne.s32.totalorder %s268, %s269
    %p280 = scmp.eq.s32.totalorder %s20, 0
    %p281 = por %p279, %p280
    %p282 = scmp.ne.s32.totalorder %s268, %s269
    %p283 = scmp.eq.s32.totalorder %s21, 1
    %p284 = por %p282, %p283
    %p286 = scmp.ne.s32.totalorder %s269, %s285
    %p287 = scmp.eq.s32.totalorder %s21, 0
    %p288 = por %p286, %p287
    %p289 = scmp.le.s32.totalorder 1, %s15
    %p290 = scmp.lt.s32.totalorder %s15, 3
    %p291 = pnand %p289, %p290
    %p292 = pneg %p291
    // Predicated region
    $region9: #{tpu_custom_call.1} parent=5 // pred_check
      _
    $region10: #{tpu_custom_call.1} parent=5 // pred_check_branch
      %294 = sbr.rel (%p291) target = $region12
    $region11: #{tpu_custom_call.1} parent=5 // pred_region
      %s295 = ssub.s32 %s15, 1
      // Predicated region
      $region13: #{tpu_custom_call.1} parent=11 // pred_check
        %p296 = pneg %p148
      $region14: #{tpu_custom_call.1} parent=11 // pred_check_branch
        %298 = sbr.rel (%p296) target = $region16
      $region15: #{tpu_custom_call.1} parent=11 // pred_region
        _
      $region16: #{tpu_custom_call.1} parent=11 // pred_fallthru
        _
      // Predicated region
      $region17: #{tpu_custom_call.1} parent=11 // pred_check
        %p299 = pneg %p169
      $region18: #{tpu_custom_call.1} parent=11 // pred_check_branch
        %301 = sbr.rel (%p299) target = $region20
      $region19: #{tpu_custom_call.1} parent=11 // pred_region
        _
      $region20: #{tpu_custom_call.1} parent=11 // pred_fallthru
        _
      // Predicated region
      $region21: #{tpu_custom_call.1} parent=11 // pred_check
        %p302 = pneg %p190
      $region22: #{tpu_custom_call.1} parent=11 // pred_check_branch
        %304 = sbr.rel (%p302) target = $region24
      $region23: #{tpu_custom_call.1} parent=11 // pred_region
        _
      $region24: #{tpu_custom_call.1} parent=11 // pred_fallthru
        _
      // Predicated region
      $region25: #{tpu_custom_call.1} parent=11 // pred_check
        %p305 = pneg %p211
      $region26: #{tpu_custom_call.1} parent=11 // pred_check_branch
        %307 = sbr.rel (%p305) target = $region28
      $region27: #{tpu_custom_call.1} parent=11 // pred_region
        _
      $region28: #{tpu_custom_call.1} parent=11 // pred_fallthru
        _
      // Predicated region
      $region29: #{tpu_custom_call.1} parent=11 // pred_check
        %p308 = pneg %p232
      $region30: #{tpu_custom_call.1} parent=11 // pred_check_branch
        %310 = sbr.rel (%p308) target = $region32
      $region31: #{tpu_custom_call.1} parent=11 // pred_region
        _
      $region32: #{tpu_custom_call.1} parent=11 // pred_fallthru
        _
      // Predicated region
      $region33: #{tpu_custom_call.1} parent=11 // pred_check
        %p311 = pneg %p253
      $region34: #{tpu_custom_call.1} parent=11 // pred_check_branch
        %313 = sbr.rel (%p311) target = $region36
      $region35: #{tpu_custom_call.1} parent=11 // pred_region
        _
      $region36: #{tpu_custom_call.1} parent=11 // pred_fallthru
        _
    $region12: #{tpu_custom_call.1} parent=5 // pred_fallthru
      _
    %p314 = scmp.lt.s32.totalorder %s15, 2
    // Predicated region
    $region37: #{tpu_custom_call.1} parent=5 // pred_check
      %p315 = pneg %p314
    $region38: #{tpu_custom_call.1} parent=5 // pred_check_branch
      %317 = sbr.rel (%p315) target = $region40
    $region39: #{tpu_custom_call.1} parent=5 // pred_region
      // Predicated region
      $region41: #{tpu_custom_call.1} parent=39 // pred_check
        %p318 = pneg %p57
      $region42: #{tpu_custom_call.1} parent=39 // pred_check_branch
        %320 = sbr.rel (%p318) target = $region44
      $region43: #{tpu_custom_call.1} parent=39 // pred_region
        %s321 = smul.u32 %s23, 4
        %s322 = ssub.s32 %s321, 1
        %p323 = scmp.gt.s32.totalorder %s322, 0
        %s324 = scalar_select %p323, %s322, 0
        %s325 = smul.u32 8, %s324
        %p326 = scmp.lt.s32.totalorder %s22, 1
        %s327 = scalar_select %p326, %s22, 1
        %p328 = scmp.lt.s32.totalorder %s325, 31
        %s329 = scalar_select %p328, %s325, 31
        %s330 = smul.addr %s327, 32
        %s331 = sadd.s32 %s329, %s330
        %s332 = smul.addr %s331, 8
        %s333 = scalar_lea.vmem %s0, %s332
        %s334 = smul.u32 %s23, 4
        %s335 = ssub.s32 %s334, 1
        %p336 = scmp.gt.s32.totalorder %s335, 0
        %s337 = scalar_select %p336, %s335, 0
        %s338 = smul.u32 8, %s337
      $region44: #{tpu_custom_call.1} parent=39 // pred_fallthru
        _
      // Predicated region
      $region45: #{tpu_custom_call.1} parent=39 // pred_check
        %p339 = pneg %p85
      $region46: #{tpu_custom_call.1} parent=39 // pred_check_branch
        %341 = sbr.rel (%p339) target = $region48
      $region47: #{tpu_custom_call.1} parent=39 // pred_region
        %s342 = smul.u32 32, %s23
        %p343 = scmp.lt.s32.totalorder %s22, 1
        %s344 = scalar_select %p343, %s22, 1
        %p345 = scmp.lt.s32.totalorder %s342, 31
        %s346 = scalar_select %p345, %s342, 31
        %s347 = smul.addr %s344, 32
        %s348 = sadd.s32 %s346, %s347
        %s349 = smul.addr %s348, 8
        %s350 = scalar_lea.vmem %s1, %s349
        %s351 = smul.u32 32, %s23
      $region48: #{tpu_custom_call.1} parent=39 // pred_fallthru
        _
      // Predicated region
      $region49: #{tpu_custom_call.1} parent=39 // pred_check
        %p352 = pneg %p121
      $region50: #{tpu_custom_call.1} parent=39 // pred_check_branch
        %354 = sbr.rel (%p352) target = $region52
      $region51: #{tpu_custom_call.1} parent=39 // pred_region
        %s355 = sadd.s32 %s23, 1
        %s356 = smul.u32 %s355, 4
        %p357 = scmp.lt.s32.totalorder %s356, 3
        %s358 = scalar_select %p357, %s356, 3
        %s359 = smul.u32 8, %s358
        %p360 = scmp.lt.s32.totalorder %s22, 1
        %s361 = scalar_select %p360, %s22, 1
        %p362 = scmp.lt.s32.totalorder %s359, 31
        %s363 = scalar_select %p362, %s359, 31
        %s364 = smul.addr %s361, 32
        %s365 = sadd.s32 %s363, %s364
        %s366 = smul.addr %s365, 8
        %s367 = scalar_lea.vmem %s2, %s366
        %s368 = sadd.s32 %s23, 1
        %s369 = smul.u32 %s368, 4
        %p370 = scmp.lt.s32.totalorder %s369, 3
        %s371 = scalar_select %p370, %s369, 3
        %s372 = smul.u32 8, %s371
      $region52: #{tpu_custom_call.1} parent=39 // pred_fallthru
        _
    $region40: #{tpu_custom_call.1} parent=5 // pred_fallthru
      _
    %p373 = scmp.le.s32.totalorder 1, %s15
    %p374 = scmp.lt.s32.totalorder %s15, 3
    %p375 = pnand %p373, %p374
    %p376 = pneg %p375
    // Predicated region
    $region53: #{tpu_custom_call.1} parent=5 // pred_check
      _
    $region54: #{tpu_custom_call.1} parent=5 // pred_check_branch
      %378 = sbr.rel (%p375) target = $region56
    $region55: #{tpu_custom_call.1} parent=5 // pred_region
      %s379 = ssub.s32 %s15, 1
      %s380 = smul.u32 %s25, 4
      %s381 = ssub.s32 %s380, 1
      %p382 = scmp.gt.s32.totalorder %s381, 0
      %s383 = scalar_select %p382, %s381, 0
      %s384 = smul.u32 8, %s383
      %p385 = scmp.lt.s32.totalorder %s24, 1
      %s386 = scalar_select %p385, %s24, 1
      %p387 = scmp.lt.s32.totalorder %s384, 31
      %s388 = scalar_select %p387, %s384, 31
      %s389 = smul.addr %s386, 32
      %s390 = sadd.s32 %s388, %s389
      %s391 = smul.addr %s390, 8
      %s392 = scalar_lea.vmem %s0, %s391
      %p393 = pneg %p63
      %p394 = pneg %p60
      %s395 = smul.u32 32, %s25
      %p396 = scmp.lt.s32.totalorder %s24, 1
      %s397 = scalar_select %p396, %s24, 1
      %p398 = scmp.lt.s32.totalorder %s395, 31
      %s399 = scalar_select %p398, %s395, 31
      %s400 = smul.addr %s397, 32
      %s401 = sadd.s32 %s399, %s400
      %s402 = smul.addr %s401, 8
      %s403 = scalar_lea.vmem %s1, %s402
      %p404 = pneg %p91
      %p405 = pneg %p88
      %s406 = sadd.s32 %s25, 1
      %s407 = smul.u32 %s406, 4
      %p408 = scmp.lt.s32.totalorder %s407, 3
      %s409 = scalar_select %p408, %s407, 3
      %s410 = smul.u32 8, %s409
      %p411 = scmp.lt.s32.totalorder %s24, 1
      %s412 = scalar_select %p411, %s24, 1
      %p413 = scmp.lt.s32.totalorder %s410, 31
      %s414 = scalar_select %p413, %s410, 31
      %s415 = smul.addr %s412, 32
      %s416 = sadd.s32 %s414, %s415
      %s417 = smul.addr %s416, 8
      %s418 = scalar_lea.vmem %s2, %s417
      %p419 = pneg %p127
      %p420 = pneg %p124
      %p421 = pneg %p148
      %p422 = pneg %p145
      %p423 = pneg %p169
      %p424 = pneg %p166
      %p425 = pneg %p190
      %p426 = pneg %p187
      %p427 = pneg %p211
      %p428 = pneg %p208
      %p429 = pneg %p232
      %p430 = pneg %p229
      %p431 = pneg %p253
      %p432 = pneg %p250
      %p433 = pneg %p281
      %p434 = pneg %p278
      %s435 = smul.u32 32, %s25
      %p436 = scmp.lt.s32.totalorder %s24, 1
      %s437 = scalar_select %p436, %s24, 1
      %p438 = scmp.lt.s32.totalorder %s435, 31
      %s439 = scalar_select %p438, %s435, 31
      %s440 = smul.addr %s437, 32
      %s441 = sadd.s32 %s439, %s440
      %s442 = smul.addr %s441, 4
      %s443 = scalar_lea.vmem %s9, %s442
      %s444 = smul.u32 %s25, 4
      %s445 = ssub.s32 %s444, 1
      %p446 = scmp.gt.s32.totalorder %s445, 0
      %s447 = scalar_select %p446, %s445, 0
      %s448 = smul.u32 8, %s447
      %p449 = scmp.lt.s32.totalorder %s24, 1
      %s450 = scalar_select %p449, %s24, 1
      %p451 = scmp.lt.s32.totalorder %s448, 31
      %s452 = scalar_select %p451, %s448, 31
      %s453 = smul.addr %s450, 32
      %s454 = sadd.s32 %s452, %s453
      %s455 = smul.addr %s454, 8
      %s456 = scalar_lea.vmem %s0, %s455
      %s457 = smul.u32 %s25, 4
      %s458 = ssub.s32 %s457, 1
      %p459 = scmp.gt.s32.totalorder %s458, 0
      %s460 = scalar_select %p459, %s458, 0
      %s461 = smul.u32 8, %s460
      %s462 = smul.u32 32, %s25
      %p463 = scmp.lt.s32.totalorder %s24, 1
      %s464 = scalar_select %p463, %s24, 1
      %p465 = scmp.lt.s32.totalorder %s462, 31
      %s466 = scalar_select %p465, %s462, 31
      %s467 = smul.addr %s464, 32
      %s468 = sadd.s32 %s466, %s467
      %s469 = smul.addr %s468, 8
      %s470 = scalar_lea.vmem %s1, %s469
      %s471 = smul.u32 32, %s25
      %s472 = sadd.s32 %s25, 1
      %s473 = smul.u32 %s472, 4
      %p474 = scmp.lt.s32.totalorder %s473, 3
      %s475 = scalar_select %p474, %s473, 3
      %s476 = smul.u32 8, %s475
      %p477 = scmp.lt.s32.totalorder %s24, 1
      %s478 = scalar_select %p477, %s24, 1
      %p479 = scmp.lt.s32.totalorder %s476, 31
      %s480 = scalar_select %p479, %s476, 31
      %s481 = smul.addr %s478, 32
      %s482 = sadd.s32 %s480, %s481
      %s483 = smul.addr %s482, 8
      %s484 = scalar_lea.vmem %s2, %s483
      %s485 = sadd.s32 %s25, 1
      %s486 = smul.u32 %s485, 4
      %p487 = scmp.lt.s32.totalorder %s486, 3
      %s488 = scalar_select %p487, %s486, 3
      %s489 = smul.u32 8, %s488
      %s490 = smul.u32 32, %s25
      %p491 = scmp.lt.s32.totalorder %s24, 1
      %s492 = scalar_select %p491, %s24, 1
      %p493 = scmp.lt.s32.totalorder %s490, 31
      %s494 = scalar_select %p493, %s490, 31
      %s495 = smul.addr %s492, 32
      %s496 = sadd.s32 %s494, %s495
      %s497 = smul.addr %s496, 4
      %s498 = scalar_lea.vmem %s9, %s497
      %s499 = smul.u32 32, %s25
      %v501 = vld [vmem:[%s456] sm:$0xff]
      %v502 = vld [vmem:[%s456 + $0x8] sm:$0xff]
      %v503 = vld [vmem:[%s456 + $0x10] sm:$0xff]
      %v504 = vld [vmem:[%s456 + $0x18] sm:$0xff]
      %v505 = vld [vmem:[%s456 + $0x20] sm:$0xff]
      %v506 = vld [vmem:[%s456 + $0x28] sm:$0xff]
      %v507 = vld [vmem:[%s456 + $0x30] sm:$0xff]
      %v508 = vld [vmem:[%s456 + $0x38] sm:$0xff]
      %v509 = vpack.c.bf16 %v502, %v501
      %v510 = vpack.c.bf16 %v504, %v503
      %v511 = vpack.c.bf16 %v506, %v505
      %v512 = vpack.c.bf16 %v508, %v507
      %vm513 = vcmask 130048
      %514 = vst.msk [vmem:[#allocation2] sm:$0xff] %vm513, %v509
      %515 = vst.msk [vmem:[#allocation2 + $0x8] sm:$0xff] %vm513, %v510
      %516 = vst.msk [vmem:[#allocation2 + $0x10] sm:$0xff] %vm513, %v511
      %517 = vst.msk [vmem:[#allocation2 + $0x18] sm:$0xff] %vm513, %v512
      %v518 = vld [vmem:[%s470] sm:$0xff]
      %v519 = vld [vmem:[%s470 + $0x8] sm:$0xff]
      %v520 = vld [vmem:[%s470 + $0x10] sm:$0xff]
      %v521 = vld [vmem:[%s470 + $0x18] sm:$0xff]
      %v522 = vld [vmem:[%s470 + $0x20] sm:$0xff]
      %v523 = vld [vmem:[%s470 + $0x28] sm:$0xff]
      %v524 = vld [vmem:[%s470 + $0x30] sm:$0xff]
      %v525 = vld [vmem:[%s470 + $0x38] sm:$0xff]
      %v526 = vld [vmem:[%s470 + $0x40] sm:$0xff]
      %v527 = vld [vmem:[%s470 + $0x48] sm:$0xff]
      %v528 = vld [vmem:[%s470 + $0x50] sm:$0xff]
      %v529 = vld [vmem:[%s470 + $0x58] sm:$0xff]
      %v530 = vld [vmem:[%s470 + $0x60] sm:$0xff]
      %v531 = vld [vmem:[%s470 + $0x68] sm:$0xff]
      %v532 = vld [vmem:[%s470 + $0x70] sm:$0xff]
      %v533 = vld [vmem:[%s470 + $0x78] sm:$0xff]
      %v534 = vld [vmem:[%s470 + $0x80] sm:$0xff]
      %v535 = vld [vmem:[%s470 + $0x88] sm:$0xff]
      %v536 = vld [vmem:[%s470 + $0x90] sm:$0xff]
      %v537 = vld [vmem:[%s470 + $0x98] sm:$0xff]
      %v538 = vld [vmem:[%s470 + $0xa0] sm:$0xff]
      %v539 = vld [vmem:[%s470 + $0xa8] sm:$0xff]
      %v540 = vld [vmem:[%s470 + $0xb0] sm:$0xff]
      %v541 = vld [vmem:[%s470 + $0xb8] sm:$0xff]
      %v542 = vld [vmem:[%s470 + $0xc0] sm:$0xff]
      %v543 = vld [vmem:[%s470 + $0xc8] sm:$0xff]
      %v544 = vld [vmem:[%s470 + $0xd0] sm:$0xff]
      %v545 = vld [vmem:[%s470 + $0xd8] sm:$0xff]
      %v546 = vld [vmem:[%s470 + $0xe0] sm:$0xff]
      %v547 = vld [vmem:[%s470 + $0xe8] sm:$0xff]
      %v548 = vld [vmem:[%s470 + $0xf0] sm:$0xff]
      %v549 = vld [vmem:[%s470 + $0xf8] sm:$0xff]
      %v550 = vpack.c.bf16 %v519, %v518
      %v551 = vpack.c.bf16 %v521, %v520
      %v552 = vpack.c.bf16 %v523, %v522
      %v553 = vpack.c.bf16 %v525, %v524
      %v554 = vpack.c.bf16 %v527, %v526
      %v555 = vpack.c.bf16 %v529, %v528
      %v556 = vpack.c.bf16 %v531, %v530
      %v557 = vpack.c.bf16 %v533, %v532
      %v558 = vpack.c.bf16 %v535, %v534
      %v559 = vpack.c.bf16 %v537, %v536
      %v560 = vpack.c.bf16 %v539, %v538
      %v561 = vpack.c.bf16 %v541, %v540
      %v562 = vpack.c.bf16 %v543, %v542
      %v563 = vpack.c.bf16 %v545, %v544
      %v564 = vpack.c.bf16 %v547, %v546
      %v565 = vpack.c.bf16 %v549, %v548
      %566 = vst.msk [vmem:[#allocation2 + $0x20] sm:$0xff] %vm513, %v550
      %567 = vst.msk [vmem:[#allocation2 + $0x28] sm:$0xff] %vm513, %v551
      %568 = vst.msk [vmem:[#allocation2 + $0x30] sm:$0xff] %vm513, %v552
      %569 = vst.msk [vmem:[#allocation2 + $0x38] sm:$0xff] %vm513, %v553
      %570 = vst.msk [vmem:[#allocation2 + $0x40] sm:$0xff] %vm513, %v554
      %571 = vst.msk [vmem:[#allocation2 + $0x48] sm:$0xff] %vm513, %v555
      %572 = vst.msk [vmem:[#allocation2 + $0x50] sm:$0xff] %vm513, %v556
      %573 = vst.msk [vmem:[#allocation2 + $0x58] sm:$0xff] %vm513, %v557
      %574 = vst.msk [vmem:[#allocation2 + $0x60] sm:$0xff] %vm513, %v558
      %575 = vst.msk [vmem:[#allocation2 + $0x68] sm:$0xff] %vm513, %v559
      %576 = vst.msk [vmem:[#allocation2 + $0x70] sm:$0xff] %vm513, %v560
      %577 = vst.msk [vmem:[#allocation2 + $0x78] sm:$0xff] %vm513, %v561
      %578 = vst.msk [vmem:[#allocation2 + $0x80] sm:$0xff] %vm513, %v562
      %579 = vst.msk [vmem:[#allocation2 + $0x88] sm:$0xff] %vm513, %v563
      %580 = vst.msk [vmem:[#allocation2 + $0x90] sm:$0xff] %vm513, %v564
      %581 = vst.msk [vmem:[#allocation2 + $0x98] sm:$0xff] %vm513, %v565
      %v582 = vld [vmem:[%s484] sm:$0xff]
      %v583 = vld [vmem:[%s484 + $0x8] sm:$0xff]
      %v584 = vld [vmem:[%s484 + $0x10] sm:$0xff]
      %v585 = vld [vmem:[%s484 + $0x18] sm:$0xff]
      %v586 = vld [vmem:[%s484 + $0x20] sm:$0xff]
      %v587 = vld [vmem:[%s484 + $0x28] sm:$0xff]
      %v588 = vld [vmem:[%s484 + $0x30] sm:$0xff]
      %v589 = vld [vmem:[%s484 + $0x38] sm:$0xff]
      %v590 = vpack.c.bf16 %v583, %v582
      %v591 = vpack.c.bf16 %v585, %v584
      %v592 = vpack.c.bf16 %v587, %v586
      %v593 = vpack.c.bf16 %v589, %v588
      %594 = vst.msk [vmem:[#allocation2 + $0xa0] sm:$0xff] %vm513, %v590
      %595 = vst.msk [vmem:[#allocation2 + $0xa8] sm:$0xff] %vm513, %v591
      %596 = vst.msk [vmem:[#allocation2 + $0xb0] sm:$0xff] %vm513, %v592
      %597 = vst.msk [vmem:[#allocation2 + $0xb8] sm:$0xff] %vm513, %v593
      %p598 = scmp.eq.s32.totalorder %s25, 0
      // Predicated region
      $region57: #{tpu_custom_call.1} parent=55 // pred_check
        %p599 = pneg %p598
      $region58: #{tpu_custom_call.1} parent=55 // pred_check_branch
        %601 = sbr.rel (%p599) target = $region60
      $region59: #{tpu_custom_call.1} parent=55 // pred_region
        %602 = vst.msk [vmem:[#allocation2] sm:$0xff] %vm513, 0
        %603 = vst.msk [vmem:[#allocation2 + $0x8] sm:$0xff] %vm513, 0
        %604 = vst.msk [vmem:[#allocation2 + $0x10] sm:$0xff] %vm513, 0
        %605 = vst.msk [vmem:[#allocation2 + $0x18] sm:$0xff] %vm513, 0
        %606 = vst.msk [vmem:[#allocation2 + $0xa0] sm:$0xff] %vm513, 0
        %607 = vst.msk [vmem:[#allocation2 + $0xa8] sm:$0xff] %vm513, 0
        %608 = vst.msk [vmem:[#allocation2 + $0xb0] sm:$0xff] %vm513, 0
        %609 = vst.msk [vmem:[#allocation2 + $0xb8] sm:$0xff] %vm513, 0
      $region60: #{tpu_custom_call.1} parent=55 // pred_fallthru
        _
      %v610 = vlaneseq
      %v611 = vshrl.u32 %v610, 7
      %v612 = vadd.s32 %v611, 8
      %v613 = vadd.s32 %v611, 16
      %v614 = vadd.s32 %v611, 24
      %v615 = vadd.s32 %v611, 32
      %v616 = vadd.s32 %v611, 40
      %v617 = vadd.s32 %v611, 48
      %v618 = vadd.s32 %v611, 56
      %v619 = vadd.s32 %v611, 64
      %v620 = vadd.s32 %v611, 72
      %v621 = vadd.s32 %v611, 80
      %v622 = vadd.s32 %v611, 88
      %v623 = vadd.s32 %v611, 96
      %v624 = vadd.s32 %v611, 104
      %v625 = vadd.s32 %v611, 112
      %v626 = vadd.s32 %v611, 120
      %v627 = vadd.s32 %v611, 128
      %v628 = vadd.s32 %v611, 136
      %v629 = vadd.s32 %v611, 144
      %v630 = vadd.s32 %v611, 152
      %v631 = vadd.s32 %v611, 160
      %v632 = vadd.s32 %v611, 168
      %v633 = vadd.s32 %v611, 176
      %v634 = vadd.s32 %v611, 184
      %v635 = vadd.s32 %v611, 192
      %v636 = vadd.s32 %v611, 200
      %v637 = vadd.s32 %v611, 208
      %v638 = vadd.s32 %v611, 216
      %v639 = vadd.s32 %v611, 224
      %v640 = vadd.s32 %v611, 232
      %v641 = vadd.s32 %v611, 240
      %v642 = vadd.s32 %v611, 248
      %v643 = vadd.s32 %v611, 256
      %v644 = vadd.s32 %v611, 264
      %v645 = vadd.s32 %v611, 272
      %v646 = vadd.s32 %v611, 280
      %v647 = vadd.s32 %v611, 288
      %v648 = vadd.s32 %v611, 296
      %v649 = vadd.s32 %v611, 304
      %v650 = vadd.s32 %v611, 312
      %v651 = vadd.s32 %v611, 320
      %v652 = vadd.s32 %v611, 328
      %v653 = vadd.s32 %v611, 336
      %v654 = vadd.s32 %v611, 344
      %v655 = vadd.s32 %v611, 352
      %v656 = vadd.s32 %v611, 360
      %v657 = vadd.s32 %v611, 368
      %v658 = vadd.s32 %v611, 376
      %vm659 = vcmp.lt.s32.totalorder %v611, 0
      %v660 = vsub.s32 0, %v611
      %v661 = vsel %vm659, %v660, %v611
      %v662 = vshrl.u32 %v661, 4
      %v663 = vand.u32 %v661, 15
      %v664 = vsub.s32 0, %v663
      %v665 = vsel %vm659, %v664, %v663
      %vm666 = vcmp.lt.s32.totalorder %v612, 0
      %v667 = vsub.s32 0, %v612
      %v668 = vsel %vm666, %v667, %v612
      %v669 = vshrl.u32 %v668, 4
      %v670 = vand.u32 %v668, 15
      %v671 = vsub.s32 0, %v670
      %v672 = vsel %vm666, %v671, %v670
      %vm673 = vcmp.lt.s32.totalorder %v613, 0
      %v674 = vsub.s32 0, %v613
      %v675 = vsel %vm673, %v674, %v613
      %v676 = vshrl.u32 %v675, 4
      %v677 = vand.u32 %v675, 15
      %v678 = vsub.s32 0, %v677
      %v679 = vsel %vm673, %v678, %v677
      %vm680 = vcmp.lt.s32.totalorder %v614, 0
      %v681 = vsub.s32 0, %v614
      %v682 = vsel %vm680, %v681, %v614
      %v683 = vshrl.u32 %v682, 4
      %v684 = vand.u32 %v682, 15
      %v685 = vsub.s32 0, %v684
      %v686 = vsel %vm680, %v685, %v684
      %vm687 = vcmp.lt.s32.totalorder %v615, 0
      %v688 = vsub.s32 0, %v615
      %v689 = vsel %vm687, %v688, %v615
      %v690 = vshrl.u32 %v689, 4
      %v691 = vand.u32 %v689, 15
      %v692 = vsub.s32 0, %v691
      %v693 = vsel %vm687, %v692, %v691
      %vm694 = vcmp.lt.s32.totalorder %v616, 0
      %v695 = vsub.s32 0, %v616
      %v696 = vsel %vm694, %v695, %v616
      %v697 = vshrl.u32 %v696, 4
      %v698 = vand.u32 %v696, 15
      %v699 = vsub.s32 0, %v698
      %v700 = vsel %vm694, %v699, %v698
      %vm701 = vcmp.lt.s32.totalorder %v617, 0
      %v702 = vsub.s32 0, %v617
      %v703 = vsel %vm701, %v702, %v617
      %v704 = vshrl.u32 %v703, 4
      %v705 = vand.u32 %v703, 15
      %v706 = vsub.s32 0, %v705
      %v707 = vsel %vm701, %v706, %v705
      %vm708 = vcmp.lt.s32.totalorder %v618, 0
      %v709 = vsub.s32 0, %v618
      %v710 = vsel %vm708, %v709, %v618
      %v711 = vshrl.u32 %v710, 4
      %v712 = vand.u32 %v710, 15
      %v713 = vsub.s32 0, %v712
      %v714 = vsel %vm708, %v713, %v712
      %vm715 = vcmp.lt.s32.totalorder %v619, 0
      %v716 = vsub.s32 0, %v619
      %v717 = vsel %vm715, %v716, %v619
      %v718 = vshrl.u32 %v717, 4
      %v719 = vand.u32 %v717, 15
      %v720 = vsub.s32 0, %v719
      %v721 = vsel %vm715, %v720, %v719
      %vm722 = vcmp.lt.s32.totalorder %v620, 0
      %v723 = vsub.s32 0, %v620
      %v724 = vsel %vm722, %v723, %v620
      %v725 = vshrl.u32 %v724, 4
      %v726 = vand.u32 %v724, 15
      %v727 = vsub.s32 0, %v726
      %v728 = vsel %vm722, %v727, %v726
      %vm729 = vcmp.lt.s32.totalorder %v621, 0
      %v730 = vsub.s32 0, %v621
      %v731 = vsel %vm729, %v730, %v621
      %v732 = vshrl.u32 %v731, 4
      %v733 = vand.u32 %v731, 15
      %v734 = vsub.s32 0, %v733
      %v735 = vsel %vm729, %v734, %v733
      %vm736 = vcmp.lt.s32.totalorder %v622, 0
      %v737 = vsub.s32 0, %v622
      %v738 = vsel %vm736, %v737, %v622
      %v739 = vshrl.u32 %v738, 4
      %v740 = vand.u32 %v738, 15
      %v741 = vsub.s32 0, %v740
      %v742 = vsel %vm736, %v741, %v740
      %vm743 = vcmp.lt.s32.totalorder %v623, 0
      %v744 = vsub.s32 0, %v623
      %v745 = vsel %vm743, %v744, %v623
      %v746 = vshrl.u32 %v745, 4
      %v747 = vand.u32 %v745, 15
      %v748 = vsub.s32 0, %v747
      %v749 = vsel %vm743, %v748, %v747
      %vm750 = vcmp.lt.s32.totalorder %v624, 0
      %v751 = vsub.s32 0, %v624
      %v752 = vsel %vm750, %v751, %v624
      %v753 = vshrl.u32 %v752, 4
      %v754 = vand.u32 %v752, 15
      %v755 = vsub.s32 0, %v754
      %v756 = vsel %vm750, %v755, %v754
      %vm757 = vcmp.lt.s32.totalorder %v625, 0
      %v758 = vsub.s32 0, %v625
      %v759 = vsel %vm757, %v758, %v625
      %v760 = vshrl.u32 %v759, 4
      %v761 = vand.u32 %v759, 15
      %v762 = vsub.s32 0, %v761
      %v763 = vsel %vm757, %v762, %v761
      %vm764 = vcmp.lt.s32.totalorder %v626, 0
      %v765 = vsub.s32 0, %v626
      %v766 = vsel %vm764, %v765, %v626
      %v767 = vshrl.u32 %v766, 4
      %v768 = vand.u32 %v766, 15
      %v769 = vsub.s32 0, %v768
      %v770 = vsel %vm764, %v769, %v768
      %vm771 = vcmp.lt.s32.totalorder %v627, 0
      %v772 = vsub.s32 0, %v627
      %v773 = vsel %vm771, %v772, %v627
      %v774 = vshrl.u32 %v773, 4
      %v775 = vand.u32 %v773, 15
      %v776 = vsub.s32 0, %v775
      %v777 = vsel %vm771, %v776, %v775
      %vm778 = vcmp.lt.s32.totalorder %v628, 0
      %v779 = vsub.s32 0, %v628
      %v780 = vsel %vm778, %v779, %v628
      %v781 = vshrl.u32 %v780, 4
      %v782 = vand.u32 %v780, 15
      %v783 = vsub.s32 0, %v782
      %v784 = vsel %vm778, %v783, %v782
      %vm785 = vcmp.lt.s32.totalorder %v629, 0
      %v786 = vsub.s32 0, %v629
      %v787 = vsel %vm785, %v786, %v629
      %v788 = vshrl.u32 %v787, 4
      %v789 = vand.u32 %v787, 15
      %v790 = vsub.s32 0, %v789
      %v791 = vsel %vm785, %v790, %v789
      %vm792 = vcmp.lt.s32.totalorder %v630, 0
      %v793 = vsub.s32 0, %v630
      %v794 = vsel %vm792, %v793, %v630
      %v795 = vshrl.u32 %v794, 4
      %v796 = vand.u32 %v794, 15
      %v797 = vsub.s32 0, %v796
      %v798 = vsel %vm792, %v797, %v796
      %vm799 = vcmp.lt.s32.totalorder %v631, 0
      %v800 = vsub.s32 0, %v631
      %v801 = vsel %vm799, %v800, %v631
      %v802 = vshrl.u32 %v801, 4
      %v803 = vand.u32 %v801, 15
      %v804 = vsub.s32 0, %v803
      %v805 = vsel %vm799, %v804, %v803
      %vm806 = vcmp.lt.s32.totalorder %v632, 0
      %v807 = vsub.s32 0, %v632
      %v808 = vsel %vm806, %v807, %v632
      %v809 = vshrl.u32 %v808, 4
      %v810 = vand.u32 %v808, 15
      %v811 = vsub.s32 0, %v810
      %v812 = vsel %vm806, %v811, %v810
      %vm813 = vcmp.lt.s32.totalorder %v633, 0
      %v814 = vsub.s32 0, %v633
      %v815 = vsel %vm813, %v814, %v633
      %v816 = vshrl.u32 %v815, 4
      %v817 = vand.u32 %v815, 15
      %v818 = vsub.s32 0, %v817
      %v819 = vsel %vm813, %v818, %v817
      %vm820 = vcmp.lt.s32.totalorder %v634, 0
      %v821 = vsub.s32 0, %v634
      %v822 = vsel %vm820, %v821, %v634
      %v823 = vshrl.u32 %v822, 4
      %v824 = vand.u32 %v822, 15
      %v825 = vsub.s32 0, %v824
      %v826 = vsel %vm820, %v825, %v824
      %vm827 = vcmp.lt.s32.totalorder %v635, 0
      %v828 = vsub.s32 0, %v635
      %v829 = vsel %vm827, %v828, %v635
      %v830 = vshrl.u32 %v829, 4
      %v831 = vand.u32 %v829, 15
      %v832 = vsub.s32 0, %v831
      %v833 = vsel %vm827, %v832, %v831
      %vm834 = vcmp.lt.s32.totalorder %v636, 0
      %v835 = vsub.s32 0, %v636
      %v836 = vsel %vm834, %v835, %v636
      %v837 = vshrl.u32 %v836, 4
      %v838 = vand.u32 %v836, 15
      %v839 = vsub.s32 0, %v838
      %v840 = vsel %vm834, %v839, %v838
      %vm841 = vcmp.lt.s32.totalorder %v637, 0
      %v842 = vsub.s32 0, %v637
      %v843 = vsel %vm841, %v842, %v637
      %v844 = vshrl.u32 %v843, 4
      %v845 = vand.u32 %v843, 15
      %v846 = vsub.s32 0, %v845
      %v847 = vsel %vm841, %v846, %v845
      %vm848 = vcmp.lt.s32.totalorder %v638, 0
      %v849 = vsub.s32 0, %v638
      %v850 = vsel %vm848, %v849, %v638
      %v851 = vshrl.u32 %v850, 4
      %v852 = vand.u32 %v850, 15
      %v853 = vsub.s32 0, %v852
      %v854 = vsel %vm848, %v853, %v852
      %vm855 = vcmp.lt.s32.totalorder %v639, 0
      %v856 = vsub.s32 0, %v639
      %v857 = vsel %vm855, %v856, %v639
      %v858 = vshrl.u32 %v857, 4
      %v859 = vand.u32 %v857, 15
      %v860 = vsub.s32 0, %v859
      %v861 = vsel %vm855, %v860, %v859
      %vm862 = vcmp.lt.s32.totalorder %v640, 0
      %v863 = vsub.s32 0, %v640
      %v864 = vsel %vm862, %v863, %v640
      %v865 = vshrl.u32 %v864, 4
      %v866 = vand.u32 %v864, 15
      %v867 = vsub.s32 0, %v866
      %v868 = vsel %vm862, %v867, %v866
      %vm869 = vcmp.lt.s32.totalorder %v641, 0
      %v870 = vsub.s32 0, %v641
      %v871 = vsel %vm869, %v870, %v641
      %v872 = vshrl.u32 %v871, 4
      %v873 = vand.u32 %v871, 15
      %v874 = vsub.s32 0, %v873
      %v875 = vsel %vm869, %v874, %v873
      %vm876 = vcmp.lt.s32.totalorder %v642, 0
      %v877 = vsub.s32 0, %v642
      %v878 = vsel %vm876, %v877, %v642
      %v879 = vshrl.u32 %v878, 4
      %v880 = vand.u32 %v878, 15
      %v881 = vsub.s32 0, %v880
      %v882 = vsel %vm876, %v881, %v880
      %vm883 = vcmp.lt.s32.totalorder %v643, 0
      %v884 = vsub.s32 0, %v643
      %v885 = vsel %vm883, %v884, %v643
      %v886 = vshrl.u32 %v885, 4
      %v887 = vand.u32 %v885, 15
      %v888 = vsub.s32 0, %v887
      %v889 = vsel %vm883, %v888, %v887
      %vm890 = vcmp.lt.s32.totalorder %v644, 0
      %v891 = vsub.s32 0, %v644
      %v892 = vsel %vm890, %v891, %v644
      %v893 = vshrl.u32 %v892, 4
      %v894 = vand.u32 %v892, 15
      %v895 = vsub.s32 0, %v894
      %v896 = vsel %vm890, %v895, %v894
      %vm897 = vcmp.lt.s32.totalorder %v645, 0
      %v898 = vsub.s32 0, %v645
      %v899 = vsel %vm897, %v898, %v645
      %v900 = vshrl.u32 %v899, 4
      %v901 = vand.u32 %v899, 15
      %v902 = vsub.s32 0, %v901
      %v903 = vsel %vm897, %v902, %v901
      %vm904 = vcmp.lt.s32.totalorder %v646, 0
      %v905 = vsub.s32 0, %v646
      %v906 = vsel %vm904, %v905, %v646
      %v907 = vshrl.u32 %v906, 4
      %v908 = vand.u32 %v906, 15
      %v909 = vsub.s32 0, %v908
      %v910 = vsel %vm904, %v909, %v908
      %vm911 = vcmp.lt.s32.totalorder %v647, 0
      %v912 = vsub.s32 0, %v647
      %v913 = vsel %vm911, %v912, %v647
      %v914 = vshrl.u32 %v913, 4
      %v915 = vand.u32 %v913, 15
      %v916 = vsub.s32 0, %v915
      %v917 = vsel %vm911, %v916, %v915
      %vm918 = vcmp.lt.s32.totalorder %v648, 0
      %v919 = vsub.s32 0, %v648
      %v920 = vsel %vm918, %v919, %v648
      %v921 = vshrl.u32 %v920, 4
      %v922 = vand.u32 %v920, 15
      %v923 = vsub.s32 0, %v922
      %v924 = vsel %vm918, %v923, %v922
      %vm925 = vcmp.lt.s32.totalorder %v649, 0
      %v926 = vsub.s32 0, %v649
      %v927 = vsel %vm925, %v926, %v649
      %v928 = vshrl.u32 %v927, 4
      %v929 = vand.u32 %v927, 15
      %v930 = vsub.s32 0, %v929
      %v931 = vsel %vm925, %v930, %v929
      %vm932 = vcmp.lt.s32.totalorder %v650, 0
      %v933 = vsub.s32 0, %v650
      %v934 = vsel %vm932, %v933, %v650
      %v935 = vshrl.u32 %v934, 4
      %v936 = vand.u32 %v934, 15
      %v937 = vsub.s32 0, %v936
      %v938 = vsel %vm932, %v937, %v936
      %vm939 = vcmp.lt.s32.totalorder %v651, 0
      %v940 = vsub.s32 0, %v651
      %v941 = vsel %vm939, %v940, %v651
      %v942 = vshrl.u32 %v941, 4
      %v943 = vand.u32 %v941, 15
      %v944 = vsub.s32 0, %v943
      %v945 = vsel %vm939, %v944, %v943
      %vm946 = vcmp.lt.s32.totalorder %v652, 0
      %v947 = vsub.s32 0, %v652
      %v948 = vsel %vm946, %v947, %v652
      %v949 = vshrl.u32 %v948, 4
      %v950 = vand.u32 %v948, 15
      %v951 = vsub.s32 0, %v950
      %v952 = vsel %vm946, %v951, %v950
      %vm953 = vcmp.lt.s32.totalorder %v653, 0
      %v954 = vsub.s32 0, %v653
      %v955 = vsel %vm953, %v954, %v653
      %v956 = vshrl.u32 %v955, 4
      %v957 = vand.u32 %v955, 15
      %v958 = vsub.s32 0, %v957
      %v959 = vsel %vm953, %v958, %v957
      %vm960 = vcmp.lt.s32.totalorder %v654, 0
      %v961 = vsub.s32 0, %v654
      %v962 = vsel %vm960, %v961, %v654
      %v963 = vshrl.u32 %v962, 4
      %v964 = vand.u32 %v962, 15
      %v965 = vsub.s32 0, %v964
      %v966 = vsel %vm960, %v965, %v964
      %vm967 = vcmp.lt.s32.totalorder %v655, 0
      %v968 = vsub.s32 0, %v655
      %v969 = vsel %vm967, %v968, %v655
      %v970 = vshrl.u32 %v969, 4
      %v971 = vand.u32 %v969, 15
      %v972 = vsub.s32 0, %v971
      %v973 = vsel %vm967, %v972, %v971
      %vm974 = vcmp.lt.s32.totalorder %v656, 0
      %v975 = vsub.s32 0, %v656
      %v976 = vsel %vm974, %v975, %v656
      %v977 = vshrl.u32 %v976, 4
      %v978 = vand.u32 %v976, 15
      %v979 = vsub.s32 0, %v978
      %v980 = vsel %vm974, %v979, %v978
      %vm981 = vcmp.lt.s32.totalorder %v657, 0
      %v982 = vsub.s32 0, %v657
      %v983 = vsel %vm981, %v982, %v657
      %v984 = vshrl.u32 %v983, 4
      %v985 = vand.u32 %v983, 15
      %v986 = vsub.s32 0, %v985
      %v987 = vsel %vm981, %v986, %v985
      %vm988 = vcmp.lt.s32.totalorder %v658, 0
      %v989 = vsub.s32 0, %v658
      %v990 = vsel %vm988, %v989, %v658
      %v991 = vshrl.u32 %v990, 4
      %v992 = vand.u32 %v990, 15
      %v993 = vsub.s32 0, %v992
      %v994 = vsel %vm988, %v993, %v992
      %vm995 = vcmp.ne.s32.totalorder %v665, 0
      %vm996 = vcmp.ne.s32.totalorder %v672, 0
      %vm997 = vcmp.ne.s32.totalorder %v679, 0
      %vm998 = vcmp.ne.s32.totalorder %v686, 0
      %vm999 = vcmp.ne.s32.totalorder %v693, 0
      %vm1000 = vcmp.ne.s32.totalorder %v700, 0
      %vm1001 = vcmp.ne.s32.totalorder %v707, 0
      %vm1002 = vcmp.ne.s32.totalorder %v714, 0
      %vm1003 = vcmp.ne.s32.totalorder %v721, 0
      %vm1004 = vcmp.ne.s32.totalorder %v728, 0
      %vm1005 = vcmp.ne.s32.totalorder %v735, 0
      %vm1006 = vcmp.ne.s32.totalorder %v742, 0
      %vm1007 = vcmp.ne.s32.totalorder %v749, 0
      %vm1008 = vcmp.ne.s32.totalorder %v756, 0
      %vm1009 = vcmp.ne.s32.totalorder %v763, 0
      %vm1010 = vcmp.ne.s32.totalorder %v770, 0
      %vm1011 = vcmp.ne.s32.totalorder %v777, 0
      %vm1012 = vcmp.ne.s32.totalorder %v784, 0
      %vm1013 = vcmp.ne.s32.totalorder %v791, 0
      %vm1014 = vcmp.ne.s32.totalorder %v798, 0
      %vm1015 = vcmp.ne.s32.totalorder %v805, 0
      %vm1016 = vcmp.ne.s32.totalorder %v812, 0
      %vm1017 = vcmp.ne.s32.totalorder %v819, 0
      %vm1018 = vcmp.ne.s32.totalorder %v826, 0
      %vm1019 = vcmp.ne.s32.totalorder %v833, 0
      %vm1020 = vcmp.ne.s32.totalorder %v840, 0
      %vm1021 = vcmp.ne.s32.totalorder %v847, 0
      %vm1022 = vcmp.ne.s32.totalorder %v854, 0
      %vm1023 = vcmp.ne.s32.totalorder %v861, 0
      %vm1024 = vcmp.ne.s32.totalorder %v868, 0
      %vm1025 = vcmp.ne.s32.totalorder %v875, 0
      %vm1026 = vcmp.ne.s32.totalorder %v882, 0
      %vm1027 = vcmp.ne.s32.totalorder %v889, 0
      %vm1028 = vcmp.ne.s32.totalorder %v896, 0
      %vm1029 = vcmp.ne.s32.totalorder %v903, 0
      %vm1030 = vcmp.ne.s32.totalorder %v910, 0
      %vm1031 = vcmp.ne.s32.totalorder %v917, 0
      %vm1032 = vcmp.ne.s32.totalorder %v924, 0
      %vm1033 = vcmp.ne.s32.totalorder %v931, 0
      %vm1034 = vcmp.ne.s32.totalorder %v938, 0
      %vm1035 = vcmp.ne.s32.totalorder %v945, 0
      %vm1036 = vcmp.ne.s32.totalorder %v952, 0
      %vm1037 = vcmp.ne.s32.totalorder %v959, 0
      %vm1038 = vcmp.ne.s32.totalorder %v966, 0
      %vm1039 = vcmp.ne.s32.totalorder %v973, 0
      %vm1040 = vcmp.ne.s32.totalorder %v980, 0
      %vm1041 = vcmp.ne.s32.totalorder %v987, 0
      %vm1042 = vcmp.ne.s32.totalorder %v994, 0
      %vm1043 = vcmp.lt.s32.totalorder %v665, 0
      %vm1044 = vcmp.lt.s32.totalorder %v672, 0
      %vm1045 = vcmp.lt.s32.totalorder %v679, 0
      %vm1046 = vcmp.lt.s32.totalorder %v686, 0
      %vm1047 = vcmp.lt.s32.totalorder %v693, 0
      %vm1048 = vcmp.lt.s32.totalorder %v700, 0
      %vm1049 = vcmp.lt.s32.totalorder %v707, 0
      %vm1050 = vcmp.lt.s32.totalorder %v714, 0
      %vm1051 = vcmp.lt.s32.totalorder %v721, 0
      %vm1052 = vcmp.lt.s32.totalorder %v728, 0
      %vm1053 = vcmp.lt.s32.totalorder %v735, 0
      %vm1054 = vcmp.lt.s32.totalorder %v742, 0
      %vm1055 = vcmp.lt.s32.totalorder %v749, 0
      %vm1056 = vcmp.lt.s32.totalorder %v756, 0
      %vm1057 = vcmp.lt.s32.totalorder %v763, 0
      %vm1058 = vcmp.lt.s32.totalorder %v770, 0
      %vm1059 = vcmp.lt.s32.totalorder %v777, 0
      %vm1060 = vcmp.lt.s32.totalorder %v784, 0
      %vm1061 = vcmp.lt.s32.totalorder %v791, 0
      %vm1062 = vcmp.lt.s32.totalorder %v798, 0
      %vm1063 = vcmp.lt.s32.totalorder %v805, 0
      %vm1064 = vcmp.lt.s32.totalorder %v812, 0
      %vm1065 = vcmp.lt.s32.totalorder %v819, 0
      %vm1066 = vcmp.lt.s32.totalorder %v826, 0
      %vm1067 = vcmp.lt.s32.totalorder %v833, 0
      %vm1068 = vcmp.lt.s32.totalorder %v840, 0
      %vm1069 = vcmp.lt.s32.totalorder %v847, 0
      %vm1070 = vcmp.lt.s32.totalorder %v854, 0
      %vm1071 = vcmp.lt.s32.totalorder %v861, 0
      %vm1072 = vcmp.lt.s32.totalorder %v868, 0
      %vm1073 = vcmp.lt.s32.totalorder %v875, 0
      %vm1074 = vcmp.lt.s32.totalorder %v882, 0
      %vm1075 = vcmp.lt.s32.totalorder %v889, 0
      %vm1076 = vcmp.lt.s32.totalorder %v896, 0
      %vm1077 = vcmp.lt.s32.totalorder %v903, 0
      %vm1078 = vcmp.lt.s32.totalorder %v910, 0
      %vm1079 = vcmp.lt.s32.totalorder %v917, 0
      %vm1080 = vcmp.lt.s32.totalorder %v924, 0
      %vm1081 = vcmp.lt.s32.totalorder %v931, 0
      %vm1082 = vcmp.lt.s32.totalorder %v938, 0
      %vm1083 = vcmp.lt.s32.totalorder %v945, 0
      %vm1084 = vcmp.lt.s32.totalorder %v952, 0
      %vm1085 = vcmp.lt.s32.totalorder %v959, 0
      %vm1086 = vcmp.lt.s32.totalorder %v966, 0
      %vm1087 = vcmp.lt.s32.totalorder %v973, 0
      %vm1088 = vcmp.lt.s32.totalorder %v980, 0
      %vm1089 = vcmp.lt.s32.totalorder %v987, 0
      %vm1090 = vcmp.lt.s32.totalorder %v994, 0
      %vm1091 = vmand %vm1043, %vm995
      %vm1092 = vmand %vm1044, %vm996
      %vm1093 = vmand %vm1045, %vm997
      %vm1094 = vmand %vm1046, %vm998
      %vm1095 = vmand %vm1047, %vm999
      %vm1096 = vmand %vm1048, %vm1000
      %vm1097 = vmand %vm1049, %vm1001
      %vm1098 = vmand %vm1050, %vm1002
      %vm1099 = vmand %vm1051, %vm1003
      %vm1100 = vmand %vm1052, %vm1004
      %vm1101 = vmand %vm1053, %vm1005
      %vm1102 = vmand %vm1054, %vm1006
      %vm1103 = vmand %vm1055, %vm1007
      %vm1104 = vmand %vm1056, %vm1008
      %vm1105 = vmand %vm1057, %vm1009
      %vm1106 = vmand %vm1058, %vm1010
      %vm1107 = vmand %vm1059, %vm1011
      %vm1108 = vmand %vm1060, %vm1012
      %vm1109 = vmand %vm1061, %vm1013
      %vm1110 = vmand %vm1062, %vm1014
      %vm1111 = vmand %vm1063, %vm1015
      %vm1112 = vmand %vm1064, %vm1016
      %vm1113 = vmand %vm1065, %vm1017
      %vm1114 = vmand %vm1066, %vm1018
      %vm1115 = vmand %vm1067, %vm1019
      %vm1116 = vmand %vm1068, %vm1020
      %vm1117 = vmand %vm1069, %vm1021
      %vm1118 = vmand %vm1070, %vm1022
      %vm1119 = vmand %vm1071, %vm1023
      %vm1120 = vmand %vm1072, %vm1024
      %vm1121 = vmand %vm1073, %vm1025
      %vm1122 = vmand %vm1074, %vm1026
      %vm1123 = vmand %vm1075, %vm1027
      %vm1124 = vmand %vm1076, %vm1028
      %vm1125 = vmand %vm1077, %vm1029
      %vm1126 = vmand %vm1078, %vm1030
      %vm1127 = vmand %vm1079, %vm1031
      %vm1128 = vmand %vm1080, %vm1032
      %vm1129 = vmand %vm1081, %vm1033
      %vm1130 = vmand %vm1082, %vm1034
      %vm1131 = vmand %vm1083, %vm1035
      %vm1132 = vmand %vm1084, %vm1036
      %vm1133 = vmand %vm1085, %vm1037
      %vm1134 = vmand %vm1086, %vm1038
      %vm1135 = vmand %vm1087, %vm1039
      %vm1136 = vmand %vm1088, %vm1040
      %vm1137 = vmand %vm1089, %vm1041
      %vm1138 = vmand %vm1090, %vm1042
      %v1139 = vadd.s32 %v665, 16
      %v1140 = vadd.s32 %v672, 16
      %v1141 = vadd.s32 %v679, 16
      %v1142 = vadd.s32 %v686, 16
      %v1143 = vadd.s32 %v693, 16
      %v1144 = vadd.s32 %v700, 16
      %v1145 = vadd.s32 %v707, 16
      %v1146 = vadd.s32 %v714, 16
      %v1147 = vadd.s32 %v721, 16
      %v1148 = vadd.s32 %v728, 16
      %v1149 = vadd.s32 %v735, 16
      %v1150 = vadd.s32 %v742, 16
      %v1151 = vadd.s32 %v749, 16
      %v1152 = vadd.s32 %v756, 16
      %v1153 = vadd.s32 %v763, 16
      %v1154 = vadd.s32 %v770, 16
      %v1155 = vadd.s32 %v777, 16
      %v1156 = vadd.s32 %v784, 16
      %v1157 = vadd.s32 %v791, 16
      %v1158 = vadd.s32 %v798, 16
      %v1159 = vadd.s32 %v805, 16
      %v1160 = vadd.s32 %v812, 16
      %v1161 = vadd.s32 %v819, 16
      %v1162 = vadd.s32 %v826, 16
      %v1163 = vadd.s32 %v833, 16
      %v1164 = vadd.s32 %v840, 16
      %v1165 = vadd.s32 %v847, 16
      %v1166 = vadd.s32 %v854, 16
      %v1167 = vadd.s32 %v861, 16
      %v1168 = vadd.s32 %v868, 16
      %v1169 = vadd.s32 %v875, 16
      %v1170 = vadd.s32 %v882, 16
      %v1171 = vadd.s32 %v889, 16
      %v1172 = vadd.s32 %v896, 16
      %v1173 = vadd.s32 %v903, 16
      %v1174 = vadd.s32 %v910, 16
      %v1175 = vadd.s32 %v917, 16
      %v1176 = vadd.s32 %v924, 16
      %v1177 = vadd.s32 %v931, 16
      %v1178 = vadd.s32 %v938, 16
      %v1179 = vadd.s32 %v945, 16
      %v1180 = vadd.s32 %v952, 16
      %v1181 = vadd.s32 %v959, 16
      %v1182 = vadd.s32 %v966, 16
      %v1183 = vadd.s32 %v973, 16
      %v1184 = vadd.s32 %v980, 16
      %v1185 = vadd.s32 %v987, 16
      %v1186 = vadd.s32 %v994, 16
      %v1187 = vsel %vm1091, %v1139, %v665
      %v1188 = vsel %vm1092, %v1140, %v672
      %v1189 = vsel %vm1093, %v1141, %v679
      %v1190 = vsel %vm1094, %v1142, %v686
      %v1191 = vsel %vm1095, %v1143, %v693
      %v1192 = vsel %vm1096, %v1144, %v700
      %v1193 = vsel %vm1097, %v1145, %v707
      %v1194 = vsel %vm1098, %v1146, %v714
      %v1195 = vsel %vm1099, %v1147, %v721
      %v1196 = vsel %vm1100, %v1148, %v728
      %v1197 = vsel %vm1101, %v1149, %v735
      %v1198 = vsel %vm1102, %v1150, %v742
      %v1199 = vsel %vm1103, %v1151, %v749
      %v1200 = vsel %vm1104, %v1152, %v756
      %v1201 = vsel %vm1105, %v1153, %v763
      %v1202 = vsel %vm1106, %v1154, %v770
      %v1203 = vsel %vm1107, %v1155, %v777
      %v1204 = vsel %vm1108, %v1156, %v784
      %v1205 = vsel %vm1109, %v1157, %v791
      %v1206 = vsel %vm1110, %v1158, %v798
      %v1207 = vsel %vm1111, %v1159, %v805
      %v1208 = vsel %vm1112, %v1160, %v812
      %v1209 = vsel %vm1113, %v1161, %v819
      %v1210 = vsel %vm1114, %v1162, %v826
      %v1211 = vsel %vm1115, %v1163, %v833
      %v1212 = vsel %vm1116, %v1164, %v840
      %v1213 = vsel %vm1117, %v1165, %v847
      %v1214 = vsel %vm1118, %v1166, %v854
      %v1215 = vsel %vm1119, %v1167, %v861
      %v1216 = vsel %vm1120, %v1168, %v868
      %v1217 = vsel %vm1121, %v1169, %v875
      %v1218 = vsel %vm1122, %v1170, %v882
      %v1219 = vsel %vm1123, %v1171, %v889
      %v1220 = vsel %vm1124, %v1172, %v896
      %v1221 = vsel %vm1125, %v1173, %v903
      %v1222 = vsel %vm1126, %v1174, %v910
      %v1223 = vsel %vm1127, %v1175, %v917
      %v1224 = vsel %vm1128, %v1176, %v924
      %v1225 = vsel %vm1129, %v1177, %v931
      %v1226 = vsel %vm1130, %v1178, %v938
      %v1227 = vsel %vm1131, %v1179, %v945
      %v1228 = vsel %vm1132, %v1180, %v952
      %v1229 = vsel %vm1133, %v1181, %v959
      %v1230 = vsel %vm1134, %v1182, %v966
      %v1231 = vsel %vm1135, %v1183, %v973
      %v1232 = vsel %vm1136, %v1184, %v980
      %v1233 = vsel %vm1137, %v1185, %v987
      %v1234 = vsel %vm1138, %v1186, %v994
      %vm1235 = vcmp.ne.s32.totalorder %v1187, 0
      %vm1236 = vcmp.ne.s32.totalorder %v1188, 0
      %vm1237 = vcmp.ne.s32.totalorder %v1189, 0
      %vm1238 = vcmp.ne.s32.totalorder %v1190, 0
      %vm1239 = vcmp.ne.s32.totalorder %v1191, 0
      %vm1240 = vcmp.ne.s32.totalorder %v1192, 0
      %vm1241 = vcmp.ne.s32.totalorder %v1193, 0
      %vm1242 = vcmp.ne.s32.totalorder %v1194, 0
      %vm1243 = vcmp.ne.s32.totalorder %v1195, 0
      %vm1244 = vcmp.ne.s32.totalorder %v1196, 0
      %vm1245 = vcmp.ne.s32.totalorder %v1197, 0
      %vm1246 = vcmp.ne.s32.totalorder %v1198, 0
      %vm1247 = vcmp.ne.s32.totalorder %v1199, 0
      %vm1248 = vcmp.ne.s32.totalorder %v1200, 0
      %vm1249 = vcmp.ne.s32.totalorder %v1201, 0
      %vm1250 = vcmp.ne.s32.totalorder %v1202, 0
      %vm1251 = vcmp.ne.s32.totalorder %v1203, 0
      %vm1252 = vcmp.ne.s32.totalorder %v1204, 0
      %vm1253 = vcmp.ne.s32.totalorder %v1205, 0
      %vm1254 = vcmp.ne.s32.totalorder %v1206, 0
      %vm1255 = vcmp.ne.s32.totalorder %v1207, 0
      %vm1256 = vcmp.ne.s32.totalorder %v1208, 0
      %vm1257 = vcmp.ne.s32.totalorder %v1209, 0
      %vm1258 = vcmp.ne.s32.totalorder %v1210, 0
      %vm1259 = vcmp.ne.s32.totalorder %v1211, 0
      %vm1260 = vcmp.ne.s32.totalorder %v1212, 0
      %vm1261 = vcmp.ne.s32.totalorder %v1213, 0
      %vm1262 = vcmp.ne.s32.totalorder %v1214, 0
      %vm1263 = vcmp.ne.s32.totalorder %v1215, 0
      %vm1264 = vcmp.ne.s32.totalorder %v1216, 0
      %vm1265 = vcmp.ne.s32.totalorder %v1217, 0
      %vm1266 = vcmp.ne.s32.totalorder %v1218, 0
      %vm1267 = vcmp.ne.s32.totalorder %v1219, 0
      %vm1268 = vcmp.ne.s32.totalorder %v1220, 0
      %vm1269 = vcmp.ne.s32.totalorder %v1221, 0
      %vm1270 = vcmp.ne.s32.totalorder %v1222, 0
      %vm1271 = vcmp.ne.s32.totalorder %v1223, 0
      %vm1272 = vcmp.ne.s32.totalorder %v1224, 0
      %vm1273 = vcmp.ne.s32.totalorder %v1225, 0
      %vm1274 = vcmp.ne.s32.totalorder %v1226, 0
      %vm1275 = vcmp.ne.s32.totalorder %v1227, 0
      %vm1276 = vcmp.ne.s32.totalorder %v1228, 0
      %vm1277 = vcmp.ne.s32.totalorder %v1229, 0
      %vm1278 = vcmp.ne.s32.totalorder %v1230, 0
      %vm1279 = vcmp.ne.s32.totalorder %v1231, 0
      %vm1280 = vcmp.ne.s32.totalorder %v1232, 0
      %vm1281 = vcmp.ne.s32.totalorder %v1233, 0
      %vm1282 = vcmp.ne.s32.totalorder %v1234, 0
      %v1283 = vsel %vm1235, 1, 0
      %v1284 = vsel %vm1236, 1, 0
      %v1285 = vsel %vm1237, 1, 0
      %v1286 = vsel %vm1238, 1, 0
      %v1287 = vsel %vm1239, 1, 0
      %v1288 = vsel %vm1240, 1, 0
      %v1289 = vsel %vm1241, 1, 0
      %v1290 = vsel %vm1242, 1, 0
      %v1291 = vsel %vm1243, 1, 0
      %v1292 = vsel %vm1244, 1, 0
      %v1293 = vsel %vm1245, 1, 0
      %v1294 = vsel %vm1246, 1, 0
      %v1295 = vsel %vm1247, 1, 0
      %v1296 = vsel %vm1248, 1, 0
      %v1297 = vsel %vm1249, 1, 0
      %v1298 = vsel %vm1250, 1, 0
      %v1299 = vsel %vm1251, 1, 0
      %v1300 = vsel %vm1252, 1, 0
      %v1301 = vsel %vm1253, 1, 0
      %v1302 = vsel %vm1254, 1, 0
      %v1303 = vsel %vm1255, 1, 0
      %v1304 = vsel %vm1256, 1, 0
      %v1305 = vsel %vm1257, 1, 0
      %v1306 = vsel %vm1258, 1, 0
      %v1307 = vsel %vm1259, 1, 0
      %v1308 = vsel %vm1260, 1, 0
      %v1309 = vsel %vm1261, 1, 0
      %v1310 = vsel %vm1262, 1, 0
      %v1311 = vsel %vm1263, 1, 0
      %v1312 = vsel %vm1264, 1, 0
      %v1313 = vsel %vm1265, 1, 0
      %v1314 = vsel %vm1266, 1, 0
      %v1315 = vsel %vm1267, 1, 0
      %v1316 = vsel %vm1268, 1, 0
      %v1317 = vsel %vm1269, 1, 0
      %v1318 = vsel %vm1270, 1, 0
      %v1319 = vsel %vm1271, 1, 0
      %v1320 = vsel %vm1272, 1, 0
      %v1321 = vsel %vm1273, 1, 0
      %v1322 = vsel %vm1274, 1, 0
      %v1323 = vsel %vm1275, 1, 0
      %v1324 = vsel %vm1276, 1, 0
      %v1325 = vsel %vm1277, 1, 0
      %v1326 = vsel %vm1278, 1, 0
      %v1327 = vsel %vm1279, 1, 0
      %v1328 = vsel %vm1280, 1, 0
      %v1329 = vsel %vm1281, 1, 0
      %v1330 = vsel %vm1282, 1, 0
      %v1331 = vcvt.s32.f32 %v1283
      %v1332 = vcvt.s32.f32 %v1284
      %v1333 = vcvt.s32.f32 %v1285
      %v1334 = vcvt.s32.f32 %v1286
      %v1335 = vcvt.s32.f32 %v1287
      %v1336 = vcvt.s32.f32 %v1288
      %v1337 = vcvt.s32.f32 %v1289
      %v1338 = vcvt.s32.f32 %v1290
      %v1339 = vcvt.s32.f32 %v1291
      %v1340 = vcvt.s32.f32 %v1292
      %v1341 = vcvt.s32.f32 %v1293
      %v1342 = vcvt.s32.f32 %v1294
      %v1343 = vcvt.s32.f32 %v1295
      %v1344 = vcvt.s32.f32 %v1296
      %v1345 = vcvt.s32.f32 %v1297
      %v1346 = vcvt.s32.f32 %v1298
      %v1347 = vcvt.s32.f32 %v1299
      %v1348 = vcvt.s32.f32 %v1300
      %v1349 = vcvt.s32.f32 %v1301
      %v1350 = vcvt.s32.f32 %v1302
      %v1351 = vcvt.s32.f32 %v1303
      %v1352 = vcvt.s32.f32 %v1304
      %v1353 = vcvt.s32.f32 %v1305
      %v1354 = vcvt.s32.f32 %v1306
      %v1355 = vcvt.s32.f32 %v1307
      %v1356 = vcvt.s32.f32 %v1308
      %v1357 = vcvt.s32.f32 %v1309
      %v1358 = vcvt.s32.f32 %v1310
      %v1359 = vcvt.s32.f32 %v1311
      %v1360 = vcvt.s32.f32 %v1312
      %v1361 = vcvt.s32.f32 %v1313
      %v1362 = vcvt.s32.f32 %v1314
      %v1363 = vcvt.s32.f32 %v1315
      %v1364 = vcvt.s32.f32 %v1316
      %v1365 = vcvt.s32.f32 %v1317
      %v1366 = vcvt.s32.f32 %v1318
      %v1367 = vcvt.s32.f32 %v1319
      %v1368 = vcvt.s32.f32 %v1320
      %v1369 = vcvt.s32.f32 %v1321
      %v1370 = vcvt.s32.f32 %v1322
      %v1371 = vcvt.s32.f32 %v1323
      %v1372 = vcvt.s32.f32 %v1324
      %v1373 = vcvt.s32.f32 %v1325
      %v1374 = vcvt.s32.f32 %v1326
      %v1375 = vcvt.s32.f32 %v1327
      %v1376 = vcvt.s32.f32 %v1328
      %v1377 = vcvt.s32.f32 %v1329
      %v1378 = vcvt.s32.f32 %v1330
      %v1379 = vpack.c.bf16 %v1332, %v1331
      %v1380 = vpack.c.bf16 %v1334, %v1333
      %v1381 = vpack.c.bf16 %v1336, %v1335
      %v1382 = vpack.c.bf16 %v1338, %v1337
      %v1383 = vpack.c.bf16 %v1340, %v1339
      %v1384 = vpack.c.bf16 %v1342, %v1341
      %v1385 = vpack.c.bf16 %v1344, %v1343
      %v1386 = vpack.c.bf16 %v1346, %v1345
      %v1387 = vpack.c.bf16 %v1348, %v1347
      %v1388 = vpack.c.bf16 %v1350, %v1349
      %v1389 = vpack.c.bf16 %v1352, %v1351
      %v1390 = vpack.c.bf16 %v1354, %v1353
      %v1391 = vpack.c.bf16 %v1356, %v1355
      %v1392 = vpack.c.bf16 %v1358, %v1357
      %v1393 = vpack.c.bf16 %v1360, %v1359
      %v1394 = vpack.c.bf16 %v1362, %v1361
      %v1395 = vpack.c.bf16 %v1364, %v1363
      %v1396 = vpack.c.bf16 %v1366, %v1365
      %v1397 = vpack.c.bf16 %v1368, %v1367
      %v1398 = vpack.c.bf16 %v1370, %v1369
      %v1399 = vpack.c.bf16 %v1372, %v1371
      %v1400 = vpack.c.bf16 %v1374, %v1373
      %v1401 = vpack.c.bf16 %v1376, %v1375
      %v1402 = vpack.c.bf16 %v1378, %v1377
      %vm1403 = vcmp.ne.s32.totalorder %v1187, 15
      %vm1404 = vcmp.ne.s32.totalorder %v1188, 15
      %vm1405 = vcmp.ne.s32.totalorder %v1189, 15
      %vm1406 = vcmp.ne.s32.totalorder %v1190, 15
      %vm1407 = vcmp.ne.s32.totalorder %v1191, 15
      %vm1408 = vcmp.ne.s32.totalorder %v1192, 15
      %vm1409 = vcmp.ne.s32.totalorder %v1193, 15
      %vm1410 = vcmp.ne.s32.totalorder %v1194, 15
      %vm1411 = vcmp.ne.s32.totalorder %v1195, 15
      %vm1412 = vcmp.ne.s32.totalorder %v1196, 15
      %vm1413 = vcmp.ne.s32.totalorder %v1197, 15
      %vm1414 = vcmp.ne.s32.totalorder %v1198, 15
      %vm1415 = vcmp.ne.s32.totalorder %v1199, 15
      %vm1416 = vcmp.ne.s32.totalorder %v1200, 15
      %vm1417 = vcmp.ne.s32.totalorder %v1201, 15
      %vm1418 = vcmp.ne.s32.totalorder %v1202, 15
      %vm1419 = vcmp.ne.s32.totalorder %v1203, 15
      %vm1420 = vcmp.ne.s32.totalorder %v1204, 15
      %vm1421 = vcmp.ne.s32.totalorder %v1205, 15
      %vm1422 = vcmp.ne.s32.totalorder %v1206, 15
      %vm1423 = vcmp.ne.s32.totalorder %v1207, 15
      %vm1424 = vcmp.ne.s32.totalorder %v1208, 15
      %vm1425 = vcmp.ne.s32.totalorder %v1209, 15
      %vm1426 = vcmp.ne.s32.totalorder %v1210, 15
      %vm1427 = vcmp.ne.s32.totalorder %v1211, 15
      %vm1428 = vcmp.ne.s32.totalorder %v1212, 15
      %vm1429 = vcmp.ne.s32.totalorder %v1213, 15
      %vm1430 = vcmp.ne.s32.totalorder %v1214, 15
      %vm1431 = vcmp.ne.s32.totalorder %v1215, 15
      %vm1432 = vcmp.ne.s32.totalorder %v1216, 15
      %vm1433 = vcmp.ne.s32.totalorder %v1217, 15
      %vm1434 = vcmp.ne.s32.totalorder %v1218, 15
      %vm1435 = vcmp.ne.s32.totalorder %v1219, 15
      %vm1436 = vcmp.ne.s32.totalorder %v1220, 15
      %vm1437 = vcmp.ne.s32.totalorder %v1221, 15
      %vm1438 = vcmp.ne.s32.totalorder %v1222, 15
      %vm1439 = vcmp.ne.s32.totalorder %v1223, 15
      %vm1440 = vcmp.ne.s32.totalorder %v1224, 15
      %vm1441 = vcmp.ne.s32.totalorder %v1225, 15
      %vm1442 = vcmp.ne.s32.totalorder %v1226, 15
      %vm1443 = vcmp.ne.s32.totalorder %v1227, 15
      %vm1444 = vcmp.ne.s32.totalorder %v1228, 15
      %vm1445 = vcmp.ne.s32.totalorder %v1229, 15
      %vm1446 = vcmp.ne.s32.totalorder %v1230, 15
      %vm1447 = vcmp.ne.s32.totalorder %v1231, 15
      %vm1448 = vcmp.ne.s32.totalorder %v1232, 15
      %vm1449 = vcmp.ne.s32.totalorder %v1233, 15
      %vm1450 = vcmp.ne.s32.totalorder %v1234, 15
      %v1451 = vsel %vm1403, 1, 0
      %v1452 = vsel %vm1404, 1, 0
      %v1453 = vsel %vm1405, 1, 0
      %v1454 = vsel %vm1406, 1, 0
      %v1455 = vsel %vm1407, 1, 0
      %v1456 = vsel %vm1408, 1, 0
      %v1457 = vsel %vm1409, 1, 0
      %v1458 = vsel %vm1410, 1, 0
      %v1459 = vsel %vm1411, 1, 0
      %v1460 = vsel %vm1412, 1, 0
      %v1461 = vsel %vm1413, 1, 0
      %v1462 = vsel %vm1414, 1, 0
      %v1463 = vsel %vm1415, 1, 0
      %v1464 = vsel %vm1416, 1, 0
      %v1465 = vsel %vm1417, 1, 0
      %v1466 = vsel %vm1418, 1, 0
      %v1467 = vsel %vm1419, 1, 0
      %v1468 = vsel %vm1420, 1, 0
      %v1469 = vsel %vm1421, 1, 0
      %v1470 = vsel %vm1422, 1, 0
      %v1471 = vsel %vm1423, 1, 0
      %v1472 = vsel %vm1424, 1, 0
      %v1473 = vsel %vm1425, 1, 0
      %v1474 = vsel %vm1426, 1, 0
      %v1475 = vsel %vm1427, 1, 0
      %v1476 = vsel %vm1428, 1, 0
      %v1477 = vsel %vm1429, 1, 0
      %v1478 = vsel %vm1430, 1, 0
      %v1479 = vsel %vm1431, 1, 0
      %v1480 = vsel %vm1432, 1, 0
      %v1481 = vsel %vm1433, 1, 0
      %v1482 = vsel %vm1434, 1, 0
      %v1483 = vsel %vm1435, 1, 0
      %v1484 = vsel %vm1436, 1, 0
      %v1485 = vsel %vm1437, 1, 0
      %v1486 = vsel %vm1438, 1, 0
      %v1487 = vsel %vm1439, 1, 0
      %v1488 = vsel %vm1440, 1, 0
      %v1489 = vsel %vm1441, 1, 0
      %v1490 = vsel %vm1442, 1, 0
      %v1491 = vsel %vm1443, 1, 0
      %v1492 = vsel %vm1444, 1, 0
      %v1493 = vsel %vm1445, 1, 0
      %v1494 = vsel %vm1446, 1, 0
      %v1495 = vsel %vm1447, 1, 0
      %v1496 = vsel %vm1448, 1, 0
      %v1497 = vsel %vm1449, 1, 0
      %v1498 = vsel %vm1450, 1, 0
      %v1499 = vcvt.s32.f32 %v1451
      %v1500 = vcvt.s32.f32 %v1452
      %v1501 = vcvt.s32.f32 %v1453
      %v1502 = vcvt.s32.f32 %v1454
      %v1503 = vcvt.s32.f32 %v1455
      %v1504 = vcvt.s32.f32 %v1456
      %v1505 = vcvt.s32.f32 %v1457
      %v1506 = vcvt.s32.f32 %v1458
      %v1507 = vcvt.s32.f32 %v1459
      %v1508 = vcvt.s32.f32 %v1460
      %v1509 = vcvt.s32.f32 %v1461
      %v1510 = vcvt.s32.f32 %v1462
      %v1511 = vcvt.s32.f32 %v1463
      %v1512 = vcvt.s32.f32 %v1464
      %v1513 = vcvt.s32.f32 %v1465
      %v1514 = vcvt.s32.f32 %v1466
      %v1515 = vcvt.s32.f32 %v1467
      %v1516 = vcvt.s32.f32 %v1468
      %v1517 = vcvt.s32.f32 %v1469
      %v1518 = vcvt.s32.f32 %v1470
      %v1519 = vcvt.s32.f32 %v1471
      %v1520 = vcvt.s32.f32 %v1472
      %v1521 = vcvt.s32.f32 %v1473
      %v1522 = vcvt.s32.f32 %v1474
      %v1523 = vcvt.s32.f32 %v1475
      %v1524 = vcvt.s32.f32 %v1476
      %v1525 = vcvt.s32.f32 %v1477
      %v1526 = vcvt.s32.f32 %v1478
      %v1527 = vcvt.s32.f32 %v1479
      %v1528 = vcvt.s32.f32 %v1480
      %v1529 = vcvt.s32.f32 %v1481
      %v1530 = vcvt.s32.f32 %v1482
      %v1531 = vcvt.s32.f32 %v1483
      %v1532 = vcvt.s32.f32 %v1484
      %v1533 = vcvt.s32.f32 %v1485
      %v1534 = vcvt.s32.f32 %v1486
      %v1535 = vcvt.s32.f32 %v1487
      %v1536 = vcvt.s32.f32 %v1488
      %v1537 = vcvt.s32.f32 %v1489
      %v1538 = vcvt.s32.f32 %v1490
      %v1539 = vcvt.s32.f32 %v1491
      %v1540 = vcvt.s32.f32 %v1492
      %v1541 = vcvt.s32.f32 %v1493
      %v1542 = vcvt.s32.f32 %v1494
      %v1543 = vcvt.s32.f32 %v1495
      %v1544 = vcvt.s32.f32 %v1496
      %v1545 = vcvt.s32.f32 %v1497
      %v1546 = vcvt.s32.f32 %v1498
      %v1547 = vpack.c.bf16 %v1500, %v1499
      %v1548 = vpack.c.bf16 %v1502, %v1501
      %v1549 = vpack.c.bf16 %v1504, %v1503
      %v1550 = vpack.c.bf16 %v1506, %v1505
      %v1551 = vpack.c.bf16 %v1508, %v1507
      %v1552 = vpack.c.bf16 %v1510, %v1509
      %v1553 = vpack.c.bf16 %v1512, %v1511
      %v1554 = vpack.c.bf16 %v1514, %v1513
      %v1555 = vpack.c.bf16 %v1516, %v1515
      %v1556 = vpack.c.bf16 %v1518, %v1517
      %v1557 = vpack.c.bf16 %v1520, %v1519
      %v1558 = vpack.c.bf16 %v1522, %v1521
      %v1559 = vpack.c.bf16 %v1524, %v1523
      %v1560 = vpack.c.bf16 %v1526, %v1525
      %v1561 = vpack.c.bf16 %v1528, %v1527
      %v1562 = vpack.c.bf16 %v1530, %v1529
      %v1563 = vpack.c.bf16 %v1532, %v1531
      %v1564 = vpack.c.bf16 %v1534, %v1533
      %v1565 = vpack.c.bf16 %v1536, %v1535
      %v1566 = vpack.c.bf16 %v1538, %v1537
      %v1567 = vpack.c.bf16 %v1540, %v1539
      %v1568 = vpack.c.bf16 %v1542, %v1541
      %v1569 = vpack.c.bf16 %v1544, %v1543
      %v1570 = vpack.c.bf16 %v1546, %v1545
      %v1571 = vld [vmem:[#allocation2] sm:$0xff]
      %v1572 = vld [vmem:[#allocation2 + $0x8] sm:$0xff]
      %v1573 = vld [vmem:[#allocation2 + $0x10] sm:$0xff]
      %v1574 = vld [vmem:[#allocation2 + $0x18] sm:$0xff]
      %v1575 = vld [vmem:[#allocation2 + $0x20] sm:$0xff]
      %v1576 = vld [vmem:[#allocation2 + $0x28] sm:$0xff]
      %v1577 = vld [vmem:[#allocation2 + $0x30] sm:$0xff]
      %v1578 = vld [vmem:[#allocation2 + $0x38] sm:$0xff]
      %v1579 = vld [vmem:[#allocation2 + $0x40] sm:$0xff]
      %v1580 = vld [vmem:[#allocation2 + $0x48] sm:$0xff]
      %v1581 = vld [vmem:[#allocation2 + $0x50] sm:$0xff]
      %v1582 = vld [vmem:[#allocation2 + $0x58] sm:$0xff]
      %v1583 = vld [vmem:[#allocation2 + $0x60] sm:$0xff]
      %v1584 = vld [vmem:[#allocation2 + $0x68] sm:$0xff]
      %v1585 = vld [vmem:[#allocation2 + $0x70] sm:$0xff]
      %v1586 = vld [vmem:[#allocation2 + $0x78] sm:$0xff]
      %v1587 = vld [vmem:[#allocation2 + $0x80] sm:$0xff]
      %v1588 = vld [vmem:[#allocation2 + $0x88] sm:$0xff]
      %v1589 = vld [vmem:[#allocation2 + $0x90] sm:$0xff]
      %v1590 = vld [vmem:[#allocation2 + $0x98] sm:$0xff]
      %v1591 = vld [vmem:[#allocation2 + $0xa0] sm:$0xff]
      %v1592 = vld [vmem:[#allocation2 + $0xa8] sm:$0xff]
      %v1593 = vld [vmem:[#allocation2 + $0xb0] sm:$0xff]
      %v1594 = vld [vmem:[#allocation2 + $0xb8] sm:$0xff]
      %v1596 = vshrl.u32 %v1594, 16
      %v1598 = vrot.slane %v1596, 7
      %vm1600 = vsmask.f32 256
      %v1602 = vshrl.u32 %v1571, 16
      %v1604 = vrot.slane %v1602, 7
      %v1605 = vshll.u32 %v1571, 16
      %v1607 = vor.u32 %v1604, %v1605
      %v1609 = vshrl.u32 %v1572, 16
      %v1611 = vrot.slane %v1609, 7
      %v1612 = vshll.u32 %v1572, 16
      %v1614 = vor.u32 %v1611, %v1612
      %v1615 = vsel %vm1600, %v1604, %v1614
      %v1617 = vshrl.u32 %v1573, 16
      %v1619 = vrot.slane %v1617, 7
      %v1620 = vshll.u32 %v1573, 16
      %v1622 = vor.u32 %v1619, %v1620
      %v1623 = vsel %vm1600, %v1611, %v1622
      %v1625 = vshrl.u32 %v1574, 16
      %v1627 = vrot.slane %v1625, 7
      %v1628 = vshll.u32 %v1574, 16
      %v1630 = vor.u32 %v1627, %v1628
      %v1631 = vsel %vm1600, %v1619, %v1630
      %v1633 = vshrl.u32 %v1575, 16
      %v1635 = vrot.slane %v1633, 7
      %v1636 = vshll.u32 %v1575, 16
      %v1638 = vor.u32 %v1635, %v1636
      %v1639 = vsel %vm1600, %v1627, %v1638
      %v1641 = vshrl.u32 %v1576, 16
      %v1643 = vrot.slane %v1641, 7
      %v1644 = vshll.u32 %v1576, 16
      %v1646 = vor.u32 %v1643, %v1644
      %v1647 = vsel %vm1600, %v1635, %v1646
      %v1649 = vshrl.u32 %v1577, 16
      %v1651 = vrot.slane %v1649, 7
      %v1652 = vshll.u32 %v1577, 16
      %v1654 = vor.u32 %v1651, %v1652
      %v1655 = vsel %vm1600, %v1643, %v1654
      %v1657 = vshrl.u32 %v1578, 16
      %v1659 = vrot.slane %v1657, 7
      %v1660 = vshll.u32 %v1578, 16
      %v1662 = vor.u32 %v1659, %v1660
      %v1663 = vsel %vm1600, %v1651, %v1662
      %v1665 = vshrl.u32 %v1579, 16
      %v1667 = vrot.slane %v1665, 7
      %v1668 = vshll.u32 %v1579, 16
      %v1670 = vor.u32 %v1667, %v1668
      %v1671 = vsel %vm1600, %v1659, %v1670
      %v1673 = vshrl.u32 %v1580, 16
      %v1675 = vrot.slane %v1673, 7
      %v1676 = vshll.u32 %v1580, 16
      %v1678 = vor.u32 %v1675, %v1676
      %v1679 = vsel %vm1600, %v1667, %v1678
      %v1681 = vshrl.u32 %v1581, 16
      %v1683 = vrot.slane %v1681, 7
      %v1684 = vshll.u32 %v1581, 16
      %v1686 = vor.u32 %v1683, %v1684
      %v1687 = vsel %vm1600, %v1675, %v1686
      %v1689 = vshrl.u32 %v1582, 16
      %v1691 = vrot.slane %v1689, 7
      %v1692 = vshll.u32 %v1582, 16
      %v1694 = vor.u32 %v1691, %v1692
      %v1695 = vsel %vm1600, %v1683, %v1694
      %v1697 = vshrl.u32 %v1583, 16
      %v1699 = vrot.slane %v1697, 7
      %v1700 = vshll.u32 %v1583, 16
      %v1702 = vor.u32 %v1699, %v1700
      %v1703 = vsel %vm1600, %v1691, %v1702
      %v1705 = vshrl.u32 %v1584, 16
      %v1707 = vrot.slane %v1705, 7
      %v1708 = vshll.u32 %v1584, 16
      %v1710 = vor.u32 %v1707, %v1708
      %v1711 = vsel %vm1600, %v1699, %v1710
      %v1713 = vshrl.u32 %v1585, 16
      %v1715 = vrot.slane %v1713, 7
      %v1716 = vshll.u32 %v1585, 16
      %v1718 = vor.u32 %v1715, %v1716
      %v1719 = vsel %vm1600, %v1707, %v1718
      %v1721 = vshrl.u32 %v1586, 16
      %v1723 = vrot.slane %v1721, 7
      %v1724 = vshll.u32 %v1586, 16
      %v1726 = vor.u32 %v1723, %v1724
      %v1727 = vsel %vm1600, %v1715, %v1726
      %v1729 = vshrl.u32 %v1587, 16
      %v1731 = vrot.slane %v1729, 7
      %v1732 = vshll.u32 %v1587, 16
      %v1734 = vor.u32 %v1731, %v1732
      %v1735 = vsel %vm1600, %v1723, %v1734
      %v1737 = vshrl.u32 %v1588, 16
      %v1739 = vrot.slane %v1737, 7
      %v1740 = vshll.u32 %v1588, 16
      %v1742 = vor.u32 %v1739, %v1740
      %v1743 = vsel %vm1600, %v1731, %v1742
      %v1745 = vshrl.u32 %v1589, 16
      %v1747 = vrot.slane %v1745, 7
      %v1748 = vshll.u32 %v1589, 16
      %v1750 = vor.u32 %v1747, %v1748
      %v1751 = vsel %vm1600, %v1739, %v1750
      %v1753 = vshrl.u32 %v1590, 16
      %v1755 = vrot.slane %v1753, 7
      %v1756 = vshll.u32 %v1590, 16
      %v1758 = vor.u32 %v1755, %v1756
      %v1759 = vsel %vm1600, %v1747, %v1758
      %v1761 = vshrl.u32 %v1591, 16
      %v1763 = vrot.slane %v1761, 7
      %v1764 = vshll.u32 %v1591, 16
      %v1766 = vor.u32 %v1763, %v1764
      %v1767 = vsel %vm1600, %v1755, %v1766
      %v1769 = vshrl.u32 %v1592, 16
      %v1771 = vrot.slane %v1769, 7
      %v1772 = vshll.u32 %v1592, 16
      %v1774 = vor.u32 %v1771, %v1772
      %v1775 = vsel %vm1600, %v1763, %v1774
      %v1777 = vshrl.u32 %v1593, 16
      %v1779 = vrot.slane %v1777, 7
      %v1780 = vshll.u32 %v1593, 16
      %v1782 = vor.u32 %v1779, %v1780
      %v1783 = vsel %vm1600, %v1771, %v1782
      %v1784 = vshll.u32 %v1594, 16
      %v1786 = vor.u32 %v1598, %v1784
      %v1787 = vsel %vm1600, %v1779, %v1786
      %vm1812 = vcmask 1040384
      %vm1813 = vmand %vm1812, %vm1600
      %v1814 = vsel %vm1813, %v1598, %v1607
      %v1815 = vmul.bf16 %v1814, %v1379
      %v1816 = vmul.bf16 %v1615, %v1380
      %v1817 = vmul.bf16 %v1623, %v1381
      %v1818 = vmul.bf16 %v1631, %v1382
      %v1819 = vmul.bf16 %v1639, %v1383
      %v1820 = vmul.bf16 %v1647, %v1384
      %v1821 = vmul.bf16 %v1655, %v1385
      %v1822 = vmul.bf16 %v1663, %v1386
      %v1823 = vmul.bf16 %v1671, %v1387
      %v1824 = vmul.bf16 %v1679, %v1388
      %v1825 = vmul.bf16 %v1687, %v1389
      %v1826 = vmul.bf16 %v1695, %v1390
      %v1827 = vmul.bf16 %v1703, %v1391
      %v1828 = vmul.bf16 %v1711, %v1392
      %v1829 = vmul.bf16 %v1719, %v1393
      %v1830 = vmul.bf16 %v1727, %v1394
      %v1831 = vmul.bf16 %v1735, %v1395
      %v1832 = vmul.bf16 %v1743, %v1396
      %v1833 = vmul.bf16 %v1751, %v1397
      %v1834 = vmul.bf16 %v1759, %v1398
      %v1835 = vmul.bf16 %v1767, %v1399
      %v1836 = vmul.bf16 %v1775, %v1400
      %v1837 = vmul.bf16 %v1783, %v1401
      %v1838 = vmul.bf16 %v1787, %v1402
      %vm1839 = vsmask.f32 7424
      %v1840 = vrot.slane %v1605, 1
      %v1841 = vor.u32 %v1602, %v1840
      %v1842 = vrot.slane %v1612, 1
      %v1843 = vsel %vm1839, %v1841, %v1842
      %v1844 = vor.u32 %v1609, %v1842
      %v1845 = vrot.slane %v1620, 1
      %v1846 = vsel %vm1839, %v1844, %v1845
      %v1847 = vor.u32 %v1617, %v1845
      %v1848 = vrot.slane %v1628, 1
      %v1849 = vsel %vm1839, %v1847, %v1848
      %v1850 = vor.u32 %v1625, %v1848
      %v1851 = vrot.slane %v1636, 1
      %v1852 = vsel %vm1839, %v1850, %v1851
      %v1853 = vor.u32 %v1633, %v1851
      %v1854 = vrot.slane %v1644, 1
      %v1855 = vsel %vm1839, %v1853, %v1854
      %v1856 = vor.u32 %v1641, %v1854
      %v1857 = vrot.slane %v1652, 1
      %v1858 = vsel %vm1839, %v1856, %v1857
      %v1859 = vor.u32 %v1649, %v1857
      %v1860 = vrot.slane %v1660, 1
      %v1861 = vsel %vm1839, %v1859, %v1860
      %v1862 = vor.u32 %v1657, %v1860
      %v1863 = vrot.slane %v1668, 1
      %v1864 = vsel %vm1839, %v1862, %v1863
      %v1865 = vor.u32 %v1665, %v1863
      %v1866 = vrot.slane %v1676, 1
      %v1867 = vsel %vm1839, %v1865, %v1866
      %v1868 = vor.u32 %v1673, %v1866
      %v1869 = vrot.slane %v1684, 1
      %v1870 = vsel %vm1839, %v1868, %v1869
      %v1871 = vor.u32 %v1681, %v1869
      %v1872 = vrot.slane %v1692, 1
      %v1873 = vsel %vm1839, %v1871, %v1872
      %v1874 = vor.u32 %v1689, %v1872
      %v1875 = vrot.slane %v1700, 1
      %v1876 = vsel %vm1839, %v1874, %v1875
      %v1877 = vor.u32 %v1697, %v1875
      %v1878 = vrot.slane %v1708, 1
      %v1879 = vsel %vm1839, %v1877, %v1878
      %v1880 = vor.u32 %v1705, %v1878
      %v1881 = vrot.slane %v1716, 1
      %v1882 = vsel %vm1839, %v1880, %v1881
      %v1883 = vor.u32 %v1713, %v1881
      %v1884 = vrot.slane %v1724, 1
      %v1885 = vsel %vm1839, %v1883, %v1884
      %v1886 = vor.u32 %v1721, %v1884
      %v1887 = vrot.slane %v1732, 1
      %v1888 = vsel %vm1839, %v1886, %v1887
      %v1889 = vor.u32 %v1729, %v1887
      %v1890 = vrot.slane %v1740, 1
      %v1891 = vsel %vm1839, %v1889, %v1890
      %v1892 = vor.u32 %v1737, %v1890
      %v1893 = vrot.slane %v1748, 1
      %v1894 = vsel %vm1839, %v1892, %v1893
      %v1895 = vor.u32 %v1745, %v1893
      %v1896 = vrot.slane %v1756, 1
      %v1897 = vsel %vm1839, %v1895, %v1896
      %v1898 = vor.u32 %v1753, %v1896
      %v1899 = vrot.slane %v1764, 1
      %v1900 = vsel %vm1839, %v1898, %v1899
      %v1901 = vor.u32 %v1761, %v1899
      %v1902 = vrot.slane %v1772, 1
      %v1903 = vsel %vm1839, %v1901, %v1902
      %v1904 = vor.u32 %v1769, %v1902
      %v1905 = vrot.slane %v1780, 1
      %v1906 = vsel %vm1839, %v1904, %v1905
      %v1907 = vor.u32 %v1777, %v1905
      %v1908 = vrot.slane %v1784, 1
      %v1909 = vsel %vm1839, %v1907, %v1908
      %v1910 = vor.u32 %v1596, %v1908
      %vm1936 = vcmask 1047552
      %vm1937 = vmand %vm1936, %vm1839
      %v1938 = vsel %vm1937, %v1910, %v1840
      %v1939 = vmul.bf16 %v1843, %v1547
      %v1940 = vmul.bf16 %v1846, %v1548
      %v1941 = vmul.bf16 %v1849, %v1549
      %v1942 = vmul.bf16 %v1852, %v1550
      %v1943 = vmul.bf16 %v1855, %v1551
      %v1944 = vmul.bf16 %v1858, %v1552
      %v1945 = vmul.bf16 %v1861, %v1553
      %v1946 = vmul.bf16 %v1864, %v1554
      %v1947 = vmul.bf16 %v1867, %v1555
      %v1948 = vmul.bf16 %v1870, %v1556
      %v1949 = vmul.bf16 %v1873, %v1557
      %v1950 = vmul.bf16 %v1876, %v1558
      %v1951 = vmul.bf16 %v1879, %v1559
      %v1952 = vmul.bf16 %v1882, %v1560
      %v1953 = vmul.bf16 %v1885, %v1561
      %v1954 = vmul.bf16 %v1888, %v1562
      %v1955 = vmul.bf16 %v1891, %v1563
      %v1956 = vmul.bf16 %v1894, %v1564
      %v1957 = vmul.bf16 %v1897, %v1565
      %v1958 = vmul.bf16 %v1900, %v1566
      %v1959 = vmul.bf16 %v1903, %v1567
      %v1960 = vmul.bf16 %v1906, %v1568
      %v1961 = vmul.bf16 %v1909, %v1569
      %v1962 = vmul.bf16 %v1938, %v1570
      %1987 = vrot.lane.b32.xlu0 %v1571, 16
      %v1988 = vpop.permute.xlu0 %1987
      %1989 = vrot.lane.b32.xlu0 %v1572, 16
      %v1990 = vpop.permute.xlu0 %1989
      %1991 = vrot.lane.b32.xlu0 %v1573, 16
      %v1992 = vpop.permute.xlu0 %1991
      %1993 = vrot.lane.b32.xlu0 %v1574, 16
      %v1994 = vpop.permute.xlu0 %1993
      %1995 = vrot.lane.b32.xlu0 %v1575, 16
      %v1996 = vpop.permute.xlu0 %1995
      %1997 = vrot.lane.b32.xlu0 %v1576, 16
      %v1998 = vpop.permute.xlu0 %1997
      %1999 = vrot.lane.b32.xlu0 %v1577, 16
      %v2000 = vpop.permute.xlu0 %1999
      %2001 = vrot.lane.b32.xlu0 %v1578, 16
      %v2002 = vpop.permute.xlu0 %2001
      %2003 = vrot.lane.b32.xlu0 %v1579, 16
      %v2004 = vpop.permute.xlu0 %2003
      %2005 = vrot.lane.b32.xlu0 %v1580, 16
      %v2006 = vpop.permute.xlu0 %2005
      %2007 = vrot.lane.b32.xlu0 %v1581, 16
      %v2008 = vpop.permute.xlu0 %2007
      %2009 = vrot.lane.b32.xlu0 %v1582, 16
      %v2010 = vpop.permute.xlu0 %2009
      %2011 = vrot.lane.b32.xlu0 %v1583, 16
      %v2012 = vpop.permute.xlu0 %2011
      %2013 = vrot.lane.b32.xlu0 %v1584, 16
      %v2014 = vpop.permute.xlu0 %2013
      %2015 = vrot.lane.b32.xlu0 %v1585, 16
      %v2016 = vpop.permute.xlu0 %2015
      %2017 = vrot.lane.b32.xlu0 %v1586, 16
      %v2018 = vpop.permute.xlu0 %2017
      %2019 = vrot.lane.b32.xlu0 %v1587, 16
      %v2020 = vpop.permute.xlu0 %2019
      %2021 = vrot.lane.b32.xlu0 %v1588, 16
      %v2022 = vpop.permute.xlu0 %2021
      %2023 = vrot.lane.b32.xlu0 %v1589, 16
      %v2024 = vpop.permute.xlu0 %2023
      %2025 = vrot.lane.b32.xlu0 %v1590, 16
      %v2026 = vpop.permute.xlu0 %2025
      %2027 = vrot.lane.b32.xlu0 %v1591, 16
      %v2028 = vpop.permute.xlu0 %2027
      %2029 = vrot.lane.b32.xlu0 %v1592, 16
      %v2030 = vpop.permute.xlu0 %2029
      %2031 = vrot.lane.b32.xlu0 %v1593, 16
      %v2032 = vpop.permute.xlu0 %2031
      %2033 = vrot.lane.b32.xlu0 %v1594, 16
      %v2034 = vpop.permute.xlu0 %2033
      %2059 = vrot.lane.b32.xlu0 %v1939, 32
      %v2060 = vpop.permute.xlu0 %2059
      %2061 = vrot.lane.b32.xlu0 %v1940, 32
      %v2062 = vpop.permute.xlu0 %2061
      %2063 = vrot.lane.b32.xlu0 %v1941, 32
      %v2064 = vpop.permute.xlu0 %2063
      %2065 = vrot.lane.b32.xlu0 %v1942, 32
      %v2066 = vpop.permute.xlu0 %2065
      %2067 = vrot.lane.b32.xlu0 %v1943, 32
      %v2068 = vpop.permute.xlu0 %2067
      %2069 = vrot.lane.b32.xlu0 %v1944, 32
      %v2070 = vpop.permute.xlu0 %2069
      %2071 = vrot.lane.b32.xlu0 %v1945, 32
      %v2072 = vpop.permute.xlu0 %2071
      %2073 = vrot.lane.b32.xlu0 %v1946, 32
      %v2074 = vpop.permute.xlu0 %2073
      %2075 = vrot.lane.b32.xlu0 %v1947, 32
      %v2076 = vpop.permute.xlu0 %2075
      %2077 = vrot.lane.b32.xlu0 %v1948, 32
      %v2078 = vpop.permute.xlu0 %2077
      %2079 = vrot.lane.b32.xlu0 %v1949, 32
      %v2080 = vpop.permute.xlu0 %2079
      %2081 = vrot.lane.b32.xlu0 %v1950, 32
      %v2082 = vpop.permute.xlu0 %2081
      %2083 = vrot.lane.b32.xlu0 %v1951, 32
      %v2084 = vpop.permute.xlu0 %2083
      %2085 = vrot.lane.b32.xlu0 %v1952, 32
      %v2086 = vpop.permute.xlu0 %2085
      %2087 = vrot.lane.b32.xlu0 %v1953, 32
      %v2088 = vpop.permute.xlu0 %2087
      %2089 = vrot.lane.b32.xlu0 %v1954, 32
      %v2090 = vpop.permute.xlu0 %2089
      %2091 = vrot.lane.b32.xlu0 %v1955, 32
      %v2092 = vpop.permute.xlu0 %2091
      %2093 = vrot.lane.b32.xlu0 %v1956, 32
      %v2094 = vpop.permute.xlu0 %2093
      %2095 = vrot.lane.b32.xlu0 %v1957, 32
      %v2096 = vpop.permute.xlu0 %2095
      %2097 = vrot.lane.b32.xlu0 %v1958, 32
      %v2098 = vpop.permute.xlu0 %2097
      %2099 = vrot.lane.b32.xlu0 %v1959, 32
      %v2100 = vpop.permute.xlu0 %2099
      %2101 = vrot.lane.b32.xlu0 %v1960, 32
      %v2102 = vpop.permute.xlu0 %2101
      %2103 = vrot.lane.b32.xlu0 %v1961, 32
      %v2104 = vpop.permute.xlu0 %2103
      %2105 = vrot.lane.b32.xlu0 %v1962, 32
      %v2106 = vpop.permute.xlu0 %2105
      %v2109 = vsel %vm513, %v1815, %v1988
      %v2112 = vsel %vm513, %v1816, %v1990
      %v2115 = vsel %vm513, %v1817, %v1992
      %v2118 = vsel %vm513, %v1818, %v1994
      %v2121 = vsel %vm513, %v1819, %v1996
      %v2124 = vsel %vm513, %v1820, %v1998
      %v2127 = vsel %vm513, %v1821, %v2000
      %v2130 = vsel %vm513, %v1822, %v2002
      %v2133 = vsel %vm513, %v1823, %v2004
      %v2136 = vsel %vm513, %v1824, %v2006
      %v2139 = vsel %vm513, %v1825, %v2008
      %v2142 = vsel %vm513, %v1826, %v2010
      %v2145 = vsel %vm513, %v1827, %v2012
      %v2148 = vsel %vm513, %v1828, %v2014
      %v2151 = vsel %vm513, %v1829, %v2016
      %v2154 = vsel %vm513, %v1830, %v2018
      %v2157 = vsel %vm513, %v1831, %v2020
      %v2160 = vsel %vm513, %v1832, %v2022
      %v2163 = vsel %vm513, %v1833, %v2024
      %v2166 = vsel %vm513, %v1834, %v2026
      %v2169 = vsel %vm513, %v1835, %v2028
      %v2172 = vsel %vm513, %v1836, %v2030
      %v2175 = vsel %vm513, %v1837, %v2032
      %v2178 = vsel %vm513, %v1838, %v2034
      %vm2179 = vcmask 261120
      %v2181 = vsel %vm2179, %v2109, %v2060
      %v2183 = vsel %vm2179, %v2112, %v2062
      %v2185 = vsel %vm2179, %v2115, %v2064
      %v2187 = vsel %vm2179, %v2118, %v2066
      %v2189 = vsel %vm2179, %v2121, %v2068
      %v2191 = vsel %vm2179, %v2124, %v2070
      %v2193 = vsel %vm2179, %v2127, %v2072
      %v2195 = vsel %vm2179, %v2130, %v2074
      %v2197 = vsel %vm2179, %v2133, %v2076
      %v2199 = vsel %vm2179, %v2136, %v2078
      %v2201 = vsel %vm2179, %v2139, %v2080
      %v2203 = vsel %vm2179, %v2142, %v2082
      %v2205 = vsel %vm2179, %v2145, %v2084
      %v2207 = vsel %vm2179, %v2148, %v2086
      %v2209 = vsel %vm2179, %v2151, %v2088
      %v2211 = vsel %vm2179, %v2154, %v2090
      %v2213 = vsel %vm2179, %v2157, %v2092
      %v2215 = vsel %vm2179, %v2160, %v2094
      %v2217 = vsel %vm2179, %v2163, %v2096
      %v2219 = vsel %vm2179, %v2166, %v2098
      %v2221 = vsel %vm2179, %v2169, %v2100
      %v2223 = vsel %vm2179, %v2172, %v2102
      %v2225 = vsel %vm2179, %v2175, %v2104
      %v2227 = vsel %vm2179, %v2178, %v2106
      %v2228 = vld [vmem:[%s3] sm:$0xf]
      %v2229 = vld [vmem:[%s3 + $0x4] sm:$0xf]
      %v2230 = vld [vmem:[%s3 + $0x8] sm:$0xf]
      %v2231 = vld [vmem:[%s3 + $0xc] sm:$0xf]
      %v2232 = vld [vmem:[%s3 + $0x10] sm:$0xf]
      %v2233 = vld [vmem:[%s3 + $0x14] sm:$0xf]
      %v2240 = vunpack.c.l.b16 %v2228
      %v2241 = vunpack.c.l.b16 %v2229
      %v2242 = vunpack.c.l.b16 %v2230
      %v2243 = vunpack.c.l.b16 %v2231
      %v2244 = vunpack.c.l.b16 %v2232
      %v2245 = vunpack.c.l.b16 %v2233
      %v2246 = vpack.c.b16 %v2241, %v2240
      %v2247 = vpack.c.b16 %v2243, %v2242
      %v2248 = vpack.c.b16 %v2245, %v2244
      %vm2252 = vcmask 392192
      %v2253 = vsel %vm2252, %v2181, 0
      %v2255 = vsel %vm2252, %v2183, 0
      %v2257 = vsel %vm2252, %v2185, 0
      %v2259 = vsel %vm2252, %v2187, 0
      %v2261 = vsel %vm2252, %v2189, 0
      %v2263 = vsel %vm2252, %v2191, 0
      %v2265 = vsel %vm2252, %v2193, 0
      %v2267 = vsel %vm2252, %v2195, 0
      %v2269 = vsel %vm2252, %v2197, 0
      %v2271 = vsel %vm2252, %v2199, 0
      %v2273 = vsel %vm2252, %v2201, 0
      %v2275 = vsel %vm2252, %v2203, 0
      %v2277 = vsel %vm2252, %v2205, 0
      %v2279 = vsel %vm2252, %v2207, 0
      %v2281 = vsel %vm2252, %v2209, 0
      %v2283 = vsel %vm2252, %v2211, 0
      %v2285 = vsel %vm2252, %v2213, 0
      %v2287 = vsel %vm2252, %v2215, 0
      %v2289 = vsel %vm2252, %v2217, 0
      %v2291 = vsel %vm2252, %v2219, 0
      %v2293 = vsel %vm2252, %v2221, 0
      %v2295 = vsel %vm2252, %v2223, 0
      %v2297 = vsel %vm2252, %v2225, 0
      %v2299 = vsel %vm2252, %v2227, 0
      %2301 = vmatprep.subr.bf16.mxu0 0
      %2302 = vmatpush1.bf16.msra.mxu0 %v2246
      %2303 = vmatprep.subr.bf16.mxu0 0
      %2304 = vmatpush1.bf16.msra.mxu0 %v2247
      %2305 = vmatprep.subr.bf16.mxu0 0
      %2306 = vmatpush1.bf16.msra.mxu0 %v2248
      %2307 = vmatprep.subr.bf16.mxu0 0
      %2308 = vmatpush1.bf16.msra.mxu0 0
      %2309 = vmatprep.subr.bf16.mxu0 0
      %2310 = vmatpush1.bf16.msra.mxu0 0
      %2311 = vmatprep.subr.bf16.mxu0 0
      %2312 = vmatpush1.bf16.msra.mxu0 0
      %2313 = vmatprep.subr.bf16.mxu0 0
      %2314 = vmatpush1.bf16.msra.mxu0 0
      %2315 = vmatprep.subr.bf16.mxu0 0
      %2316 = vmatpush1.bf16.msra.mxu0 0
      %2317 = vmatprep.subr.bf16.mxu0 0
      %2318 = vmatpush1.bf16.msra.mxu0 0
      %2319 = vmatprep.subr.bf16.mxu0 0
      %2320 = vmatpush1.bf16.msra.mxu0 0
      %2321 = vmatprep.subr.bf16.mxu0 0
      %2322 = vmatpush1.bf16.msra.mxu0 0
      %2323 = vmatprep.subr.bf16.mxu0 0
      %2324 = vmatpush1.bf16.msra.mxu0 0
      %2325 = vmatprep.subr.bf16.mxu0 0
      %2326 = vmatpush1.bf16.msra.mxu0 0
      %2327 = vmatprep.subr.bf16.mxu0 0
      %2328 = vmatpush1.bf16.msra.mxu0 0
      %2329 = vmatprep.subr.bf16.mxu0 0
      %2330 = vmatpush1.bf16.msra.mxu0 0
      %2331 = vmatprep.subr.bf16.mxu0 0
      %2332 = vmatpush1.bf16.msra.mxu0 0
      %2333 = vmatprep.mubr.bf16.mxu0 0
      %2334 = vmatmul.mubr.bf16.gmra.mrb[0].mxu0 %v2253
      %v2335 = vpop.f32.mrb[0].mxu0
      %v2336 = vadd.f32 0.0, %v2335
      %v2337 = vpop.f32.mrb[0].mxu0
      %v2338 = vpop.f32.mrb[0].mxu0
      %v2339 = vadd.f32 0.0, %v2338
      %v2340 = vpop.f32.mrb[0].mxu0
      %2341 = vmatprep.mubr.bf16.mxu0 0
      %2342 = vmatmul.mubr.bf16.gmra.mrb[0].mxu0 %v2255
      %v2343 = vpop.f32.mrb[0].mxu0
      %v2344 = vadd.f32 0.0, %v2343
      %v2345 = vpop.f32.mrb[0].mxu0
      %v2346 = vpop.f32.mrb[0].mxu0
      %v2347 = vadd.f32 0.0, %v2346
      %v2348 = vpop.f32.mrb[0].mxu0
      %2349 = vmatprep.mubr.bf16.mxu0 0
      %2350 = vmatmul.mubr.bf16.gmra.mrb[0].mxu0 %v2257
      %v2351 = vpop.f32.mrb[0].mxu0
      %v2352 = vadd.f32 0.0, %v2351
      %v2353 = vpop.f32.mrb[0].mxu0
      %v2354 = vpop.f32.mrb[0].mxu0
      %v2355 = vadd.f32 0.0, %v2354
      %v2356 = vpop.f32.mrb[0].mxu0
      %2357 = vmatprep.mubr.bf16.mxu0 0
      %2358 = vmatmul.mubr.bf16.gmra.mrb[0].mxu0 %v2259
      %v2359 = vpop.f32.mrb[0].mxu0
      %v2360 = vadd.f32 0.0, %v2359
      %v2361 = vpop.f32.mrb[0].mxu0
      %v2362 = vpop.f32.mrb[0].mxu0
      %v2363 = vadd.f32 0.0, %v2362
      %v2364 = vpop.f32.mrb[0].mxu0
      %2365 = vmatprep.mubr.bf16.mxu0 0
      %2366 = vmatmul.mubr.bf16.gmra.mrb[0].mxu0 %v2261
      %v2367 = vpop.f32.mrb[0].mxu0
      %v2368 = vadd.f32 0.0, %v2367
      %v2369 = vpop.f32.mrb[0].mxu0
      %v2370 = vpop.f32.mrb[0].mxu0
      %v2371 = vadd.f32 0.0, %v2370
      %v2372 = vpop.f32.mrb[0].mxu0
      %2373 = vmatprep.mubr.bf16.mxu0 0
      %2374 = vmatmul.mubr.bf16.gmra.mrb[0].mxu0 %v2263
      %v2375 = vpop.f32.mrb[0].mxu0
      %v2376 = vadd.f32 0.0, %v2375
      %v2377 = vpop.f32.mrb[0].mxu0
      %v2378 = vpop.f32.mrb[0].mxu0
      %v2379 = vadd.f32 0.0, %v2378
      %v2380 = vpop.f32.mrb[0].mxu0
      %2381 = vmatprep.mubr.bf16.mxu0 0
      %2382 = vmatmul.mubr.bf16.gmra.mrb[0].mxu0 %v2265
      %v2383 = vpop.f32.mrb[0].mxu0
      %v2384 = vadd.f32 0.0, %v2383
      %v2385 = vpop.f32.mrb[0].mxu0
      %v2386 = vpop.f32.mrb[0].mxu0
      %v2387 = vadd.f32 0.0, %v2386
      %v2388 = vpop.f32.mrb[0].mxu0
      %2389 = vmatprep.mubr.bf16.mxu0 0
      %2390 = vmatmul.mubr.bf16.gmra.mrb[0].mxu0 %v2267
      %v2391 = vpop.f32.mrb[0].mxu0
      %v2392 = vadd.f32 0.0, %v2391
      %v2393 = vpop.f32.mrb[0].mxu0
      %v2394 = vpop.f32.mrb[0].mxu0
      %v2395 = vadd.f32 0.0, %v2394
      %v2396 = vpop.f32.mrb[0].mxu0
      %2397 = vmatprep.mubr.bf16.mxu0 0
      %2398 = vmatmul.mubr.bf16.gmra.mrb[0].mxu0 %v2269
      %v2399 = vpop.f32.mrb[0].mxu0
      %v2400 = vadd.f32 0.0, %v2399
      %v2401 = vpop.f32.mrb[0].mxu0
      %v2402 = vpop.f32.mrb[0].mxu0
      %v2403 = vadd.f32 0.0, %v2402
      %v2404 = vpop.f32.mrb[0].mxu0
      %2405 = vmatprep.mubr.bf16.mxu0 0
      %2406 = vmatmul.mubr.bf16.gmra.mrb[0].mxu0 %v2271
      %v2407 = vpop.f32.mrb[0].mxu0
      %v2408 = vadd.f32 0.0, %v2407
      %v2409 = vpop.f32.mrb[0].mxu0
      %v2410 = vpop.f32.mrb[0].mxu0
      %v2411 = vadd.f32 0.0, %v2410
      %v2412 = vpop.f32.mrb[0].mxu0
      %2413 = vmatprep.mubr.bf16.mxu0 0
      %2414 = vmatmul.mubr.bf16.gmra.mrb[0].mxu0 %v2273
      %v2415 = vpop.f32.mrb[0].mxu0
      %v2416 = vadd.f32 0.0, %v2415
      %v2417 = vpop.f32.mrb[0].mxu0
      %v2418 = vpop.f32.mrb[0].mxu0
      %v2419 = vadd.f32 0.0, %v2418
      %v2420 = vpop.f32.mrb[0].mxu0
      %2421 = vmatprep.mubr.bf16.mxu0 0
      %2422 = vmatmul.mubr.bf16.gmra.mrb[0].mxu0 %v2275
      %v2423 = vpop.f32.mrb[0].mxu0
      %v2424 = vadd.f32 0.0, %v2423
      %v2425 = vpop.f32.mrb[0].mxu0
      %v2426 = vpop.f32.mrb[0].mxu0
      %v2427 = vadd.f32 0.0, %v2426
      %v2428 = vpop.f32.mrb[0].mxu0
      %2429 = vmatprep.mubr.bf16.mxu0 0
      %2430 = vmatmul.mubr.bf16.gmra.mrb[0].mxu0 %v2277
      %v2431 = vpop.f32.mrb[0].mxu0
      %v2432 = vadd.f32 0.0, %v2431
      %v2433 = vpop.f32.mrb[0].mxu0
      %v2434 = vpop.f32.mrb[0].mxu0
      %v2435 = vadd.f32 0.0, %v2434
      %v2436 = vpop.f32.mrb[0].mxu0
      %2437 = vmatprep.mubr.bf16.mxu0 0
      %2438 = vmatmul.mubr.bf16.gmra.mrb[0].mxu0 %v2279
      %v2439 = vpop.f32.mrb[0].mxu0
      %v2440 = vadd.f32 0.0, %v2439
      %v2441 = vpop.f32.mrb[0].mxu0
      %v2442 = vpop.f32.mrb[0].mxu0
      %v2443 = vadd.f32 0.0, %v2442
      %v2444 = vpop.f32.mrb[0].mxu0
      %2445 = vmatprep.mubr.bf16.mxu0 0
      %2446 = vmatmul.mubr.bf16.gmra.mrb[0].mxu0 %v2281
      %v2447 = vpop.f32.mrb[0].mxu0
      %v2448 = vadd.f32 0.0, %v2447
      %v2449 = vpop.f32.mrb[0].mxu0
      %v2450 = vpop.f32.mrb[0].mxu0
      %v2451 = vadd.f32 0.0, %v2450
      %v2452 = vpop.f32.mrb[0].mxu0
      %2453 = vmatprep.mubr.bf16.mxu0 0
      %2454 = vmatmul.mubr.bf16.gmra.mrb[0].mxu0 %v2283
      %v2455 = vpop.f32.mrb[0].mxu0
      %v2456 = vadd.f32 0.0, %v2455
      %v2457 = vpop.f32.mrb[0].mxu0
      %v2458 = vpop.f32.mrb[0].mxu0
      %v2459 = vadd.f32 0.0, %v2458
      %v2460 = vpop.f32.mrb[0].mxu0
      %2461 = vmatprep.mubr.bf16.mxu0 0
      %2462 = vmatmul.mubr.bf16.gmra.mrb[0].mxu0 %v2285
      %v2463 = vpop.f32.mrb[0].mxu0
      %v2464 = vadd.f32 0.0, %v2463
      %v2465 = vpop.f32.mrb[0].mxu0
      %v2466 = vpop.f32.mrb[0].mxu0
      %v2467 = vadd.f32 0.0, %v2466
      %v2468 = vpop.f32.mrb[0].mxu0
      %2469 = vmatprep.mubr.bf16.mxu0 0
      %2470 = vmatmul.mubr.bf16.gmra.mrb[0].mxu0 %v2287
      %v2471 = vpop.f32.mrb[0].mxu0
      %v2472 = vadd.f32 0.0, %v2471
      %v2473 = vpop.f32.mrb[0].mxu0
      %v2474 = vpop.f32.mrb[0].mxu0
      %v2475 = vadd.f32 0.0, %v2474
      %v2476 = vpop.f32.mrb[0].mxu0
      %2477 = vmatprep.mubr.bf16.mxu0 0
      %2478 = vmatmul.mubr.bf16.gmra.mrb[0].mxu0 %v2289
      %v2479 = vpop.f32.mrb[0].mxu0
      %v2480 = vadd.f32 0.0, %v2479
      %v2481 = vpop.f32.mrb[0].mxu0
      %v2482 = vpop.f32.mrb[0].mxu0
      %v2483 = vadd.f32 0.0, %v2482
      %v2484 = vpop.f32.mrb[0].mxu0
      %2485 = vmatprep.mubr.bf16.mxu0 0
      %2486 = vmatmul.mubr.bf16.gmra.mrb[0].mxu0 %v2291
      %v2487 = vpop.f32.mrb[0].mxu0
      %v2488 = vadd.f32 0.0, %v2487
      %v2489 = vpop.f32.mrb[0].mxu0
      %v2490 = vpop.f32.mrb[0].mxu0
      %v2491 = vadd.f32 0.0, %v2490
      %v2492 = vpop.f32.mrb[0].mxu0
      %2493 = vmatprep.mubr.bf16.mxu0 0
      %2494 = vmatmul.mubr.bf16.gmra.mrb[0].mxu0 %v2293
      %v2495 = vpop.f32.mrb[0].mxu0
      %v2496 = vadd.f32 0.0, %v2495
      %v2497 = vpop.f32.mrb[0].mxu0
      %v2498 = vpop.f32.mrb[0].mxu0
      %v2499 = vadd.f32 0.0, %v2498
      %v2500 = vpop.f32.mrb[0].mxu0
      %2501 = vmatprep.mubr.bf16.mxu0 0
      %2502 = vmatmul.mubr.bf16.gmra.mrb[0].mxu0 %v2295
      %v2503 = vpop.f32.mrb[0].mxu0
      %v2504 = vadd.f32 0.0, %v2503
      %v2505 = vpop.f32.mrb[0].mxu0
      %v2506 = vpop.f32.mrb[0].mxu0
      %v2507 = vadd.f32 0.0, %v2506
      %v2508 = vpop.f32.mrb[0].mxu0
      %2509 = vmatprep.mubr.bf16.mxu0 0
      %2510 = vmatmul.mubr.bf16.gmra.mrb[0].mxu0 %v2297
      %v2511 = vpop.f32.mrb[0].mxu0
      %v2512 = vadd.f32 0.0, %v2511
      %v2513 = vpop.f32.mrb[0].mxu0
      %v2514 = vpop.f32.mrb[0].mxu0
      %v2515 = vadd.f32 0.0, %v2514
      %v2516 = vpop.f32.mrb[0].mxu0
      %2517 = vmatprep.mubr.bf16.mxu0 0
      %2518 = vmatmul.mubr.bf16.gmra.mrb[0].mxu0 %v2299
      %v2519 = vpop.f32.mrb[0].mxu0
      %v2520 = vadd.f32 0.0, %v2519
      %v2521 = vpop.f32.mrb[0].mxu0
      %v2522 = vpop.f32.mrb[0].mxu0
      %v2523 = vadd.f32 0.0, %v2522
      %v2524 = vpop.f32.mrb[0].mxu0
      %2525 = vdwg.mxu0
      %s2526 = scalar_lea.vmem %s3, 24
      %v2527 = vld [vmem:[%s2526] sm:$0xf]
      %v2528 = vld [vmem:[%s2526 + $0x4] sm:$0xf]
      %v2529 = vld [vmem:[%s2526 + $0x8] sm:$0xf]
      %v2530 = vld [vmem:[%s2526 + $0xc] sm:$0xf]
      %v2531 = vld [vmem:[%s2526 + $0x10] sm:$0xf]
      %v2532 = vld [vmem:[%s2526 + $0x14] sm:$0xf]
      %s2533 = scalar_lea.vmem %s3, 48
      %v2534 = vld [vmem:[%s2533] sm:$0xf]
      %v2535 = vld [vmem:[%s2533 + $0x4] sm:$0xf]
      %v2536 = vld [vmem:[%s2533 + $0x8] sm:$0xf]
      %v2537 = vld [vmem:[%s2533 + $0xc] sm:$0xf]
      %v2538 = vld [vmem:[%s2533 + $0x10] sm:$0xf]
      %v2539 = vld [vmem:[%s2533 + $0x14] sm:$0xf]
      %v2546 = vunpack.c.l.b16 %v2534
      %v2547 = vunpack.c.l.b16 %v2535
      %v2548 = vunpack.c.l.b16 %v2536
      %v2549 = vunpack.c.l.b16 %v2537
      %v2550 = vunpack.c.l.b16 %v2538
      %v2551 = vunpack.c.l.b16 %v2539
      %v2552 = vpack.c.b16 %v2547, %v2546
      %v2553 = vpack.c.b16 %v2549, %v2548
      %v2554 = vpack.c.b16 %v2551, %v2550
      %2558 = vmatprep.subr.bf16.mxu0 0
      %2559 = vmatpush1.bf16.msra.mxu0 %v2552
      %2560 = vmatprep.subr.bf16.mxu0 0
      %2561 = vmatpush1.bf16.msra.mxu0 %v2553
      %2562 = vmatprep.subr.bf16.mxu0 0
      %2563 = vmatpush1.bf16.msra.mxu0 %v2554
      %2564 = vmatprep.subr.bf16.mxu0 0
      %2565 = vmatpush1.bf16.msra.mxu0 0
      %2566 = vmatprep.subr.bf16.mxu0 0
      %2567 = vmatpush1.bf16.msra.mxu0 0
      %2568 = vmatprep.subr.bf16.mxu0 0
      %2569 = vmatpush1.bf16.msra.mxu0 0
      %2570 = vmatprep.subr.bf16.mxu0 0
      %2571 = vmatpush1.bf16.msra.mxu0 0
      %2572 = vmatprep.subr.bf16.mxu0 0
      %2573 = vmatpush1.bf16.msra.mxu0 0
      %2574 = vmatprep.subr.bf16.mxu0 0
      %2575 = vmatpush1.bf16.msra.mxu0 0
      %2576 = vmatprep.subr.bf16.mxu0 0
      %2577 = vmatpush1.bf16.msra.mxu0 0
      %2578 = vmatprep.subr.bf16.mxu0 0
      %2579 = vmatpush1.bf16.msra.mxu0 0
      %2580 = vmatprep.subr.bf16.mxu0 0
      %2581 = vmatpush1.bf16.msra.mxu0 0
      %2582 = vmatprep.subr.bf16.mxu0 0
      %2583 = vmatpush1.bf16.msra.mxu0 0
      %2584 = vmatprep.subr.bf16.mxu0 0
      %2585 = vmatpush1.bf16.msra.mxu0 0
      %2586 = vmatprep.subr.bf16.mxu0 0
      %2587 = vmatpush1.bf16.msra.mxu0 0
      %2588 = vmatprep.subr.bf16.mxu0 0
      %2589 = vmatpush1.bf16.msra.mxu0 0
      %2590 = vmatprep.mubr.bf16.mxu0 0
      %2591 = vmatmul.mubr.bf16.gmra.mrb[0].mxu0 %v2253
      %v2592 = vpop.f32.mrb[0].mxu0
      %v2593 = vadd.f32 0.0, %v2592
      %v2594 = vpop.f32.mrb[0].mxu0
      %v2595 = vpop.f32.mrb[0].mxu0
      %v2596 = vadd.f32 0.0, %v2595
      %v2597 = vpop.f32.mrb[0].mxu0
      %2598 = vmatprep.mubr.bf16.mxu0 0
      %2599 = vmatmul.mubr.bf16.gmra.mrb[0].mxu0 %v2255
      %v2600 = vpop.f32.mrb[0].mxu0
      %v2601 = vadd.f32 0.0, %v2600
      %v2602 = vpop.f32.mrb[0].mxu0
      %v2603 = vpop.f32.mrb[0].mxu0
      %v2604 = vadd.f32 0.0, %v2603
      %v2605 = vpop.f32.mrb[0].mxu0
      %2606 = vmatprep.mubr.bf16.mxu0 0
      %2607 = vmatmul.mubr.bf16.gmra.mrb[0].mxu0 %v2257
      %v2608 = vpop.f32.mrb[0].mxu0
      %v2609 = vadd.f32 0.0, %v2608
      %v2610 = vpop.f32.mrb[0].mxu0
      %v2611 = vpop.f32.mrb[0].mxu0
      %v2612 = vadd.f32 0.0, %v2611
      %v2613 = vpop.f32.mrb[0].mxu0
      %2614 = vmatprep.mubr.bf16.mxu0 0
      %2615 = vmatmul.mubr.bf16.gmra.mrb[0].mxu0 %v2259
      %v2616 = vpop.f32.mrb[0].mxu0
      %v2617 = vadd.f32 0.0, %v2616
      %v2618 = vpop.f32.mrb[0].mxu0
      %v2619 = vpop.f32.mrb[0].mxu0
      %v2620 = vadd.f32 0.0, %v2619
      %v2621 = vpop.f32.mrb[0].mxu0
      %2622 = vmatprep.mubr.bf16.mxu0 0
      %2623 = vmatmul.mubr.bf16.gmra.mrb[0].mxu0 %v2261
      %v2624 = vpop.f32.mrb[0].mxu0
      %v2625 = vadd.f32 0.0, %v2624
      %v2626 = vpop.f32.mrb[0].mxu0
      %v2627 = vpop.f32.mrb[0].mxu0
      %v2628 = vadd.f32 0.0, %v2627
      %v2629 = vpop.f32.mrb[0].mxu0
      %2630 = vmatprep.mubr.bf16.mxu0 0
      %2631 = vmatmul.mubr.bf16.gmra.mrb[0].mxu0 %v2263
      %v2632 = vpop.f32.mrb[0].mxu0
      %v2633 = vadd.f32 0.0, %v2632
      %v2634 = vpop.f32.mrb[0].mxu0
      %v2635 = vpop.f32.mrb[0].mxu0
      %v2636 = vadd.f32 0.0, %v2635
      %v2637 = vpop.f32.mrb[0].mxu0
      %2638 = vmatprep.mubr.bf16.mxu0 0
      %2639 = vmatmul.mubr.bf16.gmra.mrb[0].mxu0 %v2265
      %v2640 = vpop.f32.mrb[0].mxu0
      %v2641 = vadd.f32 0.0, %v2640
      %v2642 = vpop.f32.mrb[0].mxu0
      %v2643 = vpop.f32.mrb[0].mxu0
      %v2644 = vadd.f32 0.0, %v2643
      %v2645 = vpop.f32.mrb[0].mxu0
      %2646 = vmatprep.mubr.bf16.mxu0 0
      %2647 = vmatmul.mubr.bf16.gmra.mrb[0].mxu0 %v2267
      %v2648 = vpop.f32.mrb[0].mxu0
      %v2649 = vadd.f32 0.0, %v2648
      %v2650 = vpop.f32.mrb[0].mxu0
      %v2651 = vpop.f32.mrb[0].mxu0
      %v2652 = vadd.f32 0.0, %v2651
      %v2653 = vpop.f32.mrb[0].mxu0
      %2654 = vmatprep.mubr.bf16.mxu0 0
      %2655 = vmatmul.mubr.bf16.gmra.mrb[0].mxu0 %v2269
      %v2656 = vpop.f32.mrb[0].mxu0
      %v2657 = vadd.f32 0.0, %v2656
      %v2658 = vpop.f32.mrb[0].mxu0
      %v2659 = vpop.f32.mrb[0].mxu0
      %v2660 = vadd.f32 0.0, %v2659
      %v2661 = vpop.f32.mrb[0].mxu0
      %2662 = vmatprep.mubr.bf16.mxu0 0
      %2663 = vmatmul.mubr.bf16.gmra.mrb[0].mxu0 %v2271
      %v2664 = vpop.f32.mrb[0].mxu0
      %v2665 = vadd.f32 0.0, %v2664
      %v2666 = vpop.f32.mrb[0].mxu0
      %v2667 = vpop.f32.mrb[0].mxu0
      %v2668 = vadd.f32 0.0, %v2667
      %v2669 = vpop.f32.mrb[0].mxu0
      %2670 = vmatprep.mubr.bf16.mxu0 0
      %2671 = vmatmul.mubr.bf16.gmra.mrb[0].mxu0 %v2273
      %v2672 = vpop.f32.mrb[0].mxu0
      %v2673 = vadd.f32 0.0, %v2672
      %v2674 = vpop.f32.mrb[0].mxu0
      %v2675 = vpop.f32.mrb[0].mxu0
      %v2676 = vadd.f32 0.0, %v2675
      %v2677 = vpop.f32.mrb[0].mxu0
      %2678 = vmatprep.mubr.bf16.mxu0 0
      %2679 = vmatmul.mubr.bf16.gmra.mrb[0].mxu0 %v2275
      %v2680 = vpop.f32.mrb[0].mxu0
      %v2681 = vadd.f32 0.0, %v2680
      %v2682 = vpop.f32.mrb[0].mxu0
      %v2683 = vpop.f32.mrb[0].mxu0
      %v2684 = vadd.f32 0.0, %v2683
      %v2685 = vpop.f32.mrb[0].mxu0
      %2686 = vmatprep.mubr.bf16.mxu0 0
      %2687 = vmatmul.mubr.bf16.gmra.mrb[0].mxu0 %v2277
      %v2688 = vpop.f32.mrb[0].mxu0
      %v2689 = vadd.f32 0.0, %v2688
      %v2690 = vpop.f32.mrb[0].mxu0
      %v2691 = vpop.f32.mrb[0].mxu0
      %v2692 = vadd.f32 0.0, %v2691
      %v2693 = vpop.f32.mrb[0].mxu0
      %2694 = vmatprep.mubr.bf16.mxu0 0
      %2695 = vmatmul.mubr.bf16.gmra.mrb[0].mxu0 %v2279
      %v2696 = vpop.f32.mrb[0].mxu0
      %v2697 = vadd.f32 0.0, %v2696
      %v2698 = vpop.f32.mrb[0].mxu0
      %v2699 = vpop.f32.mrb[0].mxu0
      %v2700 = vadd.f32 0.0, %v2699
      %v2701 = vpop.f32.mrb[0].mxu0
      %2702 = vmatprep.mubr.bf16.mxu0 0
      %2703 = vmatmul.mubr.bf16.gmra.mrb[0].mxu0 %v2281
      %v2704 = vpop.f32.mrb[0].mxu0
      %v2705 = vadd.f32 0.0, %v2704
      %v2706 = vpop.f32.mrb[0].mxu0
      %v2707 = vpop.f32.mrb[0].mxu0
      %v2708 = vadd.f32 0.0, %v2707
      %v2709 = vpop.f32.mrb[0].mxu0
      %2710 = vmatprep.mubr.bf16.mxu0 0
      %2711 = vmatmul.mubr.bf16.gmra.mrb[0].mxu0 %v2283
      %v2712 = vpop.f32.mrb[0].mxu0
      %v2713 = vadd.f32 0.0, %v2712
      %v2714 = vpop.f32.mrb[0].mxu0
      %v2715 = vpop.f32.mrb[0].mxu0
      %v2716 = vadd.f32 0.0, %v2715
      %v2717 = vpop.f32.mrb[0].mxu0
      %2718 = vmatprep.mubr.bf16.mxu0 0
      %2719 = vmatmul.mubr.bf16.gmra.mrb[0].mxu0 %v2285
      %v2720 = vpop.f32.mrb[0].mxu0
      %v2721 = vadd.f32 0.0, %v2720
      %v2722 = vpop.f32.mrb[0].mxu0
      %v2723 = vpop.f32.mrb[0].mxu0
      %v2724 = vadd.f32 0.0, %v2723
      %v2725 = vpop.f32.mrb[0].mxu0
      %2726 = vmatprep.mubr.bf16.mxu0 0
      %2727 = vmatmul.mubr.bf16.gmra.mrb[0].mxu0 %v2287
      %v2728 = vpop.f32.mrb[0].mxu0
      %v2729 = vadd.f32 0.0, %v2728
      %v2730 = vpop.f32.mrb[0].mxu0
      %v2731 = vpop.f32.mrb[0].mxu0
      %v2732 = vadd.f32 0.0, %v2731
      %v2733 = vpop.f32.mrb[0].mxu0
      %2734 = vmatprep.mubr.bf16.mxu0 0
      %2735 = vmatmul.mubr.bf16.gmra.mrb[0].mxu0 %v2289
      %v2736 = vpop.f32.mrb[0].mxu0
      %v2737 = vadd.f32 0.0, %v2736
      %v2738 = vpop.f32.mrb[0].mxu0
      %v2739 = vpop.f32.mrb[0].mxu0
      %v2740 = vadd.f32 0.0, %v2739
      %v2741 = vpop.f32.mrb[0].mxu0
      %2742 = vmatprep.mubr.bf16.mxu0 0
      %2743 = vmatmul.mubr.bf16.gmra.mrb[0].mxu0 %v2291
      %v2744 = vpop.f32.mrb[0].mxu0
      %v2745 = vadd.f32 0.0, %v2744
      %v2746 = vpop.f32.mrb[0].mxu0
      %v2747 = vpop.f32.mrb[0].mxu0
      %v2748 = vadd.f32 0.0, %v2747
      %v2749 = vpop.f32.mrb[0].mxu0
      %2750 = vmatprep.mubr.bf16.mxu0 0
      %2751 = vmatmul.mubr.bf16.gmra.mrb[0].mxu0 %v2293
      %v2752 = vpop.f32.mrb[0].mxu0
      %v2753 = vadd.f32 0.0, %v2752
      %v2754 = vpop.f32.mrb[0].mxu0
      %v2755 = vpop.f32.mrb[0].mxu0
      %v2756 = vadd.f32 0.0, %v2755
      %v2757 = vpop.f32.mrb[0].mxu0
      %2758 = vmatprep.mubr.bf16.mxu0 0
      %2759 = vmatmul.mubr.bf16.gmra.mrb[0].mxu0 %v2295
      %v2760 = vpop.f32.mrb[0].mxu0
      %v2761 = vadd.f32 0.0, %v2760
      %v2762 = vpop.f32.mrb[0].mxu0
      %v2763 = vpop.f32.mrb[0].mxu0
      %v2764 = vadd.f32 0.0, %v2763
      %v2765 = vpop.f32.mrb[0].mxu0
      %2766 = vmatprep.mubr.bf16.mxu0 0
      %2767 = vmatmul.mubr.bf16.gmra.mrb[0].mxu0 %v2297
      %v2768 = vpop.f32.mrb[0].mxu0
      %v2769 = vadd.f32 0.0, %v2768
      %v2770 = vpop.f32.mrb[0].mxu0
      %v2771 = vpop.f32.mrb[0].mxu0
      %v2772 = vadd.f32 0.0, %v2771
      %v2773 = vpop.f32.mrb[0].mxu0
      %2774 = vmatprep.mubr.bf16.mxu0 0
      %2775 = vmatmul.mubr.bf16.gmra.mrb[0].mxu0 %v2299
      %v2776 = vpop.f32.mrb[0].mxu0
      %v2777 = vadd.f32 0.0, %v2776
      %v2778 = vpop.f32.mrb[0].mxu0
      %v2779 = vpop.f32.mrb[0].mxu0
      %v2780 = vadd.f32 0.0, %v2779
      %v2781 = vpop.f32.mrb[0].mxu0
      %2782 = vdwg.mxu0
      %v2789 = vunpack.c.l.b16 %v2527
      %v2790 = vunpack.c.l.b16 %v2528
      %v2791 = vunpack.c.l.b16 %v2529
      %v2792 = vunpack.c.l.b16 %v2530
      %v2793 = vunpack.c.l.b16 %v2531
      %v2794 = vunpack.c.l.b16 %v2532
      %v2795 = vpack.c.b16 %v2790, %v2789
      %v2796 = vpack.c.b16 %v2792, %v2791
      %v2797 = vpack.c.b16 %v2794, %v2793
      %2801 = vmatprep.subr.bf16.mxu0 0
      %2802 = vmatpush1.bf16.msra.mxu0 %v2795
      %2803 = vmatprep.subr.bf16.mxu0 0
      %2804 = vmatpush1.bf16.msra.mxu0 %v2796
      %2805 = vmatprep.subr.bf16.mxu0 0
      %2806 = vmatpush1.bf16.msra.mxu0 %v2797
      %2807 = vmatprep.subr.bf16.mxu0 0
      %2808 = vmatpush1.bf16.msra.mxu0 0
      %2809 = vmatprep.subr.bf16.mxu0 0
      %2810 = vmatpush1.bf16.msra.mxu0 0
      %2811 = vmatprep.subr.bf16.mxu0 0
      %2812 = vmatpush1.bf16.msra.mxu0 0
      %2813 = vmatprep.subr.bf16.mxu0 0
      %2814 = vmatpush1.bf16.msra.mxu0 0
      %2815 = vmatprep.subr.bf16.mxu0 0
      %2816 = vmatpush1.bf16.msra.mxu0 0
      %2817 = vmatprep.subr.bf16.mxu0 0
      %2818 = vmatpush1.bf16.msra.mxu0 0
      %2819 = vmatprep.subr.bf16.mxu0 0
      %2820 = vmatpush1.bf16.msra.mxu0 0
      %2821 = vmatprep.subr.bf16.mxu0 0
      %2822 = vmatpush1.bf16.msra.mxu0 0
      %2823 = vmatprep.subr.bf16.mxu0 0
      %2824 = vmatpush1.bf16.msra.mxu0 0
      %2825 = vmatprep.subr.bf16.mxu0 0
      %2826 = vmatpush1.bf16.msra.mxu0 0
      %2827 = vmatprep.subr.bf16.mxu0 0
      %2828 = vmatpush1.bf16.msra.mxu0 0
      %2829 = vmatprep.subr.bf16.mxu0 0
      %2830 = vmatpush1.bf16.msra.mxu0 0
      %2831 = vmatprep.subr.bf16.mxu0 0
      %2832 = vmatpush1.bf16.msra.mxu0 0
      %2833 = vmatprep.mubr.bf16.mxu0 0
      %2834 = vmatmul.mubr.bf16.gmra.mrb[0].mxu0 %v2253
      %v2835 = vpop.f32.mrb[0].mxu0
      %v2836 = vadd.f32 %v2520, %v2835
      %v2837 = vpop.f32.mrb[0].mxu0
      %v2838 = vpop.f32.mrb[0].mxu0
      %v2839 = vadd.f32 %v2523, %v2838
      %v2840 = vpop.f32.mrb[0].mxu0
      %2841 = vmatprep.mubr.bf16.mxu0 0
      %2842 = vmatmul.mubr.bf16.gmra.mrb[0].mxu0 %v2255
      %v2843 = vpop.f32.mrb[0].mxu0
      %v2844 = vadd.f32 %v2336, %v2843
      %v2845 = vpop.f32.mrb[0].mxu0
      %v2846 = vpop.f32.mrb[0].mxu0
      %v2847 = vadd.f32 %v2339, %v2846
      %v2848 = vpop.f32.mrb[0].mxu0
      %2849 = vmatprep.mubr.bf16.mxu0 0
      %2850 = vmatmul.mubr.bf16.gmra.mrb[0].mxu0 %v2257
      %v2851 = vpop.f32.mrb[0].mxu0
      %v2852 = vadd.f32 %v2344, %v2851
      %v2853 = vpop.f32.mrb[0].mxu0
      %v2854 = vpop.f32.mrb[0].mxu0
      %v2855 = vadd.f32 %v2347, %v2854
      %v2856 = vpop.f32.mrb[0].mxu0
      %2857 = vmatprep.mubr.bf16.mxu0 0
      %2858 = vmatmul.mubr.bf16.gmra.mrb[0].mxu0 %v2259
      %v2859 = vpop.f32.mrb[0].mxu0
      %v2860 = vadd.f32 %v2352, %v2859
      %v2861 = vpop.f32.mrb[0].mxu0
      %v2862 = vpop.f32.mrb[0].mxu0
      %v2863 = vadd.f32 %v2355, %v2862
      %v2864 = vpop.f32.mrb[0].mxu0
      %2865 = vmatprep.mubr.bf16.mxu0 0
      %2866 = vmatmul.mubr.bf16.gmra.mrb[0].mxu0 %v2261
      %v2867 = vpop.f32.mrb[0].mxu0
      %v2868 = vadd.f32 %v2360, %v2867
      %v2869 = vpop.f32.mrb[0].mxu0
      %v2870 = vpop.f32.mrb[0].mxu0
      %v2871 = vadd.f32 %v2363, %v2870
      %v2872 = vpop.f32.mrb[0].mxu0
      %2873 = vmatprep.mubr.bf16.mxu0 0
      %2874 = vmatmul.mubr.bf16.gmra.mrb[0].mxu0 %v2263
      %v2875 = vpop.f32.mrb[0].mxu0
      %v2876 = vadd.f32 %v2368, %v2875
      %v2877 = vpop.f32.mrb[0].mxu0
      %v2878 = vpop.f32.mrb[0].mxu0
      %v2879 = vadd.f32 %v2371, %v2878
      %v2880 = vpop.f32.mrb[0].mxu0
      %2881 = vmatprep.mubr.bf16.mxu0 0
      %2882 = vmatmul.mubr.bf16.gmra.mrb[0].mxu0 %v2265
      %v2883 = vpop.f32.mrb[0].mxu0
      %v2884 = vadd.f32 %v2376, %v2883
      %v2885 = vpop.f32.mrb[0].mxu0
      %v2886 = vpop.f32.mrb[0].mxu0
      %v2887 = vadd.f32 %v2379, %v2886
      %v2888 = vpop.f32.mrb[0].mxu0
      %2889 = vmatprep.mubr.bf16.mxu0 0
      %2890 = vmatmul.mubr.bf16.gmra.mrb[0].mxu0 %v2267
      %v2891 = vpop.f32.mrb[0].mxu0
      %v2892 = vadd.f32 %v2384, %v2891
      %v2893 = vpop.f32.mrb[0].mxu0
      %v2894 = vpop.f32.mrb[0].mxu0
      %v2895 = vadd.f32 %v2387, %v2894
      %v2896 = vpop.f32.mrb[0].mxu0
      %2897 = vmatprep.mubr.bf16.mxu0 0
      %2898 = vmatmul.mubr.bf16.gmra.mrb[0].mxu0 %v2269
      %v2899 = vpop.f32.mrb[0].mxu0
      %v2900 = vadd.f32 %v2392, %v2899
      %v2901 = vpop.f32.mrb[0].mxu0
      %v2902 = vpop.f32.mrb[0].mxu0
      %v2903 = vadd.f32 %v2395, %v2902
      %v2904 = vpop.f32.mrb[0].mxu0
      %2905 = vmatprep.mubr.bf16.mxu0 0
      %2906 = vmatmul.mubr.bf16.gmra.mrb[0].mxu0 %v2271
      %v2907 = vpop.f32.mrb[0].mxu0
      %v2908 = vadd.f32 %v2400, %v2907
      %v2909 = vpop.f32.mrb[0].mxu0
      %v2910 = vpop.f32.mrb[0].mxu0
      %v2911 = vadd.f32 %v2403, %v2910
      %v2912 = vpop.f32.mrb[0].mxu0
      %2913 = vmatprep.mubr.bf16.mxu0 0
      %2914 = vmatmul.mubr.bf16.gmra.mrb[0].mxu0 %v2273
      %v2915 = vpop.f32.mrb[0].mxu0
      %v2916 = vadd.f32 %v2408, %v2915
      %v2917 = vpop.f32.mrb[0].mxu0
      %v2918 = vpop.f32.mrb[0].mxu0
      %v2919 = vadd.f32 %v2411, %v2918
      %v2920 = vpop.f32.mrb[0].mxu0
      %2921 = vmatprep.mubr.bf16.mxu0 0
      %2922 = vmatmul.mubr.bf16.gmra.mrb[0].mxu0 %v2275
      %v2923 = vpop.f32.mrb[0].mxu0
      %v2924 = vadd.f32 %v2416, %v2923
      %v2925 = vpop.f32.mrb[0].mxu0
      %v2926 = vpop.f32.mrb[0].mxu0
      %v2927 = vadd.f32 %v2419, %v2926
      %v2928 = vpop.f32.mrb[0].mxu0
      %2929 = vmatprep.mubr.bf16.mxu0 0
      %2930 = vmatmul.mubr.bf16.gmra.mrb[0].mxu0 %v2277
      %v2931 = vpop.f32.mrb[0].mxu0
      %v2932 = vadd.f32 %v2424, %v2931
      %v2933 = vpop.f32.mrb[0].mxu0
      %v2934 = vpop.f32.mrb[0].mxu0
      %v2935 = vadd.f32 %v2427, %v2934
      %v2936 = vpop.f32.mrb[0].mxu0
      %2937 = vmatprep.mubr.bf16.mxu0 0
      %2938 = vmatmul.mubr.bf16.gmra.mrb[0].mxu0 %v2279
      %v2939 = vpop.f32.mrb[0].mxu0
      %v2940 = vadd.f32 %v2432, %v2939
      %v2941 = vpop.f32.mrb[0].mxu0
      %v2942 = vpop.f32.mrb[0].mxu0
      %v2943 = vadd.f32 %v2435, %v2942
      %v2944 = vpop.f32.mrb[0].mxu0
      %2945 = vmatprep.mubr.bf16.mxu0 0
      %2946 = vmatmul.mubr.bf16.gmra.mrb[0].mxu0 %v2281
      %v2947 = vpop.f32.mrb[0].mxu0
      %v2948 = vadd.f32 %v2440, %v2947
      %v2949 = vpop.f32.mrb[0].mxu0
      %v2950 = vpop.f32.mrb[0].mxu0
      %v2951 = vadd.f32 %v2443, %v2950
      %v2952 = vpop.f32.mrb[0].mxu0
      %2953 = vmatprep.mubr.bf16.mxu0 0
      %2954 = vmatmul.mubr.bf16.gmra.mrb[0].mxu0 %v2283
      %v2955 = vpop.f32.mrb[0].mxu0
      %v2956 = vadd.f32 %v2448, %v2955
      %v2957 = vpop.f32.mrb[0].mxu0
      %v2958 = vpop.f32.mrb[0].mxu0
      %v2959 = vadd.f32 %v2451, %v2958
      %v2960 = vpop.f32.mrb[0].mxu0
      %2961 = vmatprep.mubr.bf16.mxu0 0
      %2962 = vmatmul.mubr.bf16.gmra.mrb[0].mxu0 %v2285
      %v2963 = vpop.f32.mrb[0].mxu0
      %v2964 = vadd.f32 %v2456, %v2963
      %v2965 = vpop.f32.mrb[0].mxu0
      %v2966 = vpop.f32.mrb[0].mxu0
      %v2967 = vadd.f32 %v2459, %v2966
      %v2968 = vpop.f32.mrb[0].mxu0
      %2969 = vmatprep.mubr.bf16.mxu0 0
      %2970 = vmatmul.mubr.bf16.gmra.mrb[0].mxu0 %v2287
      %v2971 = vpop.f32.mrb[0].mxu0
      %v2972 = vadd.f32 %v2464, %v2971
      %v2973 = vpop.f32.mrb[0].mxu0
      %v2974 = vpop.f32.mrb[0].mxu0
      %v2975 = vadd.f32 %v2467, %v2974
      %v2976 = vpop.f32.mrb[0].mxu0
      %2977 = vmatprep.mubr.bf16.mxu0 0
      %2978 = vmatmul.mubr.bf16.gmra.mrb[0].mxu0 %v2289
      %v2979 = vpop.f32.mrb[0].mxu0
      %v2980 = vadd.f32 %v2472, %v2979
      %v2981 = vpop.f32.mrb[0].mxu0
      %v2982 = vpop.f32.mrb[0].mxu0
      %v2983 = vadd.f32 %v2475, %v2982
      %v2984 = vpop.f32.mrb[0].mxu0
      %2985 = vmatprep.mubr.bf16.mxu0 0
      %2986 = vmatmul.mubr.bf16.gmra.mrb[0].mxu0 %v2291
      %v2987 = vpop.f32.mrb[0].mxu0
      %v2988 = vadd.f32 %v2480, %v2987
      %v2989 = vpop.f32.mrb[0].mxu0
      %v2990 = vpop.f32.mrb[0].mxu0
      %v2991 = vadd.f32 %v2483, %v2990
      %v2992 = vpop.f32.mrb[0].mxu0
      %2993 = vmatprep.mubr.bf16.mxu0 0
      %2994 = vmatmul.mubr.bf16.gmra.mrb[0].mxu0 %v2293
      %v2995 = vpop.f32.mrb[0].mxu0
      %v2996 = vadd.f32 %v2488, %v2995
      %v2997 = vpop.f32.mrb[0].mxu0
      %v2998 = vpop.f32.mrb[0].mxu0
      %v2999 = vadd.f32 %v2491, %v2998
      %v3000 = vpop.f32.mrb[0].mxu0
      %3001 = vmatprep.mubr.bf16.mxu0 0
      %3002 = vmatmul.mubr.bf16.gmra.mrb[0].mxu0 %v2295
      %v3003 = vpop.f32.mrb[0].mxu0
      %v3004 = vadd.f32 %v2496, %v3003
      %v3005 = vpop.f32.mrb[0].mxu0
      %v3006 = vpop.f32.mrb[0].mxu0
      %v3007 = vadd.f32 %v2499, %v3006
      %v3008 = vpop.f32.mrb[0].mxu0
      %3009 = vmatprep.mubr.bf16.mxu0 0
      %3010 = vmatmul.mubr.bf16.gmra.mrb[0].mxu0 %v2297
      %v3011 = vpop.f32.mrb[0].mxu0
      %v3012 = vadd.f32 %v2504, %v3011
      %v3013 = vpop.f32.mrb[0].mxu0
      %v3014 = vpop.f32.mrb[0].mxu0
      %v3015 = vadd.f32 %v2507, %v3014
      %v3016 = vpop.f32.mrb[0].mxu0
      %3017 = vmatprep.mubr.bf16.mxu0 0
      %3018 = vmatmul.mubr.bf16.gmra.mrb[0].mxu0 %v2299
      %v3019 = vpop.f32.mrb[0].mxu0
      %v3020 = vadd.f32 %v2512, %v3019
      %v3021 = vpop.f32.mrb[0].mxu0
      %v3022 = vpop.f32.mrb[0].mxu0
      %v3023 = vadd.f32 %v2515, %v3022
      %v3024 = vpop.f32.mrb[0].mxu0
      %3025 = vdwg.mxu0
      %v3026 = vadd.f32 %v2836, %v2601
      %v3027 = vadd.f32 %v2839, %v2604
      %v3028 = vadd.f32 %v2844, %v2609
      %v3029 = vadd.f32 %v2847, %v2612
      %v3030 = vadd.f32 %v2852, %v2617
      %v3031 = vadd.f32 %v2855, %v2620
      %v3032 = vadd.f32 %v2860, %v2625
      %v3033 = vadd.f32 %v2863, %v2628
      %v3034 = vadd.f32 %v2868, %v2633
      %v3035 = vadd.f32 %v2871, %v2636
      %v3036 = vadd.f32 %v2876, %v2641
      %v3037 = vadd.f32 %v2879, %v2644
      %v3038 = vadd.f32 %v2884, %v2649
      %v3039 = vadd.f32 %v2887, %v2652
      %v3040 = vadd.f32 %v2892, %v2657
      %v3041 = vadd.f32 %v2895, %v2660
      %v3042 = vadd.f32 %v2900, %v2665
      %v3043 = vadd.f32 %v2903, %v2668
      %v3044 = vadd.f32 %v2908, %v2673
      %v3045 = vadd.f32 %v2911, %v2676
      %v3046 = vadd.f32 %v2916, %v2681
      %v3047 = vadd.f32 %v2919, %v2684
      %v3048 = vadd.f32 %v2924, %v2689
      %v3049 = vadd.f32 %v2927, %v2692
      %v3050 = vadd.f32 %v2932, %v2697
      %v3051 = vadd.f32 %v2935, %v2700
      %v3052 = vadd.f32 %v2940, %v2705
      %v3053 = vadd.f32 %v2943, %v2708
      %v3054 = vadd.f32 %v2948, %v2713
      %v3055 = vadd.f32 %v2951, %v2716
      %v3056 = vadd.f32 %v2956, %v2721
      %v3057 = vadd.f32 %v2959, %v2724
      %v3058 = vadd.f32 %v2964, %v2729
      %v3059 = vadd.f32 %v2967, %v2732
      %v3060 = vadd.f32 %v2972, %v2737
      %v3061 = vadd.f32 %v2975, %v2740
      %v3062 = vadd.f32 %v2980, %v2745
      %v3063 = vadd.f32 %v2983, %v2748
      %v3064 = vadd.f32 %v2988, %v2753
      %v3065 = vadd.f32 %v2991, %v2756
      %v3066 = vadd.f32 %v2996, %v2761
      %v3067 = vadd.f32 %v2999, %v2764
      %v3068 = vadd.f32 %v3004, %v2769
      %v3069 = vadd.f32 %v3007, %v2772
      %v3070 = vadd.f32 %v3012, %v2777
      %v3071 = vadd.f32 %v3015, %v2780
      %v3072 = vadd.f32 %v3020, %v2593
      %v3073 = vadd.f32 %v3023, %v2596
      %v3074 = vld [vmem:[%s4] sm:$0x1]
      %v3076 = vlaneseq
      %v3077 = vshrl.u32 %v3076, 7
      %v3078 = vsub.s32 0, %v3077
      %v3079 = vrot.slane %v3074, %v3078
      %v3081 = vadd.f32 %v3026, %v3079
      %v3082 = vadd.f32 %v3027, %v3079
      %v3083 = vadd.f32 %v3028, %v3079
      %v3084 = vadd.f32 %v3029, %v3079
      %v3085 = vadd.f32 %v3030, %v3079
      %v3086 = vadd.f32 %v3031, %v3079
      %v3087 = vadd.f32 %v3032, %v3079
      %v3088 = vadd.f32 %v3033, %v3079
      %v3089 = vadd.f32 %v3034, %v3079
      %v3090 = vadd.f32 %v3035, %v3079
      %v3091 = vadd.f32 %v3036, %v3079
      %v3092 = vadd.f32 %v3037, %v3079
      %v3093 = vadd.f32 %v3038, %v3079
      %v3094 = vadd.f32 %v3039, %v3079
      %v3095 = vadd.f32 %v3040, %v3079
      %v3096 = vadd.f32 %v3041, %v3079
      %v3097 = vadd.f32 %v3042, %v3079
      %v3098 = vadd.f32 %v3043, %v3079
      %v3099 = vadd.f32 %v3044, %v3079
      %v3100 = vadd.f32 %v3045, %v3079
      %v3101 = vadd.f32 %v3046, %v3079
      %v3102 = vadd.f32 %v3047, %v3079
      %v3103 = vadd.f32 %v3048, %v3079
      %v3104 = vadd.f32 %v3049, %v3079
      %v3105 = vadd.f32 %v3050, %v3079
      %v3106 = vadd.f32 %v3051, %v3079
      %v3107 = vadd.f32 %v3052, %v3079
      %v3108 = vadd.f32 %v3053, %v3079
      %v3109 = vadd.f32 %v3054, %v3079
      %v3110 = vadd.f32 %v3055, %v3079
      %v3111 = vadd.f32 %v3056, %v3079
      %v3112 = vadd.f32 %v3057, %v3079
      %v3113 = vadd.f32 %v3058, %v3079
      %v3114 = vadd.f32 %v3059, %v3079
      %v3115 = vadd.f32 %v3060, %v3079
      %v3116 = vadd.f32 %v3061, %v3079
      %v3117 = vadd.f32 %v3062, %v3079
      %v3118 = vadd.f32 %v3063, %v3079
      %v3119 = vadd.f32 %v3064, %v3079
      %v3120 = vadd.f32 %v3065, %v3079
      %v3121 = vadd.f32 %v3066, %v3079
      %v3122 = vadd.f32 %v3067, %v3079
      %v3123 = vadd.f32 %v3068, %v3079
      %v3124 = vadd.f32 %v3069, %v3079
      %v3125 = vadd.f32 %v3070, %v3079
      %v3126 = vadd.f32 %v3071, %v3079
      %v3127 = vadd.f32 %v3072, %v3079
      %v3128 = vadd.f32 %v3073, %v3079
      %vm3129 = vcmp.ge.f32.partialorder %v3081, 0.0
      %vm3130 = vcmp.ge.f32.partialorder %v3082, 0.0
      %vm3131 = vcmp.ge.f32.partialorder %v3083, 0.0
      %vm3132 = vcmp.ge.f32.partialorder %v3084, 0.0
      %vm3133 = vcmp.ge.f32.partialorder %v3085, 0.0
      %vm3134 = vcmp.ge.f32.partialorder %v3086, 0.0
      %vm3135 = vcmp.ge.f32.partialorder %v3087, 0.0
      %vm3136 = vcmp.ge.f32.partialorder %v3088, 0.0
      %vm3137 = vcmp.ge.f32.partialorder %v3089, 0.0
      %vm3138 = vcmp.ge.f32.partialorder %v3090, 0.0
      %vm3139 = vcmp.ge.f32.partialorder %v3091, 0.0
      %vm3140 = vcmp.ge.f32.partialorder %v3092, 0.0
      %vm3141 = vcmp.ge.f32.partialorder %v3093, 0.0
      %vm3142 = vcmp.ge.f32.partialorder %v3094, 0.0
      %vm3143 = vcmp.ge.f32.partialorder %v3095, 0.0
      %vm3144 = vcmp.ge.f32.partialorder %v3096, 0.0
      %vm3145 = vcmp.ge.f32.partialorder %v3097, 0.0
      %vm3146 = vcmp.ge.f32.partialorder %v3098, 0.0
      %vm3147 = vcmp.ge.f32.partialorder %v3099, 0.0
      %vm3148 = vcmp.ge.f32.partialorder %v3100, 0.0
      %vm3149 = vcmp.ge.f32.partialorder %v3101, 0.0
      %vm3150 = vcmp.ge.f32.partialorder %v3102, 0.0
      %vm3151 = vcmp.ge.f32.partialorder %v3103, 0.0
      %vm3152 = vcmp.ge.f32.partialorder %v3104, 0.0
      %vm3153 = vcmp.ge.f32.partialorder %v3105, 0.0
      %vm3154 = vcmp.ge.f32.partialorder %v3106, 0.0
      %vm3155 = vcmp.ge.f32.partialorder %v3107, 0.0
      %vm3156 = vcmp.ge.f32.partialorder %v3108, 0.0
      %vm3157 = vcmp.ge.f32.partialorder %v3109, 0.0
      %vm3158 = vcmp.ge.f32.partialorder %v3110, 0.0
      %vm3159 = vcmp.ge.f32.partialorder %v3111, 0.0
      %vm3160 = vcmp.ge.f32.partialorder %v3112, 0.0
      %vm3161 = vcmp.ge.f32.partialorder %v3113, 0.0
      %vm3162 = vcmp.ge.f32.partialorder %v3114, 0.0
      %vm3163 = vcmp.ge.f32.partialorder %v3115, 0.0
      %vm3164 = vcmp.ge.f32.partialorder %v3116, 0.0
      %vm3165 = vcmp.ge.f32.partialorder %v3117, 0.0
      %vm3166 = vcmp.ge.f32.partialorder %v3118, 0.0
      %vm3167 = vcmp.ge.f32.partialorder %v3119, 0.0
      %vm3168 = vcmp.ge.f32.partialorder %v3120, 0.0
      %vm3169 = vcmp.ge.f32.partialorder %v3121, 0.0
      %vm3170 = vcmp.ge.f32.partialorder %v3122, 0.0
      %vm3171 = vcmp.ge.f32.partialorder %v3123, 0.0
      %vm3172 = vcmp.ge.f32.partialorder %v3124, 0.0
      %vm3173 = vcmp.ge.f32.partialorder %v3125, 0.0
      %vm3174 = vcmp.ge.f32.partialorder %v3126, 0.0
      %vm3175 = vcmp.ge.f32.partialorder %v3127, 0.0
      %vm3176 = vcmp.ge.f32.partialorder %v3128, 0.0
      %v3177 = vmul.f32 %v3081, 0.1
      %v3178 = vmul.f32 %v3082, 0.1
      %v3179 = vmul.f32 %v3083, 0.1
      %v3180 = vmul.f32 %v3084, 0.1
      %v3181 = vmul.f32 %v3085, 0.1
      %v3182 = vmul.f32 %v3086, 0.1
      %v3183 = vmul.f32 %v3087, 0.1
      %v3184 = vmul.f32 %v3088, 0.1
      %v3185 = vmul.f32 %v3089, 0.1
      %v3186 = vmul.f32 %v3090, 0.1
      %v3187 = vmul.f32 %v3091, 0.1
      %v3188 = vmul.f32 %v3092, 0.1
      %v3189 = vmul.f32 %v3093, 0.1
      %v3190 = vmul.f32 %v3094, 0.1
      %v3191 = vmul.f32 %v3095, 0.1
      %v3192 = vmul.f32 %v3096, 0.1
      %v3193 = vmul.f32 %v3097, 0.1
      %v3194 = vmul.f32 %v3098, 0.1
      %v3195 = vmul.f32 %v3099, 0.1
      %v3196 = vmul.f32 %v3100, 0.1
      %v3197 = vmul.f32 %v3101, 0.1
      %v3198 = vmul.f32 %v3102, 0.1
      %v3199 = vmul.f32 %v3103, 0.1
      %v3200 = vmul.f32 %v3104, 0.1
      %v3201 = vmul.f32 %v3105, 0.1
      %v3202 = vmul.f32 %v3106, 0.1
      %v3203 = vmul.f32 %v3107, 0.1
      %v3204 = vmul.f32 %v3108, 0.1
      %v3205 = vmul.f32 %v3109, 0.1
      %v3206 = vmul.f32 %v3110, 0.1
      %v3207 = vmul.f32 %v3111, 0.1
      %v3208 = vmul.f32 %v3112, 0.1
      %v3209 = vmul.f32 %v3113, 0.1
      %v3210 = vmul.f32 %v3114, 0.1
      %v3211 = vmul.f32 %v3115, 0.1
      %v3212 = vmul.f32 %v3116, 0.1
      %v3213 = vmul.f32 %v3117, 0.1
      %v3214 = vmul.f32 %v3118, 0.1
      %v3215 = vmul.f32 %v3119, 0.1
      %v3216 = vmul.f32 %v3120, 0.1
      %v3217 = vmul.f32 %v3121, 0.1
      %v3218 = vmul.f32 %v3122, 0.1
      %v3219 = vmul.f32 %v3123, 0.1
      %v3220 = vmul.f32 %v3124, 0.1
      %v3221 = vmul.f32 %v3125, 0.1
      %v3222 = vmul.f32 %v3126, 0.1
      %v3223 = vmul.f32 %v3127, 0.1
      %v3224 = vmul.f32 %v3128, 0.1
      %v3225 = vsel %vm3129, %v3081, %v3177
      %v3226 = vsel %vm3130, %v3082, %v3178
      %v3227 = vsel %vm3131, %v3083, %v3179
      %v3228 = vsel %vm3132, %v3084, %v3180
      %v3229 = vsel %vm3133, %v3085, %v3181
      %v3230 = vsel %vm3134, %v3086, %v3182
      %v3231 = vsel %vm3135, %v3087, %v3183
      %v3232 = vsel %vm3136, %v3088, %v3184
      %v3233 = vsel %vm3137, %v3089, %v3185
      %v3234 = vsel %vm3138, %v3090, %v3186
      %v3235 = vsel %vm3139, %v3091, %v3187
      %v3236 = vsel %vm3140, %v3092, %v3188
      %v3237 = vsel %vm3141, %v3093, %v3189
      %v3238 = vsel %vm3142, %v3094, %v3190
      %v3239 = vsel %vm3143, %v3095, %v3191
      %v3240 = vsel %vm3144, %v3096, %v3192
      %v3241 = vsel %vm3145, %v3097, %v3193
      %v3242 = vsel %vm3146, %v3098, %v3194
      %v3243 = vsel %vm3147, %v3099, %v3195
      %v3244 = vsel %vm3148, %v3100, %v3196
      %v3245 = vsel %vm3149, %v3101, %v3197
      %v3246 = vsel %vm3150, %v3102, %v3198
      %v3247 = vsel %vm3151, %v3103, %v3199
      %v3248 = vsel %vm3152, %v3104, %v3200
      %v3249 = vsel %vm3153, %v3105, %v3201
      %v3250 = vsel %vm3154, %v3106, %v3202
      %v3251 = vsel %vm3155, %v3107, %v3203
      %v3252 = vsel %vm3156, %v3108, %v3204
      %v3253 = vsel %vm3157, %v3109, %v3205
      %v3254 = vsel %vm3158, %v3110, %v3206
      %v3255 = vsel %vm3159, %v3111, %v3207
      %v3256 = vsel %vm3160, %v3112, %v3208
      %v3257 = vsel %vm3161, %v3113, %v3209
      %v3258 = vsel %vm3162, %v3114, %v3210
      %v3259 = vsel %vm3163, %v3115, %v3211
      %v3260 = vsel %vm3164, %v3116, %v3212
      %v3261 = vsel %vm3165, %v3117, %v3213
      %v3262 = vsel %vm3166, %v3118, %v3214
      %v3263 = vsel %vm3167, %v3119, %v3215
      %v3264 = vsel %vm3168, %v3120, %v3216
      %v3265 = vsel %vm3169, %v3121, %v3217
      %v3266 = vsel %vm3170, %v3122, %v3218
      %v3267 = vsel %vm3171, %v3123, %v3219
      %v3268 = vsel %vm3172, %v3124, %v3220
      %v3269 = vsel %vm3173, %v3125, %v3221
      %v3270 = vsel %vm3174, %v3126, %v3222
      %v3271 = vsel %vm3175, %v3127, %v3223
      %v3272 = vsel %vm3176, %v3128, %v3224
      %v3273 = vpack.c.bf16 %v3226, %v3225
      %v3274 = vpack.c.bf16 %v3228, %v3227
      %v3275 = vpack.c.bf16 %v3230, %v3229
      %v3276 = vpack.c.bf16 %v3232, %v3231
      %v3277 = vpack.c.bf16 %v3234, %v3233
      %v3278 = vpack.c.bf16 %v3236, %v3235
      %v3279 = vpack.c.bf16 %v3238, %v3237
      %v3280 = vpack.c.bf16 %v3240, %v3239
      %v3281 = vpack.c.bf16 %v3242, %v3241
      %v3282 = vpack.c.bf16 %v3244, %v3243
      %v3283 = vpack.c.bf16 %v3246, %v3245
      %v3284 = vpack.c.bf16 %v3248, %v3247
      %v3285 = vpack.c.bf16 %v3250, %v3249
      %v3286 = vpack.c.bf16 %v3252, %v3251
      %v3287 = vpack.c.bf16 %v3254, %v3253
      %v3288 = vpack.c.bf16 %v3256, %v3255
      %v3289 = vpack.c.bf16 %v3258, %v3257
      %v3290 = vpack.c.bf16 %v3260, %v3259
      %v3291 = vpack.c.bf16 %v3262, %v3261
      %v3292 = vpack.c.bf16 %v3264, %v3263
      %v3293 = vpack.c.bf16 %v3266, %v3265
      %v3294 = vpack.c.bf16 %v3268, %v3267
      %v3295 = vpack.c.bf16 %v3270, %v3269
      %v3296 = vpack.c.bf16 %v3272, %v3271
      %3321 = vrot.lane.b32.xlu0 %v3273, 120
      %v3322 = vpop.permute.xlu0 %3321
      %3323 = vrot.lane.b32.xlu0 %v3274, 120
      %v3324 = vpop.permute.xlu0 %3323
      %3325 = vrot.lane.b32.xlu0 %v3275, 120
      %v3326 = vpop.permute.xlu0 %3325
      %3327 = vrot.lane.b32.xlu0 %v3276, 120
      %v3328 = vpop.permute.xlu0 %3327
      %3329 = vrot.lane.b32.xlu0 %v3277, 120
      %v3330 = vpop.permute.xlu0 %3329
      %3331 = vrot.lane.b32.xlu0 %v3278, 120
      %v3332 = vpop.permute.xlu0 %3331
      %3333 = vrot.lane.b32.xlu0 %v3279, 120
      %v3334 = vpop.permute.xlu0 %3333
      %3335 = vrot.lane.b32.xlu0 %v3280, 120
      %v3336 = vpop.permute.xlu0 %3335
      %3337 = vrot.lane.b32.xlu0 %v3281, 120
      %v3338 = vpop.permute.xlu0 %3337
      %3339 = vrot.lane.b32.xlu0 %v3282, 120
      %v3340 = vpop.permute.xlu0 %3339
      %3341 = vrot.lane.b32.xlu0 %v3283, 120
      %v3342 = vpop.permute.xlu0 %3341
      %3343 = vrot.lane.b32.xlu0 %v3284, 120
      %v3344 = vpop.permute.xlu0 %3343
      %3345 = vrot.lane.b32.xlu0 %v3285, 120
      %v3346 = vpop.permute.xlu0 %3345
      %3347 = vrot.lane.b32.xlu0 %v3286, 120
      %v3348 = vpop.permute.xlu0 %3347
      %3349 = vrot.lane.b32.xlu0 %v3287, 120
      %v3350 = vpop.permute.xlu0 %3349
      %3351 = vrot.lane.b32.xlu0 %v3288, 120
      %v3352 = vpop.permute.xlu0 %3351
      %3353 = vrot.lane.b32.xlu0 %v3289, 120
      %v3354 = vpop.permute.xlu0 %3353
      %3355 = vrot.lane.b32.xlu0 %v3290, 120
      %v3356 = vpop.permute.xlu0 %3355
      %3357 = vrot.lane.b32.xlu0 %v3291, 120
      %v3358 = vpop.permute.xlu0 %3357
      %3359 = vrot.lane.b32.xlu0 %v3292, 120
      %v3360 = vpop.permute.xlu0 %3359
      %3361 = vrot.lane.b32.xlu0 %v3293, 120
      %v3362 = vpop.permute.xlu0 %3361
      %3363 = vrot.lane.b32.xlu0 %v3294, 120
      %v3364 = vpop.permute.xlu0 %3363
      %3365 = vrot.lane.b32.xlu0 %v3295, 120
      %v3366 = vpop.permute.xlu0 %3365
      %3367 = vrot.lane.b32.xlu0 %v3296, 120
      %v3368 = vpop.permute.xlu0 %3367
      %vm3393 = vcmask 31744
      %3394 = vst.msk [vmem:[#allocation3] sm:$0xff] %vm3393, %v3322
      %3395 = vst.msk [vmem:[#allocation3 + $0x8] sm:$0xff] %vm3393, %v3324
      %3396 = vst.msk [vmem:[#allocation3 + $0x10] sm:$0xff] %vm3393, %v3326
      %3397 = vst.msk [vmem:[#allocation3 + $0x18] sm:$0xff] %vm3393, %v3328
      %3398 = vst.msk [vmem:[#allocation3 + $0x20] sm:$0xff] %vm3393, %v3330
      %3399 = vst.msk [vmem:[#allocation3 + $0x28] sm:$0xff] %vm3393, %v3332
      %3400 = vst.msk [vmem:[#allocation3 + $0x30] sm:$0xff] %vm3393, %v3334
      %3401 = vst.msk [vmem:[#allocation3 + $0x38] sm:$0xff] %vm3393, %v3336
      %3402 = vst.msk [vmem:[#allocation3 + $0x40] sm:$0xff] %vm3393, %v3338
      %3403 = vst.msk [vmem:[#allocation3 + $0x48] sm:$0xff] %vm3393, %v3340
      %3404 = vst.msk [vmem:[#allocation3 + $0x50] sm:$0xff] %vm3393, %v3342
      %3405 = vst.msk [vmem:[#allocation3 + $0x58] sm:$0xff] %vm3393, %v3344
      %3406 = vst.msk [vmem:[#allocation3 + $0x60] sm:$0xff] %vm3393, %v3346
      %3407 = vst.msk [vmem:[#allocation3 + $0x68] sm:$0xff] %vm3393, %v3348
      %3408 = vst.msk [vmem:[#allocation3 + $0x70] sm:$0xff] %vm3393, %v3350
      %3409 = vst.msk [vmem:[#allocation3 + $0x78] sm:$0xff] %vm3393, %v3352
      %3410 = vst.msk [vmem:[#allocation3 + $0x80] sm:$0xff] %vm3393, %v3354
      %3411 = vst.msk [vmem:[#allocation3 + $0x88] sm:$0xff] %vm3393, %v3356
      %3412 = vst.msk [vmem:[#allocation3 + $0x90] sm:$0xff] %vm3393, %v3358
      %3413 = vst.msk [vmem:[#allocation3 + $0x98] sm:$0xff] %vm3393, %v3360
      %3414 = vst.msk [vmem:[#allocation3 + $0xa0] sm:$0xff] %vm3393, %v3362
      %3415 = vst.msk [vmem:[#allocation3 + $0xa8] sm:$0xff] %vm3393, %v3364
      %3416 = vst.msk [vmem:[#allocation3 + $0xb0] sm:$0xff] %vm3393, %v3366
      %3417 = vst.msk [vmem:[#allocation3 + $0xb8] sm:$0xff] %vm3393, %v3368
      // Predicated region
      $region61: #{tpu_custom_call.1} parent=55 // pred_check
        %p3418 = pneg %p598
      $region62: #{tpu_custom_call.1} parent=55 // pred_check_branch
        %3420 = sbr.rel (%p3418) target = $region64
      $region63: #{tpu_custom_call.1} parent=55 // pred_region
        %3421 = vst.msk [vmem:[#allocation3] sm:$0xff] %vm3393, 0
        %3422 = vst.msk [vmem:[#allocation3 + $0x8] sm:$0xff] %vm3393, 0
        %3423 = vst.msk [vmem:[#allocation3 + $0x10] sm:$0xff] %vm3393, 0
        %3424 = vst.msk [vmem:[#allocation3 + $0x18] sm:$0xff] %vm3393, 0
        %3425 = vst.msk [vmem:[#allocation3 + $0xa0] sm:$0xff] %vm3393, 0
        %3426 = vst.msk [vmem:[#allocation3 + $0xa8] sm:$0xff] %vm3393, 0
        %3427 = vst.msk [vmem:[#allocation3 + $0xb0] sm:$0xff] %vm3393, 0
        %3428 = vst.msk [vmem:[#allocation3 + $0xb8] sm:$0xff] %vm3393, 0
      $region64: #{tpu_custom_call.1} parent=55 // pred_fallthru
        _
      %v3429 = vld [vmem:[#allocation3] sm:$0xff]
      %v3430 = vld [vmem:[#allocation3 + $0x8] sm:$0xff]
      %v3431 = vld [vmem:[#allocation3 + $0x10] sm:$0xff]
      %v3432 = vld [vmem:[#allocation3 + $0x18] sm:$0xff]
      %v3433 = vld [vmem:[#allocation3 + $0x20] sm:$0xff]
      %v3434 = vld [vmem:[#allocation3 + $0x28] sm:$0xff]
      %v3435 = vld [vmem:[#allocation3 + $0x30] sm:$0xff]
      %v3436 = vld [vmem:[#allocation3 + $0x38] sm:$0xff]
      %v3437 = vld [vmem:[#allocation3 + $0x40] sm:$0xff]
      %v3438 = vld [vmem:[#allocation3 + $0x48] sm:$0xff]
      %v3439 = vld [vmem:[#allocation3 + $0x50] sm:$0xff]
      %v3440 = vld [vmem:[#allocation3 + $0x58] sm:$0xff]
      %v3441 = vld [vmem:[#allocation3 + $0x60] sm:$0xff]
      %v3442 = vld [vmem:[#allocation3 + $0x68] sm:$0xff]
      %v3443 = vld [vmem:[#allocation3 + $0x70] sm:$0xff]
      %v3444 = vld [vmem:[#allocation3 + $0x78] sm:$0xff]
      %v3445 = vld [vmem:[#allocation3 + $0x80] sm:$0xff]
      %v3446 = vld [vmem:[#allocation3 + $0x88] sm:$0xff]
      %v3447 = vld [vmem:[#allocation3 + $0x90] sm:$0xff]
      %v3448 = vld [vmem:[#allocation3 + $0x98] sm:$0xff]
      %v3449 = vld [vmem:[#allocation3 + $0xa0] sm:$0xff]
      %v3450 = vld [vmem:[#allocation3 + $0xa8] sm:$0xff]
      %v3451 = vld [vmem:[#allocation3 + $0xb0] sm:$0xff]
      %v3452 = vld [vmem:[#allocation3 + $0xb8] sm:$0xff]
      %v3454 = vshrl.u32 %v3452, 16
      %v3456 = vrot.slane %v3454, 7
      %v3459 = vshrl.u32 %v3429, 16
      %v3461 = vrot.slane %v3459, 7
      %v3462 = vshll.u32 %v3429, 16
      %v3464 = vor.u32 %v3461, %v3462
      %v3466 = vshrl.u32 %v3430, 16
      %v3468 = vrot.slane %v3466, 7
      %v3469 = vshll.u32 %v3430, 16
      %v3471 = vor.u32 %v3468, %v3469
      %v3472 = vsel %vm1600, %v3461, %v3471
      %v3474 = vshrl.u32 %v3431, 16
      %v3476 = vrot.slane %v3474, 7
      %v3477 = vshll.u32 %v3431, 16
      %v3479 = vor.u32 %v3476, %v3477
      %v3480 = vsel %vm1600, %v3468, %v3479
      %v3482 = vshrl.u32 %v3432, 16
      %v3484 = vrot.slane %v3482, 7
      %v3485 = vshll.u32 %v3432, 16
      %v3487 = vor.u32 %v3484, %v3485
      %v3488 = vsel %vm1600, %v3476, %v3487
      %v3490 = vshrl.u32 %v3433, 16
      %v3492 = vrot.slane %v3490, 7
      %v3493 = vshll.u32 %v3433, 16
      %v3495 = vor.u32 %v3492, %v3493
      %v3496 = vsel %vm1600, %v3484, %v3495
      %v3498 = vshrl.u32 %v3434, 16
      %v3500 = vrot.slane %v3498, 7
      %v3501 = vshll.u32 %v3434, 16
      %v3503 = vor.u32 %v3500, %v3501
      %v3504 = vsel %vm1600, %v3492, %v3503
      %v3506 = vshrl.u32 %v3435, 16
      %v3508 = vrot.slane %v3506, 7
      %v3509 = vshll.u32 %v3435, 16
      %v3511 = vor.u32 %v3508, %v3509
      %v3512 = vsel %vm1600, %v3500, %v3511
      %v3514 = vshrl.u32 %v3436, 16
      %v3516 = vrot.slane %v3514, 7
      %v3517 = vshll.u32 %v3436, 16
      %v3519 = vor.u32 %v3516, %v3517
      %v3520 = vsel %vm1600, %v3508, %v3519
      %v3522 = vshrl.u32 %v3437, 16
      %v3524 = vrot.slane %v3522, 7
      %v3525 = vshll.u32 %v3437, 16
      %v3527 = vor.u32 %v3524, %v3525
      %v3528 = vsel %vm1600, %v3516, %v3527
      %v3530 = vshrl.u32 %v3438, 16
      %v3532 = vrot.slane %v3530, 7
      %v3533 = vshll.u32 %v3438, 16
      %v3535 = vor.u32 %v3532, %v3533
      %v3536 = vsel %vm1600, %v3524, %v3535
      %v3538 = vshrl.u32 %v3439, 16
      %v3540 = vrot.slane %v3538, 7
      %v3541 = vshll.u32 %v3439, 16
      %v3543 = vor.u32 %v3540, %v3541
      %v3544 = vsel %vm1600, %v3532, %v3543
      %v3546 = vshrl.u32 %v3440, 16
      %v3548 = vrot.slane %v3546, 7
      %v3549 = vshll.u32 %v3440, 16
      %v3551 = vor.u32 %v3548, %v3549
      %v3552 = vsel %vm1600, %v3540, %v3551
      %v3554 = vshrl.u32 %v3441, 16
      %v3556 = vrot.slane %v3554, 7
      %v3557 = vshll.u32 %v3441, 16
      %v3559 = vor.u32 %v3556, %v3557
      %v3560 = vsel %vm1600, %v3548, %v3559
      %v3562 = vshrl.u32 %v3442, 16
      %v3564 = vrot.slane %v3562, 7
      %v3565 = vshll.u32 %v3442, 16
      %v3567 = vor.u32 %v3564, %v3565
      %v3568 = vsel %vm1600, %v3556, %v3567
      %v3570 = vshrl.u32 %v3443, 16
      %v3572 = vrot.slane %v3570, 7
      %v3573 = vshll.u32 %v3443, 16
      %v3575 = vor.u32 %v3572, %v3573
      %v3576 = vsel %vm1600, %v3564, %v3575
      %v3578 = vshrl.u32 %v3444, 16
      %v3580 = vrot.slane %v3578, 7
      %v3581 = vshll.u32 %v3444, 16
      %v3583 = vor.u32 %v3580, %v3581
      %v3584 = vsel %vm1600, %v3572, %v3583
      %v3586 = vshrl.u32 %v3445, 16
      %v3588 = vrot.slane %v3586, 7
      %v3589 = vshll.u32 %v3445, 16
      %v3591 = vor.u32 %v3588, %v3589
      %v3592 = vsel %vm1600, %v3580, %v3591
      %v3594 = vshrl.u32 %v3446, 16
      %v3596 = vrot.slane %v3594, 7
      %v3597 = vshll.u32 %v3446, 16
      %v3599 = vor.u32 %v3596, %v3597
      %v3600 = vsel %vm1600, %v3588, %v3599
      %v3602 = vshrl.u32 %v3447, 16
      %v3604 = vrot.slane %v3602, 7
      %v3605 = vshll.u32 %v3447, 16
      %v3607 = vor.u32 %v3604, %v3605
      %v3608 = vsel %vm1600, %v3596, %v3607
      %v3610 = vshrl.u32 %v3448, 16
      %v3612 = vrot.slane %v3610, 7
      %v3613 = vshll.u32 %v3448, 16
      %v3615 = vor.u32 %v3612, %v3613
      %v3616 = vsel %vm1600, %v3604, %v3615
      %v3618 = vshrl.u32 %v3449, 16
      %v3620 = vrot.slane %v3618, 7
      %v3621 = vshll.u32 %v3449, 16
      %v3623 = vor.u32 %v3620, %v3621
      %v3624 = vsel %vm1600, %v3612, %v3623
      %v3626 = vshrl.u32 %v3450, 16
      %v3628 = vrot.slane %v3626, 7
      %v3629 = vshll.u32 %v3450, 16
      %v3631 = vor.u32 %v3628, %v3629
      %v3632 = vsel %vm1600, %v3620, %v3631
      %v3634 = vshrl.u32 %v3451, 16
      %v3636 = vrot.slane %v3634, 7
      %v3637 = vshll.u32 %v3451, 16
      %v3639 = vor.u32 %v3636, %v3637
      %v3640 = vsel %vm1600, %v3628, %v3639
      %v3641 = vshll.u32 %v3452, 16
      %v3643 = vor.u32 %v3456, %v3641
      %v3644 = vsel %vm1600, %v3636, %v3643
      %v3669 = vsel %vm1813, %v3456, %v3464
      %v3670 = vmul.bf16 %v3669, %v1379
      %v3671 = vmul.bf16 %v3472, %v1380
      %v3672 = vmul.bf16 %v3480, %v1381
      %v3673 = vmul.bf16 %v3488, %v1382
      %v3674 = vmul.bf16 %v3496, %v1383
      %v3675 = vmul.bf16 %v3504, %v1384
      %v3676 = vmul.bf16 %v3512, %v1385
      %v3677 = vmul.bf16 %v3520, %v1386
      %v3678 = vmul.bf16 %v3528, %v1387
      %v3679 = vmul.bf16 %v3536, %v1388
      %v3680 = vmul.bf16 %v3544, %v1389
      %v3681 = vmul.bf16 %v3552, %v1390
      %v3682 = vmul.bf16 %v3560, %v1391
      %v3683 = vmul.bf16 %v3568, %v1392
      %v3684 = vmul.bf16 %v3576, %v1393
      %v3685 = vmul.bf16 %v3584, %v1394
      %v3686 = vmul.bf16 %v3592, %v1395
      %v3687 = vmul.bf16 %v3600, %v1396
      %v3688 = vmul.bf16 %v3608, %v1397
      %v3689 = vmul.bf16 %v3616, %v1398
      %v3690 = vmul.bf16 %v3624, %v1399
      %v3691 = vmul.bf16 %v3632, %v1400
      %v3692 = vmul.bf16 %v3640, %v1401
      %v3693 = vmul.bf16 %v3644, %v1402
      %v3694 = vrot.slane %v3462, 1
      %v3695 = vor.u32 %v3459, %v3694
      %v3696 = vrot.slane %v3469, 1
      %v3697 = vsel %vm1839, %v3695, %v3696
      %v3698 = vor.u32 %v3466, %v3696
      %v3699 = vrot.slane %v3477, 1
      %v3700 = vsel %vm1839, %v3698, %v3699
      %v3701 = vor.u32 %v3474, %v3699
      %v3702 = vrot.slane %v3485, 1
      %v3703 = vsel %vm1839, %v3701, %v3702
      %v3704 = vor.u32 %v3482, %v3702
      %v3705 = vrot.slane %v3493, 1
      %v3706 = vsel %vm1839, %v3704, %v3705
      %v3707 = vor.u32 %v3490, %v3705
      %v3708 = vrot.slane %v3501, 1
      %v3709 = vsel %vm1839, %v3707, %v3708
      %v3710 = vor.u32 %v3498, %v3708
      %v3711 = vrot.slane %v3509, 1
      %v3712 = vsel %vm1839, %v3710, %v3711
      %v3713 = vor.u32 %v3506, %v3711
      %v3714 = vrot.slane %v3517, 1
      %v3715 = vsel %vm1839, %v3713, %v3714
      %v3716 = vor.u32 %v3514, %v3714
      %v3717 = vrot.slane %v3525, 1
      %v3718 = vsel %vm1839, %v3716, %v3717
      %v3719 = vor.u32 %v3522, %v3717
      %v3720 = vrot.slane %v3533, 1
      %v3721 = vsel %vm1839, %v3719, %v3720
      %v3722 = vor.u32 %v3530, %v3720
      %v3723 = vrot.slane %v3541, 1
      %v3724 = vsel %vm1839, %v3722, %v3723
      %v3725 = vor.u32 %v3538, %v3723
      %v3726 = vrot.slane %v3549, 1
      %v3727 = vsel %vm1839, %v3725, %v3726
      %v3728 = vor.u32 %v3546, %v3726
      %v3729 = vrot.slane %v3557, 1
      %v3730 = vsel %vm1839, %v3728, %v3729
      %v3731 = vor.u32 %v3554, %v3729
      %v3732 = vrot.slane %v3565, 1
      %v3733 = vsel %vm1839, %v3731, %v3732
      %v3734 = vor.u32 %v3562, %v3732
      %v3735 = vrot.slane %v3573, 1
      %v3736 = vsel %vm1839, %v3734, %v3735
      %v3737 = vor.u32 %v3570, %v3735
      %v3738 = vrot.slane %v3581, 1
      %v3739 = vsel %vm1839, %v3737, %v3738
      %v3740 = vor.u32 %v3578, %v3738
      %v3741 = vrot.slane %v3589, 1
      %v3742 = vsel %vm1839, %v3740, %v3741
      %v3743 = vor.u32 %v3586, %v3741
      %v3744 = vrot.slane %v3597, 1
      %v3745 = vsel %vm1839, %v3743, %v3744
      %v3746 = vor.u32 %v3594, %v3744
      %v3747 = vrot.slane %v3605, 1
      %v3748 = vsel %vm1839, %v3746, %v3747
      %v3749 = vor.u32 %v3602, %v3747
      %v3750 = vrot.slane %v3613, 1
      %v3751 = vsel %vm1839, %v3749, %v3750
      %v3752 = vor.u32 %v3610, %v3750
      %v3753 = vrot.slane %v3621, 1
      %v3754 = vsel %vm1839, %v3752, %v3753
      %v3755 = vor.u32 %v3618, %v3753
      %v3756 = vrot.slane %v3629, 1
      %v3757 = vsel %vm1839, %v3755, %v3756
      %v3758 = vor.u32 %v3626, %v3756
      %v3759 = vrot.slane %v3637, 1
      %v3760 = vsel %vm1839, %v3758, %v3759
      %v3761 = vor.u32 %v3634, %v3759
      %v3762 = vrot.slane %v3641, 1
      %v3763 = vsel %vm1839, %v3761, %v3762
      %v3764 = vor.u32 %v3454, %v3762
      %v3790 = vsel %vm1937, %v3764, %v3694
      %v3791 = vmul.bf16 %v3697, %v1547
      %v3792 = vmul.bf16 %v3700, %v1548
      %v3793 = vmul.bf16 %v3703, %v1549
      %v3794 = vmul.bf16 %v3706, %v1550
      %v3795 = vmul.bf16 %v3709, %v1551
      %v3796 = vmul.bf16 %v3712, %v1552
      %v3797 = vmul.bf16 %v3715, %v1553
      %v3798 = vmul.bf16 %v3718, %v1554
      %v3799 = vmul.bf16 %v3721, %v1555
      %v3800 = vmul.bf16 %v3724, %v1556
      %v3801 = vmul.bf16 %v3727, %v1557
      %v3802 = vmul.bf16 %v3730, %v1558
      %v3803 = vmul.bf16 %v3733, %v1559
      %v3804 = vmul.bf16 %v3736, %v1560
      %v3805 = vmul.bf16 %v3739, %v1561
      %v3806 = vmul.bf16 %v3742, %v1562
      %v3807 = vmul.bf16 %v3745, %v1563
      %v3808 = vmul.bf16 %v3748, %v1564
      %v3809 = vmul.bf16 %v3751, %v1565
      %v3810 = vmul.bf16 %v3754, %v1566
      %v3811 = vmul.bf16 %v3757, %v1567
      %v3812 = vmul.bf16 %v3760, %v1568
      %v3813 = vmul.bf16 %v3763, %v1569
      %v3814 = vmul.bf16 %v3790, %v1570
      %3839 = vrot.lane.b32.xlu0 %v3429, 4
      %v3840 = vpop.permute.xlu0 %3839
      %3841 = vrot.lane.b32.xlu0 %v3430, 4
      %v3842 = vpop.permute.xlu0 %3841
      %3843 = vrot.lane.b32.xlu0 %v3431, 4
      %v3844 = vpop.permute.xlu0 %3843
      %3845 = vrot.lane.b32.xlu0 %v3432, 4
      %v3846 = vpop.permute.xlu0 %3845
      %3847 = vrot.lane.b32.xlu0 %v3433, 4
      %v3848 = vpop.permute.xlu0 %3847
      %3849 = vrot.lane.b32.xlu0 %v3434, 4
      %v3850 = vpop.permute.xlu0 %3849
      %3851 = vrot.lane.b32.xlu0 %v3435, 4
      %v3852 = vpop.permute.xlu0 %3851
      %3853 = vrot.lane.b32.xlu0 %v3436, 4
      %v3854 = vpop.permute.xlu0 %3853
      %3855 = vrot.lane.b32.xlu0 %v3437, 4
      %v3856 = vpop.permute.xlu0 %3855
      %3857 = vrot.lane.b32.xlu0 %v3438, 4
      %v3858 = vpop.permute.xlu0 %3857
      %3859 = vrot.lane.b32.xlu0 %v3439, 4
      %v3860 = vpop.permute.xlu0 %3859
      %3861 = vrot.lane.b32.xlu0 %v3440, 4
      %v3862 = vpop.permute.xlu0 %3861
      %3863 = vrot.lane.b32.xlu0 %v3441, 4
      %v3864 = vpop.permute.xlu0 %3863
      %3865 = vrot.lane.b32.xlu0 %v3442, 4
      %v3866 = vpop.permute.xlu0 %3865
      %3867 = vrot.lane.b32.xlu0 %v3443, 4
      %v3868 = vpop.permute.xlu0 %3867
      %3869 = vrot.lane.b32.xlu0 %v3444, 4
      %v3870 = vpop.permute.xlu0 %3869
      %3871 = vrot.lane.b32.xlu0 %v3445, 4
      %v3872 = vpop.permute.xlu0 %3871
      %3873 = vrot.lane.b32.xlu0 %v3446, 4
      %v3874 = vpop.permute.xlu0 %3873
      %3875 = vrot.lane.b32.xlu0 %v3447, 4
      %v3876 = vpop.permute.xlu0 %3875
      %3877 = vrot.lane.b32.xlu0 %v3448, 4
      %v3878 = vpop.permute.xlu0 %3877
      %3879 = vrot.lane.b32.xlu0 %v3449, 4
      %v3880 = vpop.permute.xlu0 %3879
      %3881 = vrot.lane.b32.xlu0 %v3450, 4
      %v3882 = vpop.permute.xlu0 %3881
      %3883 = vrot.lane.b32.xlu0 %v3451, 4
      %v3884 = vpop.permute.xlu0 %3883
      %3885 = vrot.lane.b32.xlu0 %v3452, 4
      %v3886 = vpop.permute.xlu0 %3885
      %3911 = vrot.lane.b32.xlu0 %v3791, 8
      %v3912 = vpop.permute.xlu0 %3911
      %3913 = vrot.lane.b32.xlu0 %v3792, 8
      %v3914 = vpop.permute.xlu0 %3913
      %3915 = vrot.lane.b32.xlu0 %v3793, 8
      %v3916 = vpop.permute.xlu0 %3915
      %3917 = vrot.lane.b32.xlu0 %v3794, 8
      %v3918 = vpop.permute.xlu0 %3917
      %3919 = vrot.lane.b32.xlu0 %v3795, 8
      %v3920 = vpop.permute.xlu0 %3919
      %3921 = vrot.lane.b32.xlu0 %v3796, 8
      %v3922 = vpop.permute.xlu0 %3921
      %3923 = vrot.lane.b32.xlu0 %v3797, 8
      %v3924 = vpop.permute.xlu0 %3923
      %3925 = vrot.lane.b32.xlu0 %v3798, 8
      %v3926 = vpop.permute.xlu0 %3925
      %3927 = vrot.lane.b32.xlu0 %v3799, 8
      %v3928 = vpop.permute.xlu0 %3927
      %3929 = vrot.lane.b32.xlu0 %v3800, 8
      %v3930 = vpop.permute.xlu0 %3929
      %3931 = vrot.lane.b32.xlu0 %v3801, 8
      %v3932 = vpop.permute.xlu0 %3931
      %3933 = vrot.lane.b32.xlu0 %v3802, 8
      %v3934 = vpop.permute.xlu0 %3933
      %3935 = vrot.lane.b32.xlu0 %v3803, 8
      %v3936 = vpop.permute.xlu0 %3935
      %3937 = vrot.lane.b32.xlu0 %v3804, 8
      %v3938 = vpop.permute.xlu0 %3937
      %3939 = vrot.lane.b32.xlu0 %v3805, 8
      %v3940 = vpop.permute.xlu0 %3939
      %3941 = vrot.lane.b32.xlu0 %v3806, 8
      %v3942 = vpop.permute.xlu0 %3941
      %3943 = vrot.lane.b32.xlu0 %v3807, 8
      %v3944 = vpop.permute.xlu0 %3943
      %3945 = vrot.lane.b32.xlu0 %v3808, 8
      %v3946 = vpop.permute.xlu0 %3945
      %3947 = vrot.lane.b32.xlu0 %v3809, 8
      %v3948 = vpop.permute.xlu0 %3947
      %3949 = vrot.lane.b32.xlu0 %v3810, 8
      %v3950 = vpop.permute.xlu0 %3949
      %3951 = vrot.lane.b32.xlu0 %v3811, 8
      %v3952 = vpop.permute.xlu0 %3951
      %3953 = vrot.lane.b32.xlu0 %v3812, 8
      %v3954 = vpop.permute.xlu0 %3953
      %3955 = vrot.lane.b32.xlu0 %v3813, 8
      %v3956 = vpop.permute.xlu0 %3955
      %3957 = vrot.lane.b32.xlu0 %v3814, 8
      %v3958 = vpop.permute.xlu0 %3957
      %v3961 = vsel %vm3393, %v3670, %v3840
      %v3964 = vsel %vm3393, %v3671, %v3842
      %v3967 = vsel %vm3393, %v3672, %v3844
      %v3970 = vsel %vm3393, %v3673, %v3846
      %v3973 = vsel %vm3393, %v3674, %v3848
      %v3976 = vsel %vm3393, %v3675, %v3850
      %v3979 = vsel %vm3393, %v3676, %v3852
      %v3982 = vsel %vm3393, %v3677, %v3854
      %v3985 = vsel %vm3393, %v3678, %v3856
      %v3988 = vsel %vm3393, %v3679, %v3858
      %v3991 = vsel %vm3393, %v3680, %v3860
      %v3994 = vsel %vm3393, %v3681, %v3862
      %v3997 = vsel %vm3393, %v3682, %v3864
      %v4000 = vsel %vm3393, %v3683, %v3866
      %v4003 = vsel %vm3393, %v3684, %v3868
      %v4006 = vsel %vm3393, %v3685, %v3870
      %v4009 = vsel %vm3393, %v3686, %v3872
      %v4012 = vsel %vm3393, %v3687, %v3874
      %v4015 = vsel %vm3393, %v3688, %v3876
      %v4018 = vsel %vm3393, %v3689, %v3878
      %v4021 = vsel %vm3393, %v3690, %v3880
      %v4024 = vsel %vm3393, %v3691, %v3882
      %v4027 = vsel %vm3393, %v3692, %v3884
      %v4030 = vsel %vm3393, %v3693, %v3886
      %vm4031 = vcmask 64512
      %v4033 = vsel %vm4031, %v3961, %v3912
      %v4035 = vsel %vm4031, %v3964, %v3914
      %v4037 = vsel %vm4031, %v3967, %v3916
      %v4039 = vsel %vm4031, %v3970, %v3918
      %v4041 = vsel %vm4031, %v3973, %v3920
      %v4043 = vsel %vm4031, %v3976, %v3922
      %v4045 = vsel %vm4031, %v3979, %v3924
      %v4047 = vsel %vm4031, %v3982, %v3926
      %v4049 = vsel %vm4031, %v3985, %v3928
      %v4051 = vsel %vm4031, %v3988, %v3930
      %v4053 = vsel %vm4031, %v3991, %v3932
      %v4055 = vsel %vm4031, %v3994, %v3934
      %v4057 = vsel %vm4031, %v3997, %v3936
      %v4059 = vsel %vm4031, %v4000, %v3938
      %v4061 = vsel %vm4031, %v4003, %v3940
      %v4063 = vsel %vm4031, %v4006, %v3942
      %v4065 = vsel %vm4031, %v4009, %v3944
      %v4067 = vsel %vm4031, %v4012, %v3946
      %v4069 = vsel %vm4031, %v4015, %v3948
      %v4071 = vsel %vm4031, %v4018, %v3950
      %v4073 = vsel %vm4031, %v4021, %v3952
      %v4075 = vsel %vm4031, %v4024, %v3954
      %v4077 = vsel %vm4031, %v4027, %v3956
      %v4079 = vsel %vm4031, %v4030, %v3958
      %v4080 = vld [vmem:[%s5] sm:$0xf]
      %v4081 = vld [vmem:[%s5 + $0x4] sm:$0x3]
      %v4084 = vunpack.c.l.b16 %v4080
      %v4085 = vunpack.c.l.b16 %v4081
      %v4086 = vpack.c.b16 %v4085, %v4084
      %vm4087 = vcmask 97280
      %v4088 = vsel %vm4087, %v4033, 0
      %v4090 = vsel %vm4087, %v4035, 0
      %v4092 = vsel %vm4087, %v4037, 0
      %v4094 = vsel %vm4087, %v4039, 0
      %v4096 = vsel %vm4087, %v4041, 0
      %v4098 = vsel %vm4087, %v4043, 0
      %v4100 = vsel %vm4087, %v4045, 0
      %v4102 = vsel %vm4087, %v4047, 0
      %v4104 = vsel %vm4087, %v4049, 0
      %v4106 = vsel %vm4087, %v4051, 0
      %v4108 = vsel %vm4087, %v4053, 0
      %v4110 = vsel %vm4087, %v4055, 0
      %v4112 = vsel %vm4087, %v4057, 0
      %v4114 = vsel %vm4087, %v4059, 0
      %v4116 = vsel %vm4087, %v4061, 0
      %v4118 = vsel %vm4087, %v4063, 0
      %v4120 = vsel %vm4087, %v4065, 0
      %v4122 = vsel %vm4087, %v4067, 0
      %v4124 = vsel %vm4087, %v4069, 0
      %v4126 = vsel %vm4087, %v4071, 0
      %v4128 = vsel %vm4087, %v4073, 0
      %v4130 = vsel %vm4087, %v4075, 0
      %v4132 = vsel %vm4087, %v4077, 0
      %v4134 = vsel %vm4087, %v4079, 0
      %vm4136 = vcmask 1045504
      %v4138 = vsel %vm4136, %v4086, 0
      %4140 = vmatprep.subr.bf16.mxu0 0
      %4141 = vmatpush1.bf16.msra.mxu0 %v4138
      %4142 = vmatprep.subr.bf16.mxu0 0
      %4143 = vmatpush1.bf16.msra.mxu0 0
      %4144 = vmatprep.subr.bf16.mxu0 0
      %4145 = vmatpush1.bf16.msra.mxu0 0
      %4146 = vmatprep.subr.bf16.mxu0 0
      %4147 = vmatpush1.bf16.msra.mxu0 0
      %4148 = vmatprep.subr.bf16.mxu0 0
      %4149 = vmatpush1.bf16.msra.mxu0 0
      %4150 = vmatprep.subr.bf16.mxu0 0
      %4151 = vmatpush1.bf16.msra.mxu0 0
      %4152 = vmatprep.subr.bf16.mxu0 0
      %4153 = vmatpush1.bf16.msra.mxu0 0
      %4154 = vmatprep.subr.bf16.mxu0 0
      %4155 = vmatpush1.bf16.msra.mxu0 0
      %4156 = vmatprep.subr.bf16.mxu0 0
      %4157 = vmatpush1.bf16.msra.mxu0 0
      %4158 = vmatprep.subr.bf16.mxu0 0
      %4159 = vmatpush1.bf16.msra.mxu0 0
      %4160 = vmatprep.subr.bf16.mxu0 0
      %4161 = vmatpush1.bf16.msra.mxu0 0
      %4162 = vmatprep.subr.bf16.mxu0 0
      %4163 = vmatpush1.bf16.msra.mxu0 0
      %4164 = vmatprep.subr.bf16.mxu0 0
      %4165 = vmatpush1.bf16.msra.mxu0 0
      %4166 = vmatprep.subr.bf16.mxu0 0
      %4167 = vmatpush1.bf16.msra.mxu0 0
      %4168 = vmatprep.subr.bf16.mxu0 0
      %4169 = vmatpush1.bf16.msra.mxu0 0
      %4170 = vmatprep.subr.bf16.mxu0 0
      %4171 = vmatpush1.bf16.msra.mxu0 0
      %4172 = vmatprep.mubr.bf16.mxu0 0
      %4173 = vmatmul.mubr.bf16.gmra.mrb[0].mxu0 %v4088
      %v4174 = vpop.f32.mrb[0].mxu0
      %v4175 = vadd.f32 0.0, %v4174
      %v4176 = vpop.f32.mrb[0].mxu0
      %v4177 = vpop.f32.mrb[0].mxu0
      %v4178 = vadd.f32 0.0, %v4177
      %v4179 = vpop.f32.mrb[0].mxu0
      %4180 = vmatprep.mubr.bf16.mxu0 0
      %4181 = vmatmul.mubr.bf16.gmra.mrb[0].mxu0 %v4090
      %v4182 = vpop.f32.mrb[0].mxu0
      %v4183 = vadd.f32 0.0, %v4182
      %v4184 = vpop.f32.mrb[0].mxu0
      %v4185 = vpop.f32.mrb[0].mxu0
      %v4186 = vadd.f32 0.0, %v4185
      %v4187 = vpop.f32.mrb[0].mxu0
      %4188 = vmatprep.mubr.bf16.mxu0 0
      %4189 = vmatmul.mubr.bf16.gmra.mrb[0].mxu0 %v4092
      %v4190 = vpop.f32.mrb[0].mxu0
      %v4191 = vadd.f32 0.0, %v4190
      %v4192 = vpop.f32.mrb[0].mxu0
      %v4193 = vpop.f32.mrb[0].mxu0
      %v4194 = vadd.f32 0.0, %v4193
      %v4195 = vpop.f32.mrb[0].mxu0
      %4196 = vmatprep.mubr.bf16.mxu0 0
      %4197 = vmatmul.mubr.bf16.gmra.mrb[0].mxu0 %v4094
      %v4198 = vpop.f32.mrb[0].mxu0
      %v4199 = vadd.f32 0.0, %v4198
      %v4200 = vpop.f32.mrb[0].mxu0
      %v4201 = vpop.f32.mrb[0].mxu0
      %v4202 = vadd.f32 0.0, %v4201
      %v4203 = vpop.f32.mrb[0].mxu0
      %4204 = vmatprep.mubr.bf16.mxu0 0
      %4205 = vmatmul.mubr.bf16.gmra.mrb[0].mxu0 %v4096
      %v4206 = vpop.f32.mrb[0].mxu0
      %v4207 = vadd.f32 0.0, %v4206
      %v4208 = vpop.f32.mrb[0].mxu0
      %v4209 = vpop.f32.mrb[0].mxu0
      %v4210 = vadd.f32 0.0, %v4209
      %v4211 = vpop.f32.mrb[0].mxu0
      %4212 = vmatprep.mubr.bf16.mxu0 0
      %4213 = vmatmul.mubr.bf16.gmra.mrb[0].mxu0 %v4098
      %v4214 = vpop.f32.mrb[0].mxu0
      %v4215 = vadd.f32 0.0, %v4214
      %v4216 = vpop.f32.mrb[0].mxu0
      %v4217 = vpop.f32.mrb[0].mxu0
      %v4218 = vadd.f32 0.0, %v4217
      %v4219 = vpop.f32.mrb[0].mxu0
      %4220 = vmatprep.mubr.bf16.mxu0 0
      %4221 = vmatmul.mubr.bf16.gmra.mrb[0].mxu0 %v4100
      %v4222 = vpop.f32.mrb[0].mxu0
      %v4223 = vadd.f32 0.0, %v4222
      %v4224 = vpop.f32.mrb[0].mxu0
      %v4225 = vpop.f32.mrb[0].mxu0
      %v4226 = vadd.f32 0.0, %v4225
      %v4227 = vpop.f32.mrb[0].mxu0
      %4228 = vmatprep.mubr.bf16.mxu0 0
      %4229 = vmatmul.mubr.bf16.gmra.mrb[0].mxu0 %v4102
      %v4230 = vpop.f32.mrb[0].mxu0
      %v4231 = vadd.f32 0.0, %v4230
      %v4232 = vpop.f32.mrb[0].mxu0
      %v4233 = vpop.f32.mrb[0].mxu0
      %v4234 = vadd.f32 0.0, %v4233
      %v4235 = vpop.f32.mrb[0].mxu0
      %4236 = vmatprep.mubr.bf16.mxu0 0
      %4237 = vmatmul.mubr.bf16.gmra.mrb[0].mxu0 %v4104
      %v4238 = vpop.f32.mrb[0].mxu0
      %v4239 = vadd.f32 0.0, %v4238
      %v4240 = vpop.f32.mrb[0].mxu0
      %v4241 = vpop.f32.mrb[0].mxu0
      %v4242 = vadd.f32 0.0, %v4241
      %v4243 = vpop.f32.mrb[0].mxu0
      %4244 = vmatprep.mubr.bf16.mxu0 0
      %4245 = vmatmul.mubr.bf16.gmra.mrb[0].mxu0 %v4106
      %v4246 = vpop.f32.mrb[0].mxu0
      %v4247 = vadd.f32 0.0, %v4246
      %v4248 = vpop.f32.mrb[0].mxu0
      %v4249 = vpop.f32.mrb[0].mxu0
      %v4250 = vadd.f32 0.0, %v4249
      %v4251 = vpop.f32.mrb[0].mxu0
      %4252 = vmatprep.mubr.bf16.mxu0 0
      %4253 = vmatmul.mubr.bf16.gmra.mrb[0].mxu0 %v4108
      %v4254 = vpop.f32.mrb[0].mxu0
      %v4255 = vadd.f32 0.0, %v4254
      %v4256 = vpop.f32.mrb[0].mxu0
      %v4257 = vpop.f32.mrb[0].mxu0
      %v4258 = vadd.f32 0.0, %v4257
      %v4259 = vpop.f32.mrb[0].mxu0
      %4260 = vmatprep.mubr.bf16.mxu0 0
      %4261 = vmatmul.mubr.bf16.gmra.mrb[0].mxu0 %v4110
      %v4262 = vpop.f32.mrb[0].mxu0
      %v4263 = vadd.f32 0.0, %v4262
      %v4264 = vpop.f32.mrb[0].mxu0
      %v4265 = vpop.f32.mrb[0].mxu0
      %v4266 = vadd.f32 0.0, %v4265
      %v4267 = vpop.f32.mrb[0].mxu0
      %4268 = vmatprep.mubr.bf16.mxu0 0
      %4269 = vmatmul.mubr.bf16.gmra.mrb[0].mxu0 %v4112
      %v4270 = vpop.f32.mrb[0].mxu0
      %v4271 = vadd.f32 0.0, %v4270
      %v4272 = vpop.f32.mrb[0].mxu0
      %v4273 = vpop.f32.mrb[0].mxu0
      %v4274 = vadd.f32 0.0, %v4273
      %v4275 = vpop.f32.mrb[0].mxu0
      %4276 = vmatprep.mubr.bf16.mxu0 0
      %4277 = vmatmul.mubr.bf16.gmra.mrb[0].mxu0 %v4114
      %v4278 = vpop.f32.mrb[0].mxu0
      %v4279 = vadd.f32 0.0, %v4278
      %v4280 = vpop.f32.mrb[0].mxu0
      %v4281 = vpop.f32.mrb[0].mxu0
      %v4282 = vadd.f32 0.0, %v4281
      %v4283 = vpop.f32.mrb[0].mxu0
      %4284 = vmatprep.mubr.bf16.mxu0 0
      %4285 = vmatmul.mubr.bf16.gmra.mrb[0].mxu0 %v4116
      %v4286 = vpop.f32.mrb[0].mxu0
      %v4287 = vadd.f32 0.0, %v4286
      %v4288 = vpop.f32.mrb[0].mxu0
      %v4289 = vpop.f32.mrb[0].mxu0
      %v4290 = vadd.f32 0.0, %v4289
      %v4291 = vpop.f32.mrb[0].mxu0
      %4292 = vmatprep.mubr.bf16.mxu0 0
      %4293 = vmatmul.mubr.bf16.gmra.mrb[0].mxu0 %v4118
      %v4294 = vpop.f32.mrb[0].mxu0
      %v4295 = vadd.f32 0.0, %v4294
      %v4296 = vpop.f32.mrb[0].mxu0
      %v4297 = vpop.f32.mrb[0].mxu0
      %v4298 = vadd.f32 0.0, %v4297
      %v4299 = vpop.f32.mrb[0].mxu0
      %4300 = vmatprep.mubr.bf16.mxu0 0
      %4301 = vmatmul.mubr.bf16.gmra.mrb[0].mxu0 %v4120
      %v4302 = vpop.f32.mrb[0].mxu0
      %v4303 = vadd.f32 0.0, %v4302
      %v4304 = vpop.f32.mrb[0].mxu0
      %v4305 = vpop.f32.mrb[0].mxu0
      %v4306 = vadd.f32 0.0, %v4305
      %v4307 = vpop.f32.mrb[0].mxu0
      %4308 = vmatprep.mubr.bf16.mxu0 0
      %4309 = vmatmul.mubr.bf16.gmra.mrb[0].mxu0 %v4122
      %v4310 = vpop.f32.mrb[0].mxu0
      %v4311 = vadd.f32 0.0, %v4310
      %v4312 = vpop.f32.mrb[0].mxu0
      %v4313 = vpop.f32.mrb[0].mxu0
      %v4314 = vadd.f32 0.0, %v4313
      %v4315 = vpop.f32.mrb[0].mxu0
      %4316 = vmatprep.mubr.bf16.mxu0 0
      %4317 = vmatmul.mubr.bf16.gmra.mrb[0].mxu0 %v4124
      %v4318 = vpop.f32.mrb[0].mxu0
      %v4319 = vadd.f32 0.0, %v4318
      %v4320 = vpop.f32.mrb[0].mxu0
      %v4321 = vpop.f32.mrb[0].mxu0
      %v4322 = vadd.f32 0.0, %v4321
      %v4323 = vpop.f32.mrb[0].mxu0
      %4324 = vmatprep.mubr.bf16.mxu0 0
      %4325 = vmatmul.mubr.bf16.gmra.mrb[0].mxu0 %v4126
      %v4326 = vpop.f32.mrb[0].mxu0
      %v4327 = vadd.f32 0.0, %v4326
      %v4328 = vpop.f32.mrb[0].mxu0
      %v4329 = vpop.f32.mrb[0].mxu0
      %v4330 = vadd.f32 0.0, %v4329
      %v4331 = vpop.f32.mrb[0].mxu0
      %4332 = vmatprep.mubr.bf16.mxu0 0
      %4333 = vmatmul.mubr.bf16.gmra.mrb[0].mxu0 %v4128
      %v4334 = vpop.f32.mrb[0].mxu0
      %v4335 = vadd.f32 0.0, %v4334
      %v4336 = vpop.f32.mrb[0].mxu0
      %v4337 = vpop.f32.mrb[0].mxu0
      %v4338 = vadd.f32 0.0, %v4337
      %v4339 = vpop.f32.mrb[0].mxu0
      %4340 = vmatprep.mubr.bf16.mxu0 0
      %4341 = vmatmul.mubr.bf16.gmra.mrb[0].mxu0 %v4130
      %v4342 = vpop.f32.mrb[0].mxu0
      %v4343 = vadd.f32 0.0, %v4342
      %v4344 = vpop.f32.mrb[0].mxu0
      %v4345 = vpop.f32.mrb[0].mxu0
      %v4346 = vadd.f32 0.0, %v4345
      %v4347 = vpop.f32.mrb[0].mxu0
      %4348 = vmatprep.mubr.bf16.mxu0 0
      %4349 = vmatmul.mubr.bf16.gmra.mrb[0].mxu0 %v4132
      %v4350 = vpop.f32.mrb[0].mxu0
      %v4351 = vadd.f32 0.0, %v4350
      %v4352 = vpop.f32.mrb[0].mxu0
      %v4353 = vpop.f32.mrb[0].mxu0
      %v4354 = vadd.f32 0.0, %v4353
      %v4355 = vpop.f32.mrb[0].mxu0
      %4356 = vmatprep.mubr.bf16.mxu0 0
      %4357 = vmatmul.mubr.bf16.gmra.mrb[0].mxu0 %v4134
      %v4358 = vpop.f32.mrb[0].mxu0
      %v4359 = vadd.f32 0.0, %v4358
      %v4360 = vpop.f32.mrb[0].mxu0
      %v4361 = vpop.f32.mrb[0].mxu0
      %v4362 = vadd.f32 0.0, %v4361
      %v4363 = vpop.f32.mrb[0].mxu0
      %4364 = vdwg.mxu0
      %s4365 = scalar_lea.vmem %s5, 8
      %v4366 = vld [vmem:[%s4365] sm:$0xf]
      %v4367 = vld [vmem:[%s4365 + $0x4] sm:$0x3]
      %s4368 = scalar_lea.vmem %s5, 16
      %v4369 = vld [vmem:[%s4368] sm:$0xf]
      %v4370 = vld [vmem:[%s4368 + $0x4] sm:$0x3]
      %v4373 = vunpack.c.l.b16 %v4369
      %v4374 = vunpack.c.l.b16 %v4370
      %v4375 = vpack.c.b16 %v4374, %v4373
      %v4377 = vsel %vm4136, %v4375, 0
      %4379 = vmatprep.subr.bf16.mxu0 0
      %4380 = vmatpush1.bf16.msra.mxu0 %v4377
      %4381 = vmatprep.subr.bf16.mxu0 0
      %4382 = vmatpush1.bf16.msra.mxu0 0
      %4383 = vmatprep.subr.bf16.mxu0 0
      %4384 = vmatpush1.bf16.msra.mxu0 0
      %4385 = vmatprep.subr.bf16.mxu0 0
      %4386 = vmatpush1.bf16.msra.mxu0 0
      %4387 = vmatprep.subr.bf16.mxu0 0
      %4388 = vmatpush1.bf16.msra.mxu0 0
      %4389 = vmatprep.subr.bf16.mxu0 0
      %4390 = vmatpush1.bf16.msra.mxu0 0
      %4391 = vmatprep.subr.bf16.mxu0 0
      %4392 = vmatpush1.bf16.msra.mxu0 0
      %4393 = vmatprep.subr.bf16.mxu0 0
      %4394 = vmatpush1.bf16.msra.mxu0 0
      %4395 = vmatprep.subr.bf16.mxu0 0
      %4396 = vmatpush1.bf16.msra.mxu0 0
      %4397 = vmatprep.subr.bf16.mxu0 0
      %4398 = vmatpush1.bf16.msra.mxu0 0
      %4399 = vmatprep.subr.bf16.mxu0 0
      %4400 = vmatpush1.bf16.msra.mxu0 0
      %4401 = vmatprep.subr.bf16.mxu0 0
      %4402 = vmatpush1.bf16.msra.mxu0 0
      %4403 = vmatprep.subr.bf16.mxu0 0
      %4404 = vmatpush1.bf16.msra.mxu0 0
      %4405 = vmatprep.subr.bf16.mxu0 0
      %4406 = vmatpush1.bf16.msra.mxu0 0
      %4407 = vmatprep.subr.bf16.mxu0 0
      %4408 = vmatpush1.bf16.msra.mxu0 0
      %4409 = vmatprep.subr.bf16.mxu0 0
      %4410 = vmatpush1.bf16.msra.mxu0 0
      %4411 = vmatprep.mubr.bf16.mxu0 0
      %4412 = vmatmul.mubr.bf16.gmra.mrb[0].mxu0 %v4088
      %v4413 = vpop.f32.mrb[0].mxu0
      %v4414 = vadd.f32 0.0, %v4413
      %v4415 = vpop.f32.mrb[0].mxu0
      %v4416 = vpop.f32.mrb[0].mxu0
      %v4417 = vadd.f32 0.0, %v4416
      %v4418 = vpop.f32.mrb[0].mxu0
      %4419 = vmatprep.mubr.bf16.mxu0 0
      %4420 = vmatmul.mubr.bf16.gmra.mrb[0].mxu0 %v4090
      %v4421 = vpop.f32.mrb[0].mxu0
      %v4422 = vadd.f32 0.0, %v4421
      %v4423 = vpop.f32.mrb[0].mxu0
      %v4424 = vpop.f32.mrb[0].mxu0
      %v4425 = vadd.f32 0.0, %v4424
      %v4426 = vpop.f32.mrb[0].mxu0
      %4427 = vmatprep.mubr.bf16.mxu0 0
      %4428 = vmatmul.mubr.bf16.gmra.mrb[0].mxu0 %v4092
      %v4429 = vpop.f32.mrb[0].mxu0
      %v4430 = vadd.f32 0.0, %v4429
      %v4431 = vpop.f32.mrb[0].mxu0
      %v4432 = vpop.f32.mrb[0].mxu0
      %v4433 = vadd.f32 0.0, %v4432
      %v4434 = vpop.f32.mrb[0].mxu0
      %4435 = vmatprep.mubr.bf16.mxu0 0
      %4436 = vmatmul.mubr.bf16.gmra.mrb[0].mxu0 %v4094
      %v4437 = vpop.f32.mrb[0].mxu0
      %v4438 = vadd.f32 0.0, %v4437
      %v4439 = vpop.f32.mrb[0].mxu0
      %v4440 = vpop.f32.mrb[0].mxu0
      %v4441 = vadd.f32 0.0, %v4440
      %v4442 = vpop.f32.mrb[0].mxu0
      %4443 = vmatprep.mubr.bf16.mxu0 0
      %4444 = vmatmul.mubr.bf16.gmra.mrb[0].mxu0 %v4096
      %v4445 = vpop.f32.mrb[0].mxu0
      %v4446 = vadd.f32 0.0, %v4445
      %v4447 = vpop.f32.mrb[0].mxu0
      %v4448 = vpop.f32.mrb[0].mxu0
      %v4449 = vadd.f32 0.0, %v4448
      %v4450 = vpop.f32.mrb[0].mxu0
      %4451 = vmatprep.mubr.bf16.mxu0 0
      %4452 = vmatmul.mubr.bf16.gmra.mrb[0].mxu0 %v4098
      %v4453 = vpop.f32.mrb[0].mxu0
      %v4454 = vadd.f32 0.0, %v4453
      %v4455 = vpop.f32.mrb[0].mxu0
      %v4456 = vpop.f32.mrb[0].mxu0
      %v4457 = vadd.f32 0.0, %v4456
      %v4458 = vpop.f32.mrb[0].mxu0
      %4459 = vmatprep.mubr.bf16.mxu0 0
      %4460 = vmatmul.mubr.bf16.gmra.mrb[0].mxu0 %v4100
      %v4461 = vpop.f32.mrb[0].mxu0
      %v4462 = vadd.f32 0.0, %v4461
      %v4463 = vpop.f32.mrb[0].mxu0
      %v4464 = vpop.f32.mrb[0].mxu0
      %v4465 = vadd.f32 0.0, %v4464
      %v4466 = vpop.f32.mrb[0].mxu0
      %4467 = vmatprep.mubr.bf16.mxu0 0
      %4468 = vmatmul.mubr.bf16.gmra.mrb[0].mxu0 %v4102
      %v4469 = vpop.f32.mrb[0].mxu0
      %v4470 = vadd.f32 0.0, %v4469
      %v4471 = vpop.f32.mrb[0].mxu0
      %v4472 = vpop.f32.mrb[0].mxu0
      %v4473 = vadd.f32 0.0, %v4472
      %v4474 = vpop.f32.mrb[0].mxu0
      %4475 = vmatprep.mubr.bf16.mxu0 0
      %4476 = vmatmul.mubr.bf16.gmra.mrb[0].mxu0 %v4104
      %v4477 = vpop.f32.mrb[0].mxu0
      %v4478 = vadd.f32 0.0, %v4477
      %v4479 = vpop.f32.mrb[0].mxu0
      %v4480 = vpop.f32.mrb[0].mxu0
      %v4481 = vadd.f32 0.0, %v4480
      %v4482 = vpop.f32.mrb[0].mxu0
      %4483 = vmatprep.mubr.bf16.mxu0 0
      %4484 = vmatmul.mubr.bf16.gmra.mrb[0].mxu0 %v4106
      %v4485 = vpop.f32.mrb[0].mxu0
      %v4486 = vadd.f32 0.0, %v4485
      %v4487 = vpop.f32.mrb[0].mxu0
      %v4488 = vpop.f32.mrb[0].mxu0
      %v4489 = vadd.f32 0.0, %v4488
      %v4490 = vpop.f32.mrb[0].mxu0
      %4491 = vmatprep.mubr.bf16.mxu0 0
      %4492 = vmatmul.mubr.bf16.gmra.mrb[0].mxu0 %v4108
      %v4493 = vpop.f32.mrb[0].mxu0
      %v4494 = vadd.f32 0.0, %v4493
      %v4495 = vpop.f32.mrb[0].mxu0
      %v4496 = vpop.f32.mrb[0].mxu0
      %v4497 = vadd.f32 0.0, %v4496
      %v4498 = vpop.f32.mrb[0].mxu0
      %4499 = vmatprep.mubr.bf16.mxu0 0
      %4500 = vmatmul.mubr.bf16.gmra.mrb[0].mxu0 %v4110
      %v4501 = vpop.f32.mrb[0].mxu0
      %v4502 = vadd.f32 0.0, %v4501
      %v4503 = vpop.f32.mrb[0].mxu0
      %v4504 = vpop.f32.mrb[0].mxu0
      %v4505 = vadd.f32 0.0, %v4504
      %v4506 = vpop.f32.mrb[0].mxu0
      %4507 = vmatprep.mubr.bf16.mxu0 0
      %4508 = vmatmul.mubr.bf16.gmra.mrb[0].mxu0 %v4112
      %v4509 = vpop.f32.mrb[0].mxu0
      %v4510 = vadd.f32 0.0, %v4509
      %v4511 = vpop.f32.mrb[0].mxu0
      %v4512 = vpop.f32.mrb[0].mxu0
      %v4513 = vadd.f32 0.0, %v4512
      %v4514 = vpop.f32.mrb[0].mxu0
      %4515 = vmatprep.mubr.bf16.mxu0 0
      %4516 = vmatmul.mubr.bf16.gmra.mrb[0].mxu0 %v4114
      %v4517 = vpop.f32.mrb[0].mxu0
      %v4518 = vadd.f32 0.0, %v4517
      %v4519 = vpop.f32.mrb[0].mxu0
      %v4520 = vpop.f32.mrb[0].mxu0
      %v4521 = vadd.f32 0.0, %v4520
      %v4522 = vpop.f32.mrb[0].mxu0
      %4523 = vmatprep.mubr.bf16.mxu0 0
      %4524 = vmatmul.mubr.bf16.gmra.mrb[0].mxu0 %v4116
      %v4525 = vpop.f32.mrb[0].mxu0
      %v4526 = vadd.f32 0.0, %v4525
      %v4527 = vpop.f32.mrb[0].mxu0
      %v4528 = vpop.f32.mrb[0].mxu0
      %v4529 = vadd.f32 0.0, %v4528
      %v4530 = vpop.f32.mrb[0].mxu0
      %4531 = vmatprep.mubr.bf16.mxu0 0
      %4532 = vmatmul.mubr.bf16.gmra.mrb[0].mxu0 %v4118
      %v4533 = vpop.f32.mrb[0].mxu0
      %v4534 = vadd.f32 0.0, %v4533
      %v4535 = vpop.f32.mrb[0].mxu0
      %v4536 = vpop.f32.mrb[0].mxu0
      %v4537 = vadd.f32 0.0, %v4536
      %v4538 = vpop.f32.mrb[0].mxu0
      %4539 = vmatprep.mubr.bf16.mxu0 0
      %4540 = vmatmul.mubr.bf16.gmra.mrb[0].mxu0 %v4120
      %v4541 = vpop.f32.mrb[0].mxu0
      %v4542 = vadd.f32 0.0, %v4541
      %v4543 = vpop.f32.mrb[0].mxu0
      %v4544 = vpop.f32.mrb[0].mxu0
      %v4545 = vadd.f32 0.0, %v4544
      %v4546 = vpop.f32.mrb[0].mxu0
      %4547 = vmatprep.mubr.bf16.mxu0 0
      %4548 = vmatmul.mubr.bf16.gmra.mrb[0].mxu0 %v4122
      %v4549 = vpop.f32.mrb[0].mxu0
      %v4550 = vadd.f32 0.0, %v4549
      %v4551 = vpop.f32.mrb[0].mxu0
      %v4552 = vpop.f32.mrb[0].mxu0
      %v4553 = vadd.f32 0.0, %v4552
      %v4554 = vpop.f32.mrb[0].mxu0
      %4555 = vmatprep.mubr.bf16.mxu0 0
      %4556 = vmatmul.mubr.bf16.gmra.mrb[0].mxu0 %v4124
      %v4557 = vpop.f32.mrb[0].mxu0
      %v4558 = vadd.f32 0.0, %v4557
      %v4559 = vpop.f32.mrb[0].mxu0
      %v4560 = vpop.f32.mrb[0].mxu0
      %v4561 = vadd.f32 0.0, %v4560
      %v4562 = vpop.f32.mrb[0].mxu0
      %4563 = vmatprep.mubr.bf16.mxu0 0
      %4564 = vmatmul.mubr.bf16.gmra.mrb[0].mxu0 %v4126
      %v4565 = vpop.f32.mrb[0].mxu0
      %v4566 = vadd.f32 0.0, %v4565
      %v4567 = vpop.f32.mrb[0].mxu0
      %v4568 = vpop.f32.mrb[0].mxu0
      %v4569 = vadd.f32 0.0, %v4568
      %v4570 = vpop.f32.mrb[0].mxu0
      %4571 = vmatprep.mubr.bf16.mxu0 0
      %4572 = vmatmul.mubr.bf16.gmra.mrb[0].mxu0 %v4128
      %v4573 = vpop.f32.mrb[0].mxu0
      %v4574 = vadd.f32 0.0, %v4573
      %v4575 = vpop.f32.mrb[0].mxu0
      %v4576 = vpop.f32.mrb[0].mxu0
      %v4577 = vadd.f32 0.0, %v4576
      %v4578 = vpop.f32.mrb[0].mxu0
      %4579 = vmatprep.mubr.bf16.mxu0 0
      %4580 = vmatmul.mubr.bf16.gmra.mrb[0].mxu0 %v4130
      %v4581 = vpop.f32.mrb[0].mxu0
      %v4582 = vadd.f32 0.0, %v4581
      %v4583 = vpop.f32.mrb[0].mxu0
      %v4584 = vpop.f32.mrb[0].mxu0
      %v4585 = vadd.f32 0.0, %v4584
      %v4586 = vpop.f32.mrb[0].mxu0
      %4587 = vmatprep.mubr.bf16.mxu0 0
      %4588 = vmatmul.mubr.bf16.gmra.mrb[0].mxu0 %v4132
      %v4589 = vpop.f32.mrb[0].mxu0
      %v4590 = vadd.f32 0.0, %v4589
      %v4591 = vpop.f32.mrb[0].mxu0
      %v4592 = vpop.f32.mrb[0].mxu0
      %v4593 = vadd.f32 0.0, %v4592
      %v4594 = vpop.f32.mrb[0].mxu0
      %4595 = vmatprep.mubr.bf16.mxu0 0
      %4596 = vmatmul.mubr.bf16.gmra.mrb[0].mxu0 %v4134
      %v4597 = vpop.f32.mrb[0].mxu0
      %v4598 = vadd.f32 0.0, %v4597
      %v4599 = vpop.f32.mrb[0].mxu0
      %v4600 = vpop.f32.mrb[0].mxu0
      %v4601 = vadd.f32 0.0, %v4600
      %v4602 = vpop.f32.mrb[0].mxu0
      %4603 = vdwg.mxu0
      %v4606 = vunpack.c.l.b16 %v4366
      %v4607 = vunpack.c.l.b16 %v4367
      %v4608 = vpack.c.b16 %v4607, %v4606
      %v4610 = vsel %vm4136, %v4608, 0
      %4612 = vmatprep.subr.bf16.mxu0 0
      %4613 = vmatpush1.bf16.msra.mxu0 %v4610
      %4614 = vmatprep.subr.bf16.mxu0 0
      %4615 = vmatpush1.bf16.msra.mxu0 0
      %4616 = vmatprep.subr.bf16.mxu0 0
      %4617 = vmatpush1.bf16.msra.mxu0 0
      %4618 = vmatprep.subr.bf16.mxu0 0
      %4619 = vmatpush1.bf16.msra.mxu0 0
      %4620 = vmatprep.subr.bf16.mxu0 0
      %4621 = vmatpush1.bf16.msra.mxu0 0
      %4622 = vmatprep.subr.bf16.mxu0 0
      %4623 = vmatpush1.bf16.msra.mxu0 0
      %4624 = vmatprep.subr.bf16.mxu0 0
      %4625 = vmatpush1.bf16.msra.mxu0 0
      %4626 = vmatprep.subr.bf16.mxu0 0
      %4627 = vmatpush1.bf16.msra.mxu0 0
      %4628 = vmatprep.subr.bf16.mxu0 0
      %4629 = vmatpush1.bf16.msra.mxu0 0
      %4630 = vmatprep.subr.bf16.mxu0 0
      %4631 = vmatpush1.bf16.msra.mxu0 0
      %4632 = vmatprep.subr.bf16.mxu0 0
      %4633 = vmatpush1.bf16.msra.mxu0 0
      %4634 = vmatprep.subr.bf16.mxu0 0
      %4635 = vmatpush1.bf16.msra.mxu0 0
      %4636 = vmatprep.subr.bf16.mxu0 0
      %4637 = vmatpush1.bf16.msra.mxu0 0
      %4638 = vmatprep.subr.bf16.mxu0 0
      %4639 = vmatpush1.bf16.msra.mxu0 0
      %4640 = vmatprep.subr.bf16.mxu0 0
      %4641 = vmatpush1.bf16.msra.mxu0 0
      %4642 = vmatprep.subr.bf16.mxu0 0
      %4643 = vmatpush1.bf16.msra.mxu0 0
      %4644 = vmatprep.mubr.bf16.mxu0 0
      %4645 = vmatmul.mubr.bf16.gmra.mrb[0].mxu0 %v4088
      %v4646 = vpop.f32.mrb[0].mxu0
      %v4647 = vadd.f32 %v4359, %v4646
      %v4648 = vpop.f32.mrb[0].mxu0
      %v4649 = vpop.f32.mrb[0].mxu0
      %v4650 = vadd.f32 %v4362, %v4649
      %v4651 = vpop.f32.mrb[0].mxu0
      %4652 = vmatprep.mubr.bf16.mxu0 0
      %4653 = vmatmul.mubr.bf16.gmra.mrb[0].mxu0 %v4090
      %v4654 = vpop.f32.mrb[0].mxu0
      %v4655 = vadd.f32 %v4175, %v4654
      %v4656 = vpop.f32.mrb[0].mxu0
      %v4657 = vpop.f32.mrb[0].mxu0
      %v4658 = vadd.f32 %v4178, %v4657
      %v4659 = vpop.f32.mrb[0].mxu0
      %4660 = vmatprep.mubr.bf16.mxu0 0
      %4661 = vmatmul.mubr.bf16.gmra.mrb[0].mxu0 %v4092
      %v4662 = vpop.f32.mrb[0].mxu0
      %v4663 = vadd.f32 %v4183, %v4662
      %v4664 = vpop.f32.mrb[0].mxu0
      %v4665 = vpop.f32.mrb[0].mxu0
      %v4666 = vadd.f32 %v4186, %v4665
      %v4667 = vpop.f32.mrb[0].mxu0
      %4668 = vmatprep.mubr.bf16.mxu0 0
      %4669 = vmatmul.mubr.bf16.gmra.mrb[0].mxu0 %v4094
      %v4670 = vpop.f32.mrb[0].mxu0
      %v4671 = vadd.f32 %v4191, %v4670
      %v4672 = vpop.f32.mrb[0].mxu0
      %v4673 = vpop.f32.mrb[0].mxu0
      %v4674 = vadd.f32 %v4194, %v4673
      %v4675 = vpop.f32.mrb[0].mxu0
      %4676 = vmatprep.mubr.bf16.mxu0 0
      %4677 = vmatmul.mubr.bf16.gmra.mrb[0].mxu0 %v4096
      %v4678 = vpop.f32.mrb[0].mxu0
      %v4679 = vadd.f32 %v4199, %v4678
      %v4680 = vpop.f32.mrb[0].mxu0
      %v4681 = vpop.f32.mrb[0].mxu0
      %v4682 = vadd.f32 %v4202, %v4681
      %v4683 = vpop.f32.mrb[0].mxu0
      %4684 = vmatprep.mubr.bf16.mxu0 0
      %4685 = vmatmul.mubr.bf16.gmra.mrb[0].mxu0 %v4098
      %v4686 = vpop.f32.mrb[0].mxu0
      %v4687 = vadd.f32 %v4207, %v4686
      %v4688 = vpop.f32.mrb[0].mxu0
      %v4689 = vpop.f32.mrb[0].mxu0
      %v4690 = vadd.f32 %v4210, %v4689
      %v4691 = vpop.f32.mrb[0].mxu0
      %4692 = vmatprep.mubr.bf16.mxu0 0
      %4693 = vmatmul.mubr.bf16.gmra.mrb[0].mxu0 %v4100
      %v4694 = vpop.f32.mrb[0].mxu0
      %v4695 = vadd.f32 %v4215, %v4694
      %v4696 = vpop.f32.mrb[0].mxu0
      %v4697 = vpop.f32.mrb[0].mxu0
      %v4698 = vadd.f32 %v4218, %v4697
      %v4699 = vpop.f32.mrb[0].mxu0
      %4700 = vmatprep.mubr.bf16.mxu0 0
      %4701 = vmatmul.mubr.bf16.gmra.mrb[0].mxu0 %v4102
      %v4702 = vpop.f32.mrb[0].mxu0
      %v4703 = vadd.f32 %v4223, %v4702
      %v4704 = vpop.f32.mrb[0].mxu0
      %v4705 = vpop.f32.mrb[0].mxu0
      %v4706 = vadd.f32 %v4226, %v4705
      %v4707 = vpop.f32.mrb[0].mxu0
      %4708 = vmatprep.mubr.bf16.mxu0 0
      %4709 = vmatmul.mubr.bf16.gmra.mrb[0].mxu0 %v4104
      %v4710 = vpop.f32.mrb[0].mxu0
      %v4711 = vadd.f32 %v4231, %v4710
      %v4712 = vpop.f32.mrb[0].mxu0
      %v4713 = vpop.f32.mrb[0].mxu0
      %v4714 = vadd.f32 %v4234, %v4713
      %v4715 = vpop.f32.mrb[0].mxu0
      %4716 = vmatprep.mubr.bf16.mxu0 0
      %4717 = vmatmul.mubr.bf16.gmra.mrb[0].mxu0 %v4106
      %v4718 = vpop.f32.mrb[0].mxu0
      %v4719 = vadd.f32 %v4239, %v4718
      %v4720 = vpop.f32.mrb[0].mxu0
      %v4721 = vpop.f32.mrb[0].mxu0
      %v4722 = vadd.f32 %v4242, %v4721
      %v4723 = vpop.f32.mrb[0].mxu0
      %4724 = vmatprep.mubr.bf16.mxu0 0
      %4725 = vmatmul.mubr.bf16.gmra.mrb[0].mxu0 %v4108
      %v4726 = vpop.f32.mrb[0].mxu0
      %v4727 = vadd.f32 %v4247, %v4726
      %v4728 = vpop.f32.mrb[0].mxu0
      %v4729 = vpop.f32.mrb[0].mxu0
      %v4730 = vadd.f32 %v4250, %v4729
      %v4731 = vpop.f32.mrb[0].mxu0
      %4732 = vmatprep.mubr.bf16.mxu0 0
      %4733 = vmatmul.mubr.bf16.gmra.mrb[0].mxu0 %v4110
      %v4734 = vpop.f32.mrb[0].mxu0
      %v4735 = vadd.f32 %v4255, %v4734
      %v4736 = vpop.f32.mrb[0].mxu0
      %v4737 = vpop.f32.mrb[0].mxu0
      %v4738 = vadd.f32 %v4258, %v4737
      %v4739 = vpop.f32.mrb[0].mxu0
      %4740 = vmatprep.mubr.bf16.mxu0 0
      %4741 = vmatmul.mubr.bf16.gmra.mrb[0].mxu0 %v4112
      %v4742 = vpop.f32.mrb[0].mxu0
      %v4743 = vadd.f32 %v4263, %v4742
      %v4744 = vpop.f32.mrb[0].mxu0
      %v4745 = vpop.f32.mrb[0].mxu0
      %v4746 = vadd.f32 %v4266, %v4745
      %v4747 = vpop.f32.mrb[0].mxu0
      %4748 = vmatprep.mubr.bf16.mxu0 0
      %4749 = vmatmul.mubr.bf16.gmra.mrb[0].mxu0 %v4114
      %v4750 = vpop.f32.mrb[0].mxu0
      %v4751 = vadd.f32 %v4271, %v4750
      %v4752 = vpop.f32.mrb[0].mxu0
      %v4753 = vpop.f32.mrb[0].mxu0
      %v4754 = vadd.f32 %v4274, %v4753
      %v4755 = vpop.f32.mrb[0].mxu0
      %4756 = vmatprep.mubr.bf16.mxu0 0
      %4757 = vmatmul.mubr.bf16.gmra.mrb[0].mxu0 %v4116
      %v4758 = vpop.f32.mrb[0].mxu0
      %v4759 = vadd.f32 %v4279, %v4758
      %v4760 = vpop.f32.mrb[0].mxu0
      %v4761 = vpop.f32.mrb[0].mxu0
      %v4762 = vadd.f32 %v4282, %v4761
      %v4763 = vpop.f32.mrb[0].mxu0
      %4764 = vmatprep.mubr.bf16.mxu0 0
      %4765 = vmatmul.mubr.bf16.gmra.mrb[0].mxu0 %v4118
      %v4766 = vpop.f32.mrb[0].mxu0
      %v4767 = vadd.f32 %v4287, %v4766
      %v4768 = vpop.f32.mrb[0].mxu0
      %v4769 = vpop.f32.mrb[0].mxu0
      %v4770 = vadd.f32 %v4290, %v4769
      %v4771 = vpop.f32.mrb[0].mxu0
      %4772 = vmatprep.mubr.bf16.mxu0 0
      %4773 = vmatmul.mubr.bf16.gmra.mrb[0].mxu0 %v4120
      %v4774 = vpop.f32.mrb[0].mxu0
      %v4775 = vadd.f32 %v4295, %v4774
      %v4776 = vpop.f32.mrb[0].mxu0
      %v4777 = vpop.f32.mrb[0].mxu0
      %v4778 = vadd.f32 %v4298, %v4777
      %v4779 = vpop.f32.mrb[0].mxu0
      %4780 = vmatprep.mubr.bf16.mxu0 0
      %4781 = vmatmul.mubr.bf16.gmra.mrb[0].mxu0 %v4122
      %v4782 = vpop.f32.mrb[0].mxu0
      %v4783 = vadd.f32 %v4303, %v4782
      %v4784 = vpop.f32.mrb[0].mxu0
      %v4785 = vpop.f32.mrb[0].mxu0
      %v4786 = vadd.f32 %v4306, %v4785
      %v4787 = vpop.f32.mrb[0].mxu0
      %4788 = vmatprep.mubr.bf16.mxu0 0
      %4789 = vmatmul.mubr.bf16.gmra.mrb[0].mxu0 %v4124
      %v4790 = vpop.f32.mrb[0].mxu0
      %v4791 = vadd.f32 %v4311, %v4790
      %v4792 = vpop.f32.mrb[0].mxu0
      %v4793 = vpop.f32.mrb[0].mxu0
      %v4794 = vadd.f32 %v4314, %v4793
      %v4795 = vpop.f32.mrb[0].mxu0
      %4796 = vmatprep.mubr.bf16.mxu0 0
      %4797 = vmatmul.mubr.bf16.gmra.mrb[0].mxu0 %v4126
      %v4798 = vpop.f32.mrb[0].mxu0
      %v4799 = vadd.f32 %v4319, %v4798
      %v4800 = vpop.f32.mrb[0].mxu0
      %v4801 = vpop.f32.mrb[0].mxu0
      %v4802 = vadd.f32 %v4322, %v4801
      %v4803 = vpop.f32.mrb[0].mxu0
      %4804 = vmatprep.mubr.bf16.mxu0 0
      %4805 = vmatmul.mubr.bf16.gmra.mrb[0].mxu0 %v4128
      %v4806 = vpop.f32.mrb[0].mxu0
      %v4807 = vadd.f32 %v4327, %v4806
      %v4808 = vpop.f32.mrb[0].mxu0
      %v4809 = vpop.f32.mrb[0].mxu0
      %v4810 = vadd.f32 %v4330, %v4809
      %v4811 = vpop.f32.mrb[0].mxu0
      %4812 = vmatprep.mubr.bf16.mxu0 0
      %4813 = vmatmul.mubr.bf16.gmra.mrb[0].mxu0 %v4130
      %v4814 = vpop.f32.mrb[0].mxu0
      %v4815 = vadd.f32 %v4335, %v4814
      %v4816 = vpop.f32.mrb[0].mxu0
      %v4817 = vpop.f32.mrb[0].mxu0
      %v4818 = vadd.f32 %v4338, %v4817
      %v4819 = vpop.f32.mrb[0].mxu0
      %4820 = vmatprep.mubr.bf16.mxu0 0
      %4821 = vmatmul.mubr.bf16.gmra.mrb[0].mxu0 %v4132
      %v4822 = vpop.f32.mrb[0].mxu0
      %v4823 = vadd.f32 %v4343, %v4822
      %v4824 = vpop.f32.mrb[0].mxu0
      %v4825 = vpop.f32.mrb[0].mxu0
      %v4826 = vadd.f32 %v4346, %v4825
      %v4827 = vpop.f32.mrb[0].mxu0
      %4828 = vmatprep.mubr.bf16.mxu0 0
      %4829 = vmatmul.mubr.bf16.gmra.mrb[0].mxu0 %v4134
      %v4830 = vpop.f32.mrb[0].mxu0
      %v4831 = vadd.f32 %v4351, %v4830
      %v4832 = vpop.f32.mrb[0].mxu0
      %v4833 = vpop.f32.mrb[0].mxu0
      %v4834 = vadd.f32 %v4354, %v4833
      %v4835 = vpop.f32.mrb[0].mxu0
      %4836 = vdwg.mxu0
      %v4837 = vadd.f32 %v4647, %v4422
      %v4838 = vadd.f32 %v4650, %v4425
      %v4839 = vadd.f32 %v4655, %v4430
      %v4840 = vadd.f32 %v4658, %v4433
      %v4841 = vadd.f32 %v4663, %v4438
      %v4842 = vadd.f32 %v4666, %v4441
      %v4843 = vadd.f32 %v4671, %v4446
      %v4844 = vadd.f32 %v4674, %v4449
      %v4845 = vadd.f32 %v4679, %v4454
      %v4846 = vadd.f32 %v4682, %v4457
      %v4847 = vadd.f32 %v4687, %v4462
      %v4848 = vadd.f32 %v4690, %v4465
      %v4849 = vadd.f32 %v4695, %v4470
      %v4850 = vadd.f32 %v4698, %v4473
      %v4851 = vadd.f32 %v4703, %v4478
      %v4852 = vadd.f32 %v4706, %v4481
      %v4853 = vadd.f32 %v4711, %v4486
      %v4854 = vadd.f32 %v4714, %v4489
      %v4855 = vadd.f32 %v4719, %v4494
      %v4856 = vadd.f32 %v4722, %v4497
      %v4857 = vadd.f32 %v4727, %v4502
      %v4858 = vadd.f32 %v4730, %v4505
      %v4859 = vadd.f32 %v4735, %v4510
      %v4860 = vadd.f32 %v4738, %v4513
      %v4861 = vadd.f32 %v4743, %v4518
      %v4862 = vadd.f32 %v4746, %v4521
      %v4863 = vadd.f32 %v4751, %v4526
      %v4864 = vadd.f32 %v4754, %v4529
      %v4865 = vadd.f32 %v4759, %v4534
      %v4866 = vadd.f32 %v4762, %v4537
      %v4867 = vadd.f32 %v4767, %v4542
      %v4868 = vadd.f32 %v4770, %v4545
      %v4869 = vadd.f32 %v4775, %v4550
      %v4870 = vadd.f32 %v4778, %v4553
      %v4871 = vadd.f32 %v4783, %v4558
      %v4872 = vadd.f32 %v4786, %v4561
      %v4873 = vadd.f32 %v4791, %v4566
      %v4874 = vadd.f32 %v4794, %v4569
      %v4875 = vadd.f32 %v4799, %v4574
      %v4876 = vadd.f32 %v4802, %v4577
      %v4877 = vadd.f32 %v4807, %v4582
      %v4878 = vadd.f32 %v4810, %v4585
      %v4879 = vadd.f32 %v4815, %v4590
      %v4880 = vadd.f32 %v4818, %v4593
      %v4881 = vadd.f32 %v4823, %v4598
      %v4882 = vadd.f32 %v4826, %v4601
      %v4883 = vadd.f32 %v4831, %v4414
      %v4884 = vadd.f32 %v4834, %v4417
      %v4885 = vld [vmem:[%s6] sm:$0x1]
      %v4887 = vlaneseq
      %v4888 = vshrl.u32 %v4887, 7
      %v4889 = vsub.s32 0, %v4888
      %v4890 = vrot.slane %v4885, %v4889
      %v4892 = vadd.f32 %v4837, %v4890
      %v4893 = vadd.f32 %v4838, %v4890
      %v4894 = vadd.f32 %v4839, %v4890
      %v4895 = vadd.f32 %v4840, %v4890
      %v4896 = vadd.f32 %v4841, %v4890
      %v4897 = vadd.f32 %v4842, %v4890
      %v4898 = vadd.f32 %v4843, %v4890
      %v4899 = vadd.f32 %v4844, %v4890
      %v4900 = vadd.f32 %v4845, %v4890
      %v4901 = vadd.f32 %v4846, %v4890
      %v4902 = vadd.f32 %v4847, %v4890
      %v4903 = vadd.f32 %v4848, %v4890
      %v4904 = vadd.f32 %v4849, %v4890
      %v4905 = vadd.f32 %v4850, %v4890
      %v4906 = vadd.f32 %v4851, %v4890
      %v4907 = vadd.f32 %v4852, %v4890
      %v4908 = vadd.f32 %v4853, %v4890
      %v4909 = vadd.f32 %v4854, %v4890
      %v4910 = vadd.f32 %v4855, %v4890
      %v4911 = vadd.f32 %v4856, %v4890
      %v4912 = vadd.f32 %v4857, %v4890
      %v4913 = vadd.f32 %v4858, %v4890
      %v4914 = vadd.f32 %v4859, %v4890
      %v4915 = vadd.f32 %v4860, %v4890
      %v4916 = vadd.f32 %v4861, %v4890
      %v4917 = vadd.f32 %v4862, %v4890
      %v4918 = vadd.f32 %v4863, %v4890
      %v4919 = vadd.f32 %v4864, %v4890
      %v4920 = vadd.f32 %v4865, %v4890
      %v4921 = vadd.f32 %v4866, %v4890
      %v4922 = vadd.f32 %v4867, %v4890
      %v4923 = vadd.f32 %v4868, %v4890
      %v4924 = vadd.f32 %v4869, %v4890
      %v4925 = vadd.f32 %v4870, %v4890
      %v4926 = vadd.f32 %v4871, %v4890
      %v4927 = vadd.f32 %v4872, %v4890
      %v4928 = vadd.f32 %v4873, %v4890
      %v4929 = vadd.f32 %v4874, %v4890
      %v4930 = vadd.f32 %v4875, %v4890
      %v4931 = vadd.f32 %v4876, %v4890
      %v4932 = vadd.f32 %v4877, %v4890
      %v4933 = vadd.f32 %v4878, %v4890
      %v4934 = vadd.f32 %v4879, %v4890
      %v4935 = vadd.f32 %v4880, %v4890
      %v4936 = vadd.f32 %v4881, %v4890
      %v4937 = vadd.f32 %v4882, %v4890
      %v4938 = vadd.f32 %v4883, %v4890
      %v4939 = vadd.f32 %v4884, %v4890
      %vm4940 = vcmp.ge.f32.partialorder %v4892, 0.0
      %vm4941 = vcmp.ge.f32.partialorder %v4893, 0.0
      %vm4942 = vcmp.ge.f32.partialorder %v4894, 0.0
      %vm4943 = vcmp.ge.f32.partialorder %v4895, 0.0
      %vm4944 = vcmp.ge.f32.partialorder %v4896, 0.0
      %vm4945 = vcmp.ge.f32.partialorder %v4897, 0.0
      %vm4946 = vcmp.ge.f32.partialorder %v4898, 0.0
      %vm4947 = vcmp.ge.f32.partialorder %v4899, 0.0
      %vm4948 = vcmp.ge.f32.partialorder %v4900, 0.0
      %vm4949 = vcmp.ge.f32.partialorder %v4901, 0.0
      %vm4950 = vcmp.ge.f32.partialorder %v4902, 0.0
      %vm4951 = vcmp.ge.f32.partialorder %v4903, 0.0
      %vm4952 = vcmp.ge.f32.partialorder %v4904, 0.0
      %vm4953 = vcmp.ge.f32.partialorder %v4905, 0.0
      %vm4954 = vcmp.ge.f32.partialorder %v4906, 0.0
      %vm4955 = vcmp.ge.f32.partialorder %v4907, 0.0
      %vm4956 = vcmp.ge.f32.partialorder %v4908, 0.0
      %vm4957 = vcmp.ge.f32.partialorder %v4909, 0.0
      %vm4958 = vcmp.ge.f32.partialorder %v4910, 0.0
      %vm4959 = vcmp.ge.f32.partialorder %v4911, 0.0
      %vm4960 = vcmp.ge.f32.partialorder %v4912, 0.0
      %vm4961 = vcmp.ge.f32.partialorder %v4913, 0.0
      %vm4962 = vcmp.ge.f32.partialorder %v4914, 0.0
      %vm4963 = vcmp.ge.f32.partialorder %v4915, 0.0
      %vm4964 = vcmp.ge.f32.partialorder %v4916, 0.0
      %vm4965 = vcmp.ge.f32.partialorder %v4917, 0.0
      %vm4966 = vcmp.ge.f32.partialorder %v4918, 0.0
      %vm4967 = vcmp.ge.f32.partialorder %v4919, 0.0
      %vm4968 = vcmp.ge.f32.partialorder %v4920, 0.0
      %vm4969 = vcmp.ge.f32.partialorder %v4921, 0.0
      %vm4970 = vcmp.ge.f32.partialorder %v4922, 0.0
      %vm4971 = vcmp.ge.f32.partialorder %v4923, 0.0
      %vm4972 = vcmp.ge.f32.partialorder %v4924, 0.0
      %vm4973 = vcmp.ge.f32.partialorder %v4925, 0.0
      %vm4974 = vcmp.ge.f32.partialorder %v4926, 0.0
      %vm4975 = vcmp.ge.f32.partialorder %v4927, 0.0
      %vm4976 = vcmp.ge.f32.partialorder %v4928, 0.0
      %vm4977 = vcmp.ge.f32.partialorder %v4929, 0.0
      %vm4978 = vcmp.ge.f32.partialorder %v4930, 0.0
      %vm4979 = vcmp.ge.f32.partialorder %v4931, 0.0
      %vm4980 = vcmp.ge.f32.partialorder %v4932, 0.0
      %vm4981 = vcmp.ge.f32.partialorder %v4933, 0.0
      %vm4982 = vcmp.ge.f32.partialorder %v4934, 0.0
      %vm4983 = vcmp.ge.f32.partialorder %v4935, 0.0
      %vm4984 = vcmp.ge.f32.partialorder %v4936, 0.0
      %vm4985 = vcmp.ge.f32.partialorder %v4937, 0.0
      %vm4986 = vcmp.ge.f32.partialorder %v4938, 0.0
      %vm4987 = vcmp.ge.f32.partialorder %v4939, 0.0
      %v4988 = vmul.f32 %v4892, 0.1
      %v4989 = vmul.f32 %v4893, 0.1
      %v4990 = vmul.f32 %v4894, 0.1
      %v4991 = vmul.f32 %v4895, 0.1
      %v4992 = vmul.f32 %v4896, 0.1
      %v4993 = vmul.f32 %v4897, 0.1
      %v4994 = vmul.f32 %v4898, 0.1
      %v4995 = vmul.f32 %v4899, 0.1
      %v4996 = vmul.f32 %v4900, 0.1
      %v4997 = vmul.f32 %v4901, 0.1
      %v4998 = vmul.f32 %v4902, 0.1
      %v4999 = vmul.f32 %v4903, 0.1
      %v5000 = vmul.f32 %v4904, 0.1
      %v5001 = vmul.f32 %v4905, 0.1
      %v5002 = vmul.f32 %v4906, 0.1
      %v5003 = vmul.f32 %v4907, 0.1
      %v5004 = vmul.f32 %v4908, 0.1
      %v5005 = vmul.f32 %v4909, 0.1
      %v5006 = vmul.f32 %v4910, 0.1
      %v5007 = vmul.f32 %v4911, 0.1
      %v5008 = vmul.f32 %v4912, 0.1
      %v5009 = vmul.f32 %v4913, 0.1
      %v5010 = vmul.f32 %v4914, 0.1
      %v5011 = vmul.f32 %v4915, 0.1
      %v5012 = vmul.f32 %v4916, 0.1
      %v5013 = vmul.f32 %v4917, 0.1
      %v5014 = vmul.f32 %v4918, 0.1
      %v5015 = vmul.f32 %v4919, 0.1
      %v5016 = vmul.f32 %v4920, 0.1
      %v5017 = vmul.f32 %v4921, 0.1
      %v5018 = vmul.f32 %v4922, 0.1
      %v5019 = vmul.f32 %v4923, 0.1
      %v5020 = vmul.f32 %v4924, 0.1
      %v5021 = vmul.f32 %v4925, 0.1
      %v5022 = vmul.f32 %v4926, 0.1
      %v5023 = vmul.f32 %v4927, 0.1
      %v5024 = vmul.f32 %v4928, 0.1
      %v5025 = vmul.f32 %v4929, 0.1
      %v5026 = vmul.f32 %v4930, 0.1
      %v5027 = vmul.f32 %v4931, 0.1
      %v5028 = vmul.f32 %v4932, 0.1
      %v5029 = vmul.f32 %v4933, 0.1
      %v5030 = vmul.f32 %v4934, 0.1
      %v5031 = vmul.f32 %v4935, 0.1
      %v5032 = vmul.f32 %v4936, 0.1
      %v5033 = vmul.f32 %v4937, 0.1
      %v5034 = vmul.f32 %v4938, 0.1
      %v5035 = vmul.f32 %v4939, 0.1
      %v5036 = vsel %vm4940, %v4892, %v4988
      %v5037 = vsel %vm4941, %v4893, %v4989
      %v5038 = vsel %vm4942, %v4894, %v4990
      %v5039 = vsel %vm4943, %v4895, %v4991
      %v5040 = vsel %vm4944, %v4896, %v4992
      %v5041 = vsel %vm4945, %v4897, %v4993
      %v5042 = vsel %vm4946, %v4898, %v4994
      %v5043 = vsel %vm4947, %v4899, %v4995
      %v5044 = vsel %vm4948, %v4900, %v4996
      %v5045 = vsel %vm4949, %v4901, %v4997
      %v5046 = vsel %vm4950, %v4902, %v4998
      %v5047 = vsel %vm4951, %v4903, %v4999
      %v5048 = vsel %vm4952, %v4904, %v5000
      %v5049 = vsel %vm4953, %v4905, %v5001
      %v5050 = vsel %vm4954, %v4906, %v5002
      %v5051 = vsel %vm4955, %v4907, %v5003
      %v5052 = vsel %vm4956, %v4908, %v5004
      %v5053 = vsel %vm4957, %v4909, %v5005
      %v5054 = vsel %vm4958, %v4910, %v5006
      %v5055 = vsel %vm4959, %v4911, %v5007
      %v5056 = vsel %vm4960, %v4912, %v5008
      %v5057 = vsel %vm4961, %v4913, %v5009
      %v5058 = vsel %vm4962, %v4914, %v5010
      %v5059 = vsel %vm4963, %v4915, %v5011
      %v5060 = vsel %vm4964, %v4916, %v5012
      %v5061 = vsel %vm4965, %v4917, %v5013
      %v5062 = vsel %vm4966, %v4918, %v5014
      %v5063 = vsel %vm4967, %v4919, %v5015
      %v5064 = vsel %vm4968, %v4920, %v5016
      %v5065 = vsel %vm4969, %v4921, %v5017
      %v5066 = vsel %vm4970, %v4922, %v5018
      %v5067 = vsel %vm4971, %v4923, %v5019
      %v5068 = vsel %vm4972, %v4924, %v5020
      %v5069 = vsel %vm4973, %v4925, %v5021
      %v5070 = vsel %vm4974, %v4926, %v5022
      %v5071 = vsel %vm4975, %v4927, %v5023
      %v5072 = vsel %vm4976, %v4928, %v5024
      %v5073 = vsel %vm4977, %v4929, %v5025
      %v5074 = vsel %vm4978, %v4930, %v5026
      %v5075 = vsel %vm4979, %v4931, %v5027
      %v5076 = vsel %vm4980, %v4932, %v5028
      %v5077 = vsel %vm4981, %v4933, %v5029
      %v5078 = vsel %vm4982, %v4934, %v5030
      %v5079 = vsel %vm4983, %v4935, %v5031
      %v5080 = vsel %vm4984, %v4936, %v5032
      %v5081 = vsel %vm4985, %v4937, %v5033
      %v5082 = vsel %vm4986, %v4938, %v5034
      %v5083 = vsel %vm4987, %v4939, %v5035
      %v5084 = vpack.c.bf16 %v5037, %v5036
      %v5085 = vpack.c.bf16 %v5039, %v5038
      %v5086 = vpack.c.bf16 %v5041, %v5040
      %v5087 = vpack.c.bf16 %v5043, %v5042
      %v5088 = vpack.c.bf16 %v5045, %v5044
      %v5089 = vpack.c.bf16 %v5047, %v5046
      %v5090 = vpack.c.bf16 %v5049, %v5048
      %v5091 = vpack.c.bf16 %v5051, %v5050
      %v5092 = vpack.c.bf16 %v5053, %v5052
      %v5093 = vpack.c.bf16 %v5055, %v5054
      %v5094 = vpack.c.bf16 %v5057, %v5056
      %v5095 = vpack.c.bf16 %v5059, %v5058
      %v5096 = vpack.c.bf16 %v5061, %v5060
      %v5097 = vpack.c.bf16 %v5063, %v5062
      %v5098 = vpack.c.bf16 %v5065, %v5064
      %v5099 = vpack.c.bf16 %v5067, %v5066
      %v5100 = vpack.c.bf16 %v5069, %v5068
      %v5101 = vpack.c.bf16 %v5071, %v5070
      %v5102 = vpack.c.bf16 %v5073, %v5072
      %v5103 = vpack.c.bf16 %v5075, %v5074
      %v5104 = vpack.c.bf16 %v5077, %v5076
      %v5105 = vpack.c.bf16 %v5079, %v5078
      %v5106 = vpack.c.bf16 %v5081, %v5080
      %v5107 = vpack.c.bf16 %v5083, %v5082
      %5132 = vrot.lane.b32.xlu0 %v5084, 124
      %v5133 = vpop.permute.xlu0 %5132
      %5134 = vrot.lane.b32.xlu0 %v5085, 124
      %v5135 = vpop.permute.xlu0 %5134
      %5136 = vrot.lane.b32.xlu0 %v5086, 124
      %v5137 = vpop.permute.xlu0 %5136
      %5138 = vrot.lane.b32.xlu0 %v5087, 124
      %v5139 = vpop.permute.xlu0 %5138
      %5140 = vrot.lane.b32.xlu0 %v5088, 124
      %v5141 = vpop.permute.xlu0 %5140
      %5142 = vrot.lane.b32.xlu0 %v5089, 124
      %v5143 = vpop.permute.xlu0 %5142
      %5144 = vrot.lane.b32.xlu0 %v5090, 124
      %v5145 = vpop.permute.xlu0 %5144
      %5146 = vrot.lane.b32.xlu0 %v5091, 124
      %v5147 = vpop.permute.xlu0 %5146
      %5148 = vrot.lane.b32.xlu0 %v5092, 124
      %v5149 = vpop.permute.xlu0 %5148
      %5150 = vrot.lane.b32.xlu0 %v5093, 124
      %v5151 = vpop.permute.xlu0 %5150
      %5152 = vrot.lane.b32.xlu0 %v5094, 124
      %v5153 = vpop.permute.xlu0 %5152
      %5154 = vrot.lane.b32.xlu0 %v5095, 124
      %v5155 = vpop.permute.xlu0 %5154
      %5156 = vrot.lane.b32.xlu0 %v5096, 124
      %v5157 = vpop.permute.xlu0 %5156
      %5158 = vrot.lane.b32.xlu0 %v5097, 124
      %v5159 = vpop.permute.xlu0 %5158
      %5160 = vrot.lane.b32.xlu0 %v5098, 124
      %v5161 = vpop.permute.xlu0 %5160
      %5162 = vrot.lane.b32.xlu0 %v5099, 124
      %v5163 = vpop.permute.xlu0 %5162
      %5164 = vrot.lane.b32.xlu0 %v5100, 124
      %v5165 = vpop.permute.xlu0 %5164
      %5166 = vrot.lane.b32.xlu0 %v5101, 124
      %v5167 = vpop.permute.xlu0 %5166
      %5168 = vrot.lane.b32.xlu0 %v5102, 124
      %v5169 = vpop.permute.xlu0 %5168
      %5170 = vrot.lane.b32.xlu0 %v5103, 124
      %v5171 = vpop.permute.xlu0 %5170
      %5172 = vrot.lane.b32.xlu0 %v5104, 124
      %v5173 = vpop.permute.xlu0 %5172
      %5174 = vrot.lane.b32.xlu0 %v5105, 124
      %v5175 = vpop.permute.xlu0 %5174
      %5176 = vrot.lane.b32.xlu0 %v5106, 124
      %v5177 = vpop.permute.xlu0 %5176
      %5178 = vrot.lane.b32.xlu0 %v5107, 124
      %v5179 = vpop.permute.xlu0 %5178
      %5204 = vst.msk [vmem:[#allocation4] sm:$0xff] %vm3393, %v5133
      %5205 = vst.msk [vmem:[#allocation4 + $0x8] sm:$0xff] %vm3393, %v5135
      %5206 = vst.msk [vmem:[#allocation4 + $0x10] sm:$0xff] %vm3393, %v5137
      %5207 = vst.msk [vmem:[#allocation4 + $0x18] sm:$0xff] %vm3393, %v5139
      %5208 = vst.msk [vmem:[#allocation4 + $0x20] sm:$0xff] %vm3393, %v5141
      %5209 = vst.msk [vmem:[#allocation4 + $0x28] sm:$0xff] %vm3393, %v5143
      %5210 = vst.msk [vmem:[#allocation4 + $0x30] sm:$0xff] %vm3393, %v5145
      %5211 = vst.msk [vmem:[#allocation4 + $0x38] sm:$0xff] %vm3393, %v5147
      %5212 = vst.msk [vmem:[#allocation4 + $0x40] sm:$0xff] %vm3393, %v5149
      %5213 = vst.msk [vmem:[#allocation4 + $0x48] sm:$0xff] %vm3393, %v5151
      %5214 = vst.msk [vmem:[#allocation4 + $0x50] sm:$0xff] %vm3393, %v5153
      %5215 = vst.msk [vmem:[#allocation4 + $0x58] sm:$0xff] %vm3393, %v5155
      %5216 = vst.msk [vmem:[#allocation4 + $0x60] sm:$0xff] %vm3393, %v5157
      %5217 = vst.msk [vmem:[#allocation4 + $0x68] sm:$0xff] %vm3393, %v5159
      %5218 = vst.msk [vmem:[#allocation4 + $0x70] sm:$0xff] %vm3393, %v5161
      %5219 = vst.msk [vmem:[#allocation4 + $0x78] sm:$0xff] %vm3393, %v5163
      %5220 = vst.msk [vmem:[#allocation4 + $0x80] sm:$0xff] %vm3393, %v5165
      %5221 = vst.msk [vmem:[#allocation4 + $0x88] sm:$0xff] %vm3393, %v5167
      %5222 = vst.msk [vmem:[#allocation4 + $0x90] sm:$0xff] %vm3393, %v5169
      %5223 = vst.msk [vmem:[#allocation4 + $0x98] sm:$0xff] %vm3393, %v5171
      %5224 = vst.msk [vmem:[#allocation4 + $0xa0] sm:$0xff] %vm3393, %v5173
      %5225 = vst.msk [vmem:[#allocation4 + $0xa8] sm:$0xff] %vm3393, %v5175
      %5226 = vst.msk [vmem:[#allocation4 + $0xb0] sm:$0xff] %vm3393, %v5177
      %5227 = vst.msk [vmem:[#allocation4 + $0xb8] sm:$0xff] %vm3393, %v5179
      // Predicated region
      $region65: #{tpu_custom_call.1} parent=55 // pred_check
        %p5228 = pneg %p598
      $region66: #{tpu_custom_call.1} parent=55 // pred_check_branch
        %5230 = sbr.rel (%p5228) target = $region68
      $region67: #{tpu_custom_call.1} parent=55 // pred_region
        %5231 = vst.msk [vmem:[#allocation4] sm:$0xff] %vm3393, 0
        %5232 = vst.msk [vmem:[#allocation4 + $0x8] sm:$0xff] %vm3393, 0
        %5233 = vst.msk [vmem:[#allocation4 + $0x10] sm:$0xff] %vm3393, 0
        %5234 = vst.msk [vmem:[#allocation4 + $0x18] sm:$0xff] %vm3393, 0
        %5235 = vst.msk [vmem:[#allocation4 + $0xa0] sm:$0xff] %vm3393, 0
        %5236 = vst.msk [vmem:[#allocation4 + $0xa8] sm:$0xff] %vm3393, 0
        %5237 = vst.msk [vmem:[#allocation4 + $0xb0] sm:$0xff] %vm3393, 0
        %5238 = vst.msk [vmem:[#allocation4 + $0xb8] sm:$0xff] %vm3393, 0
      $region68: #{tpu_custom_call.1} parent=55 // pred_fallthru
        _
      %v5239 = vld [vmem:[#allocation4] sm:$0xff]
      %v5240 = vld [vmem:[#allocation4 + $0x8] sm:$0xff]
      %v5241 = vld [vmem:[#allocation4 + $0x10] sm:$0xff]
      %v5242 = vld [vmem:[#allocation4 + $0x18] sm:$0xff]
      %v5243 = vld [vmem:[#allocation4 + $0x20] sm:$0xff]
      %v5244 = vld [vmem:[#allocation4 + $0x28] sm:$0xff]
      %v5245 = vld [vmem:[#allocation4 + $0x30] sm:$0xff]
      %v5246 = vld [vmem:[#allocation4 + $0x38] sm:$0xff]
      %v5247 = vld [vmem:[#allocation4 + $0x40] sm:$0xff]
      %v5248 = vld [vmem:[#allocation4 + $0x48] sm:$0xff]
      %v5249 = vld [vmem:[#allocation4 + $0x50] sm:$0xff]
      %v5250 = vld [vmem:[#allocation4 + $0x58] sm:$0xff]
      %v5251 = vld [vmem:[#allocation4 + $0x60] sm:$0xff]
      %v5252 = vld [vmem:[#allocation4 + $0x68] sm:$0xff]
      %v5253 = vld [vmem:[#allocation4 + $0x70] sm:$0xff]
      %v5254 = vld [vmem:[#allocation4 + $0x78] sm:$0xff]
      %v5255 = vld [vmem:[#allocation4 + $0x80] sm:$0xff]
      %v5256 = vld [vmem:[#allocation4 + $0x88] sm:$0xff]
      %v5257 = vld [vmem:[#allocation4 + $0x90] sm:$0xff]
      %v5258 = vld [vmem:[#allocation4 + $0x98] sm:$0xff]
      %v5259 = vld [vmem:[#allocation4 + $0xa0] sm:$0xff]
      %v5260 = vld [vmem:[#allocation4 + $0xa8] sm:$0xff]
      %v5261 = vld [vmem:[#allocation4 + $0xb0] sm:$0xff]
      %v5262 = vld [vmem:[#allocation4 + $0xb8] sm:$0xff]
      %v5264 = vshrl.u32 %v5262, 16
      %v5266 = vrot.slane %v5264, 7
      %v5269 = vshrl.u32 %v5239, 16
      %v5271 = vrot.slane %v5269, 7
      %v5272 = vshll.u32 %v5239, 16
      %v5274 = vor.u32 %v5271, %v5272
      %v5276 = vshrl.u32 %v5240, 16
      %v5278 = vrot.slane %v5276, 7
      %v5279 = vshll.u32 %v5240, 16
      %v5281 = vor.u32 %v5278, %v5279
      %v5282 = vsel %vm1600, %v5271, %v5281
      %v5284 = vshrl.u32 %v5241, 16
      %v5286 = vrot.slane %v5284, 7
      %v5287 = vshll.u32 %v5241, 16
      %v5289 = vor.u32 %v5286, %v5287
      %v5290 = vsel %vm1600, %v5278, %v5289
      %v5292 = vshrl.u32 %v5242, 16
      %v5294 = vrot.slane %v5292, 7
      %v5295 = vshll.u32 %v5242, 16
      %v5297 = vor.u32 %v5294, %v5295
      %v5298 = vsel %vm1600, %v5286, %v5297
      %v5300 = vshrl.u32 %v5243, 16
      %v5302 = vrot.slane %v5300, 7
      %v5303 = vshll.u32 %v5243, 16
      %v5305 = vor.u32 %v5302, %v5303
      %v5306 = vsel %vm1600, %v5294, %v5305
      %v5308 = vshrl.u32 %v5244, 16
      %v5310 = vrot.slane %v5308, 7
      %v5311 = vshll.u32 %v5244, 16
      %v5313 = vor.u32 %v5310, %v5311
      %v5314 = vsel %vm1600, %v5302, %v5313
      %v5316 = vshrl.u32 %v5245, 16
      %v5318 = vrot.slane %v5316, 7
      %v5319 = vshll.u32 %v5245, 16
      %v5321 = vor.u32 %v5318, %v5319
      %v5322 = vsel %vm1600, %v5310, %v5321
      %v5324 = vshrl.u32 %v5246, 16
      %v5326 = vrot.slane %v5324, 7
      %v5327 = vshll.u32 %v5246, 16
      %v5329 = vor.u32 %v5326, %v5327
      %v5330 = vsel %vm1600, %v5318, %v5329
      %v5332 = vshrl.u32 %v5247, 16
      %v5334 = vrot.slane %v5332, 7
      %v5335 = vshll.u32 %v5247, 16
      %v5337 = vor.u32 %v5334, %v5335
      %v5338 = vsel %vm1600, %v5326, %v5337
      %v5340 = vshrl.u32 %v5248, 16
      %v5342 = vrot.slane %v5340, 7
      %v5343 = vshll.u32 %v5248, 16
      %v5345 = vor.u32 %v5342, %v5343
      %v5346 = vsel %vm1600, %v5334, %v5345
      %v5348 = vshrl.u32 %v5249, 16
      %v5350 = vrot.slane %v5348, 7
      %v5351 = vshll.u32 %v5249, 16
      %v5353 = vor.u32 %v5350, %v5351
      %v5354 = vsel %vm1600, %v5342, %v5353
      %v5356 = vshrl.u32 %v5250, 16
      %v5358 = vrot.slane %v5356, 7
      %v5359 = vshll.u32 %v5250, 16
      %v5361 = vor.u32 %v5358, %v5359
      %v5362 = vsel %vm1600, %v5350, %v5361
      %v5364 = vshrl.u32 %v5251, 16
      %v5366 = vrot.slane %v5364, 7
      %v5367 = vshll.u32 %v5251, 16
      %v5369 = vor.u32 %v5366, %v5367
      %v5370 = vsel %vm1600, %v5358, %v5369
      %v5372 = vshrl.u32 %v5252, 16
      %v5374 = vrot.slane %v5372, 7
      %v5375 = vshll.u32 %v5252, 16
      %v5377 = vor.u32 %v5374, %v5375
      %v5378 = vsel %vm1600, %v5366, %v5377
      %v5380 = vshrl.u32 %v5253, 16
      %v5382 = vrot.slane %v5380, 7
      %v5383 = vshll.u32 %v5253, 16
      %v5385 = vor.u32 %v5382, %v5383
      %v5386 = vsel %vm1600, %v5374, %v5385
      %v5388 = vshrl.u32 %v5254, 16
      %v5390 = vrot.slane %v5388, 7
      %v5391 = vshll.u32 %v5254, 16
      %v5393 = vor.u32 %v5390, %v5391
      %v5394 = vsel %vm1600, %v5382, %v5393
      %v5396 = vshrl.u32 %v5255, 16
      %v5398 = vrot.slane %v5396, 7
      %v5399 = vshll.u32 %v5255, 16
      %v5401 = vor.u32 %v5398, %v5399
      %v5402 = vsel %vm1600, %v5390, %v5401
      %v5404 = vshrl.u32 %v5256, 16
      %v5406 = vrot.slane %v5404, 7
      %v5407 = vshll.u32 %v5256, 16
      %v5409 = vor.u32 %v5406, %v5407
      %v5410 = vsel %vm1600, %v5398, %v5409
      %v5412 = vshrl.u32 %v5257, 16
      %v5414 = vrot.slane %v5412, 7
      %v5415 = vshll.u32 %v5257, 16
      %v5417 = vor.u32 %v5414, %v5415
      %v5418 = vsel %vm1600, %v5406, %v5417
      %v5420 = vshrl.u32 %v5258, 16
      %v5422 = vrot.slane %v5420, 7
      %v5423 = vshll.u32 %v5258, 16
      %v5425 = vor.u32 %v5422, %v5423
      %v5426 = vsel %vm1600, %v5414, %v5425
      %v5428 = vshrl.u32 %v5259, 16
      %v5430 = vrot.slane %v5428, 7
      %v5431 = vshll.u32 %v5259, 16
      %v5433 = vor.u32 %v5430, %v5431
      %v5434 = vsel %vm1600, %v5422, %v5433
      %v5436 = vshrl.u32 %v5260, 16
      %v5438 = vrot.slane %v5436, 7
      %v5439 = vshll.u32 %v5260, 16
      %v5441 = vor.u32 %v5438, %v5439
      %v5442 = vsel %vm1600, %v5430, %v5441
      %v5444 = vshrl.u32 %v5261, 16
      %v5446 = vrot.slane %v5444, 7
      %v5447 = vshll.u32 %v5261, 16
      %v5449 = vor.u32 %v5446, %v5447
      %v5450 = vsel %vm1600, %v5438, %v5449
      %v5451 = vshll.u32 %v5262, 16
      %v5453 = vor.u32 %v5266, %v5451
      %v5454 = vsel %vm1600, %v5446, %v5453
      %v5479 = vsel %vm1813, %v5266, %v5274
      %v5480 = vmul.bf16 %v5479, %v1379
      %v5481 = vmul.bf16 %v5282, %v1380
      %v5482 = vmul.bf16 %v5290, %v1381
      %v5483 = vmul.bf16 %v5298, %v1382
      %v5484 = vmul.bf16 %v5306, %v1383
      %v5485 = vmul.bf16 %v5314, %v1384
      %v5486 = vmul.bf16 %v5322, %v1385
      %v5487 = vmul.bf16 %v5330, %v1386
      %v5488 = vmul.bf16 %v5338, %v1387
      %v5489 = vmul.bf16 %v5346, %v1388
      %v5490 = vmul.bf16 %v5354, %v1389
      %v5491 = vmul.bf16 %v5362, %v1390
      %v5492 = vmul.bf16 %v5370, %v1391
      %v5493 = vmul.bf16 %v5378, %v1392
      %v5494 = vmul.bf16 %v5386, %v1393
      %v5495 = vmul.bf16 %v5394, %v1394
      %v5496 = vmul.bf16 %v5402, %v1395
      %v5497 = vmul.bf16 %v5410, %v1396
      %v5498 = vmul.bf16 %v5418, %v1397
      %v5499 = vmul.bf16 %v5426, %v1398
      %v5500 = vmul.bf16 %v5434, %v1399
      %v5501 = vmul.bf16 %v5442, %v1400
      %v5502 = vmul.bf16 %v5450, %v1401
      %v5503 = vmul.bf16 %v5454, %v1402
      %v5504 = vrot.slane %v5272, 1
      %v5505 = vor.u32 %v5269, %v5504
      %v5506 = vrot.slane %v5279, 1
      %v5507 = vsel %vm1839, %v5505, %v5506
      %v5508 = vor.u32 %v5276, %v5506
      %v5509 = vrot.slane %v5287, 1
      %v5510 = vsel %vm1839, %v5508, %v5509
      %v5511 = vor.u32 %v5284, %v5509
      %v5512 = vrot.slane %v5295, 1
      %v5513 = vsel %vm1839, %v5511, %v5512
      %v5514 = vor.u32 %v5292, %v5512
      %v5515 = vrot.slane %v5303, 1
      %v5516 = vsel %vm1839, %v5514, %v5515
      %v5517 = vor.u32 %v5300, %v5515
      %v5518 = vrot.slane %v5311, 1
      %v5519 = vsel %vm1839, %v5517, %v5518
      %v5520 = vor.u32 %v5308, %v5518
      %v5521 = vrot.slane %v5319, 1
      %v5522 = vsel %vm1839, %v5520, %v5521
      %v5523 = vor.u32 %v5316, %v5521
      %v5524 = vrot.slane %v5327, 1
      %v5525 = vsel %vm1839, %v5523, %v5524
      %v5526 = vor.u32 %v5324, %v5524
      %v5527 = vrot.slane %v5335, 1
      %v5528 = vsel %vm1839, %v5526, %v5527
      %v5529 = vor.u32 %v5332, %v5527
      %v5530 = vrot.slane %v5343, 1
      %v5531 = vsel %vm1839, %v5529, %v5530
      %v5532 = vor.u32 %v5340, %v5530
      %v5533 = vrot.slane %v5351, 1
      %v5534 = vsel %vm1839, %v5532, %v5533
      %v5535 = vor.u32 %v5348, %v5533
      %v5536 = vrot.slane %v5359, 1
      %v5537 = vsel %vm1839, %v5535, %v5536
      %v5538 = vor.u32 %v5356, %v5536
      %v5539 = vrot.slane %v5367, 1
      %v5540 = vsel %vm1839, %v5538, %v5539
      %v5541 = vor.u32 %v5364, %v5539
      %v5542 = vrot.slane %v5375, 1
      %v5543 = vsel %vm1839, %v5541, %v5542
      %v5544 = vor.u32 %v5372, %v5542
      %v5545 = vrot.slane %v5383, 1
      %v5546 = vsel %vm1839, %v5544, %v5545
      %v5547 = vor.u32 %v5380, %v5545
      %v5548 = vrot.slane %v5391, 1
      %v5549 = vsel %vm1839, %v5547, %v5548
      %v5550 = vor.u32 %v5388, %v5548
      %v5551 = vrot.slane %v5399, 1
      %v5552 = vsel %vm1839, %v5550, %v5551
      %v5553 = vor.u32 %v5396, %v5551
      %v5554 = vrot.slane %v5407, 1
      %v5555 = vsel %vm1839, %v5553, %v5554
      %v5556 = vor.u32 %v5404, %v5554
      %v5557 = vrot.slane %v5415, 1
      %v5558 = vsel %vm1839, %v5556, %v5557
      %v5559 = vor.u32 %v5412, %v5557
      %v5560 = vrot.slane %v5423, 1
      %v5561 = vsel %vm1839, %v5559, %v5560
      %v5562 = vor.u32 %v5420, %v5560
      %v5563 = vrot.slane %v5431, 1
      %v5564 = vsel %vm1839, %v5562, %v5563
      %v5565 = vor.u32 %v5428, %v5563
      %v5566 = vrot.slane %v5439, 1
      %v5567 = vsel %vm1839, %v5565, %v5566
      %v5568 = vor.u32 %v5436, %v5566
      %v5569 = vrot.slane %v5447, 1
      %v5570 = vsel %vm1839, %v5568, %v5569
      %v5571 = vor.u32 %v5444, %v5569
      %v5572 = vrot.slane %v5451, 1
      %v5573 = vsel %vm1839, %v5571, %v5572
      %v5574 = vor.u32 %v5264, %v5572
      %v5600 = vsel %vm1937, %v5574, %v5504
      %v5601 = vmul.bf16 %v5507, %v1547
      %v5602 = vmul.bf16 %v5510, %v1548
      %v5603 = vmul.bf16 %v5513, %v1549
      %v5604 = vmul.bf16 %v5516, %v1550
      %v5605 = vmul.bf16 %v5519, %v1551
      %v5606 = vmul.bf16 %v5522, %v1552
      %v5607 = vmul.bf16 %v5525, %v1553
      %v5608 = vmul.bf16 %v5528, %v1554
      %v5609 = vmul.bf16 %v5531, %v1555
      %v5610 = vmul.bf16 %v5534, %v1556
      %v5611 = vmul.bf16 %v5537, %v1557
      %v5612 = vmul.bf16 %v5540, %v1558
      %v5613 = vmul.bf16 %v5543, %v1559
      %v5614 = vmul.bf16 %v5546, %v1560
      %v5615 = vmul.bf16 %v5549, %v1561
      %v5616 = vmul.bf16 %v5552, %v1562
      %v5617 = vmul.bf16 %v5555, %v1563
      %v5618 = vmul.bf16 %v5558, %v1564
      %v5619 = vmul.bf16 %v5561, %v1565
      %v5620 = vmul.bf16 %v5564, %v1566
      %v5621 = vmul.bf16 %v5567, %v1567
      %v5622 = vmul.bf16 %v5570, %v1568
      %v5623 = vmul.bf16 %v5573, %v1569
      %v5624 = vmul.bf16 %v5600, %v1570
      %5649 = vrot.lane.b32.xlu0 %v5239, 4
      %v5650 = vpop.permute.xlu0 %5649
      %5651 = vrot.lane.b32.xlu0 %v5240, 4
      %v5652 = vpop.permute.xlu0 %5651
      %5653 = vrot.lane.b32.xlu0 %v5241, 4
      %v5654 = vpop.permute.xlu0 %5653
      %5655 = vrot.lane.b32.xlu0 %v5242, 4
      %v5656 = vpop.permute.xlu0 %5655
      %5657 = vrot.lane.b32.xlu0 %v5243, 4
      %v5658 = vpop.permute.xlu0 %5657
      %5659 = vrot.lane.b32.xlu0 %v5244, 4
      %v5660 = vpop.permute.xlu0 %5659
      %5661 = vrot.lane.b32.xlu0 %v5245, 4
      %v5662 = vpop.permute.xlu0 %5661
      %5663 = vrot.lane.b32.xlu0 %v5246, 4
      %v5664 = vpop.permute.xlu0 %5663
      %5665 = vrot.lane.b32.xlu0 %v5247, 4
      %v5666 = vpop.permute.xlu0 %5665
      %5667 = vrot.lane.b32.xlu0 %v5248, 4
      %v5668 = vpop.permute.xlu0 %5667
      %5669 = vrot.lane.b32.xlu0 %v5249, 4
      %v5670 = vpop.permute.xlu0 %5669
      %5671 = vrot.lane.b32.xlu0 %v5250, 4
      %v5672 = vpop.permute.xlu0 %5671
      %5673 = vrot.lane.b32.xlu0 %v5251, 4
      %v5674 = vpop.permute.xlu0 %5673
      %5675 = vrot.lane.b32.xlu0 %v5252, 4
      %v5676 = vpop.permute.xlu0 %5675
      %5677 = vrot.lane.b32.xlu0 %v5253, 4
      %v5678 = vpop.permute.xlu0 %5677
      %5679 = vrot.lane.b32.xlu0 %v5254, 4
      %v5680 = vpop.permute.xlu0 %5679
      %5681 = vrot.lane.b32.xlu0 %v5255, 4
      %v5682 = vpop.permute.xlu0 %5681
      %5683 = vrot.lane.b32.xlu0 %v5256, 4
      %v5684 = vpop.permute.xlu0 %5683
      %5685 = vrot.lane.b32.xlu0 %v5257, 4
      %v5686 = vpop.permute.xlu0 %5685
      %5687 = vrot.lane.b32.xlu0 %v5258, 4
      %v5688 = vpop.permute.xlu0 %5687
      %5689 = vrot.lane.b32.xlu0 %v5259, 4
      %v5690 = vpop.permute.xlu0 %5689
      %5691 = vrot.lane.b32.xlu0 %v5260, 4
      %v5692 = vpop.permute.xlu0 %5691
      %5693 = vrot.lane.b32.xlu0 %v5261, 4
      %v5694 = vpop.permute.xlu0 %5693
      %5695 = vrot.lane.b32.xlu0 %v5262, 4
      %v5696 = vpop.permute.xlu0 %5695
      %5721 = vrot.lane.b32.xlu0 %v5601, 8
      %v5722 = vpop.permute.xlu0 %5721
      %5723 = vrot.lane.b32.xlu0 %v5602, 8
      %v5724 = vpop.permute.xlu0 %5723
      %5725 = vrot.lane.b32.xlu0 %v5603, 8
      %v5726 = vpop.permute.xlu0 %5725
      %5727 = vrot.lane.b32.xlu0 %v5604, 8
      %v5728 = vpop.permute.xlu0 %5727
      %5729 = vrot.lane.b32.xlu0 %v5605, 8
      %v5730 = vpop.permute.xlu0 %5729
      %5731 = vrot.lane.b32.xlu0 %v5606, 8
      %v5732 = vpop.permute.xlu0 %5731
      %5733 = vrot.lane.b32.xlu0 %v5607, 8
      %v5734 = vpop.permute.xlu0 %5733
      %5735 = vrot.lane.b32.xlu0 %v5608, 8
      %v5736 = vpop.permute.xlu0 %5735
      %5737 = vrot.lane.b32.xlu0 %v5609, 8
      %v5738 = vpop.permute.xlu0 %5737
      %5739 = vrot.lane.b32.xlu0 %v5610, 8
      %v5740 = vpop.permute.xlu0 %5739
      %5741 = vrot.lane.b32.xlu0 %v5611, 8
      %v5742 = vpop.permute.xlu0 %5741
      %5743 = vrot.lane.b32.xlu0 %v5612, 8
      %v5744 = vpop.permute.xlu0 %5743
      %5745 = vrot.lane.b32.xlu0 %v5613, 8
      %v5746 = vpop.permute.xlu0 %5745
      %5747 = vrot.lane.b32.xlu0 %v5614, 8
      %v5748 = vpop.permute.xlu0 %5747
      %5749 = vrot.lane.b32.xlu0 %v5615, 8
      %v5750 = vpop.permute.xlu0 %5749
      %5751 = vrot.lane.b32.xlu0 %v5616, 8
      %v5752 = vpop.permute.xlu0 %5751
      %5753 = vrot.lane.b32.xlu0 %v5617, 8
      %v5754 = vpop.permute.xlu0 %5753
      %5755 = vrot.lane.b32.xlu0 %v5618, 8
      %v5756 = vpop.permute.xlu0 %5755
      %5757 = vrot.lane.b32.xlu0 %v5619, 8
      %v5758 = vpop.permute.xlu0 %5757
      %5759 = vrot.lane.b32.xlu0 %v5620, 8
      %v5760 = vpop.permute.xlu0 %5759
      %5761 = vrot.lane.b32.xlu0 %v5621, 8
      %v5762 = vpop.permute.xlu0 %5761
      %5763 = vrot.lane.b32.xlu0 %v5622, 8
      %v5764 = vpop.permute.xlu0 %5763
      %5765 = vrot.lane.b32.xlu0 %v5623, 8
      %v5766 = vpop.permute.xlu0 %5765
      %5767 = vrot.lane.b32.xlu0 %v5624, 8
      %v5768 = vpop.permute.xlu0 %5767
      %v5771 = vsel %vm3393, %v5480, %v5650
      %v5774 = vsel %vm3393, %v5481, %v5652
      %v5777 = vsel %vm3393, %v5482, %v5654
      %v5780 = vsel %vm3393, %v5483, %v5656
      %v5783 = vsel %vm3393, %v5484, %v5658
      %v5786 = vsel %vm3393, %v5485, %v5660
      %v5789 = vsel %vm3393, %v5486, %v5662
      %v5792 = vsel %vm3393, %v5487, %v5664
      %v5795 = vsel %vm3393, %v5488, %v5666
      %v5798 = vsel %vm3393, %v5489, %v5668
      %v5801 = vsel %vm3393, %v5490, %v5670
      %v5804 = vsel %vm3393, %v5491, %v5672
      %v5807 = vsel %vm3393, %v5492, %v5674
      %v5810 = vsel %vm3393, %v5493, %v5676
      %v5813 = vsel %vm3393, %v5494, %v5678
      %v5816 = vsel %vm3393, %v5495, %v5680
      %v5819 = vsel %vm3393, %v5496, %v5682
      %v5822 = vsel %vm3393, %v5497, %v5684
      %v5825 = vsel %vm3393, %v5498, %v5686
      %v5828 = vsel %vm3393, %v5499, %v5688
      %v5831 = vsel %vm3393, %v5500, %v5690
      %v5834 = vsel %vm3393, %v5501, %v5692
      %v5837 = vsel %vm3393, %v5502, %v5694
      %v5840 = vsel %vm3393, %v5503, %v5696
      %v5842 = vsel %vm4031, %v5771, %v5722
      %v5844 = vsel %vm4031, %v5774, %v5724
      %v5846 = vsel %vm4031, %v5777, %v5726
      %v5848 = vsel %vm4031, %v5780, %v5728
      %v5850 = vsel %vm4031, %v5783, %v5730
      %v5852 = vsel %vm4031, %v5786, %v5732
      %v5854 = vsel %vm4031, %v5789, %v5734
      %v5856 = vsel %vm4031, %v5792, %v5736
      %v5858 = vsel %vm4031, %v5795, %v5738
      %v5860 = vsel %vm4031, %v5798, %v5740
      %v5862 = vsel %vm4031, %v5801, %v5742
      %v5864 = vsel %vm4031, %v5804, %v5744
      %v5866 = vsel %vm4031, %v5807, %v5746
      %v5868 = vsel %vm4031, %v5810, %v5748
      %v5870 = vsel %vm4031, %v5813, %v5750
      %v5872 = vsel %vm4031, %v5816, %v5752
      %v5874 = vsel %vm4031, %v5819, %v5754
      %v5876 = vsel %vm4031, %v5822, %v5756
      %v5878 = vsel %vm4031, %v5825, %v5758
      %v5880 = vsel %vm4031, %v5828, %v5760
      %v5882 = vsel %vm4031, %v5831, %v5762
      %v5884 = vsel %vm4031, %v5834, %v5764
      %v5886 = vsel %vm4031, %v5837, %v5766
      %v5888 = vsel %vm4031, %v5840, %v5768
      %v5889 = vld [vmem:[%s7] sm:$0xf]
      %v5890 = vld [vmem:[%s7 + $0x4] sm:$0x3]
      %v5893 = vunpack.c.l.b16 %v5889
      %v5894 = vunpack.c.l.b16 %v5890
      %v5895 = vpack.c.b16 %v5894, %v5893
      %v5896 = vsel %vm4087, %v5842, 0
      %v5898 = vsel %vm4087, %v5844, 0
      %v5900 = vsel %vm4087, %v5846, 0
      %v5902 = vsel %vm4087, %v5848, 0
      %v5904 = vsel %vm4087, %v5850, 0
      %v5906 = vsel %vm4087, %v5852, 0
      %v5908 = vsel %vm4087, %v5854, 0
      %v5910 = vsel %vm4087, %v5856, 0
      %v5912 = vsel %vm4087, %v5858, 0
      %v5914 = vsel %vm4087, %v5860, 0
      %v5916 = vsel %vm4087, %v5862, 0
      %v5918 = vsel %vm4087, %v5864, 0
      %v5920 = vsel %vm4087, %v5866, 0
      %v5922 = vsel %vm4087, %v5868, 0
      %v5924 = vsel %vm4087, %v5870, 0
      %v5926 = vsel %vm4087, %v5872, 0
      %v5928 = vsel %vm4087, %v5874, 0
      %v5930 = vsel %vm4087, %v5876, 0
      %v5932 = vsel %vm4087, %v5878, 0
      %v5934 = vsel %vm4087, %v5880, 0
      %v5936 = vsel %vm4087, %v5882, 0
      %v5938 = vsel %vm4087, %v5884, 0
      %v5940 = vsel %vm4087, %v5886, 0
      %v5942 = vsel %vm4087, %v5888, 0
      %v5945 = vsel %vm4136, %v5895, 0
      %5947 = vmatprep.subr.bf16.mxu0 0
      %5948 = vmatpush1.bf16.msra.mxu0 %v5945
      %5949 = vmatprep.subr.bf16.mxu0 0
      %5950 = vmatpush1.bf16.msra.mxu0 0
      %5951 = vmatprep.subr.bf16.mxu0 0
      %5952 = vmatpush1.bf16.msra.mxu0 0
      %5953 = vmatprep.subr.bf16.mxu0 0
      %5954 = vmatpush1.bf16.msra.mxu0 0
      %5955 = vmatprep.subr.bf16.mxu0 0
      %5956 = vmatpush1.bf16.msra.mxu0 0
      %5957 = vmatprep.subr.bf16.mxu0 0
      %5958 = vmatpush1.bf16.msra.mxu0 0
      %5959 = vmatprep.subr.bf16.mxu0 0
      %5960 = vmatpush1.bf16.msra.mxu0 0
      %5961 = vmatprep.subr.bf16.mxu0 0
      %5962 = vmatpush1.bf16.msra.mxu0 0
      %5963 = vmatprep.subr.bf16.mxu0 0
      %5964 = vmatpush1.bf16.msra.mxu0 0
      %5965 = vmatprep.subr.bf16.mxu0 0
      %5966 = vmatpush1.bf16.msra.mxu0 0
      %5967 = vmatprep.subr.bf16.mxu0 0
      %5968 = vmatpush1.bf16.msra.mxu0 0
      %5969 = vmatprep.subr.bf16.mxu0 0
      %5970 = vmatpush1.bf16.msra.mxu0 0
      %5971 = vmatprep.subr.bf16.mxu0 0
      %5972 = vmatpush1.bf16.msra.mxu0 0
      %5973 = vmatprep.subr.bf16.mxu0 0
      %5974 = vmatpush1.bf16.msra.mxu0 0
      %5975 = vmatprep.subr.bf16.mxu0 0
      %5976 = vmatpush1.bf16.msra.mxu0 0
      %5977 = vmatprep.subr.bf16.mxu0 0
      %5978 = vmatpush1.bf16.msra.mxu0 0
      %5979 = vmatprep.mubr.bf16.mxu0 0
      %5980 = vmatmul.mubr.bf16.gmra.mrb[0].mxu0 %v5896
      %v5981 = vpop.f32.mrb[0].mxu0
      %v5982 = vpop.f32.mrb[0].mxu0
      %v5983 = vpop.f32.mrb[0].mxu0
      %v5984 = vpop.f32.mrb[0].mxu0
      %5985 = vmatprep.mubr.bf16.mxu0 0
      %5986 = vmatmul.mubr.bf16.gmra.mrb[0].mxu0 %v5898
      %v5987 = vpop.f32.mrb[0].mxu0
      %v5988 = vpop.f32.mrb[0].mxu0
      %v5989 = vpop.f32.mrb[0].mxu0
      %v5990 = vpop.f32.mrb[0].mxu0
      %5991 = vmatprep.mubr.bf16.mxu0 0
      %5992 = vmatmul.mubr.bf16.gmra.mrb[0].mxu0 %v5900
      %v5993 = vpop.f32.mrb[0].mxu0
      %v5994 = vpop.f32.mrb[0].mxu0
      %v5995 = vpop.f32.mrb[0].mxu0
      %v5996 = vpop.f32.mrb[0].mxu0
      %5997 = vmatprep.mubr.bf16.mxu0 0
      %5998 = vmatmul.mubr.bf16.gmra.mrb[0].mxu0 %v5902
      %v5999 = vpop.f32.mrb[0].mxu0
      %v6000 = vadd.f32 0.0, %v5999
      %v6001 = vpop.f32.mrb[0].mxu0
      %v6002 = vpop.f32.mrb[0].mxu0
      %v6003 = vadd.f32 0.0, %v6002
      %v6004 = vpop.f32.mrb[0].mxu0
      %6005 = vmatprep.mubr.bf16.mxu0 0
      %6006 = vmatmul.mubr.bf16.gmra.mrb[0].mxu0 %v5904
      %v6007 = vpop.f32.mrb[0].mxu0
      %v6008 = vadd.f32 0.0, %v6007
      %v6009 = vpop.f32.mrb[0].mxu0
      %v6010 = vpop.f32.mrb[0].mxu0
      %v6011 = vadd.f32 0.0, %v6010
      %v6012 = vpop.f32.mrb[0].mxu0
      %6013 = vmatprep.mubr.bf16.mxu0 0
      %6014 = vmatmul.mubr.bf16.gmra.mrb[0].mxu0 %v5906
      %v6015 = vpop.f32.mrb[0].mxu0
      %v6016 = vadd.f32 0.0, %v6015
      %v6017 = vpop.f32.mrb[0].mxu0
      %v6018 = vpop.f32.mrb[0].mxu0
      %v6019 = vadd.f32 0.0, %v6018
      %v6020 = vpop.f32.mrb[0].mxu0
      %6021 = vmatprep.mubr.bf16.mxu0 0
      %6022 = vmatmul.mubr.bf16.gmra.mrb[0].mxu0 %v5908
      %v6023 = vpop.f32.mrb[0].mxu0
      %v6024 = vadd.f32 0.0, %v6023
      %v6025 = vpop.f32.mrb[0].mxu0
      %v6026 = vpop.f32.mrb[0].mxu0
      %v6027 = vadd.f32 0.0, %v6026
      %v6028 = vpop.f32.mrb[0].mxu0
      %6029 = vmatprep.mubr.bf16.mxu0 0
      %6030 = vmatmul.mubr.bf16.gmra.mrb[0].mxu0 %v5910
      %v6031 = vpop.f32.mrb[0].mxu0
      %v6032 = vadd.f32 0.0, %v6031
      %v6033 = vpop.f32.mrb[0].mxu0
      %v6034 = vpop.f32.mrb[0].mxu0
      %v6035 = vadd.f32 0.0, %v6034
      %v6036 = vpop.f32.mrb[0].mxu0
      %6037 = vmatprep.mubr.bf16.mxu0 0
      %6038 = vmatmul.mubr.bf16.gmra.mrb[0].mxu0 %v5912
      %v6039 = vpop.f32.mrb[0].mxu0
      %v6040 = vadd.f32 0.0, %v6039
      %v6041 = vpop.f32.mrb[0].mxu0
      %v6042 = vpop.f32.mrb[0].mxu0
      %v6043 = vadd.f32 0.0, %v6042
      %v6044 = vpop.f32.mrb[0].mxu0
      %6045 = vmatprep.mubr.bf16.mxu0 0
      %6046 = vmatmul.mubr.bf16.gmra.mrb[0].mxu0 %v5914
      %v6047 = vpop.f32.mrb[0].mxu0
      %v6048 = vadd.f32 0.0, %v6047
      %v6049 = vpop.f32.mrb[0].mxu0
      %v6050 = vpop.f32.mrb[0].mxu0
      %v6051 = vadd.f32 0.0, %v6050
      %v6052 = vpop.f32.mrb[0].mxu0
      %6053 = vmatprep.mubr.bf16.mxu0 0
      %6054 = vmatmul.mubr.bf16.gmra.mrb[0].mxu0 %v5916
      %v6055 = vpop.f32.mrb[0].mxu0
      %v6056 = vadd.f32 0.0, %v6055
      %v6057 = vpop.f32.mrb[0].mxu0
      %v6058 = vpop.f32.mrb[0].mxu0
      %v6059 = vadd.f32 0.0, %v6058
      %v6060 = vpop.f32.mrb[0].mxu0
      %6061 = vmatprep.mubr.bf16.mxu0 0
      %6062 = vmatmul.mubr.bf16.gmra.mrb[0].mxu0 %v5918
      %v6063 = vpop.f32.mrb[0].mxu0
      %v6064 = vadd.f32 0.0, %v6063
      %v6065 = vpop.f32.mrb[0].mxu0
      %v6066 = vpop.f32.mrb[0].mxu0
      %v6067 = vadd.f32 0.0, %v6066
      %v6068 = vpop.f32.mrb[0].mxu0
      %6069 = vmatprep.mubr.bf16.mxu0 0
      %6070 = vmatmul.mubr.bf16.gmra.mrb[0].mxu0 %v5920
      %v6071 = vpop.f32.mrb[0].mxu0
      %v6072 = vadd.f32 0.0, %v6071
      %v6073 = vpop.f32.mrb[0].mxu0
      %v6074 = vpop.f32.mrb[0].mxu0
      %v6075 = vadd.f32 0.0, %v6074
      %v6076 = vpop.f32.mrb[0].mxu0
      %6077 = vmatprep.mubr.bf16.mxu0 0
      %6078 = vmatmul.mubr.bf16.gmra.mrb[0].mxu0 %v5922
      %v6079 = vpop.f32.mrb[0].mxu0
      %v6080 = vadd.f32 0.0, %v6079
      %v6081 = vpop.f32.mrb[0].mxu0
      %v6082 = vpop.f32.mrb[0].mxu0
      %v6083 = vadd.f32 0.0, %v6082
      %v6084 = vpop.f32.mrb[0].mxu0
      %6085 = vmatprep.mubr.bf16.mxu0 0
      %6086 = vmatmul.mubr.bf16.gmra.mrb[0].mxu0 %v5924
      %v6087 = vpop.f32.mrb[0].mxu0
      %v6088 = vadd.f32 0.0, %v6087
      %v6089 = vpop.f32.mrb[0].mxu0
      %v6090 = vpop.f32.mrb[0].mxu0
      %v6091 = vadd.f32 0.0, %v6090
      %v6092 = vpop.f32.mrb[0].mxu0
      %6093 = vmatprep.mubr.bf16.mxu0 0
      %6094 = vmatmul.mubr.bf16.gmra.mrb[0].mxu0 %v5926
      %v6095 = vpop.f32.mrb[0].mxu0
      %v6096 = vadd.f32 0.0, %v6095
      %v6097 = vpop.f32.mrb[0].mxu0
      %v6098 = vpop.f32.mrb[0].mxu0
      %v6099 = vadd.f32 0.0, %v6098
      %v6100 = vpop.f32.mrb[0].mxu0
      %6101 = vmatprep.mubr.bf16.mxu0 0
      %6102 = vmatmul.mubr.bf16.gmra.mrb[0].mxu0 %v5928
      %v6103 = vpop.f32.mrb[0].mxu0
      %v6104 = vadd.f32 0.0, %v6103
      %v6105 = vpop.f32.mrb[0].mxu0
      %v6106 = vpop.f32.mrb[0].mxu0
      %v6107 = vadd.f32 0.0, %v6106
      %v6108 = vpop.f32.mrb[0].mxu0
      %6109 = vmatprep.mubr.bf16.mxu0 0
      %6110 = vmatmul.mubr.bf16.gmra.mrb[0].mxu0 %v5930
      %v6111 = vpop.f32.mrb[0].mxu0
      %v6112 = vadd.f32 0.0, %v6111
      %v6113 = vpop.f32.mrb[0].mxu0
      %v6114 = vpop.f32.mrb[0].mxu0
      %v6115 = vadd.f32 0.0, %v6114
      %v6116 = vpop.f32.mrb[0].mxu0
      %6117 = vmatprep.mubr.bf16.mxu0 0
      %6118 = vmatmul.mubr.bf16.gmra.mrb[0].mxu0 %v5932
      %v6119 = vpop.f32.mrb[0].mxu0
      %v6120 = vadd.f32 0.0, %v6119
      %v6121 = vpop.f32.mrb[0].mxu0
      %v6122 = vpop.f32.mrb[0].mxu0
      %v6123 = vadd.f32 0.0, %v6122
      %v6124 = vpop.f32.mrb[0].mxu0
      %6125 = vmatprep.mubr.bf16.mxu0 0
      %6126 = vmatmul.mubr.bf16.gmra.mrb[0].mxu0 %v5934
      %v6127 = vpop.f32.mrb[0].mxu0
      %v6128 = vpop.f32.mrb[0].mxu0
      %v6129 = vpop.f32.mrb[0].mxu0
      %v6130 = vpop.f32.mrb[0].mxu0
      %6131 = vmatprep.mubr.bf16.mxu0 0
      %6132 = vmatmul.mubr.bf16.gmra.mrb[0].mxu0 %v5936
      %v6133 = vpop.f32.mrb[0].mxu0
      %v6134 = vpop.f32.mrb[0].mxu0
      %v6135 = vpop.f32.mrb[0].mxu0
      %v6136 = vpop.f32.mrb[0].mxu0
      %6137 = vmatprep.mubr.bf16.mxu0 0
      %6138 = vmatmul.mubr.bf16.gmra.mrb[0].mxu0 %v5938
      %v6139 = vpop.f32.mrb[0].mxu0
      %v6140 = vpop.f32.mrb[0].mxu0
      %v6141 = vpop.f32.mrb[0].mxu0
      %v6142 = vpop.f32.mrb[0].mxu0
      %6143 = vmatprep.mubr.bf16.mxu0 0
      %6144 = vmatmul.mubr.bf16.gmra.mrb[0].mxu0 %v5940
      %v6145 = vpop.f32.mrb[0].mxu0
      %v6146 = vpop.f32.mrb[0].mxu0
      %v6147 = vpop.f32.mrb[0].mxu0
      %v6148 = vpop.f32.mrb[0].mxu0
      %6149 = vmatprep.mubr.bf16.mxu0 0
      %6150 = vmatmul.mubr.bf16.gmra.mrb[0].mxu0 %v5942
      %v6151 = vpop.f32.mrb[0].mxu0
      %v6152 = vpop.f32.mrb[0].mxu0
      %v6153 = vpop.f32.mrb[0].mxu0
      %v6154 = vpop.f32.mrb[0].mxu0
      %6155 = vdwg.mxu0
      %s6156 = scalar_lea.vmem %s7, 8
      %v6157 = vld [vmem:[%s6156] sm:$0xf]
      %v6158 = vld [vmem:[%s6156 + $0x4] sm:$0x3]
      %s6159 = scalar_lea.vmem %s7, 16
      %v6160 = vld [vmem:[%s6159] sm:$0xf]
      %v6161 = vld [vmem:[%s6159 + $0x4] sm:$0x3]
      %v6164 = vunpack.c.l.b16 %v6160
      %v6165 = vunpack.c.l.b16 %v6161
      %v6166 = vpack.c.b16 %v6165, %v6164
      %v6168 = vsel %vm4136, %v6166, 0
      %6170 = vmatprep.subr.bf16.mxu0 0
      %6171 = vmatpush1.bf16.msra.mxu0 %v6168
      %6172 = vmatprep.subr.bf16.mxu0 0
      %6173 = vmatpush1.bf16.msra.mxu0 0
      %6174 = vmatprep.subr.bf16.mxu0 0
      %6175 = vmatpush1.bf16.msra.mxu0 0
      %6176 = vmatprep.subr.bf16.mxu0 0
      %6177 = vmatpush1.bf16.msra.mxu0 0
      %6178 = vmatprep.subr.bf16.mxu0 0
      %6179 = vmatpush1.bf16.msra.mxu0 0
      %6180 = vmatprep.subr.bf16.mxu0 0
      %6181 = vmatpush1.bf16.msra.mxu0 0
      %6182 = vmatprep.subr.bf16.mxu0 0
      %6183 = vmatpush1.bf16.msra.mxu0 0
      %6184 = vmatprep.subr.bf16.mxu0 0
      %6185 = vmatpush1.bf16.msra.mxu0 0
      %6186 = vmatprep.subr.bf16.mxu0 0
      %6187 = vmatpush1.bf16.msra.mxu0 0
      %6188 = vmatprep.subr.bf16.mxu0 0
      %6189 = vmatpush1.bf16.msra.mxu0 0
      %6190 = vmatprep.subr.bf16.mxu0 0
      %6191 = vmatpush1.bf16.msra.mxu0 0
      %6192 = vmatprep.subr.bf16.mxu0 0
      %6193 = vmatpush1.bf16.msra.mxu0 0
      %6194 = vmatprep.subr.bf16.mxu0 0
      %6195 = vmatpush1.bf16.msra.mxu0 0
      %6196 = vmatprep.subr.bf16.mxu0 0
      %6197 = vmatpush1.bf16.msra.mxu0 0
      %6198 = vmatprep.subr.bf16.mxu0 0
      %6199 = vmatpush1.bf16.msra.mxu0 0
      %6200 = vmatprep.subr.bf16.mxu0 0
      %6201 = vmatpush1.bf16.msra.mxu0 0
      %6202 = vmatprep.mubr.bf16.mxu0 0
      %6203 = vmatmul.mubr.bf16.gmra.mrb[0].mxu0 %v5896
      %v6204 = vpop.f32.mrb[0].mxu0
      %v6205 = vpop.f32.mrb[0].mxu0
      %v6206 = vpop.f32.mrb[0].mxu0
      %v6207 = vpop.f32.mrb[0].mxu0
      %6208 = vmatprep.mubr.bf16.mxu0 0
      %6209 = vmatmul.mubr.bf16.gmra.mrb[0].mxu0 %v5898
      %v6210 = vpop.f32.mrb[0].mxu0
      %v6211 = vpop.f32.mrb[0].mxu0
      %v6212 = vpop.f32.mrb[0].mxu0
      %v6213 = vpop.f32.mrb[0].mxu0
      %6214 = vmatprep.mubr.bf16.mxu0 0
      %6215 = vmatmul.mubr.bf16.gmra.mrb[0].mxu0 %v5900
      %v6216 = vpop.f32.mrb[0].mxu0
      %v6217 = vpop.f32.mrb[0].mxu0
      %v6218 = vpop.f32.mrb[0].mxu0
      %v6219 = vpop.f32.mrb[0].mxu0
      %6220 = vmatprep.mubr.bf16.mxu0 0
      %6221 = vmatmul.mubr.bf16.gmra.mrb[0].mxu0 %v5902
      %v6222 = vpop.f32.mrb[0].mxu0
      %v6223 = vpop.f32.mrb[0].mxu0
      %v6224 = vpop.f32.mrb[0].mxu0
      %v6225 = vpop.f32.mrb[0].mxu0
      %6226 = vmatprep.mubr.bf16.mxu0 0
      %6227 = vmatmul.mubr.bf16.gmra.mrb[0].mxu0 %v5904
      %v6228 = vpop.f32.mrb[0].mxu0
      %v6229 = vpop.f32.mrb[0].mxu0
      %v6230 = vpop.f32.mrb[0].mxu0
      %v6231 = vpop.f32.mrb[0].mxu0
      %6232 = vmatprep.mubr.bf16.mxu0 0
      %6233 = vmatmul.mubr.bf16.gmra.mrb[0].mxu0 %v5906
      %v6234 = vpop.f32.mrb[0].mxu0
      %v6235 = vadd.f32 0.0, %v6234
      %v6236 = vpop.f32.mrb[0].mxu0
      %v6237 = vpop.f32.mrb[0].mxu0
      %v6238 = vadd.f32 0.0, %v6237
      %v6239 = vpop.f32.mrb[0].mxu0
      %6240 = vmatprep.mubr.bf16.mxu0 0
      %6241 = vmatmul.mubr.bf16.gmra.mrb[0].mxu0 %v5908
      %v6242 = vpop.f32.mrb[0].mxu0
      %v6243 = vadd.f32 0.0, %v6242
      %v6244 = vpop.f32.mrb[0].mxu0
      %v6245 = vpop.f32.mrb[0].mxu0
      %v6246 = vadd.f32 0.0, %v6245
      %v6247 = vpop.f32.mrb[0].mxu0
      %6248 = vmatprep.mubr.bf16.mxu0 0
      %6249 = vmatmul.mubr.bf16.gmra.mrb[0].mxu0 %v5910
      %v6250 = vpop.f32.mrb[0].mxu0
      %v6251 = vadd.f32 0.0, %v6250
      %v6252 = vpop.f32.mrb[0].mxu0
      %v6253 = vpop.f32.mrb[0].mxu0
      %v6254 = vadd.f32 0.0, %v6253
      %v6255 = vpop.f32.mrb[0].mxu0
      %6256 = vmatprep.mubr.bf16.mxu0 0
      %6257 = vmatmul.mubr.bf16.gmra.mrb[0].mxu0 %v5912
      %v6258 = vpop.f32.mrb[0].mxu0
      %v6259 = vadd.f32 0.0, %v6258
      %v6260 = vpop.f32.mrb[0].mxu0
      %v6261 = vpop.f32.mrb[0].mxu0
      %v6262 = vadd.f32 0.0, %v6261
      %v6263 = vpop.f32.mrb[0].mxu0
      %6264 = vmatprep.mubr.bf16.mxu0 0
      %6265 = vmatmul.mubr.bf16.gmra.mrb[0].mxu0 %v5914
      %v6266 = vpop.f32.mrb[0].mxu0
      %v6267 = vadd.f32 0.0, %v6266
      %v6268 = vpop.f32.mrb[0].mxu0
      %v6269 = vpop.f32.mrb[0].mxu0
      %v6270 = vadd.f32 0.0, %v6269
      %v6271 = vpop.f32.mrb[0].mxu0
      %6272 = vmatprep.mubr.bf16.mxu0 0
      %6273 = vmatmul.mubr.bf16.gmra.mrb[0].mxu0 %v5916
      %v6274 = vpop.f32.mrb[0].mxu0
      %v6275 = vadd.f32 0.0, %v6274
      %v6276 = vpop.f32.mrb[0].mxu0
      %v6277 = vpop.f32.mrb[0].mxu0
      %v6278 = vadd.f32 0.0, %v6277
      %v6279 = vpop.f32.mrb[0].mxu0
      %6280 = vmatprep.mubr.bf16.mxu0 0
      %6281 = vmatmul.mubr.bf16.gmra.mrb[0].mxu0 %v5918
      %v6282 = vpop.f32.mrb[0].mxu0
      %v6283 = vadd.f32 0.0, %v6282
      %v6284 = vpop.f32.mrb[0].mxu0
      %v6285 = vpop.f32.mrb[0].mxu0
      %v6286 = vadd.f32 0.0, %v6285
      %v6287 = vpop.f32.mrb[0].mxu0
      %6288 = vmatprep.mubr.bf16.mxu0 0
      %6289 = vmatmul.mubr.bf16.gmra.mrb[0].mxu0 %v5920
      %v6290 = vpop.f32.mrb[0].mxu0
      %v6291 = vadd.f32 0.0, %v6290
      %v6292 = vpop.f32.mrb[0].mxu0
      %v6293 = vpop.f32.mrb[0].mxu0
      %v6294 = vadd.f32 0.0, %v6293
      %v6295 = vpop.f32.mrb[0].mxu0
      %6296 = vmatprep.mubr.bf16.mxu0 0
      %6297 = vmatmul.mubr.bf16.gmra.mrb[0].mxu0 %v5922
      %v6298 = vpop.f32.mrb[0].mxu0
      %v6299 = vadd.f32 0.0, %v6298
      %v6300 = vpop.f32.mrb[0].mxu0
      %v6301 = vpop.f32.mrb[0].mxu0
      %v6302 = vadd.f32 0.0, %v6301
      %v6303 = vpop.f32.mrb[0].mxu0
      %6304 = vmatprep.mubr.bf16.mxu0 0
      %6305 = vmatmul.mubr.bf16.gmra.mrb[0].mxu0 %v5924
      %v6306 = vpop.f32.mrb[0].mxu0
      %v6307 = vadd.f32 0.0, %v6306
      %v6308 = vpop.f32.mrb[0].mxu0
      %v6309 = vpop.f32.mrb[0].mxu0
      %v6310 = vadd.f32 0.0, %v6309
      %v6311 = vpop.f32.mrb[0].mxu0
      %6312 = vmatprep.mubr.bf16.mxu0 0
      %6313 = vmatmul.mubr.bf16.gmra.mrb[0].mxu0 %v5926
      %v6314 = vpop.f32.mrb[0].mxu0
      %v6315 = vadd.f32 0.0, %v6314
      %v6316 = vpop.f32.mrb[0].mxu0
      %v6317 = vpop.f32.mrb[0].mxu0
      %v6318 = vadd.f32 0.0, %v6317
      %v6319 = vpop.f32.mrb[0].mxu0
      %6320 = vmatprep.mubr.bf16.mxu0 0
      %6321 = vmatmul.mubr.bf16.gmra.mrb[0].mxu0 %v5928
      %v6322 = vpop.f32.mrb[0].mxu0
      %v6323 = vadd.f32 0.0, %v6322
      %v6324 = vpop.f32.mrb[0].mxu0
      %v6325 = vpop.f32.mrb[0].mxu0
      %v6326 = vadd.f32 0.0, %v6325
      %v6327 = vpop.f32.mrb[0].mxu0
      %6328 = vmatprep.mubr.bf16.mxu0 0
      %6329 = vmatmul.mubr.bf16.gmra.mrb[0].mxu0 %v5930
      %v6330 = vpop.f32.mrb[0].mxu0
      %v6331 = vadd.f32 0.0, %v6330
      %v6332 = vpop.f32.mrb[0].mxu0
      %v6333 = vpop.f32.mrb[0].mxu0
      %v6334 = vadd.f32 0.0, %v6333
      %v6335 = vpop.f32.mrb[0].mxu0
      %6336 = vmatprep.mubr.bf16.mxu0 0
      %6337 = vmatmul.mubr.bf16.gmra.mrb[0].mxu0 %v5932
      %v6338 = vpop.f32.mrb[0].mxu0
      %v6339 = vadd.f32 0.0, %v6338
      %v6340 = vpop.f32.mrb[0].mxu0
      %v6341 = vpop.f32.mrb[0].mxu0
      %v6342 = vadd.f32 0.0, %v6341
      %v6343 = vpop.f32.mrb[0].mxu0
      %6344 = vmatprep.mubr.bf16.mxu0 0
      %6345 = vmatmul.mubr.bf16.gmra.mrb[0].mxu0 %v5934
      %v6346 = vpop.f32.mrb[0].mxu0
      %v6347 = vadd.f32 0.0, %v6346
      %v6348 = vpop.f32.mrb[0].mxu0
      %v6349 = vpop.f32.mrb[0].mxu0
      %v6350 = vadd.f32 0.0, %v6349
      %v6351 = vpop.f32.mrb[0].mxu0
      %6352 = vmatprep.mubr.bf16.mxu0 0
      %6353 = vmatmul.mubr.bf16.gmra.mrb[0].mxu0 %v5936
      %v6354 = vpop.f32.mrb[0].mxu0
      %v6355 = vadd.f32 0.0, %v6354
      %v6356 = vpop.f32.mrb[0].mxu0
      %v6357 = vpop.f32.mrb[0].mxu0
      %v6358 = vadd.f32 0.0, %v6357
      %v6359 = vpop.f32.mrb[0].mxu0
      %6360 = vmatprep.mubr.bf16.mxu0 0
      %6361 = vmatmul.mubr.bf16.gmra.mrb[0].mxu0 %v5938
      %v6362 = vpop.f32.mrb[0].mxu0
      %v6363 = vpop.f32.mrb[0].mxu0
      %v6364 = vpop.f32.mrb[0].mxu0
      %v6365 = vpop.f32.mrb[0].mxu0
      %6366 = vmatprep.mubr.bf16.mxu0 0
      %6367 = vmatmul.mubr.bf16.gmra.mrb[0].mxu0 %v5940
      %v6368 = vpop.f32.mrb[0].mxu0
      %v6369 = vpop.f32.mrb[0].mxu0
      %v6370 = vpop.f32.mrb[0].mxu0
      %v6371 = vpop.f32.mrb[0].mxu0
      %6372 = vmatprep.mubr.bf16.mxu0 0
      %6373 = vmatmul.mubr.bf16.gmra.mrb[0].mxu0 %v5942
      %v6374 = vpop.f32.mrb[0].mxu0
      %v6375 = vpop.f32.mrb[0].mxu0
      %v6376 = vpop.f32.mrb[0].mxu0
      %v6377 = vpop.f32.mrb[0].mxu0
      %6378 = vdwg.mxu0
      %v6381 = vunpack.c.l.b16 %v6157
      %v6382 = vunpack.c.l.b16 %v6158
      %v6383 = vpack.c.b16 %v6382, %v6381
      %v6385 = vsel %vm4136, %v6383, 0
      %6387 = vmatprep.subr.bf16.mxu0 0
      %6388 = vmatpush1.bf16.msra.mxu0 %v6385
      %6389 = vmatprep.subr.bf16.mxu0 0
      %6390 = vmatpush1.bf16.msra.mxu0 0
      %6391 = vmatprep.subr.bf16.mxu0 0
      %6392 = vmatpush1.bf16.msra.mxu0 0
      %6393 = vmatprep.subr.bf16.mxu0 0
      %6394 = vmatpush1.bf16.msra.mxu0 0
      %6395 = vmatprep.subr.bf16.mxu0 0
      %6396 = vmatpush1.bf16.msra.mxu0 0
      %6397 = vmatprep.subr.bf16.mxu0 0
      %6398 = vmatpush1.bf16.msra.mxu0 0
      %6399 = vmatprep.subr.bf16.mxu0 0
      %6400 = vmatpush1.bf16.msra.mxu0 0
      %6401 = vmatprep.subr.bf16.mxu0 0
      %6402 = vmatpush1.bf16.msra.mxu0 0
      %6403 = vmatprep.subr.bf16.mxu0 0
      %6404 = vmatpush1.bf16.msra.mxu0 0
      %6405 = vmatprep.subr.bf16.mxu0 0
      %6406 = vmatpush1.bf16.msra.mxu0 0
      %6407 = vmatprep.subr.bf16.mxu0 0
      %6408 = vmatpush1.bf16.msra.mxu0 0
      %6409 = vmatprep.subr.bf16.mxu0 0
      %6410 = vmatpush1.bf16.msra.mxu0 0
      %6411 = vmatprep.subr.bf16.mxu0 0
      %6412 = vmatpush1.bf16.msra.mxu0 0
      %6413 = vmatprep.subr.bf16.mxu0 0
      %6414 = vmatpush1.bf16.msra.mxu0 0
      %6415 = vmatprep.subr.bf16.mxu0 0
      %6416 = vmatpush1.bf16.msra.mxu0 0
      %6417 = vmatprep.subr.bf16.mxu0 0
      %6418 = vmatpush1.bf16.msra.mxu0 0
      %6419 = vmatprep.mubr.bf16.mxu0 0
      %6420 = vmatmul.mubr.bf16.gmra.mrb[0].mxu0 %v5896
      %v6421 = vpop.f32.mrb[0].mxu0
      %v6422 = vpop.f32.mrb[0].mxu0
      %v6423 = vpop.f32.mrb[0].mxu0
      %v6424 = vpop.f32.mrb[0].mxu0
      %6425 = vmatprep.mubr.bf16.mxu0 0
      %6426 = vmatmul.mubr.bf16.gmra.mrb[0].mxu0 %v5898
      %v6427 = vpop.f32.mrb[0].mxu0
      %v6428 = vpop.f32.mrb[0].mxu0
      %v6429 = vpop.f32.mrb[0].mxu0
      %v6430 = vpop.f32.mrb[0].mxu0
      %6431 = vmatprep.mubr.bf16.mxu0 0
      %6432 = vmatmul.mubr.bf16.gmra.mrb[0].mxu0 %v5900
      %v6433 = vpop.f32.mrb[0].mxu0
      %v6434 = vpop.f32.mrb[0].mxu0
      %v6435 = vpop.f32.mrb[0].mxu0
      %v6436 = vpop.f32.mrb[0].mxu0
      %6437 = vmatprep.mubr.bf16.mxu0 0
      %6438 = vmatmul.mubr.bf16.gmra.mrb[0].mxu0 %v5902
      %v6439 = vpop.f32.mrb[0].mxu0
      %v6440 = vpop.f32.mrb[0].mxu0
      %v6441 = vpop.f32.mrb[0].mxu0
      %v6442 = vpop.f32.mrb[0].mxu0
      %6443 = vmatprep.mubr.bf16.mxu0 0
      %6444 = vmatmul.mubr.bf16.gmra.mrb[0].mxu0 %v5904
      %v6445 = vpop.f32.mrb[0].mxu0
      %v6446 = vadd.f32 %v6000, %v6445
      %v6447 = vpop.f32.mrb[0].mxu0
      %v6448 = vpop.f32.mrb[0].mxu0
      %v6449 = vadd.f32 %v6003, %v6448
      %v6450 = vpop.f32.mrb[0].mxu0
      %6451 = vmatprep.mubr.bf16.mxu0 0
      %6452 = vmatmul.mubr.bf16.gmra.mrb[0].mxu0 %v5906
      %v6453 = vpop.f32.mrb[0].mxu0
      %v6454 = vadd.f32 %v6008, %v6453
      %v6455 = vpop.f32.mrb[0].mxu0
      %v6456 = vpop.f32.mrb[0].mxu0
      %v6457 = vadd.f32 %v6011, %v6456
      %v6458 = vpop.f32.mrb[0].mxu0
      %6459 = vmatprep.mubr.bf16.mxu0 0
      %6460 = vmatmul.mubr.bf16.gmra.mrb[0].mxu0 %v5908
      %v6461 = vpop.f32.mrb[0].mxu0
      %v6462 = vadd.f32 %v6016, %v6461
      %v6463 = vpop.f32.mrb[0].mxu0
      %v6464 = vpop.f32.mrb[0].mxu0
      %v6465 = vadd.f32 %v6019, %v6464
      %v6466 = vpop.f32.mrb[0].mxu0
      %6467 = vmatprep.mubr.bf16.mxu0 0
      %6468 = vmatmul.mubr.bf16.gmra.mrb[0].mxu0 %v5910
      %v6469 = vpop.f32.mrb[0].mxu0
      %v6470 = vadd.f32 %v6024, %v6469
      %v6471 = vpop.f32.mrb[0].mxu0
      %v6472 = vpop.f32.mrb[0].mxu0
      %v6473 = vadd.f32 %v6027, %v6472
      %v6474 = vpop.f32.mrb[0].mxu0
      %6475 = vmatprep.mubr.bf16.mxu0 0
      %6476 = vmatmul.mubr.bf16.gmra.mrb[0].mxu0 %v5912
      %v6477 = vpop.f32.mrb[0].mxu0
      %v6478 = vadd.f32 %v6032, %v6477
      %v6479 = vpop.f32.mrb[0].mxu0
      %v6480 = vpop.f32.mrb[0].mxu0
      %v6481 = vadd.f32 %v6035, %v6480
      %v6482 = vpop.f32.mrb[0].mxu0
      %6483 = vmatprep.mubr.bf16.mxu0 0
      %6484 = vmatmul.mubr.bf16.gmra.mrb[0].mxu0 %v5914
      %v6485 = vpop.f32.mrb[0].mxu0
      %v6486 = vadd.f32 %v6040, %v6485
      %v6487 = vpop.f32.mrb[0].mxu0
      %v6488 = vpop.f32.mrb[0].mxu0
      %v6489 = vadd.f32 %v6043, %v6488
      %v6490 = vpop.f32.mrb[0].mxu0
      %6491 = vmatprep.mubr.bf16.mxu0 0
      %6492 = vmatmul.mubr.bf16.gmra.mrb[0].mxu0 %v5916
      %v6493 = vpop.f32.mrb[0].mxu0
      %v6494 = vadd.f32 %v6048, %v6493
      %v6495 = vpop.f32.mrb[0].mxu0
      %v6496 = vpop.f32.mrb[0].mxu0
      %v6497 = vadd.f32 %v6051, %v6496
      %v6498 = vpop.f32.mrb[0].mxu0
      %6499 = vmatprep.mubr.bf16.mxu0 0
      %6500 = vmatmul.mubr.bf16.gmra.mrb[0].mxu0 %v5918
      %v6501 = vpop.f32.mrb[0].mxu0
      %v6502 = vadd.f32 %v6056, %v6501
      %v6503 = vpop.f32.mrb[0].mxu0
      %v6504 = vpop.f32.mrb[0].mxu0
      %v6505 = vadd.f32 %v6059, %v6504
      %v6506 = vpop.f32.mrb[0].mxu0
      %6507 = vmatprep.mubr.bf16.mxu0 0
      %6508 = vmatmul.mubr.bf16.gmra.mrb[0].mxu0 %v5920
      %v6509 = vpop.f32.mrb[0].mxu0
      %v6510 = vadd.f32 %v6064, %v6509
      %v6511 = vpop.f32.mrb[0].mxu0
      %v6512 = vpop.f32.mrb[0].mxu0
      %v6513 = vadd.f32 %v6067, %v6512
      %v6514 = vpop.f32.mrb[0].mxu0
      %6515 = vmatprep.mubr.bf16.mxu0 0
      %6516 = vmatmul.mubr.bf16.gmra.mrb[0].mxu0 %v5922
      %v6517 = vpop.f32.mrb[0].mxu0
      %v6518 = vadd.f32 %v6072, %v6517
      %v6519 = vpop.f32.mrb[0].mxu0
      %v6520 = vpop.f32.mrb[0].mxu0
      %v6521 = vadd.f32 %v6075, %v6520
      %v6522 = vpop.f32.mrb[0].mxu0
      %6523 = vmatprep.mubr.bf16.mxu0 0
      %6524 = vmatmul.mubr.bf16.gmra.mrb[0].mxu0 %v5924
      %v6525 = vpop.f32.mrb[0].mxu0
      %v6526 = vadd.f32 %v6080, %v6525
      %v6527 = vpop.f32.mrb[0].mxu0
      %v6528 = vpop.f32.mrb[0].mxu0
      %v6529 = vadd.f32 %v6083, %v6528
      %v6530 = vpop.f32.mrb[0].mxu0
      %6531 = vmatprep.mubr.bf16.mxu0 0
      %6532 = vmatmul.mubr.bf16.gmra.mrb[0].mxu0 %v5926
      %v6533 = vpop.f32.mrb[0].mxu0
      %v6534 = vadd.f32 %v6088, %v6533
      %v6535 = vpop.f32.mrb[0].mxu0
      %v6536 = vpop.f32.mrb[0].mxu0
      %v6537 = vadd.f32 %v6091, %v6536
      %v6538 = vpop.f32.mrb[0].mxu0
      %6539 = vmatprep.mubr.bf16.mxu0 0
      %6540 = vmatmul.mubr.bf16.gmra.mrb[0].mxu0 %v5928
      %v6541 = vpop.f32.mrb[0].mxu0
      %v6542 = vadd.f32 %v6096, %v6541
      %v6543 = vpop.f32.mrb[0].mxu0
      %v6544 = vpop.f32.mrb[0].mxu0
      %v6545 = vadd.f32 %v6099, %v6544
      %v6546 = vpop.f32.mrb[0].mxu0
      %6547 = vmatprep.mubr.bf16.mxu0 0
      %6548 = vmatmul.mubr.bf16.gmra.mrb[0].mxu0 %v5930
      %v6549 = vpop.f32.mrb[0].mxu0
      %v6550 = vadd.f32 %v6104, %v6549
      %v6551 = vpop.f32.mrb[0].mxu0
      %v6552 = vpop.f32.mrb[0].mxu0
      %v6553 = vadd.f32 %v6107, %v6552
      %v6554 = vpop.f32.mrb[0].mxu0
      %6555 = vmatprep.mubr.bf16.mxu0 0
      %6556 = vmatmul.mubr.bf16.gmra.mrb[0].mxu0 %v5932
      %v6557 = vpop.f32.mrb[0].mxu0
      %v6558 = vadd.f32 %v6112, %v6557
      %v6559 = vpop.f32.mrb[0].mxu0
      %v6560 = vpop.f32.mrb[0].mxu0
      %v6561 = vadd.f32 %v6115, %v6560
      %v6562 = vpop.f32.mrb[0].mxu0
      %6563 = vmatprep.mubr.bf16.mxu0 0
      %6564 = vmatmul.mubr.bf16.gmra.mrb[0].mxu0 %v5934
      %v6565 = vpop.f32.mrb[0].mxu0
      %v6566 = vadd.f32 %v6120, %v6565
      %v6567 = vpop.f32.mrb[0].mxu0
      %v6568 = vpop.f32.mrb[0].mxu0
      %v6569 = vadd.f32 %v6123, %v6568
      %v6570 = vpop.f32.mrb[0].mxu0
      %6571 = vmatprep.mubr.bf16.mxu0 0
      %6572 = vmatmul.mubr.bf16.gmra.mrb[0].mxu0 %v5936
      %v6573 = vpop.f32.mrb[0].mxu0
      %v6574 = vpop.f32.mrb[0].mxu0
      %v6575 = vpop.f32.mrb[0].mxu0
      %v6576 = vpop.f32.mrb[0].mxu0
      %6577 = vmatprep.mubr.bf16.mxu0 0
      %6578 = vmatmul.mubr.bf16.gmra.mrb[0].mxu0 %v5938
      %v6579 = vpop.f32.mrb[0].mxu0
      %v6580 = vpop.f32.mrb[0].mxu0
      %v6581 = vpop.f32.mrb[0].mxu0
      %v6582 = vpop.f32.mrb[0].mxu0
      %6583 = vmatprep.mubr.bf16.mxu0 0
      %6584 = vmatmul.mubr.bf16.gmra.mrb[0].mxu0 %v5940
      %v6585 = vpop.f32.mrb[0].mxu0
      %v6586 = vpop.f32.mrb[0].mxu0
      %v6587 = vpop.f32.mrb[0].mxu0
      %v6588 = vpop.f32.mrb[0].mxu0
      %6589 = vmatprep.mubr.bf16.mxu0 0
      %6590 = vmatmul.mubr.bf16.gmra.mrb[0].mxu0 %v5942
      %v6591 = vpop.f32.mrb[0].mxu0
      %v6592 = vpop.f32.mrb[0].mxu0
      %v6593 = vpop.f32.mrb[0].mxu0
      %v6594 = vpop.f32.mrb[0].mxu0
      %6595 = vdwg.mxu0
      %v6596 = vadd.f32 %v6446, %v6235
      %v6597 = vadd.f32 %v6449, %v6238
      %v6598 = vadd.f32 %v6454, %v6243
      %v6599 = vadd.f32 %v6457, %v6246
      %v6600 = vadd.f32 %v6462, %v6251
      %v6601 = vadd.f32 %v6465, %v6254
      %v6602 = vadd.f32 %v6470, %v6259
      %v6603 = vadd.f32 %v6473, %v6262
      %v6604 = vadd.f32 %v6478, %v6267
      %v6605 = vadd.f32 %v6481, %v6270
      %v6606 = vadd.f32 %v6486, %v6275
      %v6607 = vadd.f32 %v6489, %v6278
      %v6608 = vadd.f32 %v6494, %v6283
      %v6609 = vadd.f32 %v6497, %v6286
      %v6610 = vadd.f32 %v6502, %v6291
      %v6611 = vadd.f32 %v6505, %v6294
      %v6612 = vadd.f32 %v6510, %v6299
      %v6613 = vadd.f32 %v6513, %v6302
      %v6614 = vadd.f32 %v6518, %v6307
      %v6615 = vadd.f32 %v6521, %v6310
      %v6616 = vadd.f32 %v6526, %v6315
      %v6617 = vadd.f32 %v6529, %v6318
      %v6618 = vadd.f32 %v6534, %v6323
      %v6619 = vadd.f32 %v6537, %v6326
      %v6620 = vadd.f32 %v6542, %v6331
      %v6621 = vadd.f32 %v6545, %v6334
      %v6622 = vadd.f32 %v6550, %v6339
      %v6623 = vadd.f32 %v6553, %v6342
      %v6624 = vadd.f32 %v6558, %v6347
      %v6625 = vadd.f32 %v6561, %v6350
      %v6626 = vadd.f32 %v6566, %v6355
      %v6627 = vadd.f32 %v6569, %v6358
      %v6628 = vld [vmem:[%s8] sm:$0x1]
      %v6630 = vlaneseq
      %v6631 = vshrl.u32 %v6630, 7
      %v6632 = vsub.s32 0, %v6631
      %v6633 = vrot.slane %v6628, %v6632
      %v6635 = vadd.f32 %v6596, %v6633
      %v6636 = vadd.f32 %v6597, %v6633
      %v6637 = vadd.f32 %v6598, %v6633
      %v6638 = vadd.f32 %v6599, %v6633
      %v6639 = vadd.f32 %v6600, %v6633
      %v6640 = vadd.f32 %v6601, %v6633
      %v6641 = vadd.f32 %v6602, %v6633
      %v6642 = vadd.f32 %v6603, %v6633
      %v6643 = vadd.f32 %v6604, %v6633
      %v6644 = vadd.f32 %v6605, %v6633
      %v6645 = vadd.f32 %v6606, %v6633
      %v6646 = vadd.f32 %v6607, %v6633
      %v6647 = vadd.f32 %v6608, %v6633
      %v6648 = vadd.f32 %v6609, %v6633
      %v6649 = vadd.f32 %v6610, %v6633
      %v6650 = vadd.f32 %v6611, %v6633
      %v6651 = vadd.f32 %v6612, %v6633
      %v6652 = vadd.f32 %v6613, %v6633
      %v6653 = vadd.f32 %v6614, %v6633
      %v6654 = vadd.f32 %v6615, %v6633
      %v6655 = vadd.f32 %v6616, %v6633
      %v6656 = vadd.f32 %v6617, %v6633
      %v6657 = vadd.f32 %v6618, %v6633
      %v6658 = vadd.f32 %v6619, %v6633
      %v6659 = vadd.f32 %v6620, %v6633
      %v6660 = vadd.f32 %v6621, %v6633
      %v6661 = vadd.f32 %v6622, %v6633
      %v6662 = vadd.f32 %v6623, %v6633
      %v6663 = vadd.f32 %v6624, %v6633
      %v6664 = vadd.f32 %v6625, %v6633
      %v6665 = vadd.f32 %v6626, %v6633
      %v6666 = vadd.f32 %v6627, %v6633
      %6699 = vrot.lane.b32.xlu0 %v4900, 8
      %v6700 = vpop.permute.xlu0 %6699
      %6701 = vrot.lane.b32.xlu0 %v4901, 8
      %v6702 = vpop.permute.xlu0 %6701
      %6703 = vrot.lane.b32.xlu0 %v4902, 8
      %v6704 = vpop.permute.xlu0 %6703
      %6705 = vrot.lane.b32.xlu0 %v4903, 8
      %v6706 = vpop.permute.xlu0 %6705
      %6707 = vrot.lane.b32.xlu0 %v4904, 8
      %v6708 = vpop.permute.xlu0 %6707
      %6709 = vrot.lane.b32.xlu0 %v4905, 8
      %v6710 = vpop.permute.xlu0 %6709
      %6711 = vrot.lane.b32.xlu0 %v4906, 8
      %v6712 = vpop.permute.xlu0 %6711
      %6713 = vrot.lane.b32.xlu0 %v4907, 8
      %v6714 = vpop.permute.xlu0 %6713
      %6715 = vrot.lane.b32.xlu0 %v4908, 8
      %v6716 = vpop.permute.xlu0 %6715
      %6717 = vrot.lane.b32.xlu0 %v4909, 8
      %v6718 = vpop.permute.xlu0 %6717
      %6719 = vrot.lane.b32.xlu0 %v4910, 8
      %v6720 = vpop.permute.xlu0 %6719
      %6721 = vrot.lane.b32.xlu0 %v4911, 8
      %v6722 = vpop.permute.xlu0 %6721
      %6723 = vrot.lane.b32.xlu0 %v4912, 8
      %v6724 = vpop.permute.xlu0 %6723
      %6725 = vrot.lane.b32.xlu0 %v4913, 8
      %v6726 = vpop.permute.xlu0 %6725
      %6727 = vrot.lane.b32.xlu0 %v4914, 8
      %v6728 = vpop.permute.xlu0 %6727
      %6729 = vrot.lane.b32.xlu0 %v4915, 8
      %v6730 = vpop.permute.xlu0 %6729
      %6731 = vrot.lane.b32.xlu0 %v4916, 8
      %v6732 = vpop.permute.xlu0 %6731
      %6733 = vrot.lane.b32.xlu0 %v4917, 8
      %v6734 = vpop.permute.xlu0 %6733
      %6735 = vrot.lane.b32.xlu0 %v4918, 8
      %v6736 = vpop.permute.xlu0 %6735
      %6737 = vrot.lane.b32.xlu0 %v4919, 8
      %v6738 = vpop.permute.xlu0 %6737
      %6739 = vrot.lane.b32.xlu0 %v4920, 8
      %v6740 = vpop.permute.xlu0 %6739
      %6741 = vrot.lane.b32.xlu0 %v4921, 8
      %v6742 = vpop.permute.xlu0 %6741
      %6743 = vrot.lane.b32.xlu0 %v4922, 8
      %v6744 = vpop.permute.xlu0 %6743
      %6745 = vrot.lane.b32.xlu0 %v4923, 8
      %v6746 = vpop.permute.xlu0 %6745
      %6747 = vrot.lane.b32.xlu0 %v4924, 8
      %v6748 = vpop.permute.xlu0 %6747
      %6749 = vrot.lane.b32.xlu0 %v4925, 8
      %v6750 = vpop.permute.xlu0 %6749
      %6751 = vrot.lane.b32.xlu0 %v4926, 8
      %v6752 = vpop.permute.xlu0 %6751
      %6753 = vrot.lane.b32.xlu0 %v4927, 8
      %v6754 = vpop.permute.xlu0 %6753
      %6755 = vrot.lane.b32.xlu0 %v4928, 8
      %v6756 = vpop.permute.xlu0 %6755
      %6757 = vrot.lane.b32.xlu0 %v4929, 8
      %v6758 = vpop.permute.xlu0 %6757
      %6759 = vrot.lane.b32.xlu0 %v4930, 8
      %v6760 = vpop.permute.xlu0 %6759
      %6761 = vrot.lane.b32.xlu0 %v4931, 8
      %v6762 = vpop.permute.xlu0 %6761
      %6827 = vrot.lane.b32.xlu0 %v6635, 12
      %v6828 = vpop.permute.xlu0 %6827
      %6829 = vrot.lane.b32.xlu0 %v6636, 12
      %v6830 = vpop.permute.xlu0 %6829
      %6831 = vrot.lane.b32.xlu0 %v6637, 12
      %v6832 = vpop.permute.xlu0 %6831
      %6833 = vrot.lane.b32.xlu0 %v6638, 12
      %v6834 = vpop.permute.xlu0 %6833
      %6835 = vrot.lane.b32.xlu0 %v6639, 12
      %v6836 = vpop.permute.xlu0 %6835
      %6837 = vrot.lane.b32.xlu0 %v6640, 12
      %v6838 = vpop.permute.xlu0 %6837
      %6839 = vrot.lane.b32.xlu0 %v6641, 12
      %v6840 = vpop.permute.xlu0 %6839
      %6841 = vrot.lane.b32.xlu0 %v6642, 12
      %v6842 = vpop.permute.xlu0 %6841
      %6843 = vrot.lane.b32.xlu0 %v6643, 12
      %v6844 = vpop.permute.xlu0 %6843
      %6845 = vrot.lane.b32.xlu0 %v6644, 12
      %v6846 = vpop.permute.xlu0 %6845
      %6847 = vrot.lane.b32.xlu0 %v6645, 12
      %v6848 = vpop.permute.xlu0 %6847
      %6849 = vrot.lane.b32.xlu0 %v6646, 12
      %v6850 = vpop.permute.xlu0 %6849
      %6851 = vrot.lane.b32.xlu0 %v6647, 12
      %v6852 = vpop.permute.xlu0 %6851
      %6853 = vrot.lane.b32.xlu0 %v6648, 12
      %v6854 = vpop.permute.xlu0 %6853
      %6855 = vrot.lane.b32.xlu0 %v6649, 12
      %v6856 = vpop.permute.xlu0 %6855
      %6857 = vrot.lane.b32.xlu0 %v6650, 12
      %v6858 = vpop.permute.xlu0 %6857
      %6859 = vrot.lane.b32.xlu0 %v6651, 12
      %v6860 = vpop.permute.xlu0 %6859
      %6861 = vrot.lane.b32.xlu0 %v6652, 12
      %v6862 = vpop.permute.xlu0 %6861
      %6863 = vrot.lane.b32.xlu0 %v6653, 12
      %v6864 = vpop.permute.xlu0 %6863
      %6865 = vrot.lane.b32.xlu0 %v6654, 12
      %v6866 = vpop.permute.xlu0 %6865
      %6867 = vrot.lane.b32.xlu0 %v6655, 12
      %v6868 = vpop.permute.xlu0 %6867
      %6869 = vrot.lane.b32.xlu0 %v6656, 12
      %v6870 = vpop.permute.xlu0 %6869
      %6871 = vrot.lane.b32.xlu0 %v6657, 12
      %v6872 = vpop.permute.xlu0 %6871
      %6873 = vrot.lane.b32.xlu0 %v6658, 12
      %v6874 = vpop.permute.xlu0 %6873
      %6875 = vrot.lane.b32.xlu0 %v6659, 12
      %v6876 = vpop.permute.xlu0 %6875
      %6877 = vrot.lane.b32.xlu0 %v6660, 12
      %v6878 = vpop.permute.xlu0 %6877
      %6879 = vrot.lane.b32.xlu0 %v6661, 12
      %v6880 = vpop.permute.xlu0 %6879
      %6881 = vrot.lane.b32.xlu0 %v6662, 12
      %v6882 = vpop.permute.xlu0 %6881
      %6883 = vrot.lane.b32.xlu0 %v6663, 12
      %v6884 = vpop.permute.xlu0 %6883
      %6885 = vrot.lane.b32.xlu0 %v6664, 12
      %v6886 = vpop.permute.xlu0 %6885
      %6887 = vrot.lane.b32.xlu0 %v6665, 12
      %v6888 = vpop.permute.xlu0 %6887
      %6889 = vrot.lane.b32.xlu0 %v6666, 12
      %v6890 = vpop.permute.xlu0 %6889
      %v6923 = vsel %vm4031, %v3089, %v6700
      %v6924 = vsel %vm4031, %v3090, %v6702
      %v6925 = vsel %vm4031, %v3091, %v6704
      %v6926 = vsel %vm4031, %v3092, %v6706
      %v6927 = vsel %vm4031, %v3093, %v6708
      %v6928 = vsel %vm4031, %v3094, %v6710
      %v6929 = vsel %vm4031, %v3095, %v6712
      %v6930 = vsel %vm4031, %v3096, %v6714
      %v6931 = vsel %vm4031, %v3097, %v6716
      %v6932 = vsel %vm4031, %v3098, %v6718
      %v6933 = vsel %vm4031, %v3099, %v6720
      %v6934 = vsel %vm4031, %v3100, %v6722
      %v6935 = vsel %vm4031, %v3101, %v6724
      %v6936 = vsel %vm4031, %v3102, %v6726
      %v6937 = vsel %vm4031, %v3103, %v6728
      %v6938 = vsel %vm4031, %v3104, %v6730
      %v6939 = vsel %vm4031, %v3105, %v6732
      %v6940 = vsel %vm4031, %v3106, %v6734
      %v6941 = vsel %vm4031, %v3107, %v6736
      %v6942 = vsel %vm4031, %v3108, %v6738
      %v6943 = vsel %vm4031, %v3109, %v6740
      %v6944 = vsel %vm4031, %v3110, %v6742
      %v6945 = vsel %vm4031, %v3111, %v6744
      %v6946 = vsel %vm4031, %v3112, %v6746
      %v6947 = vsel %vm4031, %v3113, %v6748
      %v6948 = vsel %vm4031, %v3114, %v6750
      %v6949 = vsel %vm4031, %v3115, %v6752
      %v6950 = vsel %vm4031, %v3116, %v6754
      %v6951 = vsel %vm4031, %v3117, %v6756
      %v6952 = vsel %vm4031, %v3118, %v6758
      %v6953 = vsel %vm4031, %v3119, %v6760
      %v6954 = vsel %vm4031, %v3120, %v6762
      %v6955 = vsel %vm4087, %v6923, %v6828
      %v6956 = vsel %vm4087, %v6924, %v6830
      %v6957 = vsel %vm4087, %v6925, %v6832
      %v6958 = vsel %vm4087, %v6926, %v6834
      %v6959 = vsel %vm4087, %v6927, %v6836
      %v6960 = vsel %vm4087, %v6928, %v6838
      %v6961 = vsel %vm4087, %v6929, %v6840
      %v6962 = vsel %vm4087, %v6930, %v6842
      %v6963 = vsel %vm4087, %v6931, %v6844
      %v6964 = vsel %vm4087, %v6932, %v6846
      %v6965 = vsel %vm4087, %v6933, %v6848
      %v6966 = vsel %vm4087, %v6934, %v6850
      %v6967 = vsel %vm4087, %v6935, %v6852
      %v6968 = vsel %vm4087, %v6936, %v6854
      %v6969 = vsel %vm4087, %v6937, %v6856
      %v6970 = vsel %vm4087, %v6938, %v6858
      %v6971 = vsel %vm4087, %v6939, %v6860
      %v6972 = vsel %vm4087, %v6940, %v6862
      %v6973 = vsel %vm4087, %v6941, %v6864
      %v6974 = vsel %vm4087, %v6942, %v6866
      %v6975 = vsel %vm4087, %v6943, %v6868
      %v6976 = vsel %vm4087, %v6944, %v6870
      %v6977 = vsel %vm4087, %v6945, %v6872
      %v6978 = vsel %vm4087, %v6946, %v6874
      %v6979 = vsel %vm4087, %v6947, %v6876
      %v6980 = vsel %vm4087, %v6948, %v6878
      %v6981 = vsel %vm4087, %v6949, %v6880
      %v6982 = vsel %vm4087, %v6950, %v6882
      %v6983 = vsel %vm4087, %v6951, %v6884
      %v6984 = vsel %vm4087, %v6952, %v6886
      %v6985 = vsel %vm4087, %v6953, %v6888
      %v6986 = vsel %vm4087, %v6954, %v6890
      %v6987 = vmax.f32 %v6955, 0.0
      %v6988 = vmax.f32 %v6956, 0.0
      %v6989 = vmax.f32 %v6957, 0.0
      %v6990 = vmax.f32 %v6958, 0.0
      %v6991 = vmax.f32 %v6959, 0.0
      %v6992 = vmax.f32 %v6960, 0.0
      %v6993 = vmax.f32 %v6961, 0.0
      %v6994 = vmax.f32 %v6962, 0.0
      %v6995 = vmax.f32 %v6963, 0.0
      %v6996 = vmax.f32 %v6964, 0.0
      %v6997 = vmax.f32 %v6965, 0.0
      %v6998 = vmax.f32 %v6966, 0.0
      %v6999 = vmax.f32 %v6967, 0.0
      %v7000 = vmax.f32 %v6968, 0.0
      %v7001 = vmax.f32 %v6969, 0.0
      %v7002 = vmax.f32 %v6970, 0.0
      %v7003 = vmax.f32 %v6971, 0.0
      %v7004 = vmax.f32 %v6972, 0.0
      %v7005 = vmax.f32 %v6973, 0.0
      %v7006 = vmax.f32 %v6974, 0.0
      %v7007 = vmax.f32 %v6975, 0.0
      %v7008 = vmax.f32 %v6976, 0.0
      %v7009 = vmax.f32 %v6977, 0.0
      %v7010 = vmax.f32 %v6978, 0.0
      %v7011 = vmax.f32 %v6979, 0.0
      %v7012 = vmax.f32 %v6980, 0.0
      %v7013 = vmax.f32 %v6981, 0.0
      %v7014 = vmax.f32 %v6982, 0.0
      %v7015 = vmax.f32 %v6983, 0.0
      %v7016 = vmax.f32 %v6984, 0.0
      %v7017 = vmax.f32 %v6985, 0.0
      %v7018 = vmax.f32 %v6986, 0.0
      %v7019 = vpack.c.bf16 %v6988, %v6987
      %v7020 = vpack.c.bf16 %v6990, %v6989
      %v7021 = vpack.c.bf16 %v6992, %v6991
      %v7022 = vpack.c.bf16 %v6994, %v6993
      %v7023 = vpack.c.bf16 %v6996, %v6995
      %v7024 = vpack.c.bf16 %v6998, %v6997
      %v7025 = vpack.c.bf16 %v7000, %v6999
      %v7026 = vpack.c.bf16 %v7002, %v7001
      %v7027 = vpack.c.bf16 %v7004, %v7003
      %v7028 = vpack.c.bf16 %v7006, %v7005
      %v7029 = vpack.c.bf16 %v7008, %v7007
      %v7030 = vpack.c.bf16 %v7010, %v7009
      %v7031 = vpack.c.bf16 %v7012, %v7011
      %v7032 = vpack.c.bf16 %v7014, %v7013
      %v7033 = vpack.c.bf16 %v7016, %v7015
      %v7034 = vpack.c.bf16 %v7018, %v7017
      %v7051 = vunpack.c.l.b16 %v7019
      %v7052 = vunpack.c.h.b16 %v7019
      %v7053 = vunpack.c.l.b16 %v7020
      %v7054 = vunpack.c.h.b16 %v7020
      %v7055 = vunpack.c.l.b16 %v7021
      %v7056 = vunpack.c.h.b16 %v7021
      %v7057 = vunpack.c.l.b16 %v7022
      %v7058 = vunpack.c.h.b16 %v7022
      %v7059 = vunpack.c.l.b16 %v7023
      %v7060 = vunpack.c.h.b16 %v7023
      %v7061 = vunpack.c.l.b16 %v7024
      %v7062 = vunpack.c.h.b16 %v7024
      %v7063 = vunpack.c.l.b16 %v7025
      %v7064 = vunpack.c.h.b16 %v7025
      %v7065 = vunpack.c.l.b16 %v7026
      %v7066 = vunpack.c.h.b16 %v7026
      %v7067 = vunpack.c.l.b16 %v7027
      %v7068 = vunpack.c.h.b16 %v7027
      %v7069 = vunpack.c.l.b16 %v7028
      %v7070 = vunpack.c.h.b16 %v7028
      %v7071 = vunpack.c.l.b16 %v7029
      %v7072 = vunpack.c.h.b16 %v7029
      %v7073 = vunpack.c.l.b16 %v7030
      %v7074 = vunpack.c.h.b16 %v7030
      %v7075 = vunpack.c.l.b16 %v7031
      %v7076 = vunpack.c.h.b16 %v7031
      %v7077 = vunpack.c.l.b16 %v7032
      %v7078 = vunpack.c.h.b16 %v7032
      %v7079 = vunpack.c.l.b16 %v7033
      %v7080 = vunpack.c.h.b16 %v7033
      %v7081 = vunpack.c.l.b16 %v7034
      %v7082 = vunpack.c.h.b16 %v7034
      %v7083 = vpack.c.b16 %v7051, %v7051
      %v7084 = vpack.c.b16 %v7052, %v7052
      %v7085 = vpack.c.b16 %v7053, %v7053
      %v7086 = vpack.c.b16 %v7054, %v7054
      %v7087 = vpack.c.b16 %v7055, %v7055
      %v7088 = vpack.c.b16 %v7056, %v7056
      %v7089 = vpack.c.b16 %v7057, %v7057
      %v7090 = vpack.c.b16 %v7058, %v7058
      %v7091 = vpack.c.b16 %v7059, %v7059
      %v7092 = vpack.c.b16 %v7060, %v7060
      %v7093 = vpack.c.b16 %v7061, %v7061
      %v7094 = vpack.c.b16 %v7062, %v7062
      %v7095 = vpack.c.b16 %v7063, %v7063
      %v7096 = vpack.c.b16 %v7064, %v7064
      %v7097 = vpack.c.b16 %v7065, %v7065
      %v7098 = vpack.c.b16 %v7066, %v7066
      %v7099 = vpack.c.b16 %v7067, %v7067
      %v7100 = vpack.c.b16 %v7068, %v7068
      %v7101 = vpack.c.b16 %v7069, %v7069
      %v7102 = vpack.c.b16 %v7070, %v7070
      %v7103 = vpack.c.b16 %v7071, %v7071
      %v7104 = vpack.c.b16 %v7072, %v7072
      %v7105 = vpack.c.b16 %v7073, %v7073
      %v7106 = vpack.c.b16 %v7074, %v7074
      %v7107 = vpack.c.b16 %v7075, %v7075
      %v7108 = vpack.c.b16 %v7076, %v7076
      %v7109 = vpack.c.b16 %v7077, %v7077
      %v7110 = vpack.c.b16 %v7078, %v7078
      %v7111 = vpack.c.b16 %v7079, %v7079
      %v7112 = vpack.c.b16 %v7080, %v7080
      %v7113 = vpack.c.b16 %v7081, %v7081
      %v7114 = vpack.c.b16 %v7082, %v7082
      %vm7147 = vcmask 125952
      %7148 = vst.msk [vmem:[%s498] sm:$0xf] %vm7147, %v7083
      %7149 = vst.msk [vmem:[%s498 + $0x4] sm:$0xf] %vm7147, %v7084
      %7150 = vst.msk [vmem:[%s498 + $0x8] sm:$0xf] %vm7147, %v7085
      %7151 = vst.msk [vmem:[%s498 + $0xc] sm:$0xf] %vm7147, %v7086
      %7152 = vst.msk [vmem:[%s498 + $0x10] sm:$0xf] %vm7147, %v7087
      %7153 = vst.msk [vmem:[%s498 + $0x14] sm:$0xf] %vm7147, %v7088
      %7154 = vst.msk [vmem:[%s498 + $0x18] sm:$0xf] %vm7147, %v7089
      %7155 = vst.msk [vmem:[%s498 + $0x1c] sm:$0xf] %vm7147, %v7090
      %7156 = vst.msk [vmem:[%s498 + $0x20] sm:$0xf] %vm7147, %v7091
      %7157 = vst.msk [vmem:[%s498 + $0x24] sm:$0xf] %vm7147, %v7092
      %7158 = vst.msk [vmem:[%s498 + $0x28] sm:$0xf] %vm7147, %v7093
      %7159 = vst.msk [vmem:[%s498 + $0x2c] sm:$0xf] %vm7147, %v7094
      %7160 = vst.msk [vmem:[%s498 + $0x30] sm:$0xf] %vm7147, %v7095
      %7161 = vst.msk [vmem:[%s498 + $0x34] sm:$0xf] %vm7147, %v7096
      %7162 = vst.msk [vmem:[%s498 + $0x38] sm:$0xf] %vm7147, %v7097
      %7163 = vst.msk [vmem:[%s498 + $0x3c] sm:$0xf] %vm7147, %v7098
      %7164 = vst.msk [vmem:[%s498 + $0x40] sm:$0xf] %vm7147, %v7099
      %7165 = vst.msk [vmem:[%s498 + $0x44] sm:$0xf] %vm7147, %v7100
      %7166 = vst.msk [vmem:[%s498 + $0x48] sm:$0xf] %vm7147, %v7101
      %7167 = vst.msk [vmem:[%s498 + $0x4c] sm:$0xf] %vm7147, %v7102
      %7168 = vst.msk [vmem:[%s498 + $0x50] sm:$0xf] %vm7147, %v7103
      %7169 = vst.msk [vmem:[%s498 + $0x54] sm:$0xf] %vm7147, %v7104
      %7170 = vst.msk [vmem:[%s498 + $0x58] sm:$0xf] %vm7147, %v7105
      %7171 = vst.msk [vmem:[%s498 + $0x5c] sm:$0xf] %vm7147, %v7106
      %7172 = vst.msk [vmem:[%s498 + $0x60] sm:$0xf] %vm7147, %v7107
      %7173 = vst.msk [vmem:[%s498 + $0x64] sm:$0xf] %vm7147, %v7108
      %7174 = vst.msk [vmem:[%s498 + $0x68] sm:$0xf] %vm7147, %v7109
      %7175 = vst.msk [vmem:[%s498 + $0x6c] sm:$0xf] %vm7147, %v7110
      %7176 = vst.msk [vmem:[%s498 + $0x70] sm:$0xf] %vm7147, %v7111
      %7177 = vst.msk [vmem:[%s498 + $0x74] sm:$0xf] %vm7147, %v7112
      %7178 = vst.msk [vmem:[%s498 + $0x78] sm:$0xf] %vm7147, %v7113
      %7179 = vst.msk [vmem:[%s498 + $0x7c] sm:$0xf] %vm7147, %v7114
      %s7180 = smul.u32 32, %s25
      %p7181 = scmp.lt.s32.totalorder %s24, 1
      %s7182 = scalar_select %p7181, %s24, 1
      %p7183 = scmp.lt.s32.totalorder %s7180, 31
      %s7184 = scalar_select %p7183, %s7180, 31
      %s7185 = smul.addr %s7182, 32
      %s7186 = sadd.s32 %s7184, %s7185
      %s7187 = smul.addr %s7186, 4
      %s7188 = scalar_lea.vmem %s9, %s7187
      // Predicated region
      $region69: #{tpu_custom_call.1} parent=55 // pred_check
        %p7189 = pneg %p278
      $region70: #{tpu_custom_call.1} parent=55 // pred_check_branch
        %7191 = sbr.rel (%p7189) target = $region72
      $region71: #{tpu_custom_call.1} parent=55 // pred_region
        %s7192 = smul.u32 32, %s25
      $region72: #{tpu_custom_call.1} parent=55 // pred_fallthru
        _
    $region56: #{tpu_custom_call.1} parent=5 // pred_fallthru
      _
    %p7193 = scmp.le.s32.totalorder 2, %s15
    // Predicated region
    $region73: #{tpu_custom_call.1} parent=5 // pred_check
      %p7194 = pneg %p7193
    $region74: #{tpu_custom_call.1} parent=5 // pred_check_branch
      %7196 = sbr.rel (%p7194) target = $region76
    $region75: #{tpu_custom_call.1} parent=5 // pred_region
      %s7197 = ssub.s32 %s15, 2
      // Predicated region
      $region77: #{tpu_custom_call.1} parent=75 // pred_check
        %p7198 = pneg %p284
      $region78: #{tpu_custom_call.1} parent=75 // pred_check_branch
        %7200 = sbr.rel (%p7198) target = $region80
      $region79: #{tpu_custom_call.1} parent=75 // pred_region
        %s7201 = smul.u32 32, %s27
        %p7202 = scmp.lt.s32.totalorder %s26, 1
        %s7203 = scalar_select %p7202, %s26, 1
        %p7204 = scmp.lt.s32.totalorder %s7201, 31
        %s7205 = scalar_select %p7204, %s7201, 31
        %s7206 = smul.addr %s7203, 32
        %s7207 = sadd.s32 %s7205, %s7206
        %s7208 = smul.addr %s7207, 4
        %s7209 = scalar_lea.vmem %s9, %s7208
      $region80: #{tpu_custom_call.1} parent=75 // pred_fallthru
        _
    $region76: #{tpu_custom_call.1} parent=5 // pred_fallthru
      _
  $region6: #{tpu_custom_call.1} parent=0 // loop_footer
    %s19 = sadd.s32 1, %s15
  $region7: #{tpu_custom_call.1} parent=0 // loop_footer_branch
    %14 = sbr.rel target = $region3
  $region8: #{tpu_custom_call.1} parent=0 // loop_exit
    _

</llo_original>
